<compile_context>
chip_gen: v6e
topology: v6e:2x2x1
jax: 0.10.0
libtpu: 0.0.40
codegen_flags: <defaults>
</compile_context>

<pallas_src>
import jax
import jax.numpy as jnp
from jax import lax
from jax.experimental import pallas as pl
from jax.experimental.pallas import tpu as pltpu

# Dimensions fixed by the PyTorch module (Linear(768,16), Linear(8192,512) x2
# => sequence length is necessarily 8192 / 16 = 512).
B = 2          # batch
S = 512        # sequence length
H = 768        # hidden size
G = 16         # group projection width
F = S * G      # 8192 flattened features
O = 512        # logits per head (start / end)
NO = 2 * O     # fused start|end output columns


def _has_megacore():
    """True when one JAX device hosts 2 TensorCores (v4 / v5p / v7x)."""
    try:
        kind = jax.devices()[0].device_kind.lower()
    except Exception:
        return False
    return ("v4" in kind) or ("v5p" in kind) or ("7" in kind)


MEGACORE = _has_megacore()
NSPLIT = 2 if MEGACORE else 1      # output-half split: the megacore "parallel" axis
GK = 8 if MEGACORE else 4          # group columns consumed per reduction step
KSTEPS = G // GK                   # reduction steps per output half
NO_BLK = NO // NSPLIT              # output columns per block (lane-dense: 512/1024)


# ----------------------------- fused kernel ---------------------------------
def fused_span_kernel(x_ref, wg_ref, bg_ref, wh_ref, bh_ref, o_ref, h_ref):
    # x_ref : (B, S, H)        bf16  whole array, VMEM-resident across the grid
    # wg_ref: (G, H)           bf16  group weights (pre-transposed)
    # bg_ref: (G, 1)           f32   group bias
    # wh_ref: (GK, S, NO_BLK)  bf16  permuted head-weight block for this K step
    # bh_ref: (1, NO_BLK)      f32   head bias for this output half
    # o_ref : (B, NO_BLK)      f32   accumulator (block index constant over k)
    # h_ref : (G, B, S)        bf16  scratch: relu(x @ Wg + bg), batch in MXU rows
    k = pl.program_id(1)

    @pl.when(k == 0)
    def _init():
        # Group projection for all 16 group-columns and both batches, computed
        # ONCE per output half; `h` never leaves VMEM.  Produced "transposed"
        # ((G, S) per batch): contraction over the minor dims of both operands
        # is the standard A @ B^T MXU pattern, so no transpose op is needed.
        wg = wg_ref[...]                       # (G, H)  bf16
        bg = bg_ref[...]                       # (G, 1)  f32
        hs = []
        for b in range(B):                     # static unroll (B = 2)
            y = lax.dot_general(
                wg, x_ref[b],
                dimension_numbers=(((1,), (1,)), ((), ())),
                preferred_element_type=jnp.float32)          # (G, S) f32
            hs.append(jnp.maximum(y + bg, 0.0).astype(jnp.bfloat16))
        h_ref[...] = jnp.stack(hs, axis=1)     # (G, B, S), one full store
        # Start the accumulator from the bias.
        o_ref[...] = jnp.broadcast_to(bh_ref[...], o_ref.shape)

    # Head contribution of this step's GK group-columns.  The batch rides the
    # MXU rows, so each (S, NO_BLK) bf16 weight tile is pushed through the MXU
    # exactly once per kernel.
    acc = jnp.zeros(o_ref.shape, jnp.float32)
    for j in range(GK):                        # static unroll
        lhs = h_ref[k * GK + j]                # (B, S) bf16, dynamic leading index
        acc = acc + jnp.dot(lhs, wh_ref[j], preferred_element_type=jnp.float32)
    o_ref[...] = o_ref[...] + acc              # one lane-dense full-block store


def span_predictor_fused(x_bf16, kp):
    flops = 2 * B * F * NO + 2 * B * S * H * G
    bytes_accessed = (x_bf16.size * 2 + kp["wg"].size * 2 + kp["bg"].size * 4
                      + kp["wh"].size * 2 + kp["bh"].size * 4 + B * NO * 4)
    return pl.pallas_call(
        fused_span_kernel,
        out_shape=jax.ShapeDtypeStruct((B, NO), jnp.float32),
        grid_spec=pltpu.PrefetchScalarGridSpec(
            num_scalar_prefetch=0,
            grid=(NSPLIT, KSTEPS),
            in_specs=[
                pl.BlockSpec((B, S, H), lambda n, k: (0, 0, 0)),        # x (resident)
                pl.BlockSpec((G, H), lambda n, k: (0, 0)),              # w_group
                pl.BlockSpec((G, 1), lambda n, k: (0, 0)),              # b_group
                pl.BlockSpec((GK, S, NO_BLK), lambda n, k: (k, 0, n)),  # head weights
                pl.BlockSpec((1, NO_BLK), lambda n, k: (0, n)),         # head bias
            ],
            out_specs=pl.BlockSpec((B, NO_BLK), lambda n, k: (0, n)),
            scratch_shapes=[pltpu.VMEM((G, B, S), jnp.bfloat16)],
        ),
        compiler_params=pltpu.CompilerParams(
            dimension_semantics=("parallel", "arbitrary")),
        cost_estimate=pl.CostEstimate(
            flops=flops, transcendentals=0, bytes_accessed=bytes_accessed),
    )(x_bf16, kp["wg"], kp["bg"], kp["wh"], kp["bh"])


@jax.jit
def span_predictor_forward(x, kernel_params):
    # nn.Dropout(0.1) is the identity in eval mode -> no-op here.
    logits = span_predictor_fused(x.astype(jnp.bfloat16), kernel_params)
    return logits[:, :O], logits[:, O:]


# ------------------------------ parameters ----------------------------------
def init_module_params(key):
    # PyTorch-style U(-1/sqrt(fan_in), +1/sqrt(fan_in)) init; weights stored
    # pre-transposed to (in, out), all f32 (the "module" parameters).
    k1, k2, k3, k4, k5, k6 = jax.random.split(key, 6)
    lim_g = 1.0 / jnp.sqrt(jnp.float32(H))
    lim_h = 1.0 / jnp.sqrt(jnp.float32(F))
    return {
        "w_group": jax.random.uniform(k1, (H, G), jnp.float32, -lim_g, lim_g),
        "b_group": jax.random.uniform(k2, (G,), jnp.float32, -lim_g, lim_g),
        "w_start": jax.random.uniform(k3, (F, O), jnp.float32, -lim_h, lim_h),
        "b_start": jax.random.uniform(k4, (O,), jnp.float32, -lim_h, lim_h),
        "w_end": jax.random.uniform(k5, (F, O), jnp.float32, -lim_h, lim_h),
        "b_end": jax.random.uniform(k6, (O,), jnp.float32, -lim_h, lim_h),
    }


def prepare_kernel_params(p):
    # One-time layout transforms (off the forward path):
    #   wg : (G, H)      bf16  = w_group.T  (bf16 MXU inputs for the group proj)
    #   bg : (G, 1)      f32
    #   wh : (G, S, NO)  bf16  with wh[g, s, n] = concat(W_start, W_end)[s*16+g, n]
    #        (this permutation absorbs nn.Flatten so the kernel never reshapes h)
    #   bh : (1, NO)     f32
    wg = p["w_group"].T.astype(jnp.bfloat16)
    bg = p["b_group"].reshape(G, 1).astype(jnp.float32)
    w_heads = jnp.concatenate([p["w_start"], p["w_end"]], axis=1)       # (F, 2O)
    wh = w_heads.reshape(S, G, NO).transpose(1, 0, 2).astype(jnp.bfloat16)
    bh = jnp.concatenate([p["b_start"], p["b_end"]])[None, :].astype(jnp.float32)
    return {"wg": wg, "bg": bg, "wh": wh, "bh": bh}


def reference_forward(x, p):
    # Pure-JAX f32 reference of the PyTorch module (eval mode).
    hp = jax.lax.Precision.HIGHEST
    h = jnp.maximum(
        jnp.einsum("bsh,hg->bsg", x, p["w_group"], precision=hp) + p["b_group"],
        0.0)
    f = h.reshape(B, F)
    start = jnp.dot(f, p["w_start"], precision=hp) + p["b_start"]
    end = jnp.dot(f, p["w_end"], precision=hp) + p["b_end"]
    return start, end


# --------------------------------- main --------------------------------------
if __name__ == "__main__":
    key = jax.random.PRNGKey(0)
    kx, kp = jax.random.split(key)
    x = jax.random.normal(kx, (B, S, H), jnp.float32)

    module_params = init_module_params(kp)
    kernel_params = prepare_kernel_params(module_params)

    start, end = span_predictor_forward(x, kernel_params)
    jax.block_until_ready((start, end))

    ref_start, ref_end = reference_forward(x, module_params)
    assert start.shape == (B, O) and end.shape == (B, O)
    # bf16 x / weights / activations give ~2e-3 worst-case logit error vs the
    # f32 reference (logit scale ~0.2); 1e-2 tolerance leaves ample margin
    # while still catching any permutation / indexing mistake (those would be
    # O(0.2) errors).
    assert jnp.allclose(start, ref_start, atol=1e-2, rtol=1e-2), (
        float(jnp.max(jnp.abs(start - ref_start))))
    assert jnp.allclose(end, ref_end, atol=1e-2, rtol=1e-2), (
        float(jnp.max(jnp.abs(end - ref_end))))

    print("KERNEL_OK")
</pallas_src>

<mosaic_0001>
module attributes {stable_mosaic.version = 11 : i64} {
  func.func @fused_span_kernel(%arg0: i32, %arg1: i32, %arg2: memref<2x512x768xbf16, #tpu.memory_space<vmem>>, %arg3: memref<16x768xbf16, #tpu.memory_space<vmem>>, %arg4: memref<16x1xf32, #tpu.memory_space<vmem>>, %arg5: memref<4x512x1024xbf16, #tpu.memory_space<vmem>>, %arg6: memref<1x1024xf32, #tpu.memory_space<vmem>>, %arg7: memref<2x1024xf32, #tpu.memory_space<vmem>>, %arg8: memref<16x2x512xbf16, #tpu.memory_space<vmem>>) attributes {dimension_semantics = [#tpu.dimension_semantics<parallel>, #tpu.dimension_semantics<arbitrary>], iteration_bounds = array<i64: 1, 4>, scalar_prefetch = 0 : i64, scratch_operands = 1 : i64, tpu.core_type = #tpu.core_type<tc>, window_params = [{pipeline_mode = #tpu.pipeline_mode<synchronous>, transform_indices = @transform_0, window_bounds = array<i64: 2, 512, 768>}, {pipeline_mode = #tpu.pipeline_mode<synchronous>, transform_indices = @transform_1, window_bounds = array<i64: 16, 768>}, {pipeline_mode = #tpu.pipeline_mode<synchronous>, transform_indices = @transform_2, window_bounds = array<i64: 16, 1>}, {transform_indices = @transform_3, window_bounds = array<i64: 4, 512, 1024>}, {transform_indices = @transform_4, window_bounds = array<i64: 1, 1024>}, {transform_indices = @transform_5, window_bounds = array<i64: 2, 1024>}]} {
    %c0_i32 = arith.constant 0 : i32
    %0 = arith.cmpi eq, %arg1, %c0_i32 : i32
    %1 = arith.extui %0 : i1 to i32
    %c0_i32_0 = arith.constant 0 : i32
    %2 = arith.cmpi ne, %1, %c0_i32_0 : i32
    scf.if %2 {
      %c0_29 = arith.constant 0 : index
      %c0_30 = arith.constant 0 : index
      %43 = vector.load %arg3[%c0_29, %c0_30] : memref<16x768xbf16, #tpu.memory_space<vmem>>, vector<16x768xbf16>
      %c0_31 = arith.constant 0 : index
      %c0_32 = arith.constant 0 : index
      %44 = vector.load %arg4[%c0_31, %c0_32] : memref<16x1xf32, #tpu.memory_space<vmem>>, vector<16x1xf32>
      %c0_33 = arith.constant 0 : index
      %c0_34 = arith.constant 0 : index
      %c0_35 = arith.constant 0 : index
      %45 = vector.load %arg2[%c0_33, %c0_34, %c0_35] : memref<2x512x768xbf16, #tpu.memory_space<vmem>>, vector<1x512x768xbf16>
      %46 = vector.shape_cast %45 : vector<1x512x768xbf16> to vector<512x768xbf16>
      %cst_36 = arith.constant dense<0.000000e+00> : vector<16x512xf32>
      %47 = tpu.matmul %43, %46, %cst_36 {dimension_numbers = #tpu.dot_dimension_numbers<[1], [1], [0], [0], [0, 0, 1, 0], [], []>} : vector<16x768xbf16>, vector<512x768xbf16>, vector<16x512xf32> -> vector<16x512xf32>
      %48 = vector.broadcast %44 : vector<16x1xf32> to vector<16x512xf32>
      %49 = arith.addf %47, %48 : vector<16x512xf32>
      %cst_37 = arith.constant 0.000000e+00 : f32
      %50 = vector.broadcast %cst_37 : f32 to vector<16x512xf32>
      %51 = arith.maximumf %49, %50 : vector<16x512xf32>
      %52 = arith.truncf %51 : vector<16x512xf32> to vector<16x512xbf16>
      %c1_38 = arith.constant 1 : index
      %c0_39 = arith.constant 0 : index
      %c0_40 = arith.constant 0 : index
      %53 = vector.load %arg2[%c1_38, %c0_39, %c0_40] : memref<2x512x768xbf16, #tpu.memory_space<vmem>>, vector<1x512x768xbf16>
      %54 = vector.shape_cast %53 : vector<1x512x768xbf16> to vector<512x768xbf16>
      %cst_41 = arith.constant dense<0.000000e+00> : vector<16x512xf32>
      %55 = tpu.matmul %43, %54, %cst_41 {dimension_numbers = #tpu.dot_dimension_numbers<[1], [1], [0], [0], [0, 0, 1, 0], [], []>} : vector<16x768xbf16>, vector<512x768xbf16>, vector<16x512xf32> -> vector<16x512xf32>
      %56 = vector.broadcast %44 : vector<16x1xf32> to vector<16x512xf32>
      %57 = arith.addf %55, %56 : vector<16x512xf32>
      %cst_42 = arith.constant 0.000000e+00 : f32
      %58 = vector.broadcast %cst_42 : f32 to vector<16x512xf32>
      %59 = arith.maximumf %57, %58 : vector<16x512xf32>
      %60 = arith.truncf %59 : vector<16x512xf32> to vector<16x512xbf16>
      %61 = vector.shape_cast %52 : vector<16x512xbf16> to vector<16x1x512xbf16>
      %62 = vector.shape_cast %60 : vector<16x512xbf16> to vector<16x1x512xbf16>
      %63 = tpu.concatenate %61, %62 in 1 : vector<16x1x512xbf16>, vector<16x1x512xbf16> -> vector<16x2x512xbf16>
      %c0_43 = arith.constant 0 : index
      %c0_44 = arith.constant 0 : index
      %c0_45 = arith.constant 0 : index
      %64 = vector.load %arg8[%c0_43, %c0_44, %c0_45] : memref<16x2x512xbf16, #tpu.memory_space<vmem>>, vector<16x2x512xbf16>
      tpu.vector_store %arg8[%c0_43, %c0_44, %c0_45], %63 {strides = array<i32>} : memref<16x2x512xbf16, #tpu.memory_space<vmem>>, vector<16x2x512xbf16>,
      %c0_46 = arith.constant 0 : index
      %c0_47 = arith.constant 0 : index
      %65 = vector.load %arg6[%c0_46, %c0_47] : memref<1x1024xf32, #tpu.memory_space<vmem>>, vector<1x1024xf32>
      %66 = vector.shape_cast %65 : vector<1x1024xf32> to vector<1x1024xf32>
      %67 = vector.broadcast %66 : vector<1x1024xf32> to vector<2x1024xf32>
      %c0_48 = arith.constant 0 : index
      %c0_49 = arith.constant 0 : index
      %68 = vector.load %arg7[%c0_48, %c0_49] : memref<2x1024xf32, #tpu.memory_space<vmem>>, vector<2x1024xf32>
      tpu.vector_store %arg7[%c0_48, %c0_49], %67 {strides = array<i32>} : memref<2x1024xf32, #tpu.memory_space<vmem>>, vector<2x1024xf32>,
    } else {
    }
    %cst = arith.constant 0.000000e+00 : f32
    %3 = vector.broadcast %cst : f32 to vector<2x1024xf32>
    %c4_i32 = arith.constant 4 : i32
    %4 = arith.muli %arg1, %c4_i32 : i32
    %c0_i32_1 = arith.constant 0 : i32
    %5 = arith.addi %4, %c0_i32_1 : i32
    %6 = arith.index_cast %5 : i32 to index
    %c0 = arith.constant 0 : index
    %c0_2 = arith.constant 0 : index
    %7 = vector.load %arg8[%6, %c0, %c0_2] : memref<16x2x512xbf16, #tpu.memory_space<vmem>>, vector<1x2x512xbf16>
    %8 = vector.shape_cast %7 : vector<1x2x512xbf16> to vector<2x512xbf16>
    %c0_3 = arith.constant 0 : index
    %c0_4 = arith.constant 0 : index
    %c0_5 = arith.constant 0 : index
    %9 = vector.load %arg5[%c0_3, %c0_4, %c0_5] : memref<4x512x1024xbf16, #tpu.memory_space<vmem>>, vector<1x512x1024xbf16>
    %10 = vector.shape_cast %9 : vector<1x512x1024xbf16> to vector<512x1024xbf16>
    %cst_6 = arith.constant dense<0.000000e+00> : vector<2x1024xf32>
    %11 = tpu.matmul %8, %10, %cst_6 {dimension_numbers = #tpu.dot_dimension_numbers<[1], [0], [0], [1], [0, 0, 1, 1], [], []>} : vector<2x512xbf16>, vector<512x1024xbf16>, vector<2x1024xf32> -> vector<2x1024xf32>
    %12 = arith.addf %3, %11 : vector<2x1024xf32>
    %c4_i32_7 = arith.constant 4 : i32
    %13 = arith.muli %arg1, %c4_i32_7 : i32
    %c1_i32 = arith.constant 1 : i32
    %14 = arith.addi %13, %c1_i32 : i32
    %15 = arith.index_cast %14 : i32 to index
    %c0_8 = arith.constant 0 : index
    %c0_9 = arith.constant 0 : index
    %16 = vector.load %arg8[%15, %c0_8, %c0_9] : memref<16x2x512xbf16, #tpu.memory_space<vmem>>, vector<1x2x512xbf16>
    %17 = vector.shape_cast %16 : vector<1x2x512xbf16> to vector<2x512xbf16>
    %c1 = arith.constant 1 : index
    %c0_10 = arith.constant 0 : index
    %c0_11 = arith.constant 0 : index
    %18 = vector.load %arg5[%c1, %c0_10, %c0_11] : memref<4x512x1024xbf16, #tpu.memory_space<vmem>>, vector<1x512x1024xbf16>
    %19 = vector.shape_cast %18 : vector<1x512x1024xbf16> to vector<512x1024xbf16>
    %cst_12 = arith.constant dense<0.000000e+00> : vector<2x1024xf32>
    %20 = tpu.matmul %17, %19, %cst_12 {dimension_numbers = #tpu.dot_dimension_numbers<[1], [0], [0], [1], [0, 0, 1, 1], [], []>} : vector<2x512xbf16>, vector<512x1024xbf16>, vector<2x1024xf32> -> vector<2x1024xf32>
    %21 = arith.addf %12, %20 : vector<2x1024xf32>
    %c4_i32_13 = arith.constant 4 : i32
    %22 = arith.muli %arg1, %c4_i32_13 : i32
    %c2_i32 = arith.constant 2 : i32
    %23 = arith.addi %22, %c2_i32 : i32
    %24 = arith.index_cast %23 : i32 to index
    %c0_14 = arith.constant 0 : index
    %c0_15 = arith.constant 0 : index
    %25 = vector.load %arg8[%24, %c0_14, %c0_15] : memref<16x2x512xbf16, #tpu.memory_space<vmem>>, vector<1x2x512xbf16>
    %26 = vector.shape_cast %25 : vector<1x2x512xbf16> to vector<2x512xbf16>
    %c2 = arith.constant 2 : index
    %c0_16 = arith.constant 0 : index
    %c0_17 = arith.constant 0 : index
    %27 = vector.load %arg5[%c2, %c0_16, %c0_17] : memref<4x512x1024xbf16, #tpu.memory_space<vmem>>, vector<1x512x1024xbf16>
    %28 = vector.shape_cast %27 : vector<1x512x1024xbf16> to vector<512x1024xbf16>
    %cst_18 = arith.constant dense<0.000000e+00> : vector<2x1024xf32>
    %29 = tpu.matmul %26, %28, %cst_18 {dimension_numbers = #tpu.dot_dimension_numbers<[1], [0], [0], [1], [0, 0, 1, 1], [], []>} : vector<2x512xbf16>, vector<512x1024xbf16>, vector<2x1024xf32> -> vector<2x1024xf32>
    %30 = arith.addf %21, %29 : vector<2x1024xf32>
    %c4_i32_19 = arith.constant 4 : i32
    %31 = arith.muli %arg1, %c4_i32_19 : i32
    %c3_i32 = arith.constant 3 : i32
    %32 = arith.addi %31, %c3_i32 : i32
    %33 = arith.index_cast %32 : i32 to index
    %c0_20 = arith.constant 0 : index
    %c0_21 = arith.constant 0 : index
    %34 = vector.load %arg8[%33, %c0_20, %c0_21] : memref<16x2x512xbf16, #tpu.memory_space<vmem>>, vector<1x2x512xbf16>
    %35 = vector.shape_cast %34 : vector<1x2x512xbf16> to vector<2x512xbf16>
    %c3 = arith.constant 3 : index
    %c0_22 = arith.constant 0 : index
    %c0_23 = arith.constant 0 : index
    %36 = vector.load %arg5[%c3, %c0_22, %c0_23] : memref<4x512x1024xbf16, #tpu.memory_space<vmem>>, vector<1x512x1024xbf16>
    %37 = vector.shape_cast %36 : vector<1x512x1024xbf16> to vector<512x1024xbf16>
    %cst_24 = arith.constant dense<0.000000e+00> : vector<2x1024xf32>
    %38 = tpu.matmul %35, %37, %cst_24 {dimension_numbers = #tpu.dot_dimension_numbers<[1], [0], [0], [1], [0, 0, 1, 1], [], []>} : vector<2x512xbf16>, vector<512x1024xbf16>, vector<2x1024xf32> -> vector<2x1024xf32>
    %39 = arith.addf %30, %38 : vector<2x1024xf32>
    %c0_25 = arith.constant 0 : index
    %c0_26 = arith.constant 0 : index
    %40 = vector.load %arg7[%c0_25, %c0_26] : memref<2x1024xf32, #tpu.memory_space<vmem>>, vector<2x1024xf32>
    %41 = arith.addf %40, %39 : vector<2x1024xf32>
    %c0_27 = arith.constant 0 : index
    %c0_28 = arith.constant 0 : index
    %42 = vector.load %arg7[%c0_27, %c0_28] : memref<2x1024xf32, #tpu.memory_space<vmem>>, vector<2x1024xf32>
    tpu.vector_store %arg7[%c0_27, %c0_28], %41 {strides = array<i32>} : memref<2x1024xf32, #tpu.memory_space<vmem>>, vector<2x1024xf32>,
    return
  }
  func.func @transform_0(%arg0: i32, %arg1: i32) -> (i32, i32, i32) {
    %c0_i32 = arith.constant 0 : i32
    %c0_i32_0 = arith.constant 0 : i32
    %c0_i32_1 = arith.constant 0 : i32
    %c0_i32_2 = arith.constant 0 : i32
    return %c0_i32, %c0_i32_0, %c0_i32_1 : i32, i32, i32
  }
  func.func @transform_1(%arg0: i32, %arg1: i32) -> (i32, i32) {
    %c0_i32 = arith.constant 0 : i32
    %c0_i32_0 = arith.constant 0 : i32
    %c0_i32_1 = arith.constant 0 : i32
    return %c0_i32, %c0_i32_0 : i32, i32
  }
  func.func @transform_2(%arg0: i32, %arg1: i32) -> (i32, i32) {
    %c0_i32 = arith.constant 0 : i32
    %c0_i32_0 = arith.constant 0 : i32
    %c0_i32_1 = arith.constant 0 : i32
    return %c0_i32, %c0_i32_0 : i32, i32
  }
  func.func @transform_3(%arg0: i32, %arg1: i32) -> (i32, i32, i32) {
    %c0_i32 = arith.constant 0 : i32
    %c0_i32_0 = arith.constant 0 : i32
    return %arg1, %c0_i32, %arg0 : i32, i32, i32
  }
  func.func @transform_4(%arg0: i32, %arg1: i32) -> (i32, i32) {
    %c0_i32 = arith.constant 0 : i32
    %c0_i32_0 = arith.constant 0 : i32
    return %c0_i32, %arg0 : i32, i32
  }
  func.func @transform_5(%arg0: i32, %arg1: i32) -> (i32, i32) {
    %c0_i32 = arith.constant 0 : i32
    %c0_i32_0 = arith.constant 0 : i32
    return %c0_i32, %arg0 : i32, i32
  }
}

</mosaic_0001>

<llo_original>
// kernel: span_predictor_forward.1
$region0: #{span_predictor_forward.1}
  #allocation0 [shape = 'u32[]', space=smem, size = 0x4, offset = 0x4, fixed_abs, tag = 'smem constant byte address 0x4 - core index']
  #allocation1 [shape = 'u32[144,128]{1,0:T(1,128)}', space=vmem, size = 0x12000, scoped, tag = 'internal scratch']
  #allocation2 [shape = 'bf16[16,2,512]{2,1,0:T(2,128)(2,1)}', space=vmem, size = 0x8000, scoped, tag = 'scratch operand']
  %s0 = inlined_call_operand.vmem [shape: bf16[2,512,768], index: 0, kind: input, shape index: {}]
  %s1 = inlined_call_operand.vmem [shape: bf16[16,768], index: 1, kind: input, shape index: {}]
  %s2 = inlined_call_operand.vmem [shape: f32[16,1], index: 2, kind: input, shape index: {}]
  %s3 = inlined_call_operand.hbm [shape: bf16[16,512,1024], index: 3, kind: input, shape index: {}]
  %s4 = inlined_call_operand.vmem [shape: f32[1,1024], index: 4, kind: input, shape index: {}]
  %s5 = inlined_call_operand.vmem [shape: f32[2,1024], index: 5, kind: output, shape index: {}]
  %s6 = sld [smem:[#allocation0]]
  $region61: #{span_predictor_forward.1} parent=0
    _
  %s8 = ssub.s32 1, %s6
  %s9 = scalar_select 0, %s8, %s6
  $region1: #{span_predictor_forward.1} parent=0
    #allocation3 [shape = 'u8[8388608]{0}', space=vmem, size = 0x800000, scoped, tag = 'input window, operand 3']
    #allocation4 [shape = 's32[2]{0}', space=sflag, size = 0x8, scoped, tag = 'scoped memory for span_predictor_forward.1']
    %10 = vsyncpa [#allocation4], 0
    %s11 = scalar_lea.sflag [#allocation4], 1
    %12 = vsyncpa %s11, 0
    loop: start=0, step=1, limit=6
    $region2: #{span_predictor_forward.1} parent=1 // loop_pre_header
      _
    $region3: #{span_predictor_forward.1} parent=1 // loop_header
      %s14 = sphi 0, %s18
      %p15 = scmp.ge.s32.totalorder %s14, 6
      %s21 = sphi 0, %s33
      %s22 = sphi 0, %s29
      %s23 = sphi 0, %s21
      %s24 = sphi 0, %s22
      %s25 = sphi 0, %s23
      %s26 = sphi 0, %s24
      %s34 = sphi 0, %s34
      %s36 = sphi 0, %s34
      %s37 = sphi 0, %s36
      %s51 = sphi 0, %s37
      %s55 = sphi 0, %s55
      %s57 = sphi 0, %s55
      %s58 = sphi 0, %s57
      %s72 = sphi 0, %s58
      %s76 = sphi 0, %s76
      %s78 = sphi 0, %s76
      %s79 = sphi 0, %s78
      %s93 = sphi 0, %s79
      %s101 = sphi 0, %s103
      %s104 = sphi 0, %s101
      %s105 = sphi 0, %s104
      %s121 = sphi 0, %s105
      %s127 = sphi 0, %s129
      %s130 = sphi 0, %s127
      %s131 = sphi 0, %s130
      %s147 = sphi 0, %s131
      %s153 = sphi 0, %s155
      %s156 = sphi 0, %s153
      %s157 = sphi 0, %s156
      %s173 = sphi 0, %s157
    $region4: #{span_predictor_forward.1} parent=1 // loop_header_branch
      %17 = sbr.rel (%p15) target = $region8
    $region5: #{span_predictor_forward.1} parent=1 // loop_body
      %s19 = ssub.s32 %s14, 1
      %s20 = ssub.s32 %s14, 2
      %s27 = sadd.s32 1, %s22
      %p28 = scmp.ge.s32.totalorder %s27, 4
      %s29 = scalar_select %p28, 0, %s27
      %s30 = sadd.s32 1, %s21
      %s31 = scalar_select %p28, %s30, %s21
      %p32 = scmp.ge.s32.totalorder %s31, 1
      %s33 = scalar_select %p32, 0, %s31
      %s35 = sadd.s32 %s34, 1
      %p38 = scmp.eq.s32.totalorder %s14, 3
      %p39 = scmp.ne.s32.totalorder %s34, %s36
      %p40 = scmp.eq.s32.totalorder %s14, 0
      %p41 = por %p39, %p40
      %p42 = scmp.ne.s32.totalorder %s34, %s36
      %p43 = scmp.eq.s32.totalorder %s19, 3
      %p44 = por %p42, %p43
      %p45 = scmp.ne.s32.totalorder %s36, %s37
      %p46 = scmp.eq.s32.totalorder %s19, 0
      %p47 = por %p45, %p46
      %p48 = scmp.ne.s32.totalorder %s36, %s37
      %p49 = scmp.eq.s32.totalorder %s20, 3
      %p50 = por %p48, %p49
      %p52 = scmp.ne.s32.totalorder %s37, %s51
      %p53 = scmp.eq.s32.totalorder %s20, 0
      %p54 = por %p52, %p53
      %s56 = sadd.s32 %s55, 1
      %p59 = scmp.eq.s32.totalorder %s14, 3
      %p60 = scmp.ne.s32.totalorder %s55, %s57
      %p61 = scmp.eq.s32.totalorder %s14, 0
      %p62 = por %p60, %p61
      %p63 = scmp.ne.s32.totalorder %s55, %s57
      %p64 = scmp.eq.s32.totalorder %s19, 3
      %p65 = por %p63, %p64
      %p66 = scmp.ne.s32.totalorder %s57, %s58
      %p67 = scmp.eq.s32.totalorder %s19, 0
      %p68 = por %p66, %p67
      %p69 = scmp.ne.s32.totalorder %s57, %s58
      %p70 = scmp.eq.s32.totalorder %s20, 3
      %p71 = por %p69, %p70
      %p73 = scmp.ne.s32.totalorder %s58, %s72
      %p74 = scmp.eq.s32.totalorder %s20, 0
      %p75 = por %p73, %p74
      %s77 = sadd.s32 %s76, 1
      %p80 = scmp.eq.s32.totalorder %s14, 3
      %p81 = scmp.ne.s32.totalorder %s76, %s78
      %p82 = scmp.eq.s32.totalorder %s14, 0
      %p83 = por %p81, %p82
      %p84 = scmp.ne.s32.totalorder %s76, %s78
      %p85 = scmp.eq.s32.totalorder %s19, 3
      %p86 = por %p84, %p85
      %p87 = scmp.ne.s32.totalorder %s78, %s79
      %p88 = scmp.eq.s32.totalorder %s19, 0
      %p89 = por %p87, %p88
      %p90 = scmp.ne.s32.totalorder %s78, %s79
      %p91 = scmp.eq.s32.totalorder %s20, 3
      %p92 = por %p90, %p91
      %p94 = scmp.ne.s32.totalorder %s79, %s93
      %p95 = scmp.eq.s32.totalorder %s20, 0
      %p96 = por %p94, %p95
      %s97 = ssub.s32 %s22, %s29
      %s98 = ssub.s32 %s21, %s33
      %s99 = sor.u32 %s97, %s98
      %p100 = scmp.eq.s32.totalorder %s99, 0
      %s102 = sadd.s32 %s101, 1
      %s103 = scalar_select %p100, %s101, %s102
      %p106 = pneg %p100
      %p107 = scmp.eq.s32.totalorder %s14, 3
      %p108 = por %p106, %p107
      %p109 = scmp.ne.s32.totalorder %s101, %s104
      %p110 = scmp.eq.s32.totalorder %s14, 0
      %p111 = por %p109, %p110
      %p112 = scmp.ne.s32.totalorder %s101, %s104
      %p113 = scmp.eq.s32.totalorder %s19, 3
      %p114 = por %p112, %p113
      %p115 = scmp.ne.s32.totalorder %s104, %s105
      %p116 = scmp.eq.s32.totalorder %s19, 0
      %p117 = por %p115, %p116
      %p118 = scmp.ne.s32.totalorder %s104, %s105
      %p119 = scmp.eq.s32.totalorder %s20, 3
      %p120 = por %p118, %p119
      %p122 = scmp.ne.s32.totalorder %s105, %s121
      %p123 = scmp.eq.s32.totalorder %s20, 0
      %p124 = por %p122, %p123
      %s125 = ssub.s32 %s21, %s33
      %p126 = scmp.eq.s32.totalorder %s125, 0
      %s128 = sadd.s32 %s127, 1
      %s129 = scalar_select %p126, %s127, %s128
      %p132 = pneg %p126
      %p133 = scmp.eq.s32.totalorder %s14, 3
      %p134 = por %p132, %p133
      %p135 = scmp.ne.s32.totalorder %s127, %s130
      %p136 = scmp.eq.s32.totalorder %s14, 0
      %p137 = por %p135, %p136
      %p138 = scmp.ne.s32.totalorder %s127, %s130
      %p139 = scmp.eq.s32.totalorder %s19, 3
      %p140 = por %p138, %p139
      %p141 = scmp.ne.s32.totalorder %s130, %s131
      %p142 = scmp.eq.s32.totalorder %s19, 0
      %p143 = por %p141, %p142
      %p144 = scmp.ne.s32.totalorder %s130, %s131
      %p145 = scmp.eq.s32.totalorder %s20, 3
      %p146 = por %p144, %p145
      %p148 = scmp.ne.s32.totalorder %s131, %s147
      %p149 = scmp.eq.s32.totalorder %s20, 0
      %p150 = por %p148, %p149
      %s151 = ssub.s32 %s21, %s33
      %p152 = scmp.eq.s32.totalorder %s151, 0
      %s154 = sadd.s32 %s153, 1
      %s155 = scalar_select %p152, %s153, %s154
      %p158 = pneg %p152
      %p159 = scmp.eq.s32.totalorder %s14, 3
      %p160 = por %p158, %p159
      %p161 = scmp.ne.s32.totalorder %s153, %s156
      %p162 = scmp.eq.s32.totalorder %s14, 0
      %p163 = por %p161, %p162
      %p164 = scmp.ne.s32.totalorder %s153, %s156
      %p165 = scmp.eq.s32.totalorder %s19, 3
      %p166 = por %p164, %p165
      %p167 = scmp.ne.s32.totalorder %s156, %s157
      %p168 = scmp.eq.s32.totalorder %s19, 0
      %p169 = por %p167, %p168
      %p170 = scmp.ne.s32.totalorder %s156, %s157
      %p171 = scmp.eq.s32.totalorder %s20, 3
      %p172 = por %p170, %p171
      %p174 = scmp.ne.s32.totalorder %s157, %s173
      %p175 = scmp.eq.s32.totalorder %s20, 0
      %p176 = por %p174, %p175
      %p177 = scmp.le.s32.totalorder 1, %s14
      %p178 = scmp.lt.s32.totalorder %s14, 5
      %p179 = pnand %p177, %p178
      %p180 = pneg %p179
      // Predicated region
      $region9: #{span_predictor_forward.1} parent=5 // pred_check
        _
      $region10: #{span_predictor_forward.1} parent=5 // pred_check_branch
        %182 = sbr.rel (%p179) target = $region12
      $region11: #{span_predictor_forward.1} parent=5 // pred_region
        %s183 = ssub.s32 %s14, 1
        // Predicated region
        $region13: #{span_predictor_forward.1} parent=11 // pred_check
          %p184 = pneg %p47
        $region14: #{span_predictor_forward.1} parent=11 // pred_check_branch
          %186 = sbr.rel (%p184) target = $region16
        $region15: #{span_predictor_forward.1} parent=11 // pred_region
          _
        $region16: #{span_predictor_forward.1} parent=11 // pred_fallthru
          _
        // Predicated region
        $region17: #{span_predictor_forward.1} parent=11 // pred_check
          %p187 = pneg %p68
        $region18: #{span_predictor_forward.1} parent=11 // pred_check_branch
          %189 = sbr.rel (%p187) target = $region20
        $region19: #{span_predictor_forward.1} parent=11 // pred_region
          _
        $region20: #{span_predictor_forward.1} parent=11 // pred_fallthru
          _
        // Predicated region
        $region21: #{span_predictor_forward.1} parent=11 // pred_check
          %p190 = pneg %p89
        $region22: #{span_predictor_forward.1} parent=11 // pred_check_branch
          %192 = sbr.rel (%p190) target = $region24
        $region23: #{span_predictor_forward.1} parent=11 // pred_region
          _
        $region24: #{span_predictor_forward.1} parent=11 // pred_fallthru
          _
        // Predicated region
        $region25: #{span_predictor_forward.1} parent=11 // pred_check
          %p193 = pneg %p143
        $region26: #{span_predictor_forward.1} parent=11 // pred_check_branch
          %195 = sbr.rel (%p193) target = $region28
        $region27: #{span_predictor_forward.1} parent=11 // pred_region
          %s196 = smul.u32 8, %s23
          %p197 = scmp.lt.s32.totalorder %s196, 7
          %s198 = scalar_select %p197, %s196, 7
          %s199 = scalar_lea.vmem %s4, %s198
          %s200 = smul.u32 8, %s23
        $region28: #{span_predictor_forward.1} parent=11 // pred_fallthru
          _
      $region12: #{span_predictor_forward.1} parent=5 // pred_fallthru
        _
      %p201 = scmp.lt.s32.totalorder %s14, 4
      // Predicated region
      $region29: #{span_predictor_forward.1} parent=5 // pred_check
        %p202 = pneg %p201
      $region30: #{span_predictor_forward.1} parent=5 // pred_check_branch
        %204 = sbr.rel (%p202) target = $region32
      $region31: #{span_predictor_forward.1} parent=5 // pred_region
        // Predicated region
        $region33: #{span_predictor_forward.1} parent=31 // pred_check
          %p205 = pneg %p111
        $region34: #{span_predictor_forward.1} parent=31 // pred_check_branch
          %207 = sbr.rel (%p205) target = $region36
        $region35: #{span_predictor_forward.1} parent=31 // pred_region
          %s208 = sand.u32 %s101, 1
          %s209 = scalar_lea.sflag [#allocation4], %s208
          %s210 = sand.u32 %s101, 1
          %s211 = smul.addr %s210, 8192
          %s212 = scalar_lea.vmem [#allocation3], %s211
          %s213 = smul.u32 4, %s22
          %s214 = smul.u32 8, %s21
          %s216 = ssub.s32 131072, 131072
          %217 = vsyncadd %s209, %s216
          %s218 = smul.addr %s213, 512
          %s219 = sadd.s32 %s214, %s218
          %s220 = smul.addr %s219, 64
          %s221 = scalar_lea.hbm %s3, %s220
          %s222 = sshll.u32 %s212, 4
          %s223 = int_to_ptr.vmem [resolvable:$true] %s222
          %228 = dma.hbm_to_vmem [thread:$0]  %s221, 131072, %s223, %s209, 512, 512, 32
        $region36: #{span_predictor_forward.1} parent=31 // pred_fallthru
          _
      $region32: #{span_predictor_forward.1} parent=5 // pred_fallthru
        _
      %p229 = scmp.le.s32.totalorder 1, %s14
      %p230 = scmp.lt.s32.totalorder %s14, 5
      %p231 = pnand %p229, %p230
      %p232 = pneg %p231
      // Predicated region
      $region37: #{span_predictor_forward.1} parent=5 // pred_check
        _
      $region38: #{span_predictor_forward.1} parent=5 // pred_check_branch
        %234 = sbr.rel (%p231) target = $region40
      $region39: #{span_predictor_forward.1} parent=5 // pred_region
        %s235 = ssub.s32 %s14, 1
        %s236 = sand.u32 %s104, 1
        %s237 = scalar_lea.sflag [#allocation4], %s236
        %s238 = sand.u32 %s104, 1
        %s239 = smul.addr %s238, 8192
        %s240 = scalar_lea.vmem [#allocation3], %s239
        // Predicated region
        $region41: #{span_predictor_forward.1} parent=39 // pred_check
          %p241 = pneg %p117
        $region42: #{span_predictor_forward.1} parent=39 // pred_check_branch
          %243 = sbr.rel (%p241) target = $region44
        $region43: #{span_predictor_forward.1} parent=39 // pred_region
          %244 = dma.done %s237, 131072
        $region44: #{span_predictor_forward.1} parent=39 // pred_fallthru
          _
        %p245 = pneg %p47
        %p246 = pneg %p44
        %p247 = pneg %p68
        %p248 = pneg %p65
        %p249 = pneg %p89
        %p250 = pneg %p86
        %s251 = sand.u32 %s104, 1
        %s252 = scalar_lea.sflag [#allocation4], %s251
        %s253 = sand.u32 %s104, 1
        %s254 = smul.addr %s253, 8192
        %s255 = scalar_lea.vmem [#allocation3], %s254
        %p256 = pneg %p117
        %p257 = pneg %p114
        %s258 = smul.u32 8, %s23
        %p259 = scmp.lt.s32.totalorder %s258, 7
        %s260 = scalar_select %p259, %s258, 7
        %s261 = scalar_lea.vmem %s4, %s260
        %p262 = pneg %p143
        %p263 = pneg %p140
        %p264 = pneg %p169
        %p265 = pneg %p166
        %s266 = smul.u32 8, %s23
        %p267 = scmp.lt.s32.totalorder %s266, 7
        %s268 = scalar_select %p267, %s266, 7
        %s269 = smul.addr %s268, 2
        %s270 = scalar_lea.vmem %s5, %s269
        %s271 = smul.u32 4, %s24
        %s272 = smul.u32 8, %s23
        %s273 = smul.u32 8, %s23
        %p274 = scmp.lt.s32.totalorder %s273, 7
        %s275 = scalar_select %p274, %s273, 7
        %s276 = scalar_lea.vmem %s4, %s275
        %s277 = smul.u32 8, %s23
        %s278 = smul.u32 8, %s23
        %p279 = scmp.lt.s32.totalorder %s278, 7
        %s280 = scalar_select %p279, %s278, 7
        %s281 = smul.addr %s280, 2
        %s282 = scalar_lea.vmem %s5, %s281
        %s283 = smul.u32 8, %s23
        %p284 = scmp.eq.s32.totalorder %s24, 0
        // Predicated region
        $region45: #{span_predictor_forward.1} parent=39 // pred_check
          %p285 = pneg %p284
        $region46: #{span_predictor_forward.1} parent=39 // pred_check_branch
          %287 = sbr.rel (%p285) target = $region48
        $region47: #{span_predictor_forward.1} parent=39 // pred_region
          %v288 = vld [vmem:[%s1] sm:$0xff]
          %v289 = vld [vmem:[%s1 + $0x8] sm:$0xff]
          %v290 = vld [vmem:[%s1 + $0x10] sm:$0xff]
          %v291 = vld [vmem:[%s1 + $0x18] sm:$0xff]
          %v292 = vld [vmem:[%s1 + $0x20] sm:$0xff]
          %v293 = vld [vmem:[%s1 + $0x28] sm:$0xff]
          %v294 = vld [vmem:[%s2] sm:$0xff]
          %v295 = vld [vmem:[%s2 + $0x8] sm:$0xff]
          %v296 = vld [vmem:[%s0] sm:$0xff]
          %v297 = vld [vmem:[%s0 + $0x8] sm:$0xff]
          %v298 = vld [vmem:[%s0 + $0x10] sm:$0xff]
          %v299 = vld [vmem:[%s0 + $0x18] sm:$0xff]
          %v300 = vld [vmem:[%s0 + $0x20] sm:$0xff]
          %v301 = vld [vmem:[%s0 + $0x28] sm:$0xff]
          %v302 = vld [vmem:[%s0 + $0x30] sm:$0xff]
          %v303 = vld [vmem:[%s0 + $0x38] sm:$0xff]
          %v304 = vld [vmem:[%s0 + $0x40] sm:$0xff]
          %v305 = vld [vmem:[%s0 + $0x48] sm:$0xff]
          %v306 = vld [vmem:[%s0 + $0x50] sm:$0xff]
          %v307 = vld [vmem:[%s0 + $0x58] sm:$0xff]
          %v308 = vld [vmem:[%s0 + $0x60] sm:$0xff]
          %v309 = vld [vmem:[%s0 + $0x68] sm:$0xff]
          %v310 = vld [vmem:[%s0 + $0x70] sm:$0xff]
          %v311 = vld [vmem:[%s0 + $0x78] sm:$0xff]
          %v312 = vld [vmem:[%s0 + $0x80] sm:$0xff]
          %v313 = vld [vmem:[%s0 + $0x88] sm:$0xff]
          %v314 = vld [vmem:[%s0 + $0x90] sm:$0xff]
          %v315 = vld [vmem:[%s0 + $0x98] sm:$0xff]
          %v316 = vld [vmem:[%s0 + $0xa0] sm:$0xff]
          %v317 = vld [vmem:[%s0 + $0xa8] sm:$0xff]
          %v318 = vld [vmem:[%s0 + $0xb0] sm:$0xff]
          %v319 = vld [vmem:[%s0 + $0xb8] sm:$0xff]
          %v320 = vld [vmem:[%s0 + $0xc0] sm:$0xff]
          %v321 = vld [vmem:[%s0 + $0xc8] sm:$0xff]
          %v322 = vld [vmem:[%s0 + $0xd0] sm:$0xff]
          %v323 = vld [vmem:[%s0 + $0xd8] sm:$0xff]
          %v324 = vld [vmem:[%s0 + $0xe0] sm:$0xff]
          %v325 = vld [vmem:[%s0 + $0xe8] sm:$0xff]
          %v326 = vld [vmem:[%s0 + $0xf0] sm:$0xff]
          %v327 = vld [vmem:[%s0 + $0xf8] sm:$0xff]
          %v328 = vld [vmem:[%s0 + $0x100] sm:$0xff]
          %v329 = vld [vmem:[%s0 + $0x108] sm:$0xff]
          %v330 = vld [vmem:[%s0 + $0x110] sm:$0xff]
          %v331 = vld [vmem:[%s0 + $0x118] sm:$0xff]
          %v332 = vld [vmem:[%s0 + $0x120] sm:$0xff]
          %v333 = vld [vmem:[%s0 + $0x128] sm:$0xff]
          %v334 = vld [vmem:[%s0 + $0x130] sm:$0xff]
          %v335 = vld [vmem:[%s0 + $0x138] sm:$0xff]
          %v336 = vld [vmem:[%s0 + $0x140] sm:$0xff]
          %v337 = vld [vmem:[%s0 + $0x148] sm:$0xff]
          %v338 = vld [vmem:[%s0 + $0x150] sm:$0xff]
          %v339 = vld [vmem:[%s0 + $0x158] sm:$0xff]
          %v340 = vld [vmem:[%s0 + $0x160] sm:$0xff]
          %v341 = vld [vmem:[%s0 + $0x168] sm:$0xff]
          %v342 = vld [vmem:[%s0 + $0x170] sm:$0xff]
          %v343 = vld [vmem:[%s0 + $0x178] sm:$0xff]
          %v344 = vld [vmem:[%s0 + $0x180] sm:$0xff]
          %v345 = vld [vmem:[%s0 + $0x188] sm:$0xff]
          %v346 = vld [vmem:[%s0 + $0x190] sm:$0xff]
          %v347 = vld [vmem:[%s0 + $0x198] sm:$0xff]
          %v348 = vld [vmem:[%s0 + $0x1a0] sm:$0xff]
          %v349 = vld [vmem:[%s0 + $0x1a8] sm:$0xff]
          %v350 = vld [vmem:[%s0 + $0x1b0] sm:$0xff]
          %v351 = vld [vmem:[%s0 + $0x1b8] sm:$0xff]
          %v352 = vld [vmem:[%s0 + $0x1c0] sm:$0xff]
          %v353 = vld [vmem:[%s0 + $0x1c8] sm:$0xff]
          %v354 = vld [vmem:[%s0 + $0x1d0] sm:$0xff]
          %v355 = vld [vmem:[%s0 + $0x1d8] sm:$0xff]
          %v356 = vld [vmem:[%s0 + $0x1e0] sm:$0xff]
          %v357 = vld [vmem:[%s0 + $0x1e8] sm:$0xff]
          %v358 = vld [vmem:[%s0 + $0x1f0] sm:$0xff]
          %v359 = vld [vmem:[%s0 + $0x1f8] sm:$0xff]
          %v360 = vld [vmem:[%s0 + $0x200] sm:$0xff]
          %v361 = vld [vmem:[%s0 + $0x208] sm:$0xff]
          %v362 = vld [vmem:[%s0 + $0x210] sm:$0xff]
          %v363 = vld [vmem:[%s0 + $0x218] sm:$0xff]
          %v364 = vld [vmem:[%s0 + $0x220] sm:$0xff]
          %v365 = vld [vmem:[%s0 + $0x228] sm:$0xff]
          %v366 = vld [vmem:[%s0 + $0x230] sm:$0xff]
          %v367 = vld [vmem:[%s0 + $0x238] sm:$0xff]
          %v368 = vld [vmem:[%s0 + $0x240] sm:$0xff]
          %v369 = vld [vmem:[%s0 + $0x248] sm:$0xff]
          %v370 = vld [vmem:[%s0 + $0x250] sm:$0xff]
          %v371 = vld [vmem:[%s0 + $0x258] sm:$0xff]
          %v372 = vld [vmem:[%s0 + $0x260] sm:$0xff]
          %v373 = vld [vmem:[%s0 + $0x268] sm:$0xff]
          %v374 = vld [vmem:[%s0 + $0x270] sm:$0xff]
          %v375 = vld [vmem:[%s0 + $0x278] sm:$0xff]
          %v376 = vld [vmem:[%s0 + $0x280] sm:$0xff]
          %v377 = vld [vmem:[%s0 + $0x288] sm:$0xff]
          %v378 = vld [vmem:[%s0 + $0x290] sm:$0xff]
          %v379 = vld [vmem:[%s0 + $0x298] sm:$0xff]
          %v380 = vld [vmem:[%s0 + $0x2a0] sm:$0xff]
          %v381 = vld [vmem:[%s0 + $0x2a8] sm:$0xff]
          %v382 = vld [vmem:[%s0 + $0x2b0] sm:$0xff]
          %v383 = vld [vmem:[%s0 + $0x2b8] sm:$0xff]
          %v384 = vld [vmem:[%s0 + $0x2c0] sm:$0xff]
          %v385 = vld [vmem:[%s0 + $0x2c8] sm:$0xff]
          %v386 = vld [vmem:[%s0 + $0x2d0] sm:$0xff]
          %v387 = vld [vmem:[%s0 + $0x2d8] sm:$0xff]
          %v388 = vld [vmem:[%s0 + $0x2e0] sm:$0xff]
          %v389 = vld [vmem:[%s0 + $0x2e8] sm:$0xff]
          %v390 = vld [vmem:[%s0 + $0x2f0] sm:$0xff]
          %v391 = vld [vmem:[%s0 + $0x2f8] sm:$0xff]
          %v392 = vld [vmem:[%s0 + $0x300] sm:$0xff]
          %v393 = vld [vmem:[%s0 + $0x308] sm:$0xff]
          %v394 = vld [vmem:[%s0 + $0x310] sm:$0xff]
          %v395 = vld [vmem:[%s0 + $0x318] sm:$0xff]
          %v396 = vld [vmem:[%s0 + $0x320] sm:$0xff]
          %v397 = vld [vmem:[%s0 + $0x328] sm:$0xff]
          %v398 = vld [vmem:[%s0 + $0x330] sm:$0xff]
          %v399 = vld [vmem:[%s0 + $0x338] sm:$0xff]
          %v400 = vld [vmem:[%s0 + $0x340] sm:$0xff]
          %v401 = vld [vmem:[%s0 + $0x348] sm:$0xff]
          %v402 = vld [vmem:[%s0 + $0x350] sm:$0xff]
          %v403 = vld [vmem:[%s0 + $0x358] sm:$0xff]
          %v404 = vld [vmem:[%s0 + $0x360] sm:$0xff]
          %v405 = vld [vmem:[%s0 + $0x368] sm:$0xff]
          %v406 = vld [vmem:[%s0 + $0x370] sm:$0xff]
          %v407 = vld [vmem:[%s0 + $0x378] sm:$0xff]
          %v408 = vld [vmem:[%s0 + $0x380] sm:$0xff]
          %v409 = vld [vmem:[%s0 + $0x388] sm:$0xff]
          %v410 = vld [vmem:[%s0 + $0x390] sm:$0xff]
          %v411 = vld [vmem:[%s0 + $0x398] sm:$0xff]
          %v412 = vld [vmem:[%s0 + $0x3a0] sm:$0xff]
          %v413 = vld [vmem:[%s0 + $0x3a8] sm:$0xff]
          %v414 = vld [vmem:[%s0 + $0x3b0] sm:$0xff]
          %v415 = vld [vmem:[%s0 + $0x3b8] sm:$0xff]
          %v416 = vld [vmem:[%s0 + $0x3c0] sm:$0xff]
          %v417 = vld [vmem:[%s0 + $0x3c8] sm:$0xff]
          %v418 = vld [vmem:[%s0 + $0x3d0] sm:$0xff]
          %v419 = vld [vmem:[%s0 + $0x3d8] sm:$0xff]
          %v420 = vld [vmem:[%s0 + $0x3e0] sm:$0xff]
          %v421 = vld [vmem:[%s0 + $0x3e8] sm:$0xff]
          %v422 = vld [vmem:[%s0 + $0x3f0] sm:$0xff]
          %v423 = vld [vmem:[%s0 + $0x3f8] sm:$0xff]
          %v424 = vld [vmem:[%s0 + $0x400] sm:$0xff]
          %v425 = vld [vmem:[%s0 + $0x408] sm:$0xff]
          %v426 = vld [vmem:[%s0 + $0x410] sm:$0xff]
          %v427 = vld [vmem:[%s0 + $0x418] sm:$0xff]
          %v428 = vld [vmem:[%s0 + $0x420] sm:$0xff]
          %v429 = vld [vmem:[%s0 + $0x428] sm:$0xff]
          %v430 = vld [vmem:[%s0 + $0x430] sm:$0xff]
          %v431 = vld [vmem:[%s0 + $0x438] sm:$0xff]
          %v432 = vld [vmem:[%s0 + $0x440] sm:$0xff]
          %v433 = vld [vmem:[%s0 + $0x448] sm:$0xff]
          %v434 = vld [vmem:[%s0 + $0x450] sm:$0xff]
          %v435 = vld [vmem:[%s0 + $0x458] sm:$0xff]
          %v436 = vld [vmem:[%s0 + $0x460] sm:$0xff]
          %v437 = vld [vmem:[%s0 + $0x468] sm:$0xff]
          %v438 = vld [vmem:[%s0 + $0x470] sm:$0xff]
          %v439 = vld [vmem:[%s0 + $0x478] sm:$0xff]
          %v440 = vld [vmem:[%s0 + $0x480] sm:$0xff]
          %v441 = vld [vmem:[%s0 + $0x488] sm:$0xff]
          %v442 = vld [vmem:[%s0 + $0x490] sm:$0xff]
          %v443 = vld [vmem:[%s0 + $0x498] sm:$0xff]
          %v444 = vld [vmem:[%s0 + $0x4a0] sm:$0xff]
          %v445 = vld [vmem:[%s0 + $0x4a8] sm:$0xff]
          %v446 = vld [vmem:[%s0 + $0x4b0] sm:$0xff]
          %v447 = vld [vmem:[%s0 + $0x4b8] sm:$0xff]
          %v448 = vld [vmem:[%s0 + $0x4c0] sm:$0xff]
          %v449 = vld [vmem:[%s0 + $0x4c8] sm:$0xff]
          %v450 = vld [vmem:[%s0 + $0x4d0] sm:$0xff]
          %v451 = vld [vmem:[%s0 + $0x4d8] sm:$0xff]
          %v452 = vld [vmem:[%s0 + $0x4e0] sm:$0xff]
          %v453 = vld [vmem:[%s0 + $0x4e8] sm:$0xff]
          %v454 = vld [vmem:[%s0 + $0x4f0] sm:$0xff]
          %v455 = vld [vmem:[%s0 + $0x4f8] sm:$0xff]
          %v456 = vld [vmem:[%s0 + $0x500] sm:$0xff]
          %v457 = vld [vmem:[%s0 + $0x508] sm:$0xff]
          %v458 = vld [vmem:[%s0 + $0x510] sm:$0xff]
          %v459 = vld [vmem:[%s0 + $0x518] sm:$0xff]
          %v460 = vld [vmem:[%s0 + $0x520] sm:$0xff]
          %v461 = vld [vmem:[%s0 + $0x528] sm:$0xff]
          %v462 = vld [vmem:[%s0 + $0x530] sm:$0xff]
          %v463 = vld [vmem:[%s0 + $0x538] sm:$0xff]
          %v464 = vld [vmem:[%s0 + $0x540] sm:$0xff]
          %v465 = vld [vmem:[%s0 + $0x548] sm:$0xff]
          %v466 = vld [vmem:[%s0 + $0x550] sm:$0xff]
          %v467 = vld [vmem:[%s0 + $0x558] sm:$0xff]
          %v468 = vld [vmem:[%s0 + $0x560] sm:$0xff]
          %v469 = vld [vmem:[%s0 + $0x568] sm:$0xff]
          %v470 = vld [vmem:[%s0 + $0x570] sm:$0xff]
          %v471 = vld [vmem:[%s0 + $0x578] sm:$0xff]
          %v472 = vld [vmem:[%s0 + $0x580] sm:$0xff]
          %v473 = vld [vmem:[%s0 + $0x588] sm:$0xff]
          %v474 = vld [vmem:[%s0 + $0x590] sm:$0xff]
          %v475 = vld [vmem:[%s0 + $0x598] sm:$0xff]
          %v476 = vld [vmem:[%s0 + $0x5a0] sm:$0xff]
          %v477 = vld [vmem:[%s0 + $0x5a8] sm:$0xff]
          %v478 = vld [vmem:[%s0 + $0x5b0] sm:$0xff]
          %v479 = vld [vmem:[%s0 + $0x5b8] sm:$0xff]
          %v480 = vld [vmem:[%s0 + $0x5c0] sm:$0xff]
          %v481 = vld [vmem:[%s0 + $0x5c8] sm:$0xff]
          %v482 = vld [vmem:[%s0 + $0x5d0] sm:$0xff]
          %v483 = vld [vmem:[%s0 + $0x5d8] sm:$0xff]
          %v484 = vld [vmem:[%s0 + $0x5e0] sm:$0xff]
          %v485 = vld [vmem:[%s0 + $0x5e8] sm:$0xff]
          %v486 = vld [vmem:[%s0 + $0x5f0] sm:$0xff]
          %v487 = vld [vmem:[%s0 + $0x5f8] sm:$0xff]
          %489 = vset.pattern.permute.xlu0 0
          %490 = vperm.xlu0 %489, %v294
          %v491 = vpop.permute.xlu0 %490
          %494 = vset.pattern.permute.xlu0 0
          %495 = vperm.xlu0 %494, %v295
          %v496 = vpop.permute.xlu0 %495
          %v504 = vunpack.c.l.b16 %v288
          %v505 = vunpack.c.h.b16 %v288
          %v506 = vunpack.c.l.b16 %v289
          %v507 = vunpack.c.h.b16 %v289
          %v508 = vunpack.c.l.b16 %v290
          %v509 = vunpack.c.h.b16 %v290
          %v510 = vunpack.c.l.b16 %v291
          %v511 = vunpack.c.h.b16 %v291
          %v512 = vunpack.c.l.b16 %v292
          %v513 = vunpack.c.h.b16 %v292
          %v514 = vunpack.c.l.b16 %v293
          %v515 = vunpack.c.h.b16 %v293
          %v516 = vpack.c.b16 %v510, %v504
          %v517 = vpack.c.b16 %v511, %v505
          %v518 = vpack.c.b16 %v512, %v506
          %v519 = vpack.c.b16 %v513, %v507
          %v520 = vpack.c.b16 %v514, %v508
          %v521 = vpack.c.b16 %v515, %v509
          %v720 = vunpack.c.l.b16 %v296
          %v721 = vunpack.c.h.b16 %v296
          %v722 = vunpack.c.l.b16 %v297
          %v723 = vunpack.c.h.b16 %v297
          %v724 = vunpack.c.l.b16 %v298
          %v725 = vunpack.c.h.b16 %v298
          %v726 = vunpack.c.l.b16 %v299
          %v727 = vunpack.c.h.b16 %v299
          %v728 = vunpack.c.l.b16 %v300
          %v729 = vunpack.c.h.b16 %v300
          %v730 = vunpack.c.l.b16 %v301
          %v731 = vunpack.c.h.b16 %v301
          %v732 = vunpack.c.l.b16 %v302
          %v733 = vunpack.c.h.b16 %v302
          %v734 = vunpack.c.l.b16 %v303
          %v735 = vunpack.c.h.b16 %v303
          %v736 = vunpack.c.l.b16 %v304
          %v737 = vunpack.c.h.b16 %v304
          %v738 = vunpack.c.l.b16 %v305
          %v739 = vunpack.c.h.b16 %v305
          %v740 = vunpack.c.l.b16 %v306
          %v741 = vunpack.c.h.b16 %v306
          %v742 = vunpack.c.l.b16 %v307
          %v743 = vunpack.c.h.b16 %v307
          %v744 = vunpack.c.l.b16 %v308
          %v745 = vunpack.c.h.b16 %v308
          %v746 = vunpack.c.l.b16 %v309
          %v747 = vunpack.c.h.b16 %v309
          %v748 = vunpack.c.l.b16 %v310
          %v749 = vunpack.c.h.b16 %v310
          %v750 = vunpack.c.l.b16 %v311
          %v751 = vunpack.c.h.b16 %v311
          %v752 = vunpack.c.l.b16 %v312
          %v753 = vunpack.c.h.b16 %v312
          %v754 = vunpack.c.l.b16 %v313
          %v755 = vunpack.c.h.b16 %v313
          %v756 = vunpack.c.l.b16 %v314
          %v757 = vunpack.c.h.b16 %v314
          %v758 = vunpack.c.l.b16 %v315
          %v759 = vunpack.c.h.b16 %v315
          %v760 = vunpack.c.l.b16 %v316
          %v761 = vunpack.c.h.b16 %v316
          %v762 = vunpack.c.l.b16 %v317
          %v763 = vunpack.c.h.b16 %v317
          %v764 = vunpack.c.l.b16 %v318
          %v765 = vunpack.c.h.b16 %v318
          %v766 = vunpack.c.l.b16 %v319
          %v767 = vunpack.c.h.b16 %v319
          %v768 = vunpack.c.l.b16 %v320
          %v769 = vunpack.c.h.b16 %v320
          %v770 = vunpack.c.l.b16 %v321
          %v771 = vunpack.c.h.b16 %v321
          %v772 = vunpack.c.l.b16 %v322
          %v773 = vunpack.c.h.b16 %v322
          %v774 = vunpack.c.l.b16 %v323
          %v775 = vunpack.c.h.b16 %v323
          %v776 = vunpack.c.l.b16 %v324
          %v777 = vunpack.c.h.b16 %v324
          %v778 = vunpack.c.l.b16 %v325
          %v779 = vunpack.c.h.b16 %v325
          %v780 = vunpack.c.l.b16 %v326
          %v781 = vunpack.c.h.b16 %v326
          %v782 = vunpack.c.l.b16 %v327
          %v783 = vunpack.c.h.b16 %v327
          %v784 = vunpack.c.l.b16 %v328
          %v785 = vunpack.c.h.b16 %v328
          %v786 = vunpack.c.l.b16 %v329
          %v787 = vunpack.c.h.b16 %v329
          %v788 = vunpack.c.l.b16 %v330
          %v789 = vunpack.c.h.b16 %v330
          %v790 = vunpack.c.l.b16 %v331
          %v791 = vunpack.c.h.b16 %v331
          %v792 = vunpack.c.l.b16 %v332
          %v793 = vunpack.c.h.b16 %v332
          %v794 = vunpack.c.l.b16 %v333
          %v795 = vunpack.c.h.b16 %v333
          %v796 = vunpack.c.l.b16 %v334
          %v797 = vunpack.c.h.b16 %v334
          %v798 = vunpack.c.l.b16 %v335
          %v799 = vunpack.c.h.b16 %v335
          %v800 = vunpack.c.l.b16 %v336
          %v801 = vunpack.c.h.b16 %v336
          %v802 = vunpack.c.l.b16 %v337
          %v803 = vunpack.c.h.b16 %v337
          %v804 = vunpack.c.l.b16 %v338
          %v805 = vunpack.c.h.b16 %v338
          %v806 = vunpack.c.l.b16 %v339
          %v807 = vunpack.c.h.b16 %v339
          %v808 = vunpack.c.l.b16 %v340
          %v809 = vunpack.c.h.b16 %v340
          %v810 = vunpack.c.l.b16 %v341
          %v811 = vunpack.c.h.b16 %v341
          %v812 = vunpack.c.l.b16 %v342
          %v813 = vunpack.c.h.b16 %v342
          %v814 = vunpack.c.l.b16 %v343
          %v815 = vunpack.c.h.b16 %v343
          %v816 = vunpack.c.l.b16 %v344
          %v817 = vunpack.c.h.b16 %v344
          %v818 = vunpack.c.l.b16 %v345
          %v819 = vunpack.c.h.b16 %v345
          %v820 = vunpack.c.l.b16 %v346
          %v821 = vunpack.c.h.b16 %v346
          %v822 = vunpack.c.l.b16 %v347
          %v823 = vunpack.c.h.b16 %v347
          %v824 = vunpack.c.l.b16 %v348
          %v825 = vunpack.c.h.b16 %v348
          %v826 = vunpack.c.l.b16 %v349
          %v827 = vunpack.c.h.b16 %v349
          %v828 = vunpack.c.l.b16 %v350
          %v829 = vunpack.c.h.b16 %v350
          %v830 = vunpack.c.l.b16 %v351
          %v831 = vunpack.c.h.b16 %v351
          %v832 = vunpack.c.l.b16 %v352
          %v833 = vunpack.c.h.b16 %v352
          %v834 = vunpack.c.l.b16 %v353
          %v835 = vunpack.c.h.b16 %v353
          %v836 = vunpack.c.l.b16 %v354
          %v837 = vunpack.c.h.b16 %v354
          %v838 = vunpack.c.l.b16 %v355
          %v839 = vunpack.c.h.b16 %v355
          %v840 = vunpack.c.l.b16 %v356
          %v841 = vunpack.c.h.b16 %v356
          %v842 = vunpack.c.l.b16 %v357
          %v843 = vunpack.c.h.b16 %v357
          %v844 = vunpack.c.l.b16 %v358
          %v845 = vunpack.c.h.b16 %v358
          %v846 = vunpack.c.l.b16 %v359
          %v847 = vunpack.c.h.b16 %v359
          %v848 = vunpack.c.l.b16 %v360
          %v849 = vunpack.c.h.b16 %v360
          %v850 = vunpack.c.l.b16 %v361
          %v851 = vunpack.c.h.b16 %v361
          %v852 = vunpack.c.l.b16 %v362
          %v853 = vunpack.c.h.b16 %v362
          %v854 = vunpack.c.l.b16 %v363
          %v855 = vunpack.c.h.b16 %v363
          %v856 = vunpack.c.l.b16 %v364
          %v857 = vunpack.c.h.b16 %v364
          %v858 = vunpack.c.l.b16 %v365
          %v859 = vunpack.c.h.b16 %v365
          %v860 = vunpack.c.l.b16 %v366
          %v861 = vunpack.c.h.b16 %v366
          %v862 = vunpack.c.l.b16 %v367
          %v863 = vunpack.c.h.b16 %v367
          %v864 = vunpack.c.l.b16 %v368
          %v865 = vunpack.c.h.b16 %v368
          %v866 = vunpack.c.l.b16 %v369
          %v867 = vunpack.c.h.b16 %v369
          %v868 = vunpack.c.l.b16 %v370
          %v869 = vunpack.c.h.b16 %v370
          %v870 = vunpack.c.l.b16 %v371
          %v871 = vunpack.c.h.b16 %v371
          %v872 = vunpack.c.l.b16 %v372
          %v873 = vunpack.c.h.b16 %v372
          %v874 = vunpack.c.l.b16 %v373
          %v875 = vunpack.c.h.b16 %v373
          %v876 = vunpack.c.l.b16 %v374
          %v877 = vunpack.c.h.b16 %v374
          %v878 = vunpack.c.l.b16 %v375
          %v879 = vunpack.c.h.b16 %v375
          %v880 = vunpack.c.l.b16 %v376
          %v881 = vunpack.c.h.b16 %v376
          %v882 = vunpack.c.l.b16 %v377
          %v883 = vunpack.c.h.b16 %v377
          %v884 = vunpack.c.l.b16 %v378
          %v885 = vunpack.c.h.b16 %v378
          %v886 = vunpack.c.l.b16 %v379
          %v887 = vunpack.c.h.b16 %v379
          %v888 = vunpack.c.l.b16 %v380
          %v889 = vunpack.c.h.b16 %v380
          %v890 = vunpack.c.l.b16 %v381
          %v891 = vunpack.c.h.b16 %v381
          %v892 = vunpack.c.l.b16 %v382
          %v893 = vunpack.c.h.b16 %v382
          %v894 = vunpack.c.l.b16 %v383
          %v895 = vunpack.c.h.b16 %v383
          %v896 = vunpack.c.l.b16 %v384
          %v897 = vunpack.c.h.b16 %v384
          %v898 = vunpack.c.l.b16 %v385
          %v899 = vunpack.c.h.b16 %v385
          %v900 = vunpack.c.l.b16 %v386
          %v901 = vunpack.c.h.b16 %v386
          %v902 = vunpack.c.l.b16 %v387
          %v903 = vunpack.c.h.b16 %v387
          %v904 = vunpack.c.l.b16 %v388
          %v905 = vunpack.c.h.b16 %v388
          %v906 = vunpack.c.l.b16 %v389
          %v907 = vunpack.c.h.b16 %v389
          %v908 = vunpack.c.l.b16 %v390
          %v909 = vunpack.c.h.b16 %v390
          %v910 = vunpack.c.l.b16 %v391
          %v911 = vunpack.c.h.b16 %v391
          %v912 = vunpack.c.l.b16 %v392
          %v913 = vunpack.c.h.b16 %v392
          %v914 = vunpack.c.l.b16 %v393
          %v915 = vunpack.c.h.b16 %v393
          %v916 = vunpack.c.l.b16 %v394
          %v917 = vunpack.c.h.b16 %v394
          %v918 = vunpack.c.l.b16 %v395
          %v919 = vunpack.c.h.b16 %v395
          %v920 = vunpack.c.l.b16 %v396
          %v921 = vunpack.c.h.b16 %v396
          %v922 = vunpack.c.l.b16 %v397
          %v923 = vunpack.c.h.b16 %v397
          %v924 = vunpack.c.l.b16 %v398
          %v925 = vunpack.c.h.b16 %v398
          %v926 = vunpack.c.l.b16 %v399
          %v927 = vunpack.c.h.b16 %v399
          %v928 = vunpack.c.l.b16 %v400
          %v929 = vunpack.c.h.b16 %v400
          %v930 = vunpack.c.l.b16 %v401
          %v931 = vunpack.c.h.b16 %v401
          %v932 = vunpack.c.l.b16 %v402
          %v933 = vunpack.c.h.b16 %v402
          %v934 = vunpack.c.l.b16 %v403
          %v935 = vunpack.c.h.b16 %v403
          %v936 = vunpack.c.l.b16 %v404
          %v937 = vunpack.c.h.b16 %v404
          %v938 = vunpack.c.l.b16 %v405
          %v939 = vunpack.c.h.b16 %v405
          %v940 = vunpack.c.l.b16 %v406
          %v941 = vunpack.c.h.b16 %v406
          %v942 = vunpack.c.l.b16 %v407
          %v943 = vunpack.c.h.b16 %v407
          %v944 = vunpack.c.l.b16 %v408
          %v945 = vunpack.c.h.b16 %v408
          %v946 = vunpack.c.l.b16 %v409
          %v947 = vunpack.c.h.b16 %v409
          %v948 = vunpack.c.l.b16 %v410
          %v949 = vunpack.c.h.b16 %v410
          %v950 = vunpack.c.l.b16 %v411
          %v951 = vunpack.c.h.b16 %v411
          %v952 = vunpack.c.l.b16 %v412
          %v953 = vunpack.c.h.b16 %v412
          %v954 = vunpack.c.l.b16 %v413
          %v955 = vunpack.c.h.b16 %v413
          %v956 = vunpack.c.l.b16 %v414
          %v957 = vunpack.c.h.b16 %v414
          %v958 = vunpack.c.l.b16 %v415
          %v959 = vunpack.c.h.b16 %v415
          %v960 = vunpack.c.l.b16 %v416
          %v961 = vunpack.c.h.b16 %v416
          %v962 = vunpack.c.l.b16 %v417
          %v963 = vunpack.c.h.b16 %v417
          %v964 = vunpack.c.l.b16 %v418
          %v965 = vunpack.c.h.b16 %v418
          %v966 = vunpack.c.l.b16 %v419
          %v967 = vunpack.c.h.b16 %v419
          %v968 = vunpack.c.l.b16 %v420
          %v969 = vunpack.c.h.b16 %v420
          %v970 = vunpack.c.l.b16 %v421
          %v971 = vunpack.c.h.b16 %v421
          %v972 = vunpack.c.l.b16 %v422
          %v973 = vunpack.c.h.b16 %v422
          %v974 = vunpack.c.l.b16 %v423
          %v975 = vunpack.c.h.b16 %v423
          %v976 = vunpack.c.l.b16 %v424
          %v977 = vunpack.c.h.b16 %v424
          %v978 = vunpack.c.l.b16 %v425
          %v979 = vunpack.c.h.b16 %v425
          %v980 = vunpack.c.l.b16 %v426
          %v981 = vunpack.c.h.b16 %v426
          %v982 = vunpack.c.l.b16 %v427
          %v983 = vunpack.c.h.b16 %v427
          %v984 = vunpack.c.l.b16 %v428
          %v985 = vunpack.c.h.b16 %v428
          %v986 = vunpack.c.l.b16 %v429
          %v987 = vunpack.c.h.b16 %v429
          %v988 = vunpack.c.l.b16 %v430
          %v989 = vunpack.c.h.b16 %v430
          %v990 = vunpack.c.l.b16 %v431
          %v991 = vunpack.c.h.b16 %v431
          %v992 = vunpack.c.l.b16 %v432
          %v993 = vunpack.c.h.b16 %v432
          %v994 = vunpack.c.l.b16 %v433
          %v995 = vunpack.c.h.b16 %v433
          %v996 = vunpack.c.l.b16 %v434
          %v997 = vunpack.c.h.b16 %v434
          %v998 = vunpack.c.l.b16 %v435
          %v999 = vunpack.c.h.b16 %v435
          %v1000 = vunpack.c.l.b16 %v436
          %v1001 = vunpack.c.h.b16 %v436
          %v1002 = vunpack.c.l.b16 %v437
          %v1003 = vunpack.c.h.b16 %v437
          %v1004 = vunpack.c.l.b16 %v438
          %v1005 = vunpack.c.h.b16 %v438
          %v1006 = vunpack.c.l.b16 %v439
          %v1007 = vunpack.c.h.b16 %v439
          %v1008 = vunpack.c.l.b16 %v440
          %v1009 = vunpack.c.h.b16 %v440
          %v1010 = vunpack.c.l.b16 %v441
          %v1011 = vunpack.c.h.b16 %v441
          %v1012 = vunpack.c.l.b16 %v442
          %v1013 = vunpack.c.h.b16 %v442
          %v1014 = vunpack.c.l.b16 %v443
          %v1015 = vunpack.c.h.b16 %v443
          %v1016 = vunpack.c.l.b16 %v444
          %v1017 = vunpack.c.h.b16 %v444
          %v1018 = vunpack.c.l.b16 %v445
          %v1019 = vunpack.c.h.b16 %v445
          %v1020 = vunpack.c.l.b16 %v446
          %v1021 = vunpack.c.h.b16 %v446
          %v1022 = vunpack.c.l.b16 %v447
          %v1023 = vunpack.c.h.b16 %v447
          %v1024 = vunpack.c.l.b16 %v448
          %v1025 = vunpack.c.h.b16 %v448
          %v1026 = vunpack.c.l.b16 %v449
          %v1027 = vunpack.c.h.b16 %v449
          %v1028 = vunpack.c.l.b16 %v450
          %v1029 = vunpack.c.h.b16 %v450
          %v1030 = vunpack.c.l.b16 %v451
          %v1031 = vunpack.c.h.b16 %v451
          %v1032 = vunpack.c.l.b16 %v452
          %v1033 = vunpack.c.h.b16 %v452
          %v1034 = vunpack.c.l.b16 %v453
          %v1035 = vunpack.c.h.b16 %v453
          %v1036 = vunpack.c.l.b16 %v454
          %v1037 = vunpack.c.h.b16 %v454
          %v1038 = vunpack.c.l.b16 %v455
          %v1039 = vunpack.c.h.b16 %v455
          %v1040 = vunpack.c.l.b16 %v456
          %v1041 = vunpack.c.h.b16 %v456
          %v1042 = vunpack.c.l.b16 %v457
          %v1043 = vunpack.c.h.b16 %v457
          %v1044 = vunpack.c.l.b16 %v458
          %v1045 = vunpack.c.h.b16 %v458
          %v1046 = vunpack.c.l.b16 %v459
          %v1047 = vunpack.c.h.b16 %v459
          %v1048 = vunpack.c.l.b16 %v460
          %v1049 = vunpack.c.h.b16 %v460
          %v1050 = vunpack.c.l.b16 %v461
          %v1051 = vunpack.c.h.b16 %v461
          %v1052 = vunpack.c.l.b16 %v462
          %v1053 = vunpack.c.h.b16 %v462
          %v1054 = vunpack.c.l.b16 %v463
          %v1055 = vunpack.c.h.b16 %v463
          %v1056 = vunpack.c.l.b16 %v464
          %v1057 = vunpack.c.h.b16 %v464
          %v1058 = vunpack.c.l.b16 %v465
          %v1059 = vunpack.c.h.b16 %v465
          %v1060 = vunpack.c.l.b16 %v466
          %v1061 = vunpack.c.h.b16 %v466
          %v1062 = vunpack.c.l.b16 %v467
          %v1063 = vunpack.c.h.b16 %v467
          %v1064 = vunpack.c.l.b16 %v468
          %v1065 = vunpack.c.h.b16 %v468
          %v1066 = vunpack.c.l.b16 %v469
          %v1067 = vunpack.c.h.b16 %v469
          %v1068 = vunpack.c.l.b16 %v470
          %v1069 = vunpack.c.h.b16 %v470
          %v1070 = vunpack.c.l.b16 %v471
          %v1071 = vunpack.c.h.b16 %v471
          %v1072 = vunpack.c.l.b16 %v472
          %v1073 = vunpack.c.h.b16 %v472
          %v1074 = vunpack.c.l.b16 %v473
          %v1075 = vunpack.c.h.b16 %v473
          %v1076 = vunpack.c.l.b16 %v474
          %v1077 = vunpack.c.h.b16 %v474
          %v1078 = vunpack.c.l.b16 %v475
          %v1079 = vunpack.c.h.b16 %v475
          %v1080 = vunpack.c.l.b16 %v476
          %v1081 = vunpack.c.h.b16 %v476
          %v1082 = vunpack.c.l.b16 %v477
          %v1083 = vunpack.c.h.b16 %v477
          %v1084 = vunpack.c.l.b16 %v478
          %v1085 = vunpack.c.h.b16 %v478
          %v1086 = vunpack.c.l.b16 %v479
          %v1087 = vunpack.c.h.b16 %v479
          %v1088 = vunpack.c.l.b16 %v480
          %v1089 = vunpack.c.h.b16 %v480
          %v1090 = vunpack.c.l.b16 %v481
          %v1091 = vunpack.c.h.b16 %v481
          %v1092 = vunpack.c.l.b16 %v482
          %v1093 = vunpack.c.h.b16 %v482
          %v1094 = vunpack.c.l.b16 %v483
          %v1095 = vunpack.c.h.b16 %v483
          %v1096 = vunpack.c.l.b16 %v484
          %v1097 = vunpack.c.h.b16 %v484
          %v1098 = vunpack.c.l.b16 %v485
          %v1099 = vunpack.c.h.b16 %v485
          %v1100 = vunpack.c.l.b16 %v486
          %v1101 = vunpack.c.h.b16 %v486
          %v1102 = vunpack.c.l.b16 %v487
          %v1103 = vunpack.c.h.b16 %v487
          %v1104 = vpack.c.b16 %v726, %v720
          %v1105 = vpack.c.b16 %v727, %v721
          %v1106 = vpack.c.b16 %v728, %v722
          %v1107 = vpack.c.b16 %v729, %v723
          %v1108 = vpack.c.b16 %v730, %v724
          %v1109 = vpack.c.b16 %v731, %v725
          %v1110 = vpack.c.b16 %v738, %v732
          %v1111 = vpack.c.b16 %v739, %v733
          %v1112 = vpack.c.b16 %v740, %v734
          %v1113 = vpack.c.b16 %v741, %v735
          %v1114 = vpack.c.b16 %v742, %v736
          %v1115 = vpack.c.b16 %v743, %v737
          %v1116 = vpack.c.b16 %v750, %v744
          %v1117 = vpack.c.b16 %v751, %v745
          %v1118 = vpack.c.b16 %v752, %v746
          %v1119 = vpack.c.b16 %v753, %v747
          %v1120 = vpack.c.b16 %v754, %v748
          %v1121 = vpack.c.b16 %v755, %v749
          %v1122 = vpack.c.b16 %v762, %v756
          %v1123 = vpack.c.b16 %v763, %v757
          %v1124 = vpack.c.b16 %v764, %v758
          %v1125 = vpack.c.b16 %v765, %v759
          %v1126 = vpack.c.b16 %v766, %v760
          %v1127 = vpack.c.b16 %v767, %v761
          %v1128 = vpack.c.b16 %v774, %v768
          %v1129 = vpack.c.b16 %v775, %v769
          %v1130 = vpack.c.b16 %v776, %v770
          %v1131 = vpack.c.b16 %v777, %v771
          %v1132 = vpack.c.b16 %v778, %v772
          %v1133 = vpack.c.b16 %v779, %v773
          %v1134 = vpack.c.b16 %v786, %v780
          %v1135 = vpack.c.b16 %v787, %v781
          %v1136 = vpack.c.b16 %v788, %v782
          %v1137 = vpack.c.b16 %v789, %v783
          %v1138 = vpack.c.b16 %v790, %v784
          %v1139 = vpack.c.b16 %v791, %v785
          %v1140 = vpack.c.b16 %v798, %v792
          %v1141 = vpack.c.b16 %v799, %v793
          %v1142 = vpack.c.b16 %v800, %v794
          %v1143 = vpack.c.b16 %v801, %v795
          %v1144 = vpack.c.b16 %v802, %v796
          %v1145 = vpack.c.b16 %v803, %v797
          %v1146 = vpack.c.b16 %v810, %v804
          %v1147 = vpack.c.b16 %v811, %v805
          %v1148 = vpack.c.b16 %v812, %v806
          %v1149 = vpack.c.b16 %v813, %v807
          %v1150 = vpack.c.b16 %v814, %v808
          %v1151 = vpack.c.b16 %v815, %v809
          %v1152 = vpack.c.b16 %v822, %v816
          %v1153 = vpack.c.b16 %v823, %v817
          %v1154 = vpack.c.b16 %v824, %v818
          %v1155 = vpack.c.b16 %v825, %v819
          %v1156 = vpack.c.b16 %v826, %v820
          %v1157 = vpack.c.b16 %v827, %v821
          %v1158 = vpack.c.b16 %v834, %v828
          %v1159 = vpack.c.b16 %v835, %v829
          %v1160 = vpack.c.b16 %v836, %v830
          %v1161 = vpack.c.b16 %v837, %v831
          %v1162 = vpack.c.b16 %v838, %v832
          %v1163 = vpack.c.b16 %v839, %v833
          %v1164 = vpack.c.b16 %v846, %v840
          %v1165 = vpack.c.b16 %v847, %v841
          %v1166 = vpack.c.b16 %v848, %v842
          %v1167 = vpack.c.b16 %v849, %v843
          %v1168 = vpack.c.b16 %v850, %v844
          %v1169 = vpack.c.b16 %v851, %v845
          %v1170 = vpack.c.b16 %v858, %v852
          %v1171 = vpack.c.b16 %v859, %v853
          %v1172 = vpack.c.b16 %v860, %v854
          %v1173 = vpack.c.b16 %v861, %v855
          %v1174 = vpack.c.b16 %v862, %v856
          %v1175 = vpack.c.b16 %v863, %v857
          %v1176 = vpack.c.b16 %v870, %v864
          %v1177 = vpack.c.b16 %v871, %v865
          %v1178 = vpack.c.b16 %v872, %v866
          %v1179 = vpack.c.b16 %v873, %v867
          %v1180 = vpack.c.b16 %v874, %v868
          %v1181 = vpack.c.b16 %v875, %v869
          %v1182 = vpack.c.b16 %v882, %v876
          %v1183 = vpack.c.b16 %v883, %v877
          %v1184 = vpack.c.b16 %v884, %v878
          %v1185 = vpack.c.b16 %v885, %v879
          %v1186 = vpack.c.b16 %v886, %v880
          %v1187 = vpack.c.b16 %v887, %v881
          %v1188 = vpack.c.b16 %v894, %v888
          %v1189 = vpack.c.b16 %v895, %v889
          %v1190 = vpack.c.b16 %v896, %v890
          %v1191 = vpack.c.b16 %v897, %v891
          %v1192 = vpack.c.b16 %v898, %v892
          %v1193 = vpack.c.b16 %v899, %v893
          %v1194 = vpack.c.b16 %v906, %v900
          %v1195 = vpack.c.b16 %v907, %v901
          %v1196 = vpack.c.b16 %v908, %v902
          %v1197 = vpack.c.b16 %v909, %v903
          %v1198 = vpack.c.b16 %v910, %v904
          %v1199 = vpack.c.b16 %v911, %v905
          %v1200 = vpack.c.b16 %v918, %v912
          %v1201 = vpack.c.b16 %v919, %v913
          %v1202 = vpack.c.b16 %v920, %v914
          %v1203 = vpack.c.b16 %v921, %v915
          %v1204 = vpack.c.b16 %v922, %v916
          %v1205 = vpack.c.b16 %v923, %v917
          %v1206 = vpack.c.b16 %v930, %v924
          %v1207 = vpack.c.b16 %v931, %v925
          %v1208 = vpack.c.b16 %v932, %v926
          %v1209 = vpack.c.b16 %v933, %v927
          %v1210 = vpack.c.b16 %v934, %v928
          %v1211 = vpack.c.b16 %v935, %v929
          %v1212 = vpack.c.b16 %v942, %v936
          %v1213 = vpack.c.b16 %v943, %v937
          %v1214 = vpack.c.b16 %v944, %v938
          %v1215 = vpack.c.b16 %v945, %v939
          %v1216 = vpack.c.b16 %v946, %v940
          %v1217 = vpack.c.b16 %v947, %v941
          %v1218 = vpack.c.b16 %v954, %v948
          %v1219 = vpack.c.b16 %v955, %v949
          %v1220 = vpack.c.b16 %v956, %v950
          %v1221 = vpack.c.b16 %v957, %v951
          %v1222 = vpack.c.b16 %v958, %v952
          %v1223 = vpack.c.b16 %v959, %v953
          %v1224 = vpack.c.b16 %v966, %v960
          %v1225 = vpack.c.b16 %v967, %v961
          %v1226 = vpack.c.b16 %v968, %v962
          %v1227 = vpack.c.b16 %v969, %v963
          %v1228 = vpack.c.b16 %v970, %v964
          %v1229 = vpack.c.b16 %v971, %v965
          %v1230 = vpack.c.b16 %v978, %v972
          %v1231 = vpack.c.b16 %v979, %v973
          %v1232 = vpack.c.b16 %v980, %v974
          %v1233 = vpack.c.b16 %v981, %v975
          %v1234 = vpack.c.b16 %v982, %v976
          %v1235 = vpack.c.b16 %v983, %v977
          %v1236 = vpack.c.b16 %v990, %v984
          %v1237 = vpack.c.b16 %v991, %v985
          %v1238 = vpack.c.b16 %v992, %v986
          %v1239 = vpack.c.b16 %v993, %v987
          %v1240 = vpack.c.b16 %v994, %v988
          %v1241 = vpack.c.b16 %v995, %v989
          %v1242 = vpack.c.b16 %v1002, %v996
          %v1243 = vpack.c.b16 %v1003, %v997
          %v1244 = vpack.c.b16 %v1004, %v998
          %v1245 = vpack.c.b16 %v1005, %v999
          %v1246 = vpack.c.b16 %v1006, %v1000
          %v1247 = vpack.c.b16 %v1007, %v1001
          %v1248 = vpack.c.b16 %v1014, %v1008
          %v1249 = vpack.c.b16 %v1015, %v1009
          %v1250 = vpack.c.b16 %v1016, %v1010
          %v1251 = vpack.c.b16 %v1017, %v1011
          %v1252 = vpack.c.b16 %v1018, %v1012
          %v1253 = vpack.c.b16 %v1019, %v1013
          %v1254 = vpack.c.b16 %v1026, %v1020
          %v1255 = vpack.c.b16 %v1027, %v1021
          %v1256 = vpack.c.b16 %v1028, %v1022
          %v1257 = vpack.c.b16 %v1029, %v1023
          %v1258 = vpack.c.b16 %v1030, %v1024
          %v1259 = vpack.c.b16 %v1031, %v1025
          %v1260 = vpack.c.b16 %v1038, %v1032
          %v1261 = vpack.c.b16 %v1039, %v1033
          %v1262 = vpack.c.b16 %v1040, %v1034
          %v1263 = vpack.c.b16 %v1041, %v1035
          %v1264 = vpack.c.b16 %v1042, %v1036
          %v1265 = vpack.c.b16 %v1043, %v1037
          %v1266 = vpack.c.b16 %v1050, %v1044
          %v1267 = vpack.c.b16 %v1051, %v1045
          %v1268 = vpack.c.b16 %v1052, %v1046
          %v1269 = vpack.c.b16 %v1053, %v1047
          %v1270 = vpack.c.b16 %v1054, %v1048
          %v1271 = vpack.c.b16 %v1055, %v1049
          %v1272 = vpack.c.b16 %v1062, %v1056
          %v1273 = vpack.c.b16 %v1063, %v1057
          %v1274 = vpack.c.b16 %v1064, %v1058
          %v1275 = vpack.c.b16 %v1065, %v1059
          %v1276 = vpack.c.b16 %v1066, %v1060
          %v1277 = vpack.c.b16 %v1067, %v1061
          %v1278 = vpack.c.b16 %v1074, %v1068
          %v1279 = vpack.c.b16 %v1075, %v1069
          %v1280 = vpack.c.b16 %v1076, %v1070
          %v1281 = vpack.c.b16 %v1077, %v1071
          %v1282 = vpack.c.b16 %v1078, %v1072
          %v1283 = vpack.c.b16 %v1079, %v1073
          %v1284 = vpack.c.b16 %v1086, %v1080
          %v1285 = vpack.c.b16 %v1087, %v1081
          %v1286 = vpack.c.b16 %v1088, %v1082
          %v1287 = vpack.c.b16 %v1089, %v1083
          %v1288 = vpack.c.b16 %v1090, %v1084
          %v1289 = vpack.c.b16 %v1091, %v1085
          %v1290 = vpack.c.b16 %v1098, %v1092
          %v1291 = vpack.c.b16 %v1099, %v1093
          %v1292 = vpack.c.b16 %v1100, %v1094
          %v1293 = vpack.c.b16 %v1101, %v1095
          %v1294 = vpack.c.b16 %v1102, %v1096
          %v1295 = vpack.c.b16 %v1103, %v1097
          %1488 = vmatprep.subr.bf16.mxu0 %v1147
          %1489 = vmatpush1.bf16.xpose.msra.mxu0 %v1146
          %1490 = vmatprep.subr.bf16.mxu0 %v1141
          %1491 = vmatpush1.bf16.xpose.msra.mxu0 %v1140
          %1492 = vmatprep.subr.bf16.mxu0 %v1135
          %1493 = vmatpush1.bf16.xpose.msra.mxu0 %v1134
          %1494 = vmatprep.subr.bf16.mxu0 %v1129
          %1495 = vmatpush1.bf16.xpose.msra.mxu0 %v1128
          %1496 = vmatprep.subr.bf16.mxu0 %v1123
          %1497 = vmatpush1.bf16.xpose.msra.mxu0 %v1122
          %1498 = vmatprep.subr.bf16.mxu0 %v1117
          %1499 = vmatpush1.bf16.xpose.msra.mxu0 %v1116
          %1500 = vmatprep.subr.bf16.mxu0 %v1111
          %1501 = vmatpush1.bf16.xpose.msra.mxu0 %v1110
          %1502 = vmatprep.subr.bf16.mxu0 %v1105
          %1503 = vmatpush1.bf16.xpose.msra.mxu0 %v1104
          %1504 = vmatprep.subr.bf16.mxu0 %v1195
          %1505 = vmatpush2.bf16.xpose.msra.mxu0 %v1194
          %1506 = vmatprep.subr.bf16.mxu0 %v1189
          %1507 = vmatpush2.bf16.xpose.msra.mxu0 %v1188
          %1508 = vmatprep.subr.bf16.mxu0 %v1183
          %1509 = vmatpush2.bf16.xpose.msra.mxu0 %v1182
          %1510 = vmatprep.subr.bf16.mxu0 %v1177
          %1511 = vmatpush2.bf16.xpose.msra.mxu0 %v1176
          %1512 = vmatprep.subr.bf16.mxu0 %v1171
          %1513 = vmatpush2.bf16.xpose.msra.mxu0 %v1170
          %1514 = vmatprep.subr.bf16.mxu0 %v1165
          %1515 = vmatpush2.bf16.xpose.msra.mxu0 %v1164
          %1516 = vmatprep.subr.bf16.mxu0 %v1159
          %1517 = vmatpush2.bf16.xpose.msra.mxu0 %v1158
          %1518 = vmatprep.subr.bf16.mxu0 %v1153
          %1519 = vmatpush2.bf16.xpose.msra.mxu0 %v1152
          %1520 = vmatprep.mubr.bf16.mxu0 %v517
          %1521 = vmatmul.mubr.bf16.gmra.mxu0 %v516
          %v1522 = vpop.f32.mrf.mxu0
          %v1523 = vadd.f32 %v491, %v1522
          %v1524 = vpop.f32.mrf.mxu0
          %v1525 = vadd.f32 %v491, %v1524
          %v1526 = vpop.f32.mrf.mxu0
          %v1527 = vadd.f32 %v496, %v1526
          %v1528 = vpop.f32.mrf.mxu0
          %v1529 = vadd.f32 %v496, %v1528
          %1530 = vdwg.mxu0
          %1531 = vmatprep.subr.bf16.mxu0 %v1149
          %1532 = vmatpush1.bf16.xpose.msra.mxu0 %v1148
          %1533 = vmatprep.subr.bf16.mxu0 %v1143
          %1534 = vmatpush1.bf16.xpose.msra.mxu0 %v1142
          %1535 = vmatprep.subr.bf16.mxu0 %v1137
          %1536 = vmatpush1.bf16.xpose.msra.mxu0 %v1136
          %1537 = vmatprep.subr.bf16.mxu0 %v1131
          %1538 = vmatpush1.bf16.xpose.msra.mxu0 %v1130
          %1539 = vmatprep.subr.bf16.mxu0 %v1125
          %1540 = vmatpush1.bf16.xpose.msra.mxu0 %v1124
          %1541 = vmatprep.subr.bf16.mxu0 %v1119
          %1542 = vmatpush1.bf16.xpose.msra.mxu0 %v1118
          %1543 = vmatprep.subr.bf16.mxu0 %v1113
          %1544 = vmatpush1.bf16.xpose.msra.mxu0 %v1112
          %1545 = vmatprep.subr.bf16.mxu0 %v1107
          %1546 = vmatpush1.bf16.xpose.msra.mxu0 %v1106
          %1547 = vmatprep.subr.bf16.mxu0 %v1197
          %1548 = vmatpush2.bf16.xpose.msra.mxu0 %v1196
          %1549 = vmatprep.subr.bf16.mxu0 %v1191
          %1550 = vmatpush2.bf16.xpose.msra.mxu0 %v1190
          %1551 = vmatprep.subr.bf16.mxu0 %v1185
          %1552 = vmatpush2.bf16.xpose.msra.mxu0 %v1184
          %1553 = vmatprep.subr.bf16.mxu0 %v1179
          %1554 = vmatpush2.bf16.xpose.msra.mxu0 %v1178
          %1555 = vmatprep.subr.bf16.mxu0 %v1173
          %1556 = vmatpush2.bf16.xpose.msra.mxu0 %v1172
          %1557 = vmatprep.subr.bf16.mxu0 %v1167
          %1558 = vmatpush2.bf16.xpose.msra.mxu0 %v1166
          %1559 = vmatprep.subr.bf16.mxu0 %v1161
          %1560 = vmatpush2.bf16.xpose.msra.mxu0 %v1160
          %1561 = vmatprep.subr.bf16.mxu0 %v1155
          %1562 = vmatpush2.bf16.xpose.msra.mxu0 %v1154
          %1563 = vmatprep.mubr.bf16.mxu0 %v519
          %1564 = vmatmul.mubr.bf16.gmra.mxu0 %v518
          %v1565 = vpop.f32.mrf.mxu0
          %v1566 = vadd.f32 %v1523, %v1565
          %v1567 = vpop.f32.mrf.mxu0
          %v1568 = vadd.f32 %v1525, %v1567
          %v1569 = vpop.f32.mrf.mxu0
          %v1570 = vadd.f32 %v1527, %v1569
          %v1571 = vpop.f32.mrf.mxu0
          %v1572 = vadd.f32 %v1529, %v1571
          %1573 = vdwg.mxu0
          %1574 = vmatprep.subr.bf16.mxu0 %v1151
          %1575 = vmatpush1.bf16.xpose.msra.mxu0 %v1150
          %1576 = vmatprep.subr.bf16.mxu0 %v1145
          %1577 = vmatpush1.bf16.xpose.msra.mxu0 %v1144
          %1578 = vmatprep.subr.bf16.mxu0 %v1139
          %1579 = vmatpush1.bf16.xpose.msra.mxu0 %v1138
          %1580 = vmatprep.subr.bf16.mxu0 %v1133
          %1581 = vmatpush1.bf16.xpose.msra.mxu0 %v1132
          %1582 = vmatprep.subr.bf16.mxu0 %v1127
          %1583 = vmatpush1.bf16.xpose.msra.mxu0 %v1126
          %1584 = vmatprep.subr.bf16.mxu0 %v1121
          %1585 = vmatpush1.bf16.xpose.msra.mxu0 %v1120
          %1586 = vmatprep.subr.bf16.mxu0 %v1115
          %1587 = vmatpush1.bf16.xpose.msra.mxu0 %v1114
          %1588 = vmatprep.subr.bf16.mxu0 %v1109
          %1589 = vmatpush1.bf16.xpose.msra.mxu0 %v1108
          %1590 = vmatprep.subr.bf16.mxu0 %v1199
          %1591 = vmatpush2.bf16.xpose.msra.mxu0 %v1198
          %1592 = vmatprep.subr.bf16.mxu0 %v1193
          %1593 = vmatpush2.bf16.xpose.msra.mxu0 %v1192
          %1594 = vmatprep.subr.bf16.mxu0 %v1187
          %1595 = vmatpush2.bf16.xpose.msra.mxu0 %v1186
          %1596 = vmatprep.subr.bf16.mxu0 %v1181
          %1597 = vmatpush2.bf16.xpose.msra.mxu0 %v1180
          %1598 = vmatprep.subr.bf16.mxu0 %v1175
          %1599 = vmatpush2.bf16.xpose.msra.mxu0 %v1174
          %1600 = vmatprep.subr.bf16.mxu0 %v1169
          %1601 = vmatpush2.bf16.xpose.msra.mxu0 %v1168
          %1602 = vmatprep.subr.bf16.mxu0 %v1163
          %1603 = vmatpush2.bf16.xpose.msra.mxu0 %v1162
          %1604 = vmatprep.subr.bf16.mxu0 %v1157
          %1605 = vmatpush2.bf16.xpose.msra.mxu0 %v1156
          %1606 = vmatprep.mubr.bf16.mxu0 %v521
          %1607 = vmatmul.mubr.bf16.gmra.mxu0 %v520
          %v1608 = vpop.f32.mrf.mxu0
          %v1609 = vadd.f32 %v1566, %v1608
          %v1610 = vpop.f32.mrf.mxu0
          %v1611 = vadd.f32 %v1568, %v1610
          %v1612 = vpop.f32.mrf.mxu0
          %v1613 = vadd.f32 %v1570, %v1612
          %v1614 = vpop.f32.mrf.mxu0
          %v1615 = vadd.f32 %v1572, %v1614
          %1616 = vdwg.mxu0
          %1617 = vmatprep.subr.bf16.mxu0 %v1243
          %1618 = vmatpush1.bf16.xpose.msra.mxu0 %v1242
          %1619 = vmatprep.subr.bf16.mxu0 %v1237
          %1620 = vmatpush1.bf16.xpose.msra.mxu0 %v1236
          %1621 = vmatprep.subr.bf16.mxu0 %v1231
          %1622 = vmatpush1.bf16.xpose.msra.mxu0 %v1230
          %1623 = vmatprep.subr.bf16.mxu0 %v1225
          %1624 = vmatpush1.bf16.xpose.msra.mxu0 %v1224
          %1625 = vmatprep.subr.bf16.mxu0 %v1219
          %1626 = vmatpush1.bf16.xpose.msra.mxu0 %v1218
          %1627 = vmatprep.subr.bf16.mxu0 %v1213
          %1628 = vmatpush1.bf16.xpose.msra.mxu0 %v1212
          %1629 = vmatprep.subr.bf16.mxu0 %v1207
          %1630 = vmatpush1.bf16.xpose.msra.mxu0 %v1206
          %1631 = vmatprep.subr.bf16.mxu0 %v1201
          %1632 = vmatpush1.bf16.xpose.msra.mxu0 %v1200
          %1633 = vmatprep.subr.bf16.mxu0 %v1291
          %1634 = vmatpush2.bf16.xpose.msra.mxu0 %v1290
          %1635 = vmatprep.subr.bf16.mxu0 %v1285
          %1636 = vmatpush2.bf16.xpose.msra.mxu0 %v1284
          %1637 = vmatprep.subr.bf16.mxu0 %v1279
          %1638 = vmatpush2.bf16.xpose.msra.mxu0 %v1278
          %1639 = vmatprep.subr.bf16.mxu0 %v1273
          %1640 = vmatpush2.bf16.xpose.msra.mxu0 %v1272
          %1641 = vmatprep.subr.bf16.mxu0 %v1267
          %1642 = vmatpush2.bf16.xpose.msra.mxu0 %v1266
          %1643 = vmatprep.subr.bf16.mxu0 %v1261
          %1644 = vmatpush2.bf16.xpose.msra.mxu0 %v1260
          %1645 = vmatprep.subr.bf16.mxu0 %v1255
          %1646 = vmatpush2.bf16.xpose.msra.mxu0 %v1254
          %1647 = vmatprep.subr.bf16.mxu0 %v1249
          %1648 = vmatpush2.bf16.xpose.msra.mxu0 %v1248
          %1649 = vmatprep.mubr.bf16.mxu0 %v517
          %1650 = vmatmul.mubr.bf16.gmra.mxu0 %v516
          %v1651 = vpop.f32.mrf.mxu0
          %v1652 = vadd.f32 %v491, %v1651
          %v1653 = vpop.f32.mrf.mxu0
          %v1654 = vadd.f32 %v491, %v1653
          %v1655 = vpop.f32.mrf.mxu0
          %v1656 = vadd.f32 %v496, %v1655
          %v1657 = vpop.f32.mrf.mxu0
          %v1658 = vadd.f32 %v496, %v1657
          %1659 = vdwg.mxu0
          %1660 = vmatprep.subr.bf16.mxu0 %v1245
          %1661 = vmatpush1.bf16.xpose.msra.mxu0 %v1244
          %1662 = vmatprep.subr.bf16.mxu0 %v1239
          %1663 = vmatpush1.bf16.xpose.msra.mxu0 %v1238
          %1664 = vmatprep.subr.bf16.mxu0 %v1233
          %1665 = vmatpush1.bf16.xpose.msra.mxu0 %v1232
          %1666 = vmatprep.subr.bf16.mxu0 %v1227
          %1667 = vmatpush1.bf16.xpose.msra.mxu0 %v1226
          %1668 = vmatprep.subr.bf16.mxu0 %v1221
          %1669 = vmatpush1.bf16.xpose.msra.mxu0 %v1220
          %1670 = vmatprep.subr.bf16.mxu0 %v1215
          %1671 = vmatpush1.bf16.xpose.msra.mxu0 %v1214
          %1672 = vmatprep.subr.bf16.mxu0 %v1209
          %1673 = vmatpush1.bf16.xpose.msra.mxu0 %v1208
          %1674 = vmatprep.subr.bf16.mxu0 %v1203
          %1675 = vmatpush1.bf16.xpose.msra.mxu0 %v1202
          %1676 = vmatprep.subr.bf16.mxu0 %v1293
          %1677 = vmatpush2.bf16.xpose.msra.mxu0 %v1292
          %1678 = vmatprep.subr.bf16.mxu0 %v1287
          %1679 = vmatpush2.bf16.xpose.msra.mxu0 %v1286
          %1680 = vmatprep.subr.bf16.mxu0 %v1281
          %1681 = vmatpush2.bf16.xpose.msra.mxu0 %v1280
          %1682 = vmatprep.subr.bf16.mxu0 %v1275
          %1683 = vmatpush2.bf16.xpose.msra.mxu0 %v1274
          %1684 = vmatprep.subr.bf16.mxu0 %v1269
          %1685 = vmatpush2.bf16.xpose.msra.mxu0 %v1268
          %1686 = vmatprep.subr.bf16.mxu0 %v1263
          %1687 = vmatpush2.bf16.xpose.msra.mxu0 %v1262
          %1688 = vmatprep.subr.bf16.mxu0 %v1257
          %1689 = vmatpush2.bf16.xpose.msra.mxu0 %v1256
          %1690 = vmatprep.subr.bf16.mxu0 %v1251
          %1691 = vmatpush2.bf16.xpose.msra.mxu0 %v1250
          %1692 = vmatprep.mubr.bf16.mxu0 %v519
          %1693 = vmatmul.mubr.bf16.gmra.mxu0 %v518
          %v1694 = vpop.f32.mrf.mxu0
          %v1695 = vadd.f32 %v1652, %v1694
          %v1696 = vpop.f32.mrf.mxu0
          %v1697 = vadd.f32 %v1654, %v1696
          %v1698 = vpop.f32.mrf.mxu0
          %v1699 = vadd.f32 %v1656, %v1698
          %v1700 = vpop.f32.mrf.mxu0
          %v1701 = vadd.f32 %v1658, %v1700
          %1702 = vdwg.mxu0
          %1703 = vmatprep.subr.bf16.mxu0 %v1247
          %1704 = vmatpush1.bf16.xpose.msra.mxu0 %v1246
          %1705 = vmatprep.subr.bf16.mxu0 %v1241
          %1706 = vmatpush1.bf16.xpose.msra.mxu0 %v1240
          %1707 = vmatprep.subr.bf16.mxu0 %v1235
          %1708 = vmatpush1.bf16.xpose.msra.mxu0 %v1234
          %1709 = vmatprep.subr.bf16.mxu0 %v1229
          %1710 = vmatpush1.bf16.xpose.msra.mxu0 %v1228
          %1711 = vmatprep.subr.bf16.mxu0 %v1223
          %1712 = vmatpush1.bf16.xpose.msra.mxu0 %v1222
          %1713 = vmatprep.subr.bf16.mxu0 %v1217
          %1714 = vmatpush1.bf16.xpose.msra.mxu0 %v1216
          %1715 = vmatprep.subr.bf16.mxu0 %v1211
          %1716 = vmatpush1.bf16.xpose.msra.mxu0 %v1210
          %1717 = vmatprep.subr.bf16.mxu0 %v1205
          %1718 = vmatpush1.bf16.xpose.msra.mxu0 %v1204
          %1719 = vmatprep.subr.bf16.mxu0 %v1295
          %1720 = vmatpush2.bf16.xpose.msra.mxu0 %v1294
          %1721 = vmatprep.subr.bf16.mxu0 %v1289
          %1722 = vmatpush2.bf16.xpose.msra.mxu0 %v1288
          %1723 = vmatprep.subr.bf16.mxu0 %v1283
          %1724 = vmatpush2.bf16.xpose.msra.mxu0 %v1282
          %1725 = vmatprep.subr.bf16.mxu0 %v1277
          %1726 = vmatpush2.bf16.xpose.msra.mxu0 %v1276
          %1727 = vmatprep.subr.bf16.mxu0 %v1271
          %1728 = vmatpush2.bf16.xpose.msra.mxu0 %v1270
          %1729 = vmatprep.subr.bf16.mxu0 %v1265
          %1730 = vmatpush2.bf16.xpose.msra.mxu0 %v1264
          %1731 = vmatprep.subr.bf16.mxu0 %v1259
          %1732 = vmatpush2.bf16.xpose.msra.mxu0 %v1258
          %1733 = vmatprep.subr.bf16.mxu0 %v1253
          %1734 = vmatpush2.bf16.xpose.msra.mxu0 %v1252
          %1735 = vmatprep.mubr.bf16.mxu0 %v521
          %1736 = vmatmul.mubr.bf16.gmra.mxu0 %v520
          %v1737 = vpop.f32.mrf.mxu0
          %v1738 = vadd.f32 %v1695, %v1737
          %v1739 = vpop.f32.mrf.mxu0
          %v1740 = vadd.f32 %v1697, %v1739
          %v1741 = vpop.f32.mrf.mxu0
          %v1742 = vadd.f32 %v1699, %v1741
          %v1743 = vpop.f32.mrf.mxu0
          %v1744 = vadd.f32 %v1701, %v1743
          %1745 = vdwg.mxu0
          %v1746 = vmax.f32 %v1609, 0.0
          %v1747 = vmax.f32 %v1611, 0.0
          %v1748 = vmax.f32 %v1738, 0.0
          %v1749 = vmax.f32 %v1740, 0.0
          %v1750 = vmax.f32 %v1613, 0.0
          %v1751 = vmax.f32 %v1615, 0.0
          %v1752 = vmax.f32 %v1742, 0.0
          %v1753 = vmax.f32 %v1744, 0.0
          %v1754 = vpack.c.bf16 %v1750, %v1746
          %v1755 = vpack.c.bf16 %v1751, %v1747
          %v1756 = vpack.c.bf16 %v1752, %v1748
          %v1757 = vpack.c.bf16 %v1753, %v1749
          %s1758 = scalar_lea.vmem %s0, 1536
          %v1759 = vld [vmem:[%s1758] sm:$0xff]
          %v1760 = vld [vmem:[%s1758 + $0x8] sm:$0xff]
          %v1761 = vld [vmem:[%s1758 + $0x10] sm:$0xff]
          %v1762 = vld [vmem:[%s1758 + $0x18] sm:$0xff]
          %v1763 = vld [vmem:[%s1758 + $0x20] sm:$0xff]
          %v1764 = vld [vmem:[%s1758 + $0x28] sm:$0xff]
          %v1765 = vld [vmem:[%s1758 + $0x30] sm:$0xff]
          %v1766 = vld [vmem:[%s1758 + $0x38] sm:$0xff]
          %v1767 = vld [vmem:[%s1758 + $0x40] sm:$0xff]
          %v1768 = vld [vmem:[%s1758 + $0x48] sm:$0xff]
          %v1769 = vld [vmem:[%s1758 + $0x50] sm:$0xff]
          %v1770 = vld [vmem:[%s1758 + $0x58] sm:$0xff]
          %v1771 = vld [vmem:[%s1758 + $0x60] sm:$0xff]
          %v1772 = vld [vmem:[%s1758 + $0x68] sm:$0xff]
          %v1773 = vld [vmem:[%s1758 + $0x70] sm:$0xff]
          %v1774 = vld [vmem:[%s1758 + $0x78] sm:$0xff]
          %v1775 = vld [vmem:[%s1758 + $0x80] sm:$0xff]
          %v1776 = vld [vmem:[%s1758 + $0x88] sm:$0xff]
          %v1777 = vld [vmem:[%s1758 + $0x90] sm:$0xff]
          %v1778 = vld [vmem:[%s1758 + $0x98] sm:$0xff]
          %v1779 = vld [vmem:[%s1758 + $0xa0] sm:$0xff]
          %v1780 = vld [vmem:[%s1758 + $0xa8] sm:$0xff]
          %v1781 = vld [vmem:[%s1758 + $0xb0] sm:$0xff]
          %v1782 = vld [vmem:[%s1758 + $0xb8] sm:$0xff]
          %v1783 = vld [vmem:[%s1758 + $0xc0] sm:$0xff]
          %v1784 = vld [vmem:[%s1758 + $0xc8] sm:$0xff]
          %v1785 = vld [vmem:[%s1758 + $0xd0] sm:$0xff]
          %v1786 = vld [vmem:[%s1758 + $0xd8] sm:$0xff]
          %v1787 = vld [vmem:[%s1758 + $0xe0] sm:$0xff]
          %v1788 = vld [vmem:[%s1758 + $0xe8] sm:$0xff]
          %v1789 = vld [vmem:[%s1758 + $0xf0] sm:$0xff]
          %v1790 = vld [vmem:[%s1758 + $0xf8] sm:$0xff]
          %v1791 = vld [vmem:[%s1758 + $0x100] sm:$0xff]
          %v1792 = vld [vmem:[%s1758 + $0x108] sm:$0xff]
          %v1793 = vld [vmem:[%s1758 + $0x110] sm:$0xff]
          %v1794 = vld [vmem:[%s1758 + $0x118] sm:$0xff]
          %v1795 = vld [vmem:[%s1758 + $0x120] sm:$0xff]
          %v1796 = vld [vmem:[%s1758 + $0x128] sm:$0xff]
          %v1797 = vld [vmem:[%s1758 + $0x130] sm:$0xff]
          %v1798 = vld [vmem:[%s1758 + $0x138] sm:$0xff]
          %v1799 = vld [vmem:[%s1758 + $0x140] sm:$0xff]
          %v1800 = vld [vmem:[%s1758 + $0x148] sm:$0xff]
          %v1801 = vld [vmem:[%s1758 + $0x150] sm:$0xff]
          %v1802 = vld [vmem:[%s1758 + $0x158] sm:$0xff]
          %v1803 = vld [vmem:[%s1758 + $0x160] sm:$0xff]
          %v1804 = vld [vmem:[%s1758 + $0x168] sm:$0xff]
          %v1805 = vld [vmem:[%s1758 + $0x170] sm:$0xff]
          %v1806 = vld [vmem:[%s1758 + $0x178] sm:$0xff]
          %v1807 = vld [vmem:[%s1758 + $0x180] sm:$0xff]
          %v1808 = vld [vmem:[%s1758 + $0x188] sm:$0xff]
          %v1809 = vld [vmem:[%s1758 + $0x190] sm:$0xff]
          %v1810 = vld [vmem:[%s1758 + $0x198] sm:$0xff]
          %v1811 = vld [vmem:[%s1758 + $0x1a0] sm:$0xff]
          %v1812 = vld [vmem:[%s1758 + $0x1a8] sm:$0xff]
          %v1813 = vld [vmem:[%s1758 + $0x1b0] sm:$0xff]
          %v1814 = vld [vmem:[%s1758 + $0x1b8] sm:$0xff]
          %v1815 = vld [vmem:[%s1758 + $0x1c0] sm:$0xff]
          %v1816 = vld [vmem:[%s1758 + $0x1c8] sm:$0xff]
          %v1817 = vld [vmem:[%s1758 + $0x1d0] sm:$0xff]
          %v1818 = vld [vmem:[%s1758 + $0x1d8] sm:$0xff]
          %v1819 = vld [vmem:[%s1758 + $0x1e0] sm:$0xff]
          %v1820 = vld [vmem:[%s1758 + $0x1e8] sm:$0xff]
          %v1821 = vld [vmem:[%s1758 + $0x1f0] sm:$0xff]
          %v1822 = vld [vmem:[%s1758 + $0x1f8] sm:$0xff]
          %v1823 = vld [vmem:[%s1758 + $0x200] sm:$0xff]
          %v1824 = vld [vmem:[%s1758 + $0x208] sm:$0xff]
          %v1825 = vld [vmem:[%s1758 + $0x210] sm:$0xff]
          %v1826 = vld [vmem:[%s1758 + $0x218] sm:$0xff]
          %v1827 = vld [vmem:[%s1758 + $0x220] sm:$0xff]
          %v1828 = vld [vmem:[%s1758 + $0x228] sm:$0xff]
          %v1829 = vld [vmem:[%s1758 + $0x230] sm:$0xff]
          %v1830 = vld [vmem:[%s1758 + $0x238] sm:$0xff]
          %v1831 = vld [vmem:[%s1758 + $0x240] sm:$0xff]
          %v1832 = vld [vmem:[%s1758 + $0x248] sm:$0xff]
          %v1833 = vld [vmem:[%s1758 + $0x250] sm:$0xff]
          %v1834 = vld [vmem:[%s1758 + $0x258] sm:$0xff]
          %v1835 = vld [vmem:[%s1758 + $0x260] sm:$0xff]
          %v1836 = vld [vmem:[%s1758 + $0x268] sm:$0xff]
          %v1837 = vld [vmem:[%s1758 + $0x270] sm:$0xff]
          %v1838 = vld [vmem:[%s1758 + $0x278] sm:$0xff]
          %v1839 = vld [vmem:[%s1758 + $0x280] sm:$0xff]
          %v1840 = vld [vmem:[%s1758 + $0x288] sm:$0xff]
          %v1841 = vld [vmem:[%s1758 + $0x290] sm:$0xff]
          %v1842 = vld [vmem:[%s1758 + $0x298] sm:$0xff]
          %v1843 = vld [vmem:[%s1758 + $0x2a0] sm:$0xff]
          %v1844 = vld [vmem:[%s1758 + $0x2a8] sm:$0xff]
          %v1845 = vld [vmem:[%s1758 + $0x2b0] sm:$0xff]
          %v1846 = vld [vmem:[%s1758 + $0x2b8] sm:$0xff]
          %v1847 = vld [vmem:[%s1758 + $0x2c0] sm:$0xff]
          %v1848 = vld [vmem:[%s1758 + $0x2c8] sm:$0xff]
          %v1849 = vld [vmem:[%s1758 + $0x2d0] sm:$0xff]
          %v1850 = vld [vmem:[%s1758 + $0x2d8] sm:$0xff]
          %v1851 = vld [vmem:[%s1758 + $0x2e0] sm:$0xff]
          %v1852 = vld [vmem:[%s1758 + $0x2e8] sm:$0xff]
          %v1853 = vld [vmem:[%s1758 + $0x2f0] sm:$0xff]
          %v1854 = vld [vmem:[%s1758 + $0x2f8] sm:$0xff]
          %v1855 = vld [vmem:[%s1758 + $0x300] sm:$0xff]
          %v1856 = vld [vmem:[%s1758 + $0x308] sm:$0xff]
          %v1857 = vld [vmem:[%s1758 + $0x310] sm:$0xff]
          %v1858 = vld [vmem:[%s1758 + $0x318] sm:$0xff]
          %v1859 = vld [vmem:[%s1758 + $0x320] sm:$0xff]
          %v1860 = vld [vmem:[%s1758 + $0x328] sm:$0xff]
          %v1861 = vld [vmem:[%s1758 + $0x330] sm:$0xff]
          %v1862 = vld [vmem:[%s1758 + $0x338] sm:$0xff]
          %v1863 = vld [vmem:[%s1758 + $0x340] sm:$0xff]
          %v1864 = vld [vmem:[%s1758 + $0x348] sm:$0xff]
          %v1865 = vld [vmem:[%s1758 + $0x350] sm:$0xff]
          %v1866 = vld [vmem:[%s1758 + $0x358] sm:$0xff]
          %v1867 = vld [vmem:[%s1758 + $0x360] sm:$0xff]
          %v1868 = vld [vmem:[%s1758 + $0x368] sm:$0xff]
          %v1869 = vld [vmem:[%s1758 + $0x370] sm:$0xff]
          %v1870 = vld [vmem:[%s1758 + $0x378] sm:$0xff]
          %v1871 = vld [vmem:[%s1758 + $0x380] sm:$0xff]
          %v1872 = vld [vmem:[%s1758 + $0x388] sm:$0xff]
          %v1873 = vld [vmem:[%s1758 + $0x390] sm:$0xff]
          %v1874 = vld [vmem:[%s1758 + $0x398] sm:$0xff]
          %v1875 = vld [vmem:[%s1758 + $0x3a0] sm:$0xff]
          %v1876 = vld [vmem:[%s1758 + $0x3a8] sm:$0xff]
          %v1877 = vld [vmem:[%s1758 + $0x3b0] sm:$0xff]
          %v1878 = vld [vmem:[%s1758 + $0x3b8] sm:$0xff]
          %v1879 = vld [vmem:[%s1758 + $0x3c0] sm:$0xff]
          %v1880 = vld [vmem:[%s1758 + $0x3c8] sm:$0xff]
          %v1881 = vld [vmem:[%s1758 + $0x3d0] sm:$0xff]
          %v1882 = vld [vmem:[%s1758 + $0x3d8] sm:$0xff]
          %v1883 = vld [vmem:[%s1758 + $0x3e0] sm:$0xff]
          %v1884 = vld [vmem:[%s1758 + $0x3e8] sm:$0xff]
          %v1885 = vld [vmem:[%s1758 + $0x3f0] sm:$0xff]
          %v1886 = vld [vmem:[%s1758 + $0x3f8] sm:$0xff]
          %v1887 = vld [vmem:[%s1758 + $0x400] sm:$0xff]
          %v1888 = vld [vmem:[%s1758 + $0x408] sm:$0xff]
          %v1889 = vld [vmem:[%s1758 + $0x410] sm:$0xff]
          %v1890 = vld [vmem:[%s1758 + $0x418] sm:$0xff]
          %v1891 = vld [vmem:[%s1758 + $0x420] sm:$0xff]
          %v1892 = vld [vmem:[%s1758 + $0x428] sm:$0xff]
          %v1893 = vld [vmem:[%s1758 + $0x430] sm:$0xff]
          %v1894 = vld [vmem:[%s1758 + $0x438] sm:$0xff]
          %v1895 = vld [vmem:[%s1758 + $0x440] sm:$0xff]
          %v1896 = vld [vmem:[%s1758 + $0x448] sm:$0xff]
          %v1897 = vld [vmem:[%s1758 + $0x450] sm:$0xff]
          %v1898 = vld [vmem:[%s1758 + $0x458] sm:$0xff]
          %v1899 = vld [vmem:[%s1758 + $0x460] sm:$0xff]
          %v1900 = vld [vmem:[%s1758 + $0x468] sm:$0xff]
          %v1901 = vld [vmem:[%s1758 + $0x470] sm:$0xff]
          %v1902 = vld [vmem:[%s1758 + $0x478] sm:$0xff]
          %v1903 = vld [vmem:[%s1758 + $0x480] sm:$0xff]
          %v1904 = vld [vmem:[%s1758 + $0x488] sm:$0xff]
          %v1905 = vld [vmem:[%s1758 + $0x490] sm:$0xff]
          %v1906 = vld [vmem:[%s1758 + $0x498] sm:$0xff]
          %v1907 = vld [vmem:[%s1758 + $0x4a0] sm:$0xff]
          %v1908 = vld [vmem:[%s1758 + $0x4a8] sm:$0xff]
          %v1909 = vld [vmem:[%s1758 + $0x4b0] sm:$0xff]
          %v1910 = vld [vmem:[%s1758 + $0x4b8] sm:$0xff]
          %v1911 = vld [vmem:[%s1758 + $0x4c0] sm:$0xff]
          %v1912 = vld [vmem:[%s1758 + $0x4c8] sm:$0xff]
          %v1913 = vld [vmem:[%s1758 + $0x4d0] sm:$0xff]
          %v1914 = vld [vmem:[%s1758 + $0x4d8] sm:$0xff]
          %v1915 = vld [vmem:[%s1758 + $0x4e0] sm:$0xff]
          %v1916 = vld [vmem:[%s1758 + $0x4e8] sm:$0xff]
          %v1917 = vld [vmem:[%s1758 + $0x4f0] sm:$0xff]
          %v1918 = vld [vmem:[%s1758 + $0x4f8] sm:$0xff]
          %v1919 = vld [vmem:[%s1758 + $0x500] sm:$0xff]
          %v1920 = vld [vmem:[%s1758 + $0x508] sm:$0xff]
          %v1921 = vld [vmem:[%s1758 + $0x510] sm:$0xff]
          %v1922 = vld [vmem:[%s1758 + $0x518] sm:$0xff]
          %v1923 = vld [vmem:[%s1758 + $0x520] sm:$0xff]
          %v1924 = vld [vmem:[%s1758 + $0x528] sm:$0xff]
          %v1925 = vld [vmem:[%s1758 + $0x530] sm:$0xff]
          %v1926 = vld [vmem:[%s1758 + $0x538] sm:$0xff]
          %v1927 = vld [vmem:[%s1758 + $0x540] sm:$0xff]
          %v1928 = vld [vmem:[%s1758 + $0x548] sm:$0xff]
          %v1929 = vld [vmem:[%s1758 + $0x550] sm:$0xff]
          %v1930 = vld [vmem:[%s1758 + $0x558] sm:$0xff]
          %v1931 = vld [vmem:[%s1758 + $0x560] sm:$0xff]
          %v1932 = vld [vmem:[%s1758 + $0x568] sm:$0xff]
          %v1933 = vld [vmem:[%s1758 + $0x570] sm:$0xff]
          %v1934 = vld [vmem:[%s1758 + $0x578] sm:$0xff]
          %v1935 = vld [vmem:[%s1758 + $0x580] sm:$0xff]
          %v1936 = vld [vmem:[%s1758 + $0x588] sm:$0xff]
          %v1937 = vld [vmem:[%s1758 + $0x590] sm:$0xff]
          %v1938 = vld [vmem:[%s1758 + $0x598] sm:$0xff]
          %v1939 = vld [vmem:[%s1758 + $0x5a0] sm:$0xff]
          %v1940 = vld [vmem:[%s1758 + $0x5a8] sm:$0xff]
          %v1941 = vld [vmem:[%s1758 + $0x5b0] sm:$0xff]
          %v1942 = vld [vmem:[%s1758 + $0x5b8] sm:$0xff]
          %v1943 = vld [vmem:[%s1758 + $0x5c0] sm:$0xff]
          %v1944 = vld [vmem:[%s1758 + $0x5c8] sm:$0xff]
          %v1945 = vld [vmem:[%s1758 + $0x5d0] sm:$0xff]
          %v1946 = vld [vmem:[%s1758 + $0x5d8] sm:$0xff]
          %v1947 = vld [vmem:[%s1758 + $0x5e0] sm:$0xff]
          %v1948 = vld [vmem:[%s1758 + $0x5e8] sm:$0xff]
          %v1949 = vld [vmem:[%s1758 + $0x5f0] sm:$0xff]
          %v1950 = vld [vmem:[%s1758 + $0x5f8] sm:$0xff]
          %v2143 = vunpack.c.l.b16 %v1759
          %v2144 = vunpack.c.h.b16 %v1759
          %v2145 = vunpack.c.l.b16 %v1760
          %v2146 = vunpack.c.h.b16 %v1760
          %v2147 = vunpack.c.l.b16 %v1761
          %v2148 = vunpack.c.h.b16 %v1761
          %v2149 = vunpack.c.l.b16 %v1762
          %v2150 = vunpack.c.h.b16 %v1762
          %v2151 = vunpack.c.l.b16 %v1763
          %v2152 = vunpack.c.h.b16 %v1763
          %v2153 = vunpack.c.l.b16 %v1764
          %v2154 = vunpack.c.h.b16 %v1764
          %v2155 = vunpack.c.l.b16 %v1765
          %v2156 = vunpack.c.h.b16 %v1765
          %v2157 = vunpack.c.l.b16 %v1766
          %v2158 = vunpack.c.h.b16 %v1766
          %v2159 = vunpack.c.l.b16 %v1767
          %v2160 = vunpack.c.h.b16 %v1767
          %v2161 = vunpack.c.l.b16 %v1768
          %v2162 = vunpack.c.h.b16 %v1768
          %v2163 = vunpack.c.l.b16 %v1769
          %v2164 = vunpack.c.h.b16 %v1769
          %v2165 = vunpack.c.l.b16 %v1770
          %v2166 = vunpack.c.h.b16 %v1770
          %v2167 = vunpack.c.l.b16 %v1771
          %v2168 = vunpack.c.h.b16 %v1771
          %v2169 = vunpack.c.l.b16 %v1772
          %v2170 = vunpack.c.h.b16 %v1772
          %v2171 = vunpack.c.l.b16 %v1773
          %v2172 = vunpack.c.h.b16 %v1773
          %v2173 = vunpack.c.l.b16 %v1774
          %v2174 = vunpack.c.h.b16 %v1774
          %v2175 = vunpack.c.l.b16 %v1775
          %v2176 = vunpack.c.h.b16 %v1775
          %v2177 = vunpack.c.l.b16 %v1776
          %v2178 = vunpack.c.h.b16 %v1776
          %v2179 = vunpack.c.l.b16 %v1777
          %v2180 = vunpack.c.h.b16 %v1777
          %v2181 = vunpack.c.l.b16 %v1778
          %v2182 = vunpack.c.h.b16 %v1778
          %v2183 = vunpack.c.l.b16 %v1779
          %v2184 = vunpack.c.h.b16 %v1779
          %v2185 = vunpack.c.l.b16 %v1780
          %v2186 = vunpack.c.h.b16 %v1780
          %v2187 = vunpack.c.l.b16 %v1781
          %v2188 = vunpack.c.h.b16 %v1781
          %v2189 = vunpack.c.l.b16 %v1782
          %v2190 = vunpack.c.h.b16 %v1782
          %v2191 = vunpack.c.l.b16 %v1783
          %v2192 = vunpack.c.h.b16 %v1783
          %v2193 = vunpack.c.l.b16 %v1784
          %v2194 = vunpack.c.h.b16 %v1784
          %v2195 = vunpack.c.l.b16 %v1785
          %v2196 = vunpack.c.h.b16 %v1785
          %v2197 = vunpack.c.l.b16 %v1786
          %v2198 = vunpack.c.h.b16 %v1786
          %v2199 = vunpack.c.l.b16 %v1787
          %v2200 = vunpack.c.h.b16 %v1787
          %v2201 = vunpack.c.l.b16 %v1788
          %v2202 = vunpack.c.h.b16 %v1788
          %v2203 = vunpack.c.l.b16 %v1789
          %v2204 = vunpack.c.h.b16 %v1789
          %v2205 = vunpack.c.l.b16 %v1790
          %v2206 = vunpack.c.h.b16 %v1790
          %v2207 = vunpack.c.l.b16 %v1791
          %v2208 = vunpack.c.h.b16 %v1791
          %v2209 = vunpack.c.l.b16 %v1792
          %v2210 = vunpack.c.h.b16 %v1792
          %v2211 = vunpack.c.l.b16 %v1793
          %v2212 = vunpack.c.h.b16 %v1793
          %v2213 = vunpack.c.l.b16 %v1794
          %v2214 = vunpack.c.h.b16 %v1794
          %v2215 = vunpack.c.l.b16 %v1795
          %v2216 = vunpack.c.h.b16 %v1795
          %v2217 = vunpack.c.l.b16 %v1796
          %v2218 = vunpack.c.h.b16 %v1796
          %v2219 = vunpack.c.l.b16 %v1797
          %v2220 = vunpack.c.h.b16 %v1797
          %v2221 = vunpack.c.l.b16 %v1798
          %v2222 = vunpack.c.h.b16 %v1798
          %v2223 = vunpack.c.l.b16 %v1799
          %v2224 = vunpack.c.h.b16 %v1799
          %v2225 = vunpack.c.l.b16 %v1800
          %v2226 = vunpack.c.h.b16 %v1800
          %v2227 = vunpack.c.l.b16 %v1801
          %v2228 = vunpack.c.h.b16 %v1801
          %v2229 = vunpack.c.l.b16 %v1802
          %v2230 = vunpack.c.h.b16 %v1802
          %v2231 = vunpack.c.l.b16 %v1803
          %v2232 = vunpack.c.h.b16 %v1803
          %v2233 = vunpack.c.l.b16 %v1804
          %v2234 = vunpack.c.h.b16 %v1804
          %v2235 = vunpack.c.l.b16 %v1805
          %v2236 = vunpack.c.h.b16 %v1805
          %v2237 = vunpack.c.l.b16 %v1806
          %v2238 = vunpack.c.h.b16 %v1806
          %v2239 = vunpack.c.l.b16 %v1807
          %v2240 = vunpack.c.h.b16 %v1807
          %v2241 = vunpack.c.l.b16 %v1808
          %v2242 = vunpack.c.h.b16 %v1808
          %v2243 = vunpack.c.l.b16 %v1809
          %v2244 = vunpack.c.h.b16 %v1809
          %v2245 = vunpack.c.l.b16 %v1810
          %v2246 = vunpack.c.h.b16 %v1810
          %v2247 = vunpack.c.l.b16 %v1811
          %v2248 = vunpack.c.h.b16 %v1811
          %v2249 = vunpack.c.l.b16 %v1812
          %v2250 = vunpack.c.h.b16 %v1812
          %v2251 = vunpack.c.l.b16 %v1813
          %v2252 = vunpack.c.h.b16 %v1813
          %v2253 = vunpack.c.l.b16 %v1814
          %v2254 = vunpack.c.h.b16 %v1814
          %v2255 = vunpack.c.l.b16 %v1815
          %v2256 = vunpack.c.h.b16 %v1815
          %v2257 = vunpack.c.l.b16 %v1816
          %v2258 = vunpack.c.h.b16 %v1816
          %v2259 = vunpack.c.l.b16 %v1817
          %v2260 = vunpack.c.h.b16 %v1817
          %v2261 = vunpack.c.l.b16 %v1818
          %v2262 = vunpack.c.h.b16 %v1818
          %v2263 = vunpack.c.l.b16 %v1819
          %v2264 = vunpack.c.h.b16 %v1819
          %v2265 = vunpack.c.l.b16 %v1820
          %v2266 = vunpack.c.h.b16 %v1820
          %v2267 = vunpack.c.l.b16 %v1821
          %v2268 = vunpack.c.h.b16 %v1821
          %v2269 = vunpack.c.l.b16 %v1822
          %v2270 = vunpack.c.h.b16 %v1822
          %v2271 = vunpack.c.l.b16 %v1823
          %v2272 = vunpack.c.h.b16 %v1823
          %v2273 = vunpack.c.l.b16 %v1824
          %v2274 = vunpack.c.h.b16 %v1824
          %v2275 = vunpack.c.l.b16 %v1825
          %v2276 = vunpack.c.h.b16 %v1825
          %v2277 = vunpack.c.l.b16 %v1826
          %v2278 = vunpack.c.h.b16 %v1826
          %v2279 = vunpack.c.l.b16 %v1827
          %v2280 = vunpack.c.h.b16 %v1827
          %v2281 = vunpack.c.l.b16 %v1828
          %v2282 = vunpack.c.h.b16 %v1828
          %v2283 = vunpack.c.l.b16 %v1829
          %v2284 = vunpack.c.h.b16 %v1829
          %v2285 = vunpack.c.l.b16 %v1830
          %v2286 = vunpack.c.h.b16 %v1830
          %v2287 = vunpack.c.l.b16 %v1831
          %v2288 = vunpack.c.h.b16 %v1831
          %v2289 = vunpack.c.l.b16 %v1832
          %v2290 = vunpack.c.h.b16 %v1832
          %v2291 = vunpack.c.l.b16 %v1833
          %v2292 = vunpack.c.h.b16 %v1833
          %v2293 = vunpack.c.l.b16 %v1834
          %v2294 = vunpack.c.h.b16 %v1834
          %v2295 = vunpack.c.l.b16 %v1835
          %v2296 = vunpack.c.h.b16 %v1835
          %v2297 = vunpack.c.l.b16 %v1836
          %v2298 = vunpack.c.h.b16 %v1836
          %v2299 = vunpack.c.l.b16 %v1837
          %v2300 = vunpack.c.h.b16 %v1837
          %v2301 = vunpack.c.l.b16 %v1838
          %v2302 = vunpack.c.h.b16 %v1838
          %v2303 = vunpack.c.l.b16 %v1839
          %v2304 = vunpack.c.h.b16 %v1839
          %v2305 = vunpack.c.l.b16 %v1840
          %v2306 = vunpack.c.h.b16 %v1840
          %v2307 = vunpack.c.l.b16 %v1841
          %v2308 = vunpack.c.h.b16 %v1841
          %v2309 = vunpack.c.l.b16 %v1842
          %v2310 = vunpack.c.h.b16 %v1842
          %v2311 = vunpack.c.l.b16 %v1843
          %v2312 = vunpack.c.h.b16 %v1843
          %v2313 = vunpack.c.l.b16 %v1844
          %v2314 = vunpack.c.h.b16 %v1844
          %v2315 = vunpack.c.l.b16 %v1845
          %v2316 = vunpack.c.h.b16 %v1845
          %v2317 = vunpack.c.l.b16 %v1846
          %v2318 = vunpack.c.h.b16 %v1846
          %v2319 = vunpack.c.l.b16 %v1847
          %v2320 = vunpack.c.h.b16 %v1847
          %v2321 = vunpack.c.l.b16 %v1848
          %v2322 = vunpack.c.h.b16 %v1848
          %v2323 = vunpack.c.l.b16 %v1849
          %v2324 = vunpack.c.h.b16 %v1849
          %v2325 = vunpack.c.l.b16 %v1850
          %v2326 = vunpack.c.h.b16 %v1850
          %v2327 = vunpack.c.l.b16 %v1851
          %v2328 = vunpack.c.h.b16 %v1851
          %v2329 = vunpack.c.l.b16 %v1852
          %v2330 = vunpack.c.h.b16 %v1852
          %v2331 = vunpack.c.l.b16 %v1853
          %v2332 = vunpack.c.h.b16 %v1853
          %v2333 = vunpack.c.l.b16 %v1854
          %v2334 = vunpack.c.h.b16 %v1854
          %v2335 = vunpack.c.l.b16 %v1855
          %v2336 = vunpack.c.h.b16 %v1855
          %v2337 = vunpack.c.l.b16 %v1856
          %v2338 = vunpack.c.h.b16 %v1856
          %v2339 = vunpack.c.l.b16 %v1857
          %v2340 = vunpack.c.h.b16 %v1857
          %v2341 = vunpack.c.l.b16 %v1858
          %v2342 = vunpack.c.h.b16 %v1858
          %v2343 = vunpack.c.l.b16 %v1859
          %v2344 = vunpack.c.h.b16 %v1859
          %v2345 = vunpack.c.l.b16 %v1860
          %v2346 = vunpack.c.h.b16 %v1860
          %v2347 = vunpack.c.l.b16 %v1861
          %v2348 = vunpack.c.h.b16 %v1861
          %v2349 = vunpack.c.l.b16 %v1862
          %v2350 = vunpack.c.h.b16 %v1862
          %v2351 = vunpack.c.l.b16 %v1863
          %v2352 = vunpack.c.h.b16 %v1863
          %v2353 = vunpack.c.l.b16 %v1864
          %v2354 = vunpack.c.h.b16 %v1864
          %v2355 = vunpack.c.l.b16 %v1865
          %v2356 = vunpack.c.h.b16 %v1865
          %v2357 = vunpack.c.l.b16 %v1866
          %v2358 = vunpack.c.h.b16 %v1866
          %v2359 = vunpack.c.l.b16 %v1867
          %v2360 = vunpack.c.h.b16 %v1867
          %v2361 = vunpack.c.l.b16 %v1868
          %v2362 = vunpack.c.h.b16 %v1868
          %v2363 = vunpack.c.l.b16 %v1869
          %v2364 = vunpack.c.h.b16 %v1869
          %v2365 = vunpack.c.l.b16 %v1870
          %v2366 = vunpack.c.h.b16 %v1870
          %v2367 = vunpack.c.l.b16 %v1871
          %v2368 = vunpack.c.h.b16 %v1871
          %v2369 = vunpack.c.l.b16 %v1872
          %v2370 = vunpack.c.h.b16 %v1872
          %v2371 = vunpack.c.l.b16 %v1873
          %v2372 = vunpack.c.h.b16 %v1873
          %v2373 = vunpack.c.l.b16 %v1874
          %v2374 = vunpack.c.h.b16 %v1874
          %v2375 = vunpack.c.l.b16 %v1875
          %v2376 = vunpack.c.h.b16 %v1875
          %v2377 = vunpack.c.l.b16 %v1876
          %v2378 = vunpack.c.h.b16 %v1876
          %v2379 = vunpack.c.l.b16 %v1877
          %v2380 = vunpack.c.h.b16 %v1877
          %v2381 = vunpack.c.l.b16 %v1878
          %v2382 = vunpack.c.h.b16 %v1878
          %v2383 = vunpack.c.l.b16 %v1879
          %v2384 = vunpack.c.h.b16 %v1879
          %v2385 = vunpack.c.l.b16 %v1880
          %v2386 = vunpack.c.h.b16 %v1880
          %v2387 = vunpack.c.l.b16 %v1881
          %v2388 = vunpack.c.h.b16 %v1881
          %v2389 = vunpack.c.l.b16 %v1882
          %v2390 = vunpack.c.h.b16 %v1882
          %v2391 = vunpack.c.l.b16 %v1883
          %v2392 = vunpack.c.h.b16 %v1883
          %v2393 = vunpack.c.l.b16 %v1884
          %v2394 = vunpack.c.h.b16 %v1884
          %v2395 = vunpack.c.l.b16 %v1885
          %v2396 = vunpack.c.h.b16 %v1885
          %v2397 = vunpack.c.l.b16 %v1886
          %v2398 = vunpack.c.h.b16 %v1886
          %v2399 = vunpack.c.l.b16 %v1887
          %v2400 = vunpack.c.h.b16 %v1887
          %v2401 = vunpack.c.l.b16 %v1888
          %v2402 = vunpack.c.h.b16 %v1888
          %v2403 = vunpack.c.l.b16 %v1889
          %v2404 = vunpack.c.h.b16 %v1889
          %v2405 = vunpack.c.l.b16 %v1890
          %v2406 = vunpack.c.h.b16 %v1890
          %v2407 = vunpack.c.l.b16 %v1891
          %v2408 = vunpack.c.h.b16 %v1891
          %v2409 = vunpack.c.l.b16 %v1892
          %v2410 = vunpack.c.h.b16 %v1892
          %v2411 = vunpack.c.l.b16 %v1893
          %v2412 = vunpack.c.h.b16 %v1893
          %v2413 = vunpack.c.l.b16 %v1894
          %v2414 = vunpack.c.h.b16 %v1894
          %v2415 = vunpack.c.l.b16 %v1895
          %v2416 = vunpack.c.h.b16 %v1895
          %v2417 = vunpack.c.l.b16 %v1896
          %v2418 = vunpack.c.h.b16 %v1896
          %v2419 = vunpack.c.l.b16 %v1897
          %v2420 = vunpack.c.h.b16 %v1897
          %v2421 = vunpack.c.l.b16 %v1898
          %v2422 = vunpack.c.h.b16 %v1898
          %v2423 = vunpack.c.l.b16 %v1899
          %v2424 = vunpack.c.h.b16 %v1899
          %v2425 = vunpack.c.l.b16 %v1900
          %v2426 = vunpack.c.h.b16 %v1900
          %v2427 = vunpack.c.l.b16 %v1901
          %v2428 = vunpack.c.h.b16 %v1901
          %v2429 = vunpack.c.l.b16 %v1902
          %v2430 = vunpack.c.h.b16 %v1902
          %v2431 = vunpack.c.l.b16 %v1903
          %v2432 = vunpack.c.h.b16 %v1903
          %v2433 = vunpack.c.l.b16 %v1904
          %v2434 = vunpack.c.h.b16 %v1904
          %v2435 = vunpack.c.l.b16 %v1905
          %v2436 = vunpack.c.h.b16 %v1905
          %v2437 = vunpack.c.l.b16 %v1906
          %v2438 = vunpack.c.h.b16 %v1906
          %v2439 = vunpack.c.l.b16 %v1907
          %v2440 = vunpack.c.h.b16 %v1907
          %v2441 = vunpack.c.l.b16 %v1908
          %v2442 = vunpack.c.h.b16 %v1908
          %v2443 = vunpack.c.l.b16 %v1909
          %v2444 = vunpack.c.h.b16 %v1909
          %v2445 = vunpack.c.l.b16 %v1910
          %v2446 = vunpack.c.h.b16 %v1910
          %v2447 = vunpack.c.l.b16 %v1911
          %v2448 = vunpack.c.h.b16 %v1911
          %v2449 = vunpack.c.l.b16 %v1912
          %v2450 = vunpack.c.h.b16 %v1912
          %v2451 = vunpack.c.l.b16 %v1913
          %v2452 = vunpack.c.h.b16 %v1913
          %v2453 = vunpack.c.l.b16 %v1914
          %v2454 = vunpack.c.h.b16 %v1914
          %v2455 = vunpack.c.l.b16 %v1915
          %v2456 = vunpack.c.h.b16 %v1915
          %v2457 = vunpack.c.l.b16 %v1916
          %v2458 = vunpack.c.h.b16 %v1916
          %v2459 = vunpack.c.l.b16 %v1917
          %v2460 = vunpack.c.h.b16 %v1917
          %v2461 = vunpack.c.l.b16 %v1918
          %v2462 = vunpack.c.h.b16 %v1918
          %v2463 = vunpack.c.l.b16 %v1919
          %v2464 = vunpack.c.h.b16 %v1919
          %v2465 = vunpack.c.l.b16 %v1920
          %v2466 = vunpack.c.h.b16 %v1920
          %v2467 = vunpack.c.l.b16 %v1921
          %v2468 = vunpack.c.h.b16 %v1921
          %v2469 = vunpack.c.l.b16 %v1922
          %v2470 = vunpack.c.h.b16 %v1922
          %v2471 = vunpack.c.l.b16 %v1923
          %v2472 = vunpack.c.h.b16 %v1923
          %v2473 = vunpack.c.l.b16 %v1924
          %v2474 = vunpack.c.h.b16 %v1924
          %v2475 = vunpack.c.l.b16 %v1925
          %v2476 = vunpack.c.h.b16 %v1925
          %v2477 = vunpack.c.l.b16 %v1926
          %v2478 = vunpack.c.h.b16 %v1926
          %v2479 = vunpack.c.l.b16 %v1927
          %v2480 = vunpack.c.h.b16 %v1927
          %v2481 = vunpack.c.l.b16 %v1928
          %v2482 = vunpack.c.h.b16 %v1928
          %v2483 = vunpack.c.l.b16 %v1929
          %v2484 = vunpack.c.h.b16 %v1929
          %v2485 = vunpack.c.l.b16 %v1930
          %v2486 = vunpack.c.h.b16 %v1930
          %v2487 = vunpack.c.l.b16 %v1931
          %v2488 = vunpack.c.h.b16 %v1931
          %v2489 = vunpack.c.l.b16 %v1932
          %v2490 = vunpack.c.h.b16 %v1932
          %v2491 = vunpack.c.l.b16 %v1933
          %v2492 = vunpack.c.h.b16 %v1933
          %v2493 = vunpack.c.l.b16 %v1934
          %v2494 = vunpack.c.h.b16 %v1934
          %v2495 = vunpack.c.l.b16 %v1935
          %v2496 = vunpack.c.h.b16 %v1935
          %v2497 = vunpack.c.l.b16 %v1936
          %v2498 = vunpack.c.h.b16 %v1936
          %v2499 = vunpack.c.l.b16 %v1937
          %v2500 = vunpack.c.h.b16 %v1937
          %v2501 = vunpack.c.l.b16 %v1938
          %v2502 = vunpack.c.h.b16 %v1938
          %v2503 = vunpack.c.l.b16 %v1939
          %v2504 = vunpack.c.h.b16 %v1939
          %v2505 = vunpack.c.l.b16 %v1940
          %v2506 = vunpack.c.h.b16 %v1940
          %v2507 = vunpack.c.l.b16 %v1941
          %v2508 = vunpack.c.h.b16 %v1941
          %v2509 = vunpack.c.l.b16 %v1942
          %v2510 = vunpack.c.h.b16 %v1942
          %v2511 = vunpack.c.l.b16 %v1943
          %v2512 = vunpack.c.h.b16 %v1943
          %v2513 = vunpack.c.l.b16 %v1944
          %v2514 = vunpack.c.h.b16 %v1944
          %v2515 = vunpack.c.l.b16 %v1945
          %v2516 = vunpack.c.h.b16 %v1945
          %v2517 = vunpack.c.l.b16 %v1946
          %v2518 = vunpack.c.h.b16 %v1946
          %v2519 = vunpack.c.l.b16 %v1947
          %v2520 = vunpack.c.h.b16 %v1947
          %v2521 = vunpack.c.l.b16 %v1948
          %v2522 = vunpack.c.h.b16 %v1948
          %v2523 = vunpack.c.l.b16 %v1949
          %v2524 = vunpack.c.h.b16 %v1949
          %v2525 = vunpack.c.l.b16 %v1950
          %v2526 = vunpack.c.h.b16 %v1950
          %v2527 = vpack.c.b16 %v2149, %v2143
          %v2528 = vpack.c.b16 %v2150, %v2144
          %v2529 = vpack.c.b16 %v2151, %v2145
          %v2530 = vpack.c.b16 %v2152, %v2146
          %v2531 = vpack.c.b16 %v2153, %v2147
          %v2532 = vpack.c.b16 %v2154, %v2148
          %v2533 = vpack.c.b16 %v2161, %v2155
          %v2534 = vpack.c.b16 %v2162, %v2156
          %v2535 = vpack.c.b16 %v2163, %v2157
          %v2536 = vpack.c.b16 %v2164, %v2158
          %v2537 = vpack.c.b16 %v2165, %v2159
          %v2538 = vpack.c.b16 %v2166, %v2160
          %v2539 = vpack.c.b16 %v2173, %v2167
          %v2540 = vpack.c.b16 %v2174, %v2168
          %v2541 = vpack.c.b16 %v2175, %v2169
          %v2542 = vpack.c.b16 %v2176, %v2170
          %v2543 = vpack.c.b16 %v2177, %v2171
          %v2544 = vpack.c.b16 %v2178, %v2172
          %v2545 = vpack.c.b16 %v2185, %v2179
          %v2546 = vpack.c.b16 %v2186, %v2180
          %v2547 = vpack.c.b16 %v2187, %v2181
          %v2548 = vpack.c.b16 %v2188, %v2182
          %v2549 = vpack.c.b16 %v2189, %v2183
          %v2550 = vpack.c.b16 %v2190, %v2184
          %v2551 = vpack.c.b16 %v2197, %v2191
          %v2552 = vpack.c.b16 %v2198, %v2192
          %v2553 = vpack.c.b16 %v2199, %v2193
          %v2554 = vpack.c.b16 %v2200, %v2194
          %v2555 = vpack.c.b16 %v2201, %v2195
          %v2556 = vpack.c.b16 %v2202, %v2196
          %v2557 = vpack.c.b16 %v2209, %v2203
          %v2558 = vpack.c.b16 %v2210, %v2204
          %v2559 = vpack.c.b16 %v2211, %v2205
          %v2560 = vpack.c.b16 %v2212, %v2206
          %v2561 = vpack.c.b16 %v2213, %v2207
          %v2562 = vpack.c.b16 %v2214, %v2208
          %v2563 = vpack.c.b16 %v2221, %v2215
          %v2564 = vpack.c.b16 %v2222, %v2216
          %v2565 = vpack.c.b16 %v2223, %v2217
          %v2566 = vpack.c.b16 %v2224, %v2218
          %v2567 = vpack.c.b16 %v2225, %v2219
          %v2568 = vpack.c.b16 %v2226, %v2220
          %v2569 = vpack.c.b16 %v2233, %v2227
          %v2570 = vpack.c.b16 %v2234, %v2228
          %v2571 = vpack.c.b16 %v2235, %v2229
          %v2572 = vpack.c.b16 %v2236, %v2230
          %v2573 = vpack.c.b16 %v2237, %v2231
          %v2574 = vpack.c.b16 %v2238, %v2232
          %v2575 = vpack.c.b16 %v2245, %v2239
          %v2576 = vpack.c.b16 %v2246, %v2240
          %v2577 = vpack.c.b16 %v2247, %v2241
          %v2578 = vpack.c.b16 %v2248, %v2242
          %v2579 = vpack.c.b16 %v2249, %v2243
          %v2580 = vpack.c.b16 %v2250, %v2244
          %v2581 = vpack.c.b16 %v2257, %v2251
          %v2582 = vpack.c.b16 %v2258, %v2252
          %v2583 = vpack.c.b16 %v2259, %v2253
          %v2584 = vpack.c.b16 %v2260, %v2254
          %v2585 = vpack.c.b16 %v2261, %v2255
          %v2586 = vpack.c.b16 %v2262, %v2256
          %v2587 = vpack.c.b16 %v2269, %v2263
          %v2588 = vpack.c.b16 %v2270, %v2264
          %v2589 = vpack.c.b16 %v2271, %v2265
          %v2590 = vpack.c.b16 %v2272, %v2266
          %v2591 = vpack.c.b16 %v2273, %v2267
          %v2592 = vpack.c.b16 %v2274, %v2268
          %v2593 = vpack.c.b16 %v2281, %v2275
          %v2594 = vpack.c.b16 %v2282, %v2276
          %v2595 = vpack.c.b16 %v2283, %v2277
          %v2596 = vpack.c.b16 %v2284, %v2278
          %v2597 = vpack.c.b16 %v2285, %v2279
          %v2598 = vpack.c.b16 %v2286, %v2280
          %v2599 = vpack.c.b16 %v2293, %v2287
          %v2600 = vpack.c.b16 %v2294, %v2288
          %v2601 = vpack.c.b16 %v2295, %v2289
          %v2602 = vpack.c.b16 %v2296, %v2290
          %v2603 = vpack.c.b16 %v2297, %v2291
          %v2604 = vpack.c.b16 %v2298, %v2292
          %v2605 = vpack.c.b16 %v2305, %v2299
          %v2606 = vpack.c.b16 %v2306, %v2300
          %v2607 = vpack.c.b16 %v2307, %v2301
          %v2608 = vpack.c.b16 %v2308, %v2302
          %v2609 = vpack.c.b16 %v2309, %v2303
          %v2610 = vpack.c.b16 %v2310, %v2304
          %v2611 = vpack.c.b16 %v2317, %v2311
          %v2612 = vpack.c.b16 %v2318, %v2312
          %v2613 = vpack.c.b16 %v2319, %v2313
          %v2614 = vpack.c.b16 %v2320, %v2314
          %v2615 = vpack.c.b16 %v2321, %v2315
          %v2616 = vpack.c.b16 %v2322, %v2316
          %v2617 = vpack.c.b16 %v2329, %v2323
          %v2618 = vpack.c.b16 %v2330, %v2324
          %v2619 = vpack.c.b16 %v2331, %v2325
          %v2620 = vpack.c.b16 %v2332, %v2326
          %v2621 = vpack.c.b16 %v2333, %v2327
          %v2622 = vpack.c.b16 %v2334, %v2328
          %v2623 = vpack.c.b16 %v2341, %v2335
          %v2624 = vpack.c.b16 %v2342, %v2336
          %v2625 = vpack.c.b16 %v2343, %v2337
          %v2626 = vpack.c.b16 %v2344, %v2338
          %v2627 = vpack.c.b16 %v2345, %v2339
          %v2628 = vpack.c.b16 %v2346, %v2340
          %v2629 = vpack.c.b16 %v2353, %v2347
          %v2630 = vpack.c.b16 %v2354, %v2348
          %v2631 = vpack.c.b16 %v2355, %v2349
          %v2632 = vpack.c.b16 %v2356, %v2350
          %v2633 = vpack.c.b16 %v2357, %v2351
          %v2634 = vpack.c.b16 %v2358, %v2352
          %v2635 = vpack.c.b16 %v2365, %v2359
          %v2636 = vpack.c.b16 %v2366, %v2360
          %v2637 = vpack.c.b16 %v2367, %v2361
          %v2638 = vpack.c.b16 %v2368, %v2362
          %v2639 = vpack.c.b16 %v2369, %v2363
          %v2640 = vpack.c.b16 %v2370, %v2364
          %v2641 = vpack.c.b16 %v2377, %v2371
          %v2642 = vpack.c.b16 %v2378, %v2372
          %v2643 = vpack.c.b16 %v2379, %v2373
          %v2644 = vpack.c.b16 %v2380, %v2374
          %v2645 = vpack.c.b16 %v2381, %v2375
          %v2646 = vpack.c.b16 %v2382, %v2376
          %v2647 = vpack.c.b16 %v2389, %v2383
          %v2648 = vpack.c.b16 %v2390, %v2384
          %v2649 = vpack.c.b16 %v2391, %v2385
          %v2650 = vpack.c.b16 %v2392, %v2386
          %v2651 = vpack.c.b16 %v2393, %v2387
          %v2652 = vpack.c.b16 %v2394, %v2388
          %v2653 = vpack.c.b16 %v2401, %v2395
          %v2654 = vpack.c.b16 %v2402, %v2396
          %v2655 = vpack.c.b16 %v2403, %v2397
          %v2656 = vpack.c.b16 %v2404, %v2398
          %v2657 = vpack.c.b16 %v2405, %v2399
          %v2658 = vpack.c.b16 %v2406, %v2400
          %v2659 = vpack.c.b16 %v2413, %v2407
          %v2660 = vpack.c.b16 %v2414, %v2408
          %v2661 = vpack.c.b16 %v2415, %v2409
          %v2662 = vpack.c.b16 %v2416, %v2410
          %v2663 = vpack.c.b16 %v2417, %v2411
          %v2664 = vpack.c.b16 %v2418, %v2412
          %v2665 = vpack.c.b16 %v2425, %v2419
          %v2666 = vpack.c.b16 %v2426, %v2420
          %v2667 = vpack.c.b16 %v2427, %v2421
          %v2668 = vpack.c.b16 %v2428, %v2422
          %v2669 = vpack.c.b16 %v2429, %v2423
          %v2670 = vpack.c.b16 %v2430, %v2424
          %v2671 = vpack.c.b16 %v2437, %v2431
          %v2672 = vpack.c.b16 %v2438, %v2432
          %v2673 = vpack.c.b16 %v2439, %v2433
          %v2674 = vpack.c.b16 %v2440, %v2434
          %v2675 = vpack.c.b16 %v2441, %v2435
          %v2676 = vpack.c.b16 %v2442, %v2436
          %v2677 = vpack.c.b16 %v2449, %v2443
          %v2678 = vpack.c.b16 %v2450, %v2444
          %v2679 = vpack.c.b16 %v2451, %v2445
          %v2680 = vpack.c.b16 %v2452, %v2446
          %v2681 = vpack.c.b16 %v2453, %v2447
          %v2682 = vpack.c.b16 %v2454, %v2448
          %v2683 = vpack.c.b16 %v2461, %v2455
          %v2684 = vpack.c.b16 %v2462, %v2456
          %v2685 = vpack.c.b16 %v2463, %v2457
          %v2686 = vpack.c.b16 %v2464, %v2458
          %v2687 = vpack.c.b16 %v2465, %v2459
          %v2688 = vpack.c.b16 %v2466, %v2460
          %v2689 = vpack.c.b16 %v2473, %v2467
          %v2690 = vpack.c.b16 %v2474, %v2468
          %v2691 = vpack.c.b16 %v2475, %v2469
          %v2692 = vpack.c.b16 %v2476, %v2470
          %v2693 = vpack.c.b16 %v2477, %v2471
          %v2694 = vpack.c.b16 %v2478, %v2472
          %v2695 = vpack.c.b16 %v2485, %v2479
          %v2696 = vpack.c.b16 %v2486, %v2480
          %v2697 = vpack.c.b16 %v2487, %v2481
          %v2698 = vpack.c.b16 %v2488, %v2482
          %v2699 = vpack.c.b16 %v2489, %v2483
          %v2700 = vpack.c.b16 %v2490, %v2484
          %v2701 = vpack.c.b16 %v2497, %v2491
          %v2702 = vpack.c.b16 %v2498, %v2492
          %v2703 = vpack.c.b16 %v2499, %v2493
          %v2704 = vpack.c.b16 %v2500, %v2494
          %v2705 = vpack.c.b16 %v2501, %v2495
          %v2706 = vpack.c.b16 %v2502, %v2496
          %v2707 = vpack.c.b16 %v2509, %v2503
          %v2708 = vpack.c.b16 %v2510, %v2504
          %v2709 = vpack.c.b16 %v2511, %v2505
          %v2710 = vpack.c.b16 %v2512, %v2506
          %v2711 = vpack.c.b16 %v2513, %v2507
          %v2712 = vpack.c.b16 %v2514, %v2508
          %v2713 = vpack.c.b16 %v2521, %v2515
          %v2714 = vpack.c.b16 %v2522, %v2516
          %v2715 = vpack.c.b16 %v2523, %v2517
          %v2716 = vpack.c.b16 %v2524, %v2518
          %v2717 = vpack.c.b16 %v2525, %v2519
          %v2718 = vpack.c.b16 %v2526, %v2520
          %2911 = vmatprep.subr.bf16.mxu0 %v2570
          %2912 = vmatpush1.bf16.xpose.msra.mxu0 %v2569
          %2913 = vmatprep.subr.bf16.mxu0 %v2564
          %2914 = vmatpush1.bf16.xpose.msra.mxu0 %v2563
          %2915 = vmatprep.subr.bf16.mxu0 %v2558
          %2916 = vmatpush1.bf16.xpose.msra.mxu0 %v2557
          %2917 = vmatprep.subr.bf16.mxu0 %v2552
          %2918 = vmatpush1.bf16.xpose.msra.mxu0 %v2551
          %2919 = vmatprep.subr.bf16.mxu0 %v2546
          %2920 = vmatpush1.bf16.xpose.msra.mxu0 %v2545
          %2921 = vmatprep.subr.bf16.mxu0 %v2540
          %2922 = vmatpush1.bf16.xpose.msra.mxu0 %v2539
          %2923 = vmatprep.subr.bf16.mxu0 %v2534
          %2924 = vmatpush1.bf16.xpose.msra.mxu0 %v2533
          %2925 = vmatprep.subr.bf16.mxu0 %v2528
          %2926 = vmatpush1.bf16.xpose.msra.mxu0 %v2527
          %2927 = vmatprep.subr.bf16.mxu0 %v2618
          %2928 = vmatpush2.bf16.xpose.msra.mxu0 %v2617
          %2929 = vmatprep.subr.bf16.mxu0 %v2612
          %2930 = vmatpush2.bf16.xpose.msra.mxu0 %v2611
          %2931 = vmatprep.subr.bf16.mxu0 %v2606
          %2932 = vmatpush2.bf16.xpose.msra.mxu0 %v2605
          %2933 = vmatprep.subr.bf16.mxu0 %v2600
          %2934 = vmatpush2.bf16.xpose.msra.mxu0 %v2599
          %2935 = vmatprep.subr.bf16.mxu0 %v2594
          %2936 = vmatpush2.bf16.xpose.msra.mxu0 %v2593
          %2937 = vmatprep.subr.bf16.mxu0 %v2588
          %2938 = vmatpush2.bf16.xpose.msra.mxu0 %v2587
          %2939 = vmatprep.subr.bf16.mxu0 %v2582
          %2940 = vmatpush2.bf16.xpose.msra.mxu0 %v2581
          %2941 = vmatprep.subr.bf16.mxu0 %v2576
          %2942 = vmatpush2.bf16.xpose.msra.mxu0 %v2575
          %2943 = vmatprep.mubr.bf16.mxu0 %v517
          %2944 = vmatmul.mubr.bf16.gmra.mxu0 %v516
          %v2945 = vpop.f32.mrf.mxu0
          %v2946 = vadd.f32 %v491, %v2945
          %v2947 = vpop.f32.mrf.mxu0
          %v2948 = vadd.f32 %v491, %v2947
          %v2949 = vpop.f32.mrf.mxu0
          %v2950 = vadd.f32 %v496, %v2949
          %v2951 = vpop.f32.mrf.mxu0
          %v2952 = vadd.f32 %v496, %v2951
          %2953 = vdwg.mxu0
          %2954 = vmatprep.subr.bf16.mxu0 %v2572
          %2955 = vmatpush1.bf16.xpose.msra.mxu0 %v2571
          %2956 = vmatprep.subr.bf16.mxu0 %v2566
          %2957 = vmatpush1.bf16.xpose.msra.mxu0 %v2565
          %2958 = vmatprep.subr.bf16.mxu0 %v2560
          %2959 = vmatpush1.bf16.xpose.msra.mxu0 %v2559
          %2960 = vmatprep.subr.bf16.mxu0 %v2554
          %2961 = vmatpush1.bf16.xpose.msra.mxu0 %v2553
          %2962 = vmatprep.subr.bf16.mxu0 %v2548
          %2963 = vmatpush1.bf16.xpose.msra.mxu0 %v2547
          %2964 = vmatprep.subr.bf16.mxu0 %v2542
          %2965 = vmatpush1.bf16.xpose.msra.mxu0 %v2541
          %2966 = vmatprep.subr.bf16.mxu0 %v2536
          %2967 = vmatpush1.bf16.xpose.msra.mxu0 %v2535
          %2968 = vmatprep.subr.bf16.mxu0 %v2530
          %2969 = vmatpush1.bf16.xpose.msra.mxu0 %v2529
          %2970 = vmatprep.subr.bf16.mxu0 %v2620
          %2971 = vmatpush2.bf16.xpose.msra.mxu0 %v2619
          %2972 = vmatprep.subr.bf16.mxu0 %v2614
          %2973 = vmatpush2.bf16.xpose.msra.mxu0 %v2613
          %2974 = vmatprep.subr.bf16.mxu0 %v2608
          %2975 = vmatpush2.bf16.xpose.msra.mxu0 %v2607
          %2976 = vmatprep.subr.bf16.mxu0 %v2602
          %2977 = vmatpush2.bf16.xpose.msra.mxu0 %v2601
          %2978 = vmatprep.subr.bf16.mxu0 %v2596
          %2979 = vmatpush2.bf16.xpose.msra.mxu0 %v2595
          %2980 = vmatprep.subr.bf16.mxu0 %v2590
          %2981 = vmatpush2.bf16.xpose.msra.mxu0 %v2589
          %2982 = vmatprep.subr.bf16.mxu0 %v2584
          %2983 = vmatpush2.bf16.xpose.msra.mxu0 %v2583
          %2984 = vmatprep.subr.bf16.mxu0 %v2578
          %2985 = vmatpush2.bf16.xpose.msra.mxu0 %v2577
          %2986 = vmatprep.mubr.bf16.mxu0 %v519
          %2987 = vmatmul.mubr.bf16.gmra.mxu0 %v518
          %v2988 = vpop.f32.mrf.mxu0
          %v2989 = vadd.f32 %v2946, %v2988
          %v2990 = vpop.f32.mrf.mxu0
          %v2991 = vadd.f32 %v2948, %v2990
          %v2992 = vpop.f32.mrf.mxu0
          %v2993 = vadd.f32 %v2950, %v2992
          %v2994 = vpop.f32.mrf.mxu0
          %v2995 = vadd.f32 %v2952, %v2994
          %2996 = vdwg.mxu0
          %2997 = vmatprep.subr.bf16.mxu0 %v2574
          %2998 = vmatpush1.bf16.xpose.msra.mxu0 %v2573
          %2999 = vmatprep.subr.bf16.mxu0 %v2568
          %3000 = vmatpush1.bf16.xpose.msra.mxu0 %v2567
          %3001 = vmatprep.subr.bf16.mxu0 %v2562
          %3002 = vmatpush1.bf16.xpose.msra.mxu0 %v2561
          %3003 = vmatprep.subr.bf16.mxu0 %v2556
          %3004 = vmatpush1.bf16.xpose.msra.mxu0 %v2555
          %3005 = vmatprep.subr.bf16.mxu0 %v2550
          %3006 = vmatpush1.bf16.xpose.msra.mxu0 %v2549
          %3007 = vmatprep.subr.bf16.mxu0 %v2544
          %3008 = vmatpush1.bf16.xpose.msra.mxu0 %v2543
          %3009 = vmatprep.subr.bf16.mxu0 %v2538
          %3010 = vmatpush1.bf16.xpose.msra.mxu0 %v2537
          %3011 = vmatprep.subr.bf16.mxu0 %v2532
          %3012 = vmatpush1.bf16.xpose.msra.mxu0 %v2531
          %3013 = vmatprep.subr.bf16.mxu0 %v2622
          %3014 = vmatpush2.bf16.xpose.msra.mxu0 %v2621
          %3015 = vmatprep.subr.bf16.mxu0 %v2616
          %3016 = vmatpush2.bf16.xpose.msra.mxu0 %v2615
          %3017 = vmatprep.subr.bf16.mxu0 %v2610
          %3018 = vmatpush2.bf16.xpose.msra.mxu0 %v2609
          %3019 = vmatprep.subr.bf16.mxu0 %v2604
          %3020 = vmatpush2.bf16.xpose.msra.mxu0 %v2603
          %3021 = vmatprep.subr.bf16.mxu0 %v2598
          %3022 = vmatpush2.bf16.xpose.msra.mxu0 %v2597
          %3023 = vmatprep.subr.bf16.mxu0 %v2592
          %3024 = vmatpush2.bf16.xpose.msra.mxu0 %v2591
          %3025 = vmatprep.subr.bf16.mxu0 %v2586
          %3026 = vmatpush2.bf16.xpose.msra.mxu0 %v2585
          %3027 = vmatprep.subr.bf16.mxu0 %v2580
          %3028 = vmatpush2.bf16.xpose.msra.mxu0 %v2579
          %3029 = vmatprep.mubr.bf16.mxu0 %v521
          %3030 = vmatmul.mubr.bf16.gmra.mxu0 %v520
          %v3031 = vpop.f32.mrf.mxu0
          %v3032 = vadd.f32 %v2989, %v3031
          %v3033 = vpop.f32.mrf.mxu0
          %v3034 = vadd.f32 %v2991, %v3033
          %v3035 = vpop.f32.mrf.mxu0
          %v3036 = vadd.f32 %v2993, %v3035
          %v3037 = vpop.f32.mrf.mxu0
          %v3038 = vadd.f32 %v2995, %v3037
          %3039 = vdwg.mxu0
          %3040 = vmatprep.subr.bf16.mxu0 %v2666
          %3041 = vmatpush1.bf16.xpose.msra.mxu0 %v2665
          %3042 = vmatprep.subr.bf16.mxu0 %v2660
          %3043 = vmatpush1.bf16.xpose.msra.mxu0 %v2659
          %3044 = vmatprep.subr.bf16.mxu0 %v2654
          %3045 = vmatpush1.bf16.xpose.msra.mxu0 %v2653
          %3046 = vmatprep.subr.bf16.mxu0 %v2648
          %3047 = vmatpush1.bf16.xpose.msra.mxu0 %v2647
          %3048 = vmatprep.subr.bf16.mxu0 %v2642
          %3049 = vmatpush1.bf16.xpose.msra.mxu0 %v2641
          %3050 = vmatprep.subr.bf16.mxu0 %v2636
          %3051 = vmatpush1.bf16.xpose.msra.mxu0 %v2635
          %3052 = vmatprep.subr.bf16.mxu0 %v2630
          %3053 = vmatpush1.bf16.xpose.msra.mxu0 %v2629
          %3054 = vmatprep.subr.bf16.mxu0 %v2624
          %3055 = vmatpush1.bf16.xpose.msra.mxu0 %v2623
          %3056 = vmatprep.subr.bf16.mxu0 %v2714
          %3057 = vmatpush2.bf16.xpose.msra.mxu0 %v2713
          %3058 = vmatprep.subr.bf16.mxu0 %v2708
          %3059 = vmatpush2.bf16.xpose.msra.mxu0 %v2707
          %3060 = vmatprep.subr.bf16.mxu0 %v2702
          %3061 = vmatpush2.bf16.xpose.msra.mxu0 %v2701
          %3062 = vmatprep.subr.bf16.mxu0 %v2696
          %3063 = vmatpush2.bf16.xpose.msra.mxu0 %v2695
          %3064 = vmatprep.subr.bf16.mxu0 %v2690
          %3065 = vmatpush2.bf16.xpose.msra.mxu0 %v2689
          %3066 = vmatprep.subr.bf16.mxu0 %v2684
          %3067 = vmatpush2.bf16.xpose.msra.mxu0 %v2683
          %3068 = vmatprep.subr.bf16.mxu0 %v2678
          %3069 = vmatpush2.bf16.xpose.msra.mxu0 %v2677
          %3070 = vmatprep.subr.bf16.mxu0 %v2672
          %3071 = vmatpush2.bf16.xpose.msra.mxu0 %v2671
          %3072 = vmatprep.mubr.bf16.mxu0 %v517
          %3073 = vmatmul.mubr.bf16.gmra.mxu0 %v516
          %v3074 = vpop.f32.mrf.mxu0
          %v3075 = vadd.f32 %v491, %v3074
          %v3076 = vpop.f32.mrf.mxu0
          %v3077 = vadd.f32 %v491, %v3076
          %v3078 = vpop.f32.mrf.mxu0
          %v3079 = vadd.f32 %v496, %v3078
          %v3080 = vpop.f32.mrf.mxu0
          %v3081 = vadd.f32 %v496, %v3080
          %3082 = vdwg.mxu0
          %3083 = vmatprep.subr.bf16.mxu0 %v2668
          %3084 = vmatpush1.bf16.xpose.msra.mxu0 %v2667
          %3085 = vmatprep.subr.bf16.mxu0 %v2662
          %3086 = vmatpush1.bf16.xpose.msra.mxu0 %v2661
          %3087 = vmatprep.subr.bf16.mxu0 %v2656
          %3088 = vmatpush1.bf16.xpose.msra.mxu0 %v2655
          %3089 = vmatprep.subr.bf16.mxu0 %v2650
          %3090 = vmatpush1.bf16.xpose.msra.mxu0 %v2649
          %3091 = vmatprep.subr.bf16.mxu0 %v2644
          %3092 = vmatpush1.bf16.xpose.msra.mxu0 %v2643
          %3093 = vmatprep.subr.bf16.mxu0 %v2638
          %3094 = vmatpush1.bf16.xpose.msra.mxu0 %v2637
          %3095 = vmatprep.subr.bf16.mxu0 %v2632
          %3096 = vmatpush1.bf16.xpose.msra.mxu0 %v2631
          %3097 = vmatprep.subr.bf16.mxu0 %v2626
          %3098 = vmatpush1.bf16.xpose.msra.mxu0 %v2625
          %3099 = vmatprep.subr.bf16.mxu0 %v2716
          %3100 = vmatpush2.bf16.xpose.msra.mxu0 %v2715
          %3101 = vmatprep.subr.bf16.mxu0 %v2710
          %3102 = vmatpush2.bf16.xpose.msra.mxu0 %v2709
          %3103 = vmatprep.subr.bf16.mxu0 %v2704
          %3104 = vmatpush2.bf16.xpose.msra.mxu0 %v2703
          %3105 = vmatprep.subr.bf16.mxu0 %v2698
          %3106 = vmatpush2.bf16.xpose.msra.mxu0 %v2697
          %3107 = vmatprep.subr.bf16.mxu0 %v2692
          %3108 = vmatpush2.bf16.xpose.msra.mxu0 %v2691
          %3109 = vmatprep.subr.bf16.mxu0 %v2686
          %3110 = vmatpush2.bf16.xpose.msra.mxu0 %v2685
          %3111 = vmatprep.subr.bf16.mxu0 %v2680
          %3112 = vmatpush2.bf16.xpose.msra.mxu0 %v2679
          %3113 = vmatprep.subr.bf16.mxu0 %v2674
          %3114 = vmatpush2.bf16.xpose.msra.mxu0 %v2673
          %3115 = vmatprep.mubr.bf16.mxu0 %v519
          %3116 = vmatmul.mubr.bf16.gmra.mxu0 %v518
          %v3117 = vpop.f32.mrf.mxu0
          %v3118 = vadd.f32 %v3075, %v3117
          %v3119 = vpop.f32.mrf.mxu0
          %v3120 = vadd.f32 %v3077, %v3119
          %v3121 = vpop.f32.mrf.mxu0
          %v3122 = vadd.f32 %v3079, %v3121
          %v3123 = vpop.f32.mrf.mxu0
          %v3124 = vadd.f32 %v3081, %v3123
          %3125 = vdwg.mxu0
          %3126 = vmatprep.subr.bf16.mxu0 %v2670
          %3127 = vmatpush1.bf16.xpose.msra.mxu0 %v2669
          %3128 = vmatprep.subr.bf16.mxu0 %v2664
          %3129 = vmatpush1.bf16.xpose.msra.mxu0 %v2663
          %3130 = vmatprep.subr.bf16.mxu0 %v2658
          %3131 = vmatpush1.bf16.xpose.msra.mxu0 %v2657
          %3132 = vmatprep.subr.bf16.mxu0 %v2652
          %3133 = vmatpush1.bf16.xpose.msra.mxu0 %v2651
          %3134 = vmatprep.subr.bf16.mxu0 %v2646
          %3135 = vmatpush1.bf16.xpose.msra.mxu0 %v2645
          %3136 = vmatprep.subr.bf16.mxu0 %v2640
          %3137 = vmatpush1.bf16.xpose.msra.mxu0 %v2639
          %3138 = vmatprep.subr.bf16.mxu0 %v2634
          %3139 = vmatpush1.bf16.xpose.msra.mxu0 %v2633
          %3140 = vmatprep.subr.bf16.mxu0 %v2628
          %3141 = vmatpush1.bf16.xpose.msra.mxu0 %v2627
          %3142 = vmatprep.subr.bf16.mxu0 %v2718
          %3143 = vmatpush2.bf16.xpose.msra.mxu0 %v2717
          %3144 = vmatprep.subr.bf16.mxu0 %v2712
          %3145 = vmatpush2.bf16.xpose.msra.mxu0 %v2711
          %3146 = vmatprep.subr.bf16.mxu0 %v2706
          %3147 = vmatpush2.bf16.xpose.msra.mxu0 %v2705
          %3148 = vmatprep.subr.bf16.mxu0 %v2700
          %3149 = vmatpush2.bf16.xpose.msra.mxu0 %v2699
          %3150 = vmatprep.subr.bf16.mxu0 %v2694
          %3151 = vmatpush2.bf16.xpose.msra.mxu0 %v2693
          %3152 = vmatprep.subr.bf16.mxu0 %v2688
          %3153 = vmatpush2.bf16.xpose.msra.mxu0 %v2687
          %3154 = vmatprep.subr.bf16.mxu0 %v2682
          %3155 = vmatpush2.bf16.xpose.msra.mxu0 %v2681
          %3156 = vmatprep.subr.bf16.mxu0 %v2676
          %3157 = vmatpush2.bf16.xpose.msra.mxu0 %v2675
          %3158 = vmatprep.mubr.bf16.mxu0 %v521
          %3159 = vmatmul.mubr.bf16.gmra.mxu0 %v520
          %v3160 = vpop.f32.mrf.mxu0
          %v3161 = vadd.f32 %v3118, %v3160
          %v3162 = vpop.f32.mrf.mxu0
          %v3163 = vadd.f32 %v3120, %v3162
          %v3164 = vpop.f32.mrf.mxu0
          %v3165 = vadd.f32 %v3122, %v3164
          %v3166 = vpop.f32.mrf.mxu0
          %v3167 = vadd.f32 %v3124, %v3166
          %3168 = vdwg.mxu0
          %v3169 = vmax.f32 %v3032, 0.0
          %v3170 = vmax.f32 %v3034, 0.0
          %v3171 = vmax.f32 %v3161, 0.0
          %v3172 = vmax.f32 %v3163, 0.0
          %v3173 = vmax.f32 %v3036, 0.0
          %v3174 = vmax.f32 %v3038, 0.0
          %v3175 = vmax.f32 %v3165, 0.0
          %v3176 = vmax.f32 %v3167, 0.0
          %v3177 = vpack.c.bf16 %v3173, %v3169
          %v3178 = vpack.c.bf16 %v3174, %v3170
          %v3179 = vpack.c.bf16 %v3175, %v3171
          %v3180 = vpack.c.bf16 %v3176, %v3172
          %v3185 = vcombine.low %v1754, %v1755
          %v3186 = vcombine.high %v1754, %v1755
          %v3187 = vcombine.low %v1756, %v1757
          %v3188 = vcombine.high %v1756, %v1757
          %v3190 = vunpack.c.l.s4 1966171168
          %v3191 = vunpack.c.0.s8 %v3190
          %v3192 = vlaneseq
          %v3193 = vshrl.u32 %v3192, 7
          %v3194 = vsub.s32 %v3191, %v3193
          %v3195 = vrot.slane %v3185, %v3194
          %v3197 = vunpack.c.l.s4 1966171168
          %v3198 = vunpack.c.0.s8 %v3197
          %v3199 = vlaneseq
          %v3200 = vshrl.u32 %v3199, 7
          %v3201 = vsub.s32 %v3198, %v3200
          %v3202 = vrot.slane %v3186, %v3201
          %v3204 = vunpack.c.l.s4 1966171168
          %v3205 = vunpack.c.0.s8 %v3204
          %v3206 = vlaneseq
          %v3207 = vshrl.u32 %v3206, 7
          %v3208 = vsub.s32 %v3205, %v3207
          %v3209 = vrot.slane %v3187, %v3208
          %v3211 = vunpack.c.l.s4 1966171168
          %v3212 = vunpack.c.0.s8 %v3211
          %v3213 = vlaneseq
          %v3214 = vshrl.u32 %v3213, 7
          %v3215 = vsub.s32 %v3212, %v3214
          %v3216 = vrot.slane %v3188, %v3215
          %v3217 = vcombine.low %v3195, %v3209
          %v3218 = vcombine.high %v3195, %v3209
          %v3219 = vcombine.low %v3202, %v3216
          %v3220 = vcombine.high %v3202, %v3216
          %v3222 = vunpack.c.l.s4 1966171168
          %v3223 = vunpack.c.0.s8 %v3222
          %v3224 = vlaneseq
          %v3225 = vshrl.u32 %v3224, 7
          %v3226 = vsub.s32 %v3223, %v3225
          %v3227 = vrot.slane %v3217, %v3226
          %v3229 = vunpack.c.l.s4 1966171168
          %v3230 = vunpack.c.0.s8 %v3229
          %v3231 = vlaneseq
          %v3232 = vshrl.u32 %v3231, 7
          %v3233 = vsub.s32 %v3230, %v3232
          %v3234 = vrot.slane %v3219, %v3233
          %v3236 = vunpack.c.l.s4 1966171168
          %v3237 = vunpack.c.0.s8 %v3236
          %v3238 = vlaneseq
          %v3239 = vshrl.u32 %v3238, 7
          %v3240 = vsub.s32 %v3237, %v3239
          %v3241 = vrot.slane %v3218, %v3240
          %v3243 = vunpack.c.l.s4 1966171168
          %v3244 = vunpack.c.0.s8 %v3243
          %v3245 = vlaneseq
          %v3246 = vshrl.u32 %v3245, 7
          %v3247 = vsub.s32 %v3244, %v3246
          %v3248 = vrot.slane %v3220, %v3247
          %v3249 = vcombine.high %v3227, %v3227
          %v3250 = vcombine.high %v3234, %v3234
          %v3251 = vcombine.high %v3241, %v3241
          %v3252 = vcombine.high %v3248, %v3248
          %v3253 = vunpack.i.l.s16 %v3227
          %v3254 = vunpack.i.h.s16 %v3227
          %v3255 = vunpack.i.l.s16 %v3241
          %v3256 = vunpack.i.h.s16 %v3241
          %v3257 = vunpack.i.l.s16 %v3249
          %v3258 = vunpack.i.h.s16 %v3249
          %v3259 = vunpack.i.l.s16 %v3251
          %v3260 = vunpack.i.h.s16 %v3251
          %v3261 = vunpack.i.l.s16 %v3234
          %v3262 = vunpack.i.h.s16 %v3234
          %v3263 = vunpack.i.l.s16 %v3248
          %v3264 = vunpack.i.h.s16 %v3248
          %v3265 = vunpack.i.l.s16 %v3250
          %v3266 = vunpack.i.h.s16 %v3250
          %v3267 = vunpack.i.l.s16 %v3252
          %v3268 = vunpack.i.h.s16 %v3252
          %v3273 = vcombine.low %v3177, %v3178
          %v3274 = vcombine.high %v3177, %v3178
          %v3275 = vcombine.low %v3179, %v3180
          %v3276 = vcombine.high %v3179, %v3180
          %v3278 = vunpack.c.l.s4 1966171168
          %v3279 = vunpack.c.0.s8 %v3278
          %v3280 = vlaneseq
          %v3281 = vshrl.u32 %v3280, 7
          %v3282 = vsub.s32 %v3279, %v3281
          %v3283 = vrot.slane %v3273, %v3282
          %v3285 = vunpack.c.l.s4 1966171168
          %v3286 = vunpack.c.0.s8 %v3285
          %v3287 = vlaneseq
          %v3288 = vshrl.u32 %v3287, 7
          %v3289 = vsub.s32 %v3286, %v3288
          %v3290 = vrot.slane %v3274, %v3289
          %v3292 = vunpack.c.l.s4 1966171168
          %v3293 = vunpack.c.0.s8 %v3292
          %v3294 = vlaneseq
          %v3295 = vshrl.u32 %v3294, 7
          %v3296 = vsub.s32 %v3293, %v3295
          %v3297 = vrot.slane %v3275, %v3296
          %v3299 = vunpack.c.l.s4 1966171168
          %v3300 = vunpack.c.0.s8 %v3299
          %v3301 = vlaneseq
          %v3302 = vshrl.u32 %v3301, 7
          %v3303 = vsub.s32 %v3300, %v3302
          %v3304 = vrot.slane %v3276, %v3303
          %v3305 = vcombine.low %v3283, %v3297
          %v3306 = vcombine.high %v3283, %v3297
          %v3307 = vcombine.low %v3290, %v3304
          %v3308 = vcombine.high %v3290, %v3304
          %v3310 = vunpack.c.l.s4 1966171168
          %v3311 = vunpack.c.0.s8 %v3310
          %v3312 = vlaneseq
          %v3313 = vshrl.u32 %v3312, 7
          %v3314 = vsub.s32 %v3311, %v3313
          %v3315 = vrot.slane %v3305, %v3314
          %v3317 = vunpack.c.l.s4 1966171168
          %v3318 = vunpack.c.0.s8 %v3317
          %v3319 = vlaneseq
          %v3320 = vshrl.u32 %v3319, 7
          %v3321 = vsub.s32 %v3318, %v3320
          %v3322 = vrot.slane %v3307, %v3321
          %v3324 = vunpack.c.l.s4 1966171168
          %v3325 = vunpack.c.0.s8 %v3324
          %v3326 = vlaneseq
          %v3327 = vshrl.u32 %v3326, 7
          %v3328 = vsub.s32 %v3325, %v3327
          %v3329 = vrot.slane %v3306, %v3328
          %v3331 = vunpack.c.l.s4 1966171168
          %v3332 = vunpack.c.0.s8 %v3331
          %v3333 = vlaneseq
          %v3334 = vshrl.u32 %v3333, 7
          %v3335 = vsub.s32 %v3332, %v3334
          %v3336 = vrot.slane %v3308, %v3335
          %v3337 = vcombine.high %v3315, %v3315
          %v3338 = vcombine.high %v3322, %v3322
          %v3339 = vcombine.high %v3329, %v3329
          %v3340 = vcombine.high %v3336, %v3336
          %v3341 = vunpack.i.l.s16 %v3315
          %v3342 = vunpack.i.h.s16 %v3315
          %v3343 = vunpack.i.l.s16 %v3329
          %v3344 = vunpack.i.h.s16 %v3329
          %v3345 = vunpack.i.l.s16 %v3337
          %v3346 = vunpack.i.h.s16 %v3337
          %v3347 = vunpack.i.l.s16 %v3339
          %v3348 = vunpack.i.h.s16 %v3339
          %v3349 = vunpack.i.l.s16 %v3322
          %v3350 = vunpack.i.h.s16 %v3322
          %v3351 = vunpack.i.l.s16 %v3336
          %v3352 = vunpack.i.h.s16 %v3336
          %v3353 = vunpack.i.l.s16 %v3338
          %v3354 = vunpack.i.h.s16 %v3338
          %v3355 = vunpack.i.l.s16 %v3340
          %v3356 = vunpack.i.h.s16 %v3340
          %v3357 = vpack.i.b16 %v3253, %v3253
          %v3358 = vpack.i.b16 %v3254, %v3254
          %v3359 = vpack.i.b16 %v3255, %v3255
          %v3360 = vpack.i.b16 %v3256, %v3256
          %v3361 = vpack.i.b16 %v3257, %v3257
          %v3362 = vpack.i.b16 %v3258, %v3258
          %v3363 = vpack.i.b16 %v3259, %v3259
          %v3364 = vpack.i.b16 %v3260, %v3260
          %v3365 = vpack.i.b16 %v3261, %v3261
          %v3366 = vpack.i.b16 %v3262, %v3262
          %v3367 = vpack.i.b16 %v3263, %v3263
          %v3368 = vpack.i.b16 %v3264, %v3264
          %v3369 = vpack.i.b16 %v3265, %v3265
          %v3370 = vpack.i.b16 %v3266, %v3266
          %v3371 = vpack.i.b16 %v3267, %v3267
          %v3372 = vpack.i.b16 %v3268, %v3268
          %v3373 = vlaneseq
          %v3374 = vshrl.u32 %v3373, 7
          %v3375 = vsub.s32 0, %v3374
          %v3376 = vrot.slane %v3357, %v3375
          %v3377 = vlaneseq
          %v3378 = vshrl.u32 %v3377, 7
          %v3379 = vsub.s32 1, %v3378
          %v3380 = vrot.slane %v3357, %v3379
          %v3381 = vlaneseq
          %v3382 = vshrl.u32 %v3381, 7
          %v3383 = vsub.s32 2, %v3382
          %v3384 = vrot.slane %v3357, %v3383
          %v3385 = vlaneseq
          %v3386 = vshrl.u32 %v3385, 7
          %v3387 = vsub.s32 3, %v3386
          %v3388 = vrot.slane %v3357, %v3387
          %v3389 = vlaneseq
          %v3390 = vshrl.u32 %v3389, 7
          %v3391 = vsub.s32 0, %v3390
          %v3392 = vrot.slane %v3358, %v3391
          %v3393 = vlaneseq
          %v3394 = vshrl.u32 %v3393, 7
          %v3395 = vsub.s32 1, %v3394
          %v3396 = vrot.slane %v3358, %v3395
          %v3397 = vlaneseq
          %v3398 = vshrl.u32 %v3397, 7
          %v3399 = vsub.s32 2, %v3398
          %v3400 = vrot.slane %v3358, %v3399
          %v3401 = vlaneseq
          %v3402 = vshrl.u32 %v3401, 7
          %v3403 = vsub.s32 3, %v3402
          %v3404 = vrot.slane %v3358, %v3403
          %v3405 = vlaneseq
          %v3406 = vshrl.u32 %v3405, 7
          %v3407 = vsub.s32 0, %v3406
          %v3408 = vrot.slane %v3359, %v3407
          %v3409 = vlaneseq
          %v3410 = vshrl.u32 %v3409, 7
          %v3411 = vsub.s32 1, %v3410
          %v3412 = vrot.slane %v3359, %v3411
          %v3413 = vlaneseq
          %v3414 = vshrl.u32 %v3413, 7
          %v3415 = vsub.s32 2, %v3414
          %v3416 = vrot.slane %v3359, %v3415
          %v3417 = vlaneseq
          %v3418 = vshrl.u32 %v3417, 7
          %v3419 = vsub.s32 3, %v3418
          %v3420 = vrot.slane %v3359, %v3419
          %v3421 = vlaneseq
          %v3422 = vshrl.u32 %v3421, 7
          %v3423 = vsub.s32 0, %v3422
          %v3424 = vrot.slane %v3360, %v3423
          %v3425 = vlaneseq
          %v3426 = vshrl.u32 %v3425, 7
          %v3427 = vsub.s32 1, %v3426
          %v3428 = vrot.slane %v3360, %v3427
          %v3429 = vlaneseq
          %v3430 = vshrl.u32 %v3429, 7
          %v3431 = vsub.s32 2, %v3430
          %v3432 = vrot.slane %v3360, %v3431
          %v3433 = vlaneseq
          %v3434 = vshrl.u32 %v3433, 7
          %v3435 = vsub.s32 3, %v3434
          %v3436 = vrot.slane %v3360, %v3435
          %v3437 = vlaneseq
          %v3438 = vshrl.u32 %v3437, 7
          %v3439 = vsub.s32 0, %v3438
          %v3440 = vrot.slane %v3361, %v3439
          %v3441 = vlaneseq
          %v3442 = vshrl.u32 %v3441, 7
          %v3443 = vsub.s32 1, %v3442
          %v3444 = vrot.slane %v3361, %v3443
          %v3445 = vlaneseq
          %v3446 = vshrl.u32 %v3445, 7
          %v3447 = vsub.s32 2, %v3446
          %v3448 = vrot.slane %v3361, %v3447
          %v3449 = vlaneseq
          %v3450 = vshrl.u32 %v3449, 7
          %v3451 = vsub.s32 3, %v3450
          %v3452 = vrot.slane %v3361, %v3451
          %v3453 = vlaneseq
          %v3454 = vshrl.u32 %v3453, 7
          %v3455 = vsub.s32 0, %v3454
          %v3456 = vrot.slane %v3362, %v3455
          %v3457 = vlaneseq
          %v3458 = vshrl.u32 %v3457, 7
          %v3459 = vsub.s32 1, %v3458
          %v3460 = vrot.slane %v3362, %v3459
          %v3461 = vlaneseq
          %v3462 = vshrl.u32 %v3461, 7
          %v3463 = vsub.s32 2, %v3462
          %v3464 = vrot.slane %v3362, %v3463
          %v3465 = vlaneseq
          %v3466 = vshrl.u32 %v3465, 7
          %v3467 = vsub.s32 3, %v3466
          %v3468 = vrot.slane %v3362, %v3467
          %v3469 = vlaneseq
          %v3470 = vshrl.u32 %v3469, 7
          %v3471 = vsub.s32 0, %v3470
          %v3472 = vrot.slane %v3363, %v3471
          %v3473 = vlaneseq
          %v3474 = vshrl.u32 %v3473, 7
          %v3475 = vsub.s32 1, %v3474
          %v3476 = vrot.slane %v3363, %v3475
          %v3477 = vlaneseq
          %v3478 = vshrl.u32 %v3477, 7
          %v3479 = vsub.s32 2, %v3478
          %v3480 = vrot.slane %v3363, %v3479
          %v3481 = vlaneseq
          %v3482 = vshrl.u32 %v3481, 7
          %v3483 = vsub.s32 3, %v3482
          %v3484 = vrot.slane %v3363, %v3483
          %v3485 = vlaneseq
          %v3486 = vshrl.u32 %v3485, 7
          %v3487 = vsub.s32 0, %v3486
          %v3488 = vrot.slane %v3364, %v3487
          %v3489 = vlaneseq
          %v3490 = vshrl.u32 %v3489, 7
          %v3491 = vsub.s32 1, %v3490
          %v3492 = vrot.slane %v3364, %v3491
          %v3493 = vlaneseq
          %v3494 = vshrl.u32 %v3493, 7
          %v3495 = vsub.s32 2, %v3494
          %v3496 = vrot.slane %v3364, %v3495
          %v3497 = vlaneseq
          %v3498 = vshrl.u32 %v3497, 7
          %v3499 = vsub.s32 3, %v3498
          %v3500 = vrot.slane %v3364, %v3499
          %v3501 = vlaneseq
          %v3502 = vshrl.u32 %v3501, 7
          %v3503 = vsub.s32 0, %v3502
          %v3504 = vrot.slane %v3365, %v3503
          %v3505 = vlaneseq
          %v3506 = vshrl.u32 %v3505, 7
          %v3507 = vsub.s32 1, %v3506
          %v3508 = vrot.slane %v3365, %v3507
          %v3509 = vlaneseq
          %v3510 = vshrl.u32 %v3509, 7
          %v3511 = vsub.s32 2, %v3510
          %v3512 = vrot.slane %v3365, %v3511
          %v3513 = vlaneseq
          %v3514 = vshrl.u32 %v3513, 7
          %v3515 = vsub.s32 3, %v3514
          %v3516 = vrot.slane %v3365, %v3515
          %v3517 = vlaneseq
          %v3518 = vshrl.u32 %v3517, 7
          %v3519 = vsub.s32 0, %v3518
          %v3520 = vrot.slane %v3366, %v3519
          %v3521 = vlaneseq
          %v3522 = vshrl.u32 %v3521, 7
          %v3523 = vsub.s32 1, %v3522
          %v3524 = vrot.slane %v3366, %v3523
          %v3525 = vlaneseq
          %v3526 = vshrl.u32 %v3525, 7
          %v3527 = vsub.s32 2, %v3526
          %v3528 = vrot.slane %v3366, %v3527
          %v3529 = vlaneseq
          %v3530 = vshrl.u32 %v3529, 7
          %v3531 = vsub.s32 3, %v3530
          %v3532 = vrot.slane %v3366, %v3531
          %v3533 = vlaneseq
          %v3534 = vshrl.u32 %v3533, 7
          %v3535 = vsub.s32 0, %v3534
          %v3536 = vrot.slane %v3367, %v3535
          %v3537 = vlaneseq
          %v3538 = vshrl.u32 %v3537, 7
          %v3539 = vsub.s32 1, %v3538
          %v3540 = vrot.slane %v3367, %v3539
          %v3541 = vlaneseq
          %v3542 = vshrl.u32 %v3541, 7
          %v3543 = vsub.s32 2, %v3542
          %v3544 = vrot.slane %v3367, %v3543
          %v3545 = vlaneseq
          %v3546 = vshrl.u32 %v3545, 7
          %v3547 = vsub.s32 3, %v3546
          %v3548 = vrot.slane %v3367, %v3547
          %v3549 = vlaneseq
          %v3550 = vshrl.u32 %v3549, 7
          %v3551 = vsub.s32 0, %v3550
          %v3552 = vrot.slane %v3368, %v3551
          %v3553 = vlaneseq
          %v3554 = vshrl.u32 %v3553, 7
          %v3555 = vsub.s32 1, %v3554
          %v3556 = vrot.slane %v3368, %v3555
          %v3557 = vlaneseq
          %v3558 = vshrl.u32 %v3557, 7
          %v3559 = vsub.s32 2, %v3558
          %v3560 = vrot.slane %v3368, %v3559
          %v3561 = vlaneseq
          %v3562 = vshrl.u32 %v3561, 7
          %v3563 = vsub.s32 3, %v3562
          %v3564 = vrot.slane %v3368, %v3563
          %v3565 = vlaneseq
          %v3566 = vshrl.u32 %v3565, 7
          %v3567 = vsub.s32 0, %v3566
          %v3568 = vrot.slane %v3369, %v3567
          %v3569 = vlaneseq
          %v3570 = vshrl.u32 %v3569, 7
          %v3571 = vsub.s32 1, %v3570
          %v3572 = vrot.slane %v3369, %v3571
          %v3573 = vlaneseq
          %v3574 = vshrl.u32 %v3573, 7
          %v3575 = vsub.s32 2, %v3574
          %v3576 = vrot.slane %v3369, %v3575
          %v3577 = vlaneseq
          %v3578 = vshrl.u32 %v3577, 7
          %v3579 = vsub.s32 3, %v3578
          %v3580 = vrot.slane %v3369, %v3579
          %v3581 = vlaneseq
          %v3582 = vshrl.u32 %v3581, 7
          %v3583 = vsub.s32 0, %v3582
          %v3584 = vrot.slane %v3370, %v3583
          %v3585 = vlaneseq
          %v3586 = vshrl.u32 %v3585, 7
          %v3587 = vsub.s32 1, %v3586
          %v3588 = vrot.slane %v3370, %v3587
          %v3589 = vlaneseq
          %v3590 = vshrl.u32 %v3589, 7
          %v3591 = vsub.s32 2, %v3590
          %v3592 = vrot.slane %v3370, %v3591
          %v3593 = vlaneseq
          %v3594 = vshrl.u32 %v3593, 7
          %v3595 = vsub.s32 3, %v3594
          %v3596 = vrot.slane %v3370, %v3595
          %v3597 = vlaneseq
          %v3598 = vshrl.u32 %v3597, 7
          %v3599 = vsub.s32 0, %v3598
          %v3600 = vrot.slane %v3371, %v3599
          %v3601 = vlaneseq
          %v3602 = vshrl.u32 %v3601, 7
          %v3603 = vsub.s32 1, %v3602
          %v3604 = vrot.slane %v3371, %v3603
          %v3605 = vlaneseq
          %v3606 = vshrl.u32 %v3605, 7
          %v3607 = vsub.s32 2, %v3606
          %v3608 = vrot.slane %v3371, %v3607
          %v3609 = vlaneseq
          %v3610 = vshrl.u32 %v3609, 7
          %v3611 = vsub.s32 3, %v3610
          %v3612 = vrot.slane %v3371, %v3611
          %v3613 = vlaneseq
          %v3614 = vshrl.u32 %v3613, 7
          %v3615 = vsub.s32 0, %v3614
          %v3616 = vrot.slane %v3372, %v3615
          %v3617 = vlaneseq
          %v3618 = vshrl.u32 %v3617, 7
          %v3619 = vsub.s32 1, %v3618
          %v3620 = vrot.slane %v3372, %v3619
          %v3621 = vlaneseq
          %v3622 = vshrl.u32 %v3621, 7
          %v3623 = vsub.s32 2, %v3622
          %v3624 = vrot.slane %v3372, %v3623
          %v3625 = vlaneseq
          %v3626 = vshrl.u32 %v3625, 7
          %v3627 = vsub.s32 3, %v3626
          %v3628 = vrot.slane %v3372, %v3627
          %v3693 = vpack.i.b16 %v3341, %v3341
          %v3694 = vpack.i.b16 %v3342, %v3342
          %v3695 = vpack.i.b16 %v3343, %v3343
          %v3696 = vpack.i.b16 %v3344, %v3344
          %v3697 = vpack.i.b16 %v3345, %v3345
          %v3698 = vpack.i.b16 %v3346, %v3346
          %v3699 = vpack.i.b16 %v3347, %v3347
          %v3700 = vpack.i.b16 %v3348, %v3348
          %v3701 = vpack.i.b16 %v3349, %v3349
          %v3702 = vpack.i.b16 %v3350, %v3350
          %v3703 = vpack.i.b16 %v3351, %v3351
          %v3704 = vpack.i.b16 %v3352, %v3352
          %v3705 = vpack.i.b16 %v3353, %v3353
          %v3706 = vpack.i.b16 %v3354, %v3354
          %v3707 = vpack.i.b16 %v3355, %v3355
          %v3708 = vpack.i.b16 %v3356, %v3356
          %v3709 = vlaneseq
          %v3710 = vshrl.u32 %v3709, 7
          %v3711 = vsub.s32 0, %v3710
          %v3712 = vrot.slane %v3693, %v3711
          %v3713 = vlaneseq
          %v3714 = vshrl.u32 %v3713, 7
          %v3715 = vsub.s32 1, %v3714
          %v3716 = vrot.slane %v3693, %v3715
          %v3717 = vlaneseq
          %v3718 = vshrl.u32 %v3717, 7
          %v3719 = vsub.s32 2, %v3718
          %v3720 = vrot.slane %v3693, %v3719
          %v3721 = vlaneseq
          %v3722 = vshrl.u32 %v3721, 7
          %v3723 = vsub.s32 3, %v3722
          %v3724 = vrot.slane %v3693, %v3723
          %v3725 = vlaneseq
          %v3726 = vshrl.u32 %v3725, 7
          %v3727 = vsub.s32 0, %v3726
          %v3728 = vrot.slane %v3694, %v3727
          %v3729 = vlaneseq
          %v3730 = vshrl.u32 %v3729, 7
          %v3731 = vsub.s32 1, %v3730
          %v3732 = vrot.slane %v3694, %v3731
          %v3733 = vlaneseq
          %v3734 = vshrl.u32 %v3733, 7
          %v3735 = vsub.s32 2, %v3734
          %v3736 = vrot.slane %v3694, %v3735
          %v3737 = vlaneseq
          %v3738 = vshrl.u32 %v3737, 7
          %v3739 = vsub.s32 3, %v3738
          %v3740 = vrot.slane %v3694, %v3739
          %v3741 = vlaneseq
          %v3742 = vshrl.u32 %v3741, 7
          %v3743 = vsub.s32 0, %v3742
          %v3744 = vrot.slane %v3695, %v3743
          %v3745 = vlaneseq
          %v3746 = vshrl.u32 %v3745, 7
          %v3747 = vsub.s32 1, %v3746
          %v3748 = vrot.slane %v3695, %v3747
          %v3749 = vlaneseq
          %v3750 = vshrl.u32 %v3749, 7
          %v3751 = vsub.s32 2, %v3750
          %v3752 = vrot.slane %v3695, %v3751
          %v3753 = vlaneseq
          %v3754 = vshrl.u32 %v3753, 7
          %v3755 = vsub.s32 3, %v3754
          %v3756 = vrot.slane %v3695, %v3755
          %v3757 = vlaneseq
          %v3758 = vshrl.u32 %v3757, 7
          %v3759 = vsub.s32 0, %v3758
          %v3760 = vrot.slane %v3696, %v3759
          %v3761 = vlaneseq
          %v3762 = vshrl.u32 %v3761, 7
          %v3763 = vsub.s32 1, %v3762
          %v3764 = vrot.slane %v3696, %v3763
          %v3765 = vlaneseq
          %v3766 = vshrl.u32 %v3765, 7
          %v3767 = vsub.s32 2, %v3766
          %v3768 = vrot.slane %v3696, %v3767
          %v3769 = vlaneseq
          %v3770 = vshrl.u32 %v3769, 7
          %v3771 = vsub.s32 3, %v3770
          %v3772 = vrot.slane %v3696, %v3771
          %v3773 = vlaneseq
          %v3774 = vshrl.u32 %v3773, 7
          %v3775 = vsub.s32 0, %v3774
          %v3776 = vrot.slane %v3697, %v3775
          %v3777 = vlaneseq
          %v3778 = vshrl.u32 %v3777, 7
          %v3779 = vsub.s32 1, %v3778
          %v3780 = vrot.slane %v3697, %v3779
          %v3781 = vlaneseq
          %v3782 = vshrl.u32 %v3781, 7
          %v3783 = vsub.s32 2, %v3782
          %v3784 = vrot.slane %v3697, %v3783
          %v3785 = vlaneseq
          %v3786 = vshrl.u32 %v3785, 7
          %v3787 = vsub.s32 3, %v3786
          %v3788 = vrot.slane %v3697, %v3787
          %v3789 = vlaneseq
          %v3790 = vshrl.u32 %v3789, 7
          %v3791 = vsub.s32 0, %v3790
          %v3792 = vrot.slane %v3698, %v3791
          %v3793 = vlaneseq
          %v3794 = vshrl.u32 %v3793, 7
          %v3795 = vsub.s32 1, %v3794
          %v3796 = vrot.slane %v3698, %v3795
          %v3797 = vlaneseq
          %v3798 = vshrl.u32 %v3797, 7
          %v3799 = vsub.s32 2, %v3798
          %v3800 = vrot.slane %v3698, %v3799
          %v3801 = vlaneseq
          %v3802 = vshrl.u32 %v3801, 7
          %v3803 = vsub.s32 3, %v3802
          %v3804 = vrot.slane %v3698, %v3803
          %v3805 = vlaneseq
          %v3806 = vshrl.u32 %v3805, 7
          %v3807 = vsub.s32 0, %v3806
          %v3808 = vrot.slane %v3699, %v3807
          %v3809 = vlaneseq
          %v3810 = vshrl.u32 %v3809, 7
          %v3811 = vsub.s32 1, %v3810
          %v3812 = vrot.slane %v3699, %v3811
          %v3813 = vlaneseq
          %v3814 = vshrl.u32 %v3813, 7
          %v3815 = vsub.s32 2, %v3814
          %v3816 = vrot.slane %v3699, %v3815
          %v3817 = vlaneseq
          %v3818 = vshrl.u32 %v3817, 7
          %v3819 = vsub.s32 3, %v3818
          %v3820 = vrot.slane %v3699, %v3819
          %v3821 = vlaneseq
          %v3822 = vshrl.u32 %v3821, 7
          %v3823 = vsub.s32 0, %v3822
          %v3824 = vrot.slane %v3700, %v3823
          %v3825 = vlaneseq
          %v3826 = vshrl.u32 %v3825, 7
          %v3827 = vsub.s32 1, %v3826
          %v3828 = vrot.slane %v3700, %v3827
          %v3829 = vlaneseq
          %v3830 = vshrl.u32 %v3829, 7
          %v3831 = vsub.s32 2, %v3830
          %v3832 = vrot.slane %v3700, %v3831
          %v3833 = vlaneseq
          %v3834 = vshrl.u32 %v3833, 7
          %v3835 = vsub.s32 3, %v3834
          %v3836 = vrot.slane %v3700, %v3835
          %v3837 = vlaneseq
          %v3838 = vshrl.u32 %v3837, 7
          %v3839 = vsub.s32 0, %v3838
          %v3840 = vrot.slane %v3701, %v3839
          %v3841 = vlaneseq
          %v3842 = vshrl.u32 %v3841, 7
          %v3843 = vsub.s32 1, %v3842
          %v3844 = vrot.slane %v3701, %v3843
          %v3845 = vlaneseq
          %v3846 = vshrl.u32 %v3845, 7
          %v3847 = vsub.s32 2, %v3846
          %v3848 = vrot.slane %v3701, %v3847
          %v3849 = vlaneseq
          %v3850 = vshrl.u32 %v3849, 7
          %v3851 = vsub.s32 3, %v3850
          %v3852 = vrot.slane %v3701, %v3851
          %v3853 = vlaneseq
          %v3854 = vshrl.u32 %v3853, 7
          %v3855 = vsub.s32 0, %v3854
          %v3856 = vrot.slane %v3702, %v3855
          %v3857 = vlaneseq
          %v3858 = vshrl.u32 %v3857, 7
          %v3859 = vsub.s32 1, %v3858
          %v3860 = vrot.slane %v3702, %v3859
          %v3861 = vlaneseq
          %v3862 = vshrl.u32 %v3861, 7
          %v3863 = vsub.s32 2, %v3862
          %v3864 = vrot.slane %v3702, %v3863
          %v3865 = vlaneseq
          %v3866 = vshrl.u32 %v3865, 7
          %v3867 = vsub.s32 3, %v3866
          %v3868 = vrot.slane %v3702, %v3867
          %v3869 = vlaneseq
          %v3870 = vshrl.u32 %v3869, 7
          %v3871 = vsub.s32 0, %v3870
          %v3872 = vrot.slane %v3703, %v3871
          %v3873 = vlaneseq
          %v3874 = vshrl.u32 %v3873, 7
          %v3875 = vsub.s32 1, %v3874
          %v3876 = vrot.slane %v3703, %v3875
          %v3877 = vlaneseq
          %v3878 = vshrl.u32 %v3877, 7
          %v3879 = vsub.s32 2, %v3878
          %v3880 = vrot.slane %v3703, %v3879
          %v3881 = vlaneseq
          %v3882 = vshrl.u32 %v3881, 7
          %v3883 = vsub.s32 3, %v3882
          %v3884 = vrot.slane %v3703, %v3883
          %v3885 = vlaneseq
          %v3886 = vshrl.u32 %v3885, 7
          %v3887 = vsub.s32 0, %v3886
          %v3888 = vrot.slane %v3704, %v3887
          %v3889 = vlaneseq
          %v3890 = vshrl.u32 %v3889, 7
          %v3891 = vsub.s32 1, %v3890
          %v3892 = vrot.slane %v3704, %v3891
          %v3893 = vlaneseq
          %v3894 = vshrl.u32 %v3893, 7
          %v3895 = vsub.s32 2, %v3894
          %v3896 = vrot.slane %v3704, %v3895
          %v3897 = vlaneseq
          %v3898 = vshrl.u32 %v3897, 7
          %v3899 = vsub.s32 3, %v3898
          %v3900 = vrot.slane %v3704, %v3899
          %v3901 = vlaneseq
          %v3902 = vshrl.u32 %v3901, 7
          %v3903 = vsub.s32 0, %v3902
          %v3904 = vrot.slane %v3705, %v3903
          %v3905 = vlaneseq
          %v3906 = vshrl.u32 %v3905, 7
          %v3907 = vsub.s32 1, %v3906
          %v3908 = vrot.slane %v3705, %v3907
          %v3909 = vlaneseq
          %v3910 = vshrl.u32 %v3909, 7
          %v3911 = vsub.s32 2, %v3910
          %v3912 = vrot.slane %v3705, %v3911
          %v3913 = vlaneseq
          %v3914 = vshrl.u32 %v3913, 7
          %v3915 = vsub.s32 3, %v3914
          %v3916 = vrot.slane %v3705, %v3915
          %v3917 = vlaneseq
          %v3918 = vshrl.u32 %v3917, 7
          %v3919 = vsub.s32 0, %v3918
          %v3920 = vrot.slane %v3706, %v3919
          %v3921 = vlaneseq
          %v3922 = vshrl.u32 %v3921, 7
          %v3923 = vsub.s32 1, %v3922
          %v3924 = vrot.slane %v3706, %v3923
          %v3925 = vlaneseq
          %v3926 = vshrl.u32 %v3925, 7
          %v3927 = vsub.s32 2, %v3926
          %v3928 = vrot.slane %v3706, %v3927
          %v3929 = vlaneseq
          %v3930 = vshrl.u32 %v3929, 7
          %v3931 = vsub.s32 3, %v3930
          %v3932 = vrot.slane %v3706, %v3931
          %v3933 = vlaneseq
          %v3934 = vshrl.u32 %v3933, 7
          %v3935 = vsub.s32 0, %v3934
          %v3936 = vrot.slane %v3707, %v3935
          %v3937 = vlaneseq
          %v3938 = vshrl.u32 %v3937, 7
          %v3939 = vsub.s32 1, %v3938
          %v3940 = vrot.slane %v3707, %v3939
          %v3941 = vlaneseq
          %v3942 = vshrl.u32 %v3941, 7
          %v3943 = vsub.s32 2, %v3942
          %v3944 = vrot.slane %v3707, %v3943
          %v3945 = vlaneseq
          %v3946 = vshrl.u32 %v3945, 7
          %v3947 = vsub.s32 3, %v3946
          %v3948 = vrot.slane %v3707, %v3947
          %v3949 = vlaneseq
          %v3950 = vshrl.u32 %v3949, 7
          %v3951 = vsub.s32 0, %v3950
          %v3952 = vrot.slane %v3708, %v3951
          %v3953 = vlaneseq
          %v3954 = vshrl.u32 %v3953, 7
          %v3955 = vsub.s32 1, %v3954
          %v3956 = vrot.slane %v3708, %v3955
          %v3957 = vlaneseq
          %v3958 = vshrl.u32 %v3957, 7
          %v3959 = vsub.s32 2, %v3958
          %v3960 = vrot.slane %v3708, %v3959
          %v3961 = vlaneseq
          %v3962 = vshrl.u32 %v3961, 7
          %v3963 = vsub.s32 3, %v3962
          %v3964 = vrot.slane %v3708, %v3963
          %vm4029 = vcmask 1040384
          %vm4030 = vsmask.f32 256
          %vm4031 = vmand %vm4029, %vm4030
          %v4032 = vsel %vm4031, %v3376, %v3712
          %v4033 = vsel %vm4031, %v3380, %v3716
          %v4034 = vsel %vm4031, %v3384, %v3720
          %v4035 = vsel %vm4031, %v3388, %v3724
          %v4036 = vsel %vm4031, %v3392, %v3728
          %v4037 = vsel %vm4031, %v3396, %v3732
          %v4038 = vsel %vm4031, %v3400, %v3736
          %v4039 = vsel %vm4031, %v3404, %v3740
          %v4040 = vsel %vm4031, %v3408, %v3744
          %v4041 = vsel %vm4031, %v3412, %v3748
          %v4042 = vsel %vm4031, %v3416, %v3752
          %v4043 = vsel %vm4031, %v3420, %v3756
          %v4044 = vsel %vm4031, %v3424, %v3760
          %v4045 = vsel %vm4031, %v3428, %v3764
          %v4046 = vsel %vm4031, %v3432, %v3768
          %v4047 = vsel %vm4031, %v3436, %v3772
          %v4048 = vsel %vm4031, %v3440, %v3776
          %v4049 = vsel %vm4031, %v3444, %v3780
          %v4050 = vsel %vm4031, %v3448, %v3784
          %v4051 = vsel %vm4031, %v3452, %v3788
          %v4052 = vsel %vm4031, %v3456, %v3792
          %v4053 = vsel %vm4031, %v3460, %v3796
          %v4054 = vsel %vm4031, %v3464, %v3800
          %v4055 = vsel %vm4031, %v3468, %v3804
          %v4056 = vsel %vm4031, %v3472, %v3808
          %v4057 = vsel %vm4031, %v3476, %v3812
          %v4058 = vsel %vm4031, %v3480, %v3816
          %v4059 = vsel %vm4031, %v3484, %v3820
          %v4060 = vsel %vm4031, %v3488, %v3824
          %v4061 = vsel %vm4031, %v3492, %v3828
          %v4062 = vsel %vm4031, %v3496, %v3832
          %v4063 = vsel %vm4031, %v3500, %v3836
          %v4064 = vsel %vm4031, %v3504, %v3840
          %v4065 = vsel %vm4031, %v3508, %v3844
          %v4066 = vsel %vm4031, %v3512, %v3848
          %v4067 = vsel %vm4031, %v3516, %v3852
          %v4068 = vsel %vm4031, %v3520, %v3856
          %v4069 = vsel %vm4031, %v3524, %v3860
          %v4070 = vsel %vm4031, %v3528, %v3864
          %v4071 = vsel %vm4031, %v3532, %v3868
          %v4072 = vsel %vm4031, %v3536, %v3872
          %v4073 = vsel %vm4031, %v3540, %v3876
          %v4074 = vsel %vm4031, %v3544, %v3880
          %v4075 = vsel %vm4031, %v3548, %v3884
          %v4076 = vsel %vm4031, %v3552, %v3888
          %v4077 = vsel %vm4031, %v3556, %v3892
          %v4078 = vsel %vm4031, %v3560, %v3896
          %v4079 = vsel %vm4031, %v3564, %v3900
          %v4080 = vsel %vm4031, %v3568, %v3904
          %v4081 = vsel %vm4031, %v3572, %v3908
          %v4082 = vsel %vm4031, %v3576, %v3912
          %v4083 = vsel %vm4031, %v3580, %v3916
          %v4084 = vsel %vm4031, %v3584, %v3920
          %v4085 = vsel %vm4031, %v3588, %v3924
          %v4086 = vsel %vm4031, %v3592, %v3928
          %v4087 = vsel %vm4031, %v3596, %v3932
          %v4088 = vsel %vm4031, %v3600, %v3936
          %v4089 = vsel %vm4031, %v3604, %v3940
          %v4090 = vsel %vm4031, %v3608, %v3944
          %v4091 = vsel %vm4031, %v3612, %v3948
          %v4092 = vsel %vm4031, %v3616, %v3952
          %v4093 = vsel %vm4031, %v3620, %v3956
          %v4094 = vsel %vm4031, %v3624, %v3960
          %v4095 = vsel %vm4031, %v3628, %v3964
          %v4160 = vcombine.low %v4032, %v4033
          %v4161 = vcombine.low %v4034, %v4035
          %v4163 = vunpack.c.l.s4 1966171168
          %v4164 = vunpack.c.0.s8 %v4163
          %v4165 = vlaneseq
          %v4166 = vshrl.u32 %v4165, 7
          %v4167 = vsub.s32 %v4164, %v4166
          %v4168 = vrot.slane %v4160, %v4167
          %v4170 = vunpack.c.l.s4 1966171168
          %v4171 = vunpack.c.0.s8 %v4170
          %v4172 = vlaneseq
          %v4173 = vshrl.u32 %v4172, 7
          %v4174 = vsub.s32 %v4171, %v4173
          %v4175 = vrot.slane %v4161, %v4174
          %v4176 = vcombine.low %v4168, %v4175
          %v4178 = vunpack.c.l.s4 1966171168
          %v4179 = vunpack.c.0.s8 %v4178
          %v4180 = vlaneseq
          %v4181 = vshrl.u32 %v4180, 7
          %v4182 = vsub.s32 %v4179, %v4181
          %v4183 = vrot.slane %v4176, %v4182
          %v4184 = vcombine.low %v4036, %v4037
          %v4185 = vcombine.low %v4038, %v4039
          %v4187 = vunpack.c.l.s4 1966171168
          %v4188 = vunpack.c.0.s8 %v4187
          %v4189 = vlaneseq
          %v4190 = vshrl.u32 %v4189, 7
          %v4191 = vsub.s32 %v4188, %v4190
          %v4192 = vrot.slane %v4184, %v4191
          %v4194 = vunpack.c.l.s4 1966171168
          %v4195 = vunpack.c.0.s8 %v4194
          %v4196 = vlaneseq
          %v4197 = vshrl.u32 %v4196, 7
          %v4198 = vsub.s32 %v4195, %v4197
          %v4199 = vrot.slane %v4185, %v4198
          %v4200 = vcombine.low %v4192, %v4199
          %v4202 = vunpack.c.l.s4 1966171168
          %v4203 = vunpack.c.0.s8 %v4202
          %v4204 = vlaneseq
          %v4205 = vshrl.u32 %v4204, 7
          %v4206 = vsub.s32 %v4203, %v4205
          %v4207 = vrot.slane %v4200, %v4206
          %v4208 = vcombine.low %v4040, %v4041
          %v4209 = vcombine.low %v4042, %v4043
          %v4211 = vunpack.c.l.s4 1966171168
          %v4212 = vunpack.c.0.s8 %v4211
          %v4213 = vlaneseq
          %v4214 = vshrl.u32 %v4213, 7
          %v4215 = vsub.s32 %v4212, %v4214
          %v4216 = vrot.slane %v4208, %v4215
          %v4218 = vunpack.c.l.s4 1966171168
          %v4219 = vunpack.c.0.s8 %v4218
          %v4220 = vlaneseq
          %v4221 = vshrl.u32 %v4220, 7
          %v4222 = vsub.s32 %v4219, %v4221
          %v4223 = vrot.slane %v4209, %v4222
          %v4224 = vcombine.low %v4216, %v4223
          %v4226 = vunpack.c.l.s4 1966171168
          %v4227 = vunpack.c.0.s8 %v4226
          %v4228 = vlaneseq
          %v4229 = vshrl.u32 %v4228, 7
          %v4230 = vsub.s32 %v4227, %v4229
          %v4231 = vrot.slane %v4224, %v4230
          %v4232 = vcombine.low %v4044, %v4045
          %v4233 = vcombine.low %v4046, %v4047
          %v4235 = vunpack.c.l.s4 1966171168
          %v4236 = vunpack.c.0.s8 %v4235
          %v4237 = vlaneseq
          %v4238 = vshrl.u32 %v4237, 7
          %v4239 = vsub.s32 %v4236, %v4238
          %v4240 = vrot.slane %v4232, %v4239
          %v4242 = vunpack.c.l.s4 1966171168
          %v4243 = vunpack.c.0.s8 %v4242
          %v4244 = vlaneseq
          %v4245 = vshrl.u32 %v4244, 7
          %v4246 = vsub.s32 %v4243, %v4245
          %v4247 = vrot.slane %v4233, %v4246
          %v4248 = vcombine.low %v4240, %v4247
          %v4250 = vunpack.c.l.s4 1966171168
          %v4251 = vunpack.c.0.s8 %v4250
          %v4252 = vlaneseq
          %v4253 = vshrl.u32 %v4252, 7
          %v4254 = vsub.s32 %v4251, %v4253
          %v4255 = vrot.slane %v4248, %v4254
          %v4256 = vcombine.low %v4048, %v4049
          %v4257 = vcombine.low %v4050, %v4051
          %v4259 = vunpack.c.l.s4 1966171168
          %v4260 = vunpack.c.0.s8 %v4259
          %v4261 = vlaneseq
          %v4262 = vshrl.u32 %v4261, 7
          %v4263 = vsub.s32 %v4260, %v4262
          %v4264 = vrot.slane %v4256, %v4263
          %v4266 = vunpack.c.l.s4 1966171168
          %v4267 = vunpack.c.0.s8 %v4266
          %v4268 = vlaneseq
          %v4269 = vshrl.u32 %v4268, 7
          %v4270 = vsub.s32 %v4267, %v4269
          %v4271 = vrot.slane %v4257, %v4270
          %v4272 = vcombine.low %v4264, %v4271
          %v4274 = vunpack.c.l.s4 1966171168
          %v4275 = vunpack.c.0.s8 %v4274
          %v4276 = vlaneseq
          %v4277 = vshrl.u32 %v4276, 7
          %v4278 = vsub.s32 %v4275, %v4277
          %v4279 = vrot.slane %v4272, %v4278
          %v4280 = vcombine.low %v4052, %v4053
          %v4281 = vcombine.low %v4054, %v4055
          %v4283 = vunpack.c.l.s4 1966171168
          %v4284 = vunpack.c.0.s8 %v4283
          %v4285 = vlaneseq
          %v4286 = vshrl.u32 %v4285, 7
          %v4287 = vsub.s32 %v4284, %v4286
          %v4288 = vrot.slane %v4280, %v4287
          %v4290 = vunpack.c.l.s4 1966171168
          %v4291 = vunpack.c.0.s8 %v4290
          %v4292 = vlaneseq
          %v4293 = vshrl.u32 %v4292, 7
          %v4294 = vsub.s32 %v4291, %v4293
          %v4295 = vrot.slane %v4281, %v4294
          %v4296 = vcombine.low %v4288, %v4295
          %v4298 = vunpack.c.l.s4 1966171168
          %v4299 = vunpack.c.0.s8 %v4298
          %v4300 = vlaneseq
          %v4301 = vshrl.u32 %v4300, 7
          %v4302 = vsub.s32 %v4299, %v4301
          %v4303 = vrot.slane %v4296, %v4302
          %v4304 = vcombine.low %v4056, %v4057
          %v4305 = vcombine.low %v4058, %v4059
          %v4307 = vunpack.c.l.s4 1966171168
          %v4308 = vunpack.c.0.s8 %v4307
          %v4309 = vlaneseq
          %v4310 = vshrl.u32 %v4309, 7
          %v4311 = vsub.s32 %v4308, %v4310
          %v4312 = vrot.slane %v4304, %v4311
          %v4314 = vunpack.c.l.s4 1966171168
          %v4315 = vunpack.c.0.s8 %v4314
          %v4316 = vlaneseq
          %v4317 = vshrl.u32 %v4316, 7
          %v4318 = vsub.s32 %v4315, %v4317
          %v4319 = vrot.slane %v4305, %v4318
          %v4320 = vcombine.low %v4312, %v4319
          %v4322 = vunpack.c.l.s4 1966171168
          %v4323 = vunpack.c.0.s8 %v4322
          %v4324 = vlaneseq
          %v4325 = vshrl.u32 %v4324, 7
          %v4326 = vsub.s32 %v4323, %v4325
          %v4327 = vrot.slane %v4320, %v4326
          %v4328 = vcombine.low %v4060, %v4061
          %v4329 = vcombine.low %v4062, %v4063
          %v4331 = vunpack.c.l.s4 1966171168
          %v4332 = vunpack.c.0.s8 %v4331
          %v4333 = vlaneseq
          %v4334 = vshrl.u32 %v4333, 7
          %v4335 = vsub.s32 %v4332, %v4334
          %v4336 = vrot.slane %v4328, %v4335
          %v4338 = vunpack.c.l.s4 1966171168
          %v4339 = vunpack.c.0.s8 %v4338
          %v4340 = vlaneseq
          %v4341 = vshrl.u32 %v4340, 7
          %v4342 = vsub.s32 %v4339, %v4341
          %v4343 = vrot.slane %v4329, %v4342
          %v4344 = vcombine.low %v4336, %v4343
          %v4346 = vunpack.c.l.s4 1966171168
          %v4347 = vunpack.c.0.s8 %v4346
          %v4348 = vlaneseq
          %v4349 = vshrl.u32 %v4348, 7
          %v4350 = vsub.s32 %v4347, %v4349
          %v4351 = vrot.slane %v4344, %v4350
          %v4352 = vcombine.low %v4064, %v4065
          %v4353 = vcombine.low %v4066, %v4067
          %v4355 = vunpack.c.l.s4 1966171168
          %v4356 = vunpack.c.0.s8 %v4355
          %v4357 = vlaneseq
          %v4358 = vshrl.u32 %v4357, 7
          %v4359 = vsub.s32 %v4356, %v4358
          %v4360 = vrot.slane %v4352, %v4359
          %v4362 = vunpack.c.l.s4 1966171168
          %v4363 = vunpack.c.0.s8 %v4362
          %v4364 = vlaneseq
          %v4365 = vshrl.u32 %v4364, 7
          %v4366 = vsub.s32 %v4363, %v4365
          %v4367 = vrot.slane %v4353, %v4366
          %v4368 = vcombine.low %v4360, %v4367
          %v4370 = vunpack.c.l.s4 1966171168
          %v4371 = vunpack.c.0.s8 %v4370
          %v4372 = vlaneseq
          %v4373 = vshrl.u32 %v4372, 7
          %v4374 = vsub.s32 %v4371, %v4373
          %v4375 = vrot.slane %v4368, %v4374
          %v4376 = vcombine.low %v4068, %v4069
          %v4377 = vcombine.low %v4070, %v4071
          %v4379 = vunpack.c.l.s4 1966171168
          %v4380 = vunpack.c.0.s8 %v4379
          %v4381 = vlaneseq
          %v4382 = vshrl.u32 %v4381, 7
          %v4383 = vsub.s32 %v4380, %v4382
          %v4384 = vrot.slane %v4376, %v4383
          %v4386 = vunpack.c.l.s4 1966171168
          %v4387 = vunpack.c.0.s8 %v4386
          %v4388 = vlaneseq
          %v4389 = vshrl.u32 %v4388, 7
          %v4390 = vsub.s32 %v4387, %v4389
          %v4391 = vrot.slane %v4377, %v4390
          %v4392 = vcombine.low %v4384, %v4391
          %v4394 = vunpack.c.l.s4 1966171168
          %v4395 = vunpack.c.0.s8 %v4394
          %v4396 = vlaneseq
          %v4397 = vshrl.u32 %v4396, 7
          %v4398 = vsub.s32 %v4395, %v4397
          %v4399 = vrot.slane %v4392, %v4398
          %v4400 = vcombine.low %v4072, %v4073
          %v4401 = vcombine.low %v4074, %v4075
          %v4403 = vunpack.c.l.s4 1966171168
          %v4404 = vunpack.c.0.s8 %v4403
          %v4405 = vlaneseq
          %v4406 = vshrl.u32 %v4405, 7
          %v4407 = vsub.s32 %v4404, %v4406
          %v4408 = vrot.slane %v4400, %v4407
          %v4410 = vunpack.c.l.s4 1966171168
          %v4411 = vunpack.c.0.s8 %v4410
          %v4412 = vlaneseq
          %v4413 = vshrl.u32 %v4412, 7
          %v4414 = vsub.s32 %v4411, %v4413
          %v4415 = vrot.slane %v4401, %v4414
          %v4416 = vcombine.low %v4408, %v4415
          %v4418 = vunpack.c.l.s4 1966171168
          %v4419 = vunpack.c.0.s8 %v4418
          %v4420 = vlaneseq
          %v4421 = vshrl.u32 %v4420, 7
          %v4422 = vsub.s32 %v4419, %v4421
          %v4423 = vrot.slane %v4416, %v4422
          %v4424 = vcombine.low %v4076, %v4077
          %v4425 = vcombine.low %v4078, %v4079
          %v4427 = vunpack.c.l.s4 1966171168
          %v4428 = vunpack.c.0.s8 %v4427
          %v4429 = vlaneseq
          %v4430 = vshrl.u32 %v4429, 7
          %v4431 = vsub.s32 %v4428, %v4430
          %v4432 = vrot.slane %v4424, %v4431
          %v4434 = vunpack.c.l.s4 1966171168
          %v4435 = vunpack.c.0.s8 %v4434
          %v4436 = vlaneseq
          %v4437 = vshrl.u32 %v4436, 7
          %v4438 = vsub.s32 %v4435, %v4437
          %v4439 = vrot.slane %v4425, %v4438
          %v4440 = vcombine.low %v4432, %v4439
          %v4442 = vunpack.c.l.s4 1966171168
          %v4443 = vunpack.c.0.s8 %v4442
          %v4444 = vlaneseq
          %v4445 = vshrl.u32 %v4444, 7
          %v4446 = vsub.s32 %v4443, %v4445
          %v4447 = vrot.slane %v4440, %v4446
          %v4448 = vcombine.low %v4080, %v4081
          %v4449 = vcombine.low %v4082, %v4083
          %v4451 = vunpack.c.l.s4 1966171168
          %v4452 = vunpack.c.0.s8 %v4451
          %v4453 = vlaneseq
          %v4454 = vshrl.u32 %v4453, 7
          %v4455 = vsub.s32 %v4452, %v4454
          %v4456 = vrot.slane %v4448, %v4455
          %v4458 = vunpack.c.l.s4 1966171168
          %v4459 = vunpack.c.0.s8 %v4458
          %v4460 = vlaneseq
          %v4461 = vshrl.u32 %v4460, 7
          %v4462 = vsub.s32 %v4459, %v4461
          %v4463 = vrot.slane %v4449, %v4462
          %v4464 = vcombine.low %v4456, %v4463
          %v4466 = vunpack.c.l.s4 1966171168
          %v4467 = vunpack.c.0.s8 %v4466
          %v4468 = vlaneseq
          %v4469 = vshrl.u32 %v4468, 7
          %v4470 = vsub.s32 %v4467, %v4469
          %v4471 = vrot.slane %v4464, %v4470
          %v4472 = vcombine.low %v4084, %v4085
          %v4473 = vcombine.low %v4086, %v4087
          %v4475 = vunpack.c.l.s4 1966171168
          %v4476 = vunpack.c.0.s8 %v4475
          %v4477 = vlaneseq
          %v4478 = vshrl.u32 %v4477, 7
          %v4479 = vsub.s32 %v4476, %v4478
          %v4480 = vrot.slane %v4472, %v4479
          %v4482 = vunpack.c.l.s4 1966171168
          %v4483 = vunpack.c.0.s8 %v4482
          %v4484 = vlaneseq
          %v4485 = vshrl.u32 %v4484, 7
          %v4486 = vsub.s32 %v4483, %v4485
          %v4487 = vrot.slane %v4473, %v4486
          %v4488 = vcombine.low %v4480, %v4487
          %v4490 = vunpack.c.l.s4 1966171168
          %v4491 = vunpack.c.0.s8 %v4490
          %v4492 = vlaneseq
          %v4493 = vshrl.u32 %v4492, 7
          %v4494 = vsub.s32 %v4491, %v4493
          %v4495 = vrot.slane %v4488, %v4494
          %v4496 = vcombine.low %v4088, %v4089
          %v4497 = vcombine.low %v4090, %v4091
          %v4499 = vunpack.c.l.s4 1966171168
          %v4500 = vunpack.c.0.s8 %v4499
          %v4501 = vlaneseq
          %v4502 = vshrl.u32 %v4501, 7
          %v4503 = vsub.s32 %v4500, %v4502
          %v4504 = vrot.slane %v4496, %v4503
          %v4506 = vunpack.c.l.s4 1966171168
          %v4507 = vunpack.c.0.s8 %v4506
          %v4508 = vlaneseq
          %v4509 = vshrl.u32 %v4508, 7
          %v4510 = vsub.s32 %v4507, %v4509
          %v4511 = vrot.slane %v4497, %v4510
          %v4512 = vcombine.low %v4504, %v4511
          %v4514 = vunpack.c.l.s4 1966171168
          %v4515 = vunpack.c.0.s8 %v4514
          %v4516 = vlaneseq
          %v4517 = vshrl.u32 %v4516, 7
          %v4518 = vsub.s32 %v4515, %v4517
          %v4519 = vrot.slane %v4512, %v4518
          %v4520 = vcombine.low %v4092, %v4093
          %v4521 = vcombine.low %v4094, %v4095
          %v4523 = vunpack.c.l.s4 1966171168
          %v4524 = vunpack.c.0.s8 %v4523
          %v4525 = vlaneseq
          %v4526 = vshrl.u32 %v4525, 7
          %v4527 = vsub.s32 %v4524, %v4526
          %v4528 = vrot.slane %v4520, %v4527
          %v4530 = vunpack.c.l.s4 1966171168
          %v4531 = vunpack.c.0.s8 %v4530
          %v4532 = vlaneseq
          %v4533 = vshrl.u32 %v4532, 7
          %v4534 = vsub.s32 %v4531, %v4533
          %v4535 = vrot.slane %v4521, %v4534
          %v4536 = vcombine.low %v4528, %v4535
          %v4538 = vunpack.c.l.s4 1966171168
          %v4539 = vunpack.c.0.s8 %v4538
          %v4540 = vlaneseq
          %v4541 = vshrl.u32 %v4540, 7
          %v4542 = vsub.s32 %v4539, %v4541
          %v4543 = vrot.slane %v4536, %v4542
          %4560 = vst [vmem:[#allocation2] sm:$0xf] %v4183
          %4561 = vst [vmem:[#allocation2 + $0x4] sm:$0xf] %v4207
          %4562 = vst [vmem:[#allocation2 + $0x8] sm:$0xf] %v4231
          %4563 = vst [vmem:[#allocation2 + $0xc] sm:$0xf] %v4255
          %4564 = vst [vmem:[#allocation2 + $0x10] sm:$0xf] %v4279
          %4565 = vst [vmem:[#allocation2 + $0x14] sm:$0xf] %v4303
          %4566 = vst [vmem:[#allocation2 + $0x18] sm:$0xf] %v4327
          %4567 = vst [vmem:[#allocation2 + $0x1c] sm:$0xf] %v4351
          %4568 = vst [vmem:[#allocation2 + $0x20] sm:$0xf] %v4375
          %4569 = vst [vmem:[#allocation2 + $0x24] sm:$0xf] %v4399
          %4570 = vst [vmem:[#allocation2 + $0x28] sm:$0xf] %v4423
          %4571 = vst [vmem:[#allocation2 + $0x2c] sm:$0xf] %v4447
          %4572 = vst [vmem:[#allocation2 + $0x30] sm:$0xf] %v4471
          %4573 = vst [vmem:[#allocation2 + $0x34] sm:$0xf] %v4495
          %4574 = vst [vmem:[#allocation2 + $0x38] sm:$0xf] %v4519
          %4575 = vst [vmem:[#allocation2 + $0x3c] sm:$0xf] %v4543
          %v4576 = vld [vmem:[%s276] sm:$0xff]
          %v4578 = vlaneseq
          %v4579 = vshrl.u32 %v4578, 7
          %v4580 = vsub.s32 0, %v4579
          %v4581 = vrot.slane %v4576, %v4580
          %v4582 = vlaneseq
          %v4583 = vshrl.u32 %v4582, 7
          %v4584 = vsub.s32 1, %v4583
          %v4585 = vrot.slane %v4576, %v4584
          %v4586 = vlaneseq
          %v4587 = vshrl.u32 %v4586, 7
          %v4588 = vsub.s32 2, %v4587
          %v4589 = vrot.slane %v4576, %v4588
          %v4590 = vlaneseq
          %v4591 = vshrl.u32 %v4590, 7
          %v4592 = vsub.s32 3, %v4591
          %v4593 = vrot.slane %v4576, %v4592
          %v4594 = vlaneseq
          %v4595 = vshrl.u32 %v4594, 7
          %v4596 = vsub.s32 4, %v4595
          %v4597 = vrot.slane %v4576, %v4596
          %v4598 = vlaneseq
          %v4599 = vshrl.u32 %v4598, 7
          %v4600 = vsub.s32 5, %v4599
          %v4601 = vrot.slane %v4576, %v4600
          %v4602 = vlaneseq
          %v4603 = vshrl.u32 %v4602, 7
          %v4604 = vsub.s32 6, %v4603
          %v4605 = vrot.slane %v4576, %v4604
          %v4606 = vlaneseq
          %v4607 = vshrl.u32 %v4606, 7
          %v4608 = vsub.s32 7, %v4607
          %v4609 = vrot.slane %v4576, %v4608
          %v4610 = vcombine.low %v4581, %v4585
          %v4611 = vcombine.low %v4589, %v4593
          %v4613 = vunpack.c.l.s4 1983009808
          %v4614 = vunpack.c.0.s8 %v4613
          %v4615 = vlaneseq
          %v4616 = vshrl.u32 %v4615, 7
          %v4617 = vsub.s32 %v4614, %v4616
          %v4618 = vrot.slane %v4610, %v4617
          %v4620 = vunpack.c.l.s4 1983009808
          %v4621 = vunpack.c.0.s8 %v4620
          %v4622 = vlaneseq
          %v4623 = vshrl.u32 %v4622, 7
          %v4624 = vsub.s32 %v4621, %v4623
          %v4625 = vrot.slane %v4611, %v4624
          %v4626 = vcombine.low %v4618, %v4625
          %v4627 = vcombine.low %v4597, %v4601
          %v4628 = vcombine.low %v4605, %v4609
          %v4630 = vunpack.c.l.s4 1983009808
          %v4631 = vunpack.c.0.s8 %v4630
          %v4632 = vlaneseq
          %v4633 = vshrl.u32 %v4632, 7
          %v4634 = vsub.s32 %v4631, %v4633
          %v4635 = vrot.slane %v4627, %v4634
          %v4637 = vunpack.c.l.s4 1983009808
          %v4638 = vunpack.c.0.s8 %v4637
          %v4639 = vlaneseq
          %v4640 = vshrl.u32 %v4639, 7
          %v4641 = vsub.s32 %v4638, %v4640
          %v4642 = vrot.slane %v4628, %v4641
          %v4643 = vcombine.low %v4635, %v4642
          %4646 = vst [vmem:[%s282] sm:$0xff] %v4626
          %4647 = vst [vmem:[%s282 + $0x8] sm:$0xff] %v4643
        $region48: #{span_predictor_forward.1} parent=39 // pred_fallthru
          _
        %s4648 = smul.u32 %s24, 4
        %s4649 = smul.u32 %s4648, 4
        %s4650 = scalar_lea.vmem [#allocation2], %s4649
        %v4651 = vld [vmem:[%s4650] sm:$0xf]
        %v4652 = vld [vmem:[%s240] sm:$0xff]
        %v4653 = vld [vmem:[%s240 + $0x8] sm:$0xff]
        %v4654 = vld [vmem:[%s240 + $0x10] sm:$0xff]
        %v4655 = vld [vmem:[%s240 + $0x18] sm:$0xff]
        %v4656 = vld [vmem:[%s240 + $0x20] sm:$0xff]
        %v4657 = vld [vmem:[%s240 + $0x28] sm:$0xff]
        %v4658 = vld [vmem:[%s240 + $0x30] sm:$0xff]
        %v4659 = vld [vmem:[%s240 + $0x38] sm:$0xff]
        %v4660 = vld [vmem:[%s240 + $0x40] sm:$0xff]
        %v4661 = vld [vmem:[%s240 + $0x48] sm:$0xff]
        %v4662 = vld [vmem:[%s240 + $0x50] sm:$0xff]
        %v4663 = vld [vmem:[%s240 + $0x58] sm:$0xff]
        %v4664 = vld [vmem:[%s240 + $0x60] sm:$0xff]
        %v4665 = vld [vmem:[%s240 + $0x68] sm:$0xff]
        %v4666 = vld [vmem:[%s240 + $0x70] sm:$0xff]
        %v4667 = vld [vmem:[%s240 + $0x78] sm:$0xff]
        %v4668 = vld [vmem:[%s240 + $0x80] sm:$0xff]
        %v4669 = vld [vmem:[%s240 + $0x88] sm:$0xff]
        %v4670 = vld [vmem:[%s240 + $0x90] sm:$0xff]
        %v4671 = vld [vmem:[%s240 + $0x98] sm:$0xff]
        %v4672 = vld [vmem:[%s240 + $0xa0] sm:$0xff]
        %v4673 = vld [vmem:[%s240 + $0xa8] sm:$0xff]
        %v4674 = vld [vmem:[%s240 + $0xb0] sm:$0xff]
        %v4675 = vld [vmem:[%s240 + $0xb8] sm:$0xff]
        %v4676 = vld [vmem:[%s240 + $0xc0] sm:$0xff]
        %v4677 = vld [vmem:[%s240 + $0xc8] sm:$0xff]
        %v4678 = vld [vmem:[%s240 + $0xd0] sm:$0xff]
        %v4679 = vld [vmem:[%s240 + $0xd8] sm:$0xff]
        %v4680 = vld [vmem:[%s240 + $0xe0] sm:$0xff]
        %v4681 = vld [vmem:[%s240 + $0xe8] sm:$0xff]
        %v4682 = vld [vmem:[%s240 + $0xf0] sm:$0xff]
        %v4683 = vld [vmem:[%s240 + $0xf8] sm:$0xff]
        %v4684 = vld [vmem:[%s240 + $0x100] sm:$0xff]
        %v4685 = vld [vmem:[%s240 + $0x108] sm:$0xff]
        %v4686 = vld [vmem:[%s240 + $0x110] sm:$0xff]
        %v4687 = vld [vmem:[%s240 + $0x118] sm:$0xff]
        %v4688 = vld [vmem:[%s240 + $0x120] sm:$0xff]
        %v4689 = vld [vmem:[%s240 + $0x128] sm:$0xff]
        %v4690 = vld [vmem:[%s240 + $0x130] sm:$0xff]
        %v4691 = vld [vmem:[%s240 + $0x138] sm:$0xff]
        %v4692 = vld [vmem:[%s240 + $0x140] sm:$0xff]
        %v4693 = vld [vmem:[%s240 + $0x148] sm:$0xff]
        %v4694 = vld [vmem:[%s240 + $0x150] sm:$0xff]
        %v4695 = vld [vmem:[%s240 + $0x158] sm:$0xff]
        %v4696 = vld [vmem:[%s240 + $0x160] sm:$0xff]
        %v4697 = vld [vmem:[%s240 + $0x168] sm:$0xff]
        %v4698 = vld [vmem:[%s240 + $0x170] sm:$0xff]
        %v4699 = vld [vmem:[%s240 + $0x178] sm:$0xff]
        %v4700 = vld [vmem:[%s240 + $0x180] sm:$0xff]
        %v4701 = vld [vmem:[%s240 + $0x188] sm:$0xff]
        %v4702 = vld [vmem:[%s240 + $0x190] sm:$0xff]
        %v4703 = vld [vmem:[%s240 + $0x198] sm:$0xff]
        %v4704 = vld [vmem:[%s240 + $0x1a0] sm:$0xff]
        %v4705 = vld [vmem:[%s240 + $0x1a8] sm:$0xff]
        %v4706 = vld [vmem:[%s240 + $0x1b0] sm:$0xff]
        %v4707 = vld [vmem:[%s240 + $0x1b8] sm:$0xff]
        %v4708 = vld [vmem:[%s240 + $0x1c0] sm:$0xff]
        %v4709 = vld [vmem:[%s240 + $0x1c8] sm:$0xff]
        %v4710 = vld [vmem:[%s240 + $0x1d0] sm:$0xff]
        %v4711 = vld [vmem:[%s240 + $0x1d8] sm:$0xff]
        %v4712 = vld [vmem:[%s240 + $0x1e0] sm:$0xff]
        %v4713 = vld [vmem:[%s240 + $0x1e8] sm:$0xff]
        %v4714 = vld [vmem:[%s240 + $0x1f0] sm:$0xff]
        %v4715 = vld [vmem:[%s240 + $0x1f8] sm:$0xff]
        %v4716 = vld [vmem:[%s240 + $0x200] sm:$0xff]
        %v4717 = vld [vmem:[%s240 + $0x208] sm:$0xff]
        %v4718 = vld [vmem:[%s240 + $0x210] sm:$0xff]
        %v4719 = vld [vmem:[%s240 + $0x218] sm:$0xff]
        %v4720 = vld [vmem:[%s240 + $0x220] sm:$0xff]
        %v4721 = vld [vmem:[%s240 + $0x228] sm:$0xff]
        %v4722 = vld [vmem:[%s240 + $0x230] sm:$0xff]
        %v4723 = vld [vmem:[%s240 + $0x238] sm:$0xff]
        %v4724 = vld [vmem:[%s240 + $0x240] sm:$0xff]
        %v4725 = vld [vmem:[%s240 + $0x248] sm:$0xff]
        %v4726 = vld [vmem:[%s240 + $0x250] sm:$0xff]
        %v4727 = vld [vmem:[%s240 + $0x258] sm:$0xff]
        %v4728 = vld [vmem:[%s240 + $0x260] sm:$0xff]
        %v4729 = vld [vmem:[%s240 + $0x268] sm:$0xff]
        %v4730 = vld [vmem:[%s240 + $0x270] sm:$0xff]
        %v4731 = vld [vmem:[%s240 + $0x278] sm:$0xff]
        %v4732 = vld [vmem:[%s240 + $0x280] sm:$0xff]
        %v4733 = vld [vmem:[%s240 + $0x288] sm:$0xff]
        %v4734 = vld [vmem:[%s240 + $0x290] sm:$0xff]
        %v4735 = vld [vmem:[%s240 + $0x298] sm:$0xff]
        %v4736 = vld [vmem:[%s240 + $0x2a0] sm:$0xff]
        %v4737 = vld [vmem:[%s240 + $0x2a8] sm:$0xff]
        %v4738 = vld [vmem:[%s240 + $0x2b0] sm:$0xff]
        %v4739 = vld [vmem:[%s240 + $0x2b8] sm:$0xff]
        %v4740 = vld [vmem:[%s240 + $0x2c0] sm:$0xff]
        %v4741 = vld [vmem:[%s240 + $0x2c8] sm:$0xff]
        %v4742 = vld [vmem:[%s240 + $0x2d0] sm:$0xff]
        %v4743 = vld [vmem:[%s240 + $0x2d8] sm:$0xff]
        %v4744 = vld [vmem:[%s240 + $0x2e0] sm:$0xff]
        %v4745 = vld [vmem:[%s240 + $0x2e8] sm:$0xff]
        %v4746 = vld [vmem:[%s240 + $0x2f0] sm:$0xff]
        %v4747 = vld [vmem:[%s240 + $0x2f8] sm:$0xff]
        %v4748 = vld [vmem:[%s240 + $0x300] sm:$0xff]
        %v4749 = vld [vmem:[%s240 + $0x308] sm:$0xff]
        %v4750 = vld [vmem:[%s240 + $0x310] sm:$0xff]
        %v4751 = vld [vmem:[%s240 + $0x318] sm:$0xff]
        %v4752 = vld [vmem:[%s240 + $0x320] sm:$0xff]
        %v4753 = vld [vmem:[%s240 + $0x328] sm:$0xff]
        %v4754 = vld [vmem:[%s240 + $0x330] sm:$0xff]
        %v4755 = vld [vmem:[%s240 + $0x338] sm:$0xff]
        %v4756 = vld [vmem:[%s240 + $0x340] sm:$0xff]
        %v4757 = vld [vmem:[%s240 + $0x348] sm:$0xff]
        %v4758 = vld [vmem:[%s240 + $0x350] sm:$0xff]
        %v4759 = vld [vmem:[%s240 + $0x358] sm:$0xff]
        %v4760 = vld [vmem:[%s240 + $0x360] sm:$0xff]
        %v4761 = vld [vmem:[%s240 + $0x368] sm:$0xff]
        %v4762 = vld [vmem:[%s240 + $0x370] sm:$0xff]
        %v4763 = vld [vmem:[%s240 + $0x378] sm:$0xff]
        %v4764 = vld [vmem:[%s240 + $0x380] sm:$0xff]
        %v4765 = vld [vmem:[%s240 + $0x388] sm:$0xff]
        %v4766 = vld [vmem:[%s240 + $0x390] sm:$0xff]
        %v4767 = vld [vmem:[%s240 + $0x398] sm:$0xff]
        %v4768 = vld [vmem:[%s240 + $0x3a0] sm:$0xff]
        %v4769 = vld [vmem:[%s240 + $0x3a8] sm:$0xff]
        %v4770 = vld [vmem:[%s240 + $0x3b0] sm:$0xff]
        %v4771 = vld [vmem:[%s240 + $0x3b8] sm:$0xff]
        %v4772 = vld [vmem:[%s240 + $0x3c0] sm:$0xff]
        %v4773 = vld [vmem:[%s240 + $0x3c8] sm:$0xff]
        %v4774 = vld [vmem:[%s240 + $0x3d0] sm:$0xff]
        %v4775 = vld [vmem:[%s240 + $0x3d8] sm:$0xff]
        %v4776 = vld [vmem:[%s240 + $0x3e0] sm:$0xff]
        %v4777 = vld [vmem:[%s240 + $0x3e8] sm:$0xff]
        %v4778 = vld [vmem:[%s240 + $0x3f0] sm:$0xff]
        %v4779 = vld [vmem:[%s240 + $0x3f8] sm:$0xff]
        %v4780 = vld [vmem:[%s240 + $0x400] sm:$0xff]
        %v4781 = vld [vmem:[%s240 + $0x408] sm:$0xff]
        %v4782 = vld [vmem:[%s240 + $0x410] sm:$0xff]
        %v4783 = vld [vmem:[%s240 + $0x418] sm:$0xff]
        %v4784 = vld [vmem:[%s240 + $0x420] sm:$0xff]
        %v4785 = vld [vmem:[%s240 + $0x428] sm:$0xff]
        %v4786 = vld [vmem:[%s240 + $0x430] sm:$0xff]
        %v4787 = vld [vmem:[%s240 + $0x438] sm:$0xff]
        %v4788 = vld [vmem:[%s240 + $0x440] sm:$0xff]
        %v4789 = vld [vmem:[%s240 + $0x448] sm:$0xff]
        %v4790 = vld [vmem:[%s240 + $0x450] sm:$0xff]
        %v4791 = vld [vmem:[%s240 + $0x458] sm:$0xff]
        %v4792 = vld [vmem:[%s240 + $0x460] sm:$0xff]
        %v4793 = vld [vmem:[%s240 + $0x468] sm:$0xff]
        %v4794 = vld [vmem:[%s240 + $0x470] sm:$0xff]
        %v4795 = vld [vmem:[%s240 + $0x478] sm:$0xff]
        %v4796 = vld [vmem:[%s240 + $0x480] sm:$0xff]
        %v4797 = vld [vmem:[%s240 + $0x488] sm:$0xff]
        %v4798 = vld [vmem:[%s240 + $0x490] sm:$0xff]
        %v4799 = vld [vmem:[%s240 + $0x498] sm:$0xff]
        %v4800 = vld [vmem:[%s240 + $0x4a0] sm:$0xff]
        %v4801 = vld [vmem:[%s240 + $0x4a8] sm:$0xff]
        %v4802 = vld [vmem:[%s240 + $0x4b0] sm:$0xff]
        %v4803 = vld [vmem:[%s240 + $0x4b8] sm:$0xff]
        %v4804 = vld [vmem:[%s240 + $0x4c0] sm:$0xff]
        %v4805 = vld [vmem:[%s240 + $0x4c8] sm:$0xff]
        %v4806 = vld [vmem:[%s240 + $0x4d0] sm:$0xff]
        %v4807 = vld [vmem:[%s240 + $0x4d8] sm:$0xff]
        %v4808 = vld [vmem:[%s240 + $0x4e0] sm:$0xff]
        %v4809 = vld [vmem:[%s240 + $0x4e8] sm:$0xff]
        %v4810 = vld [vmem:[%s240 + $0x4f0] sm:$0xff]
        %v4811 = vld [vmem:[%s240 + $0x4f8] sm:$0xff]
        %v4812 = vld [vmem:[%s240 + $0x500] sm:$0xff]
        %v4813 = vld [vmem:[%s240 + $0x508] sm:$0xff]
        %v4814 = vld [vmem:[%s240 + $0x510] sm:$0xff]
        %v4815 = vld [vmem:[%s240 + $0x518] sm:$0xff]
        %v4816 = vld [vmem:[%s240 + $0x520] sm:$0xff]
        %v4817 = vld [vmem:[%s240 + $0x528] sm:$0xff]
        %v4818 = vld [vmem:[%s240 + $0x530] sm:$0xff]
        %v4819 = vld [vmem:[%s240 + $0x538] sm:$0xff]
        %v4820 = vld [vmem:[%s240 + $0x540] sm:$0xff]
        %v4821 = vld [vmem:[%s240 + $0x548] sm:$0xff]
        %v4822 = vld [vmem:[%s240 + $0x550] sm:$0xff]
        %v4823 = vld [vmem:[%s240 + $0x558] sm:$0xff]
        %v4824 = vld [vmem:[%s240 + $0x560] sm:$0xff]
        %v4825 = vld [vmem:[%s240 + $0x568] sm:$0xff]
        %v4826 = vld [vmem:[%s240 + $0x570] sm:$0xff]
        %v4827 = vld [vmem:[%s240 + $0x578] sm:$0xff]
        %v4828 = vld [vmem:[%s240 + $0x580] sm:$0xff]
        %v4829 = vld [vmem:[%s240 + $0x588] sm:$0xff]
        %v4830 = vld [vmem:[%s240 + $0x590] sm:$0xff]
        %v4831 = vld [vmem:[%s240 + $0x598] sm:$0xff]
        %v4832 = vld [vmem:[%s240 + $0x5a0] sm:$0xff]
        %v4833 = vld [vmem:[%s240 + $0x5a8] sm:$0xff]
        %v4834 = vld [vmem:[%s240 + $0x5b0] sm:$0xff]
        %v4835 = vld [vmem:[%s240 + $0x5b8] sm:$0xff]
        %v4836 = vld [vmem:[%s240 + $0x5c0] sm:$0xff]
        %v4837 = vld [vmem:[%s240 + $0x5c8] sm:$0xff]
        %v4838 = vld [vmem:[%s240 + $0x5d0] sm:$0xff]
        %v4839 = vld [vmem:[%s240 + $0x5d8] sm:$0xff]
        %v4840 = vld [vmem:[%s240 + $0x5e0] sm:$0xff]
        %v4841 = vld [vmem:[%s240 + $0x5e8] sm:$0xff]
        %v4842 = vld [vmem:[%s240 + $0x5f0] sm:$0xff]
        %v4843 = vld [vmem:[%s240 + $0x5f8] sm:$0xff]
        %v4844 = vld [vmem:[%s240 + $0x600] sm:$0xff]
        %v4845 = vld [vmem:[%s240 + $0x608] sm:$0xff]
        %v4846 = vld [vmem:[%s240 + $0x610] sm:$0xff]
        %v4847 = vld [vmem:[%s240 + $0x618] sm:$0xff]
        %v4848 = vld [vmem:[%s240 + $0x620] sm:$0xff]
        %v4849 = vld [vmem:[%s240 + $0x628] sm:$0xff]
        %v4850 = vld [vmem:[%s240 + $0x630] sm:$0xff]
        %v4851 = vld [vmem:[%s240 + $0x638] sm:$0xff]
        %v4852 = vld [vmem:[%s240 + $0x640] sm:$0xff]
        %v4853 = vld [vmem:[%s240 + $0x648] sm:$0xff]
        %v4854 = vld [vmem:[%s240 + $0x650] sm:$0xff]
        %v4855 = vld [vmem:[%s240 + $0x658] sm:$0xff]
        %v4856 = vld [vmem:[%s240 + $0x660] sm:$0xff]
        %v4857 = vld [vmem:[%s240 + $0x668] sm:$0xff]
        %v4858 = vld [vmem:[%s240 + $0x670] sm:$0xff]
        %v4859 = vld [vmem:[%s240 + $0x678] sm:$0xff]
        %v4860 = vld [vmem:[%s240 + $0x680] sm:$0xff]
        %v4861 = vld [vmem:[%s240 + $0x688] sm:$0xff]
        %v4862 = vld [vmem:[%s240 + $0x690] sm:$0xff]
        %v4863 = vld [vmem:[%s240 + $0x698] sm:$0xff]
        %v4864 = vld [vmem:[%s240 + $0x6a0] sm:$0xff]
        %v4865 = vld [vmem:[%s240 + $0x6a8] sm:$0xff]
        %v4866 = vld [vmem:[%s240 + $0x6b0] sm:$0xff]
        %v4867 = vld [vmem:[%s240 + $0x6b8] sm:$0xff]
        %v4868 = vld [vmem:[%s240 + $0x6c0] sm:$0xff]
        %v4869 = vld [vmem:[%s240 + $0x6c8] sm:$0xff]
        %v4870 = vld [vmem:[%s240 + $0x6d0] sm:$0xff]
        %v4871 = vld [vmem:[%s240 + $0x6d8] sm:$0xff]
        %v4872 = vld [vmem:[%s240 + $0x6e0] sm:$0xff]
        %v4873 = vld [vmem:[%s240 + $0x6e8] sm:$0xff]
        %v4874 = vld [vmem:[%s240 + $0x6f0] sm:$0xff]
        %v4875 = vld [vmem:[%s240 + $0x6f8] sm:$0xff]
        %v4876 = vld [vmem:[%s240 + $0x700] sm:$0xff]
        %v4877 = vld [vmem:[%s240 + $0x708] sm:$0xff]
        %v4878 = vld [vmem:[%s240 + $0x710] sm:$0xff]
        %v4879 = vld [vmem:[%s240 + $0x718] sm:$0xff]
        %v4880 = vld [vmem:[%s240 + $0x720] sm:$0xff]
        %v4881 = vld [vmem:[%s240 + $0x728] sm:$0xff]
        %v4882 = vld [vmem:[%s240 + $0x730] sm:$0xff]
        %v4883 = vld [vmem:[%s240 + $0x738] sm:$0xff]
        %v4884 = vld [vmem:[%s240 + $0x740] sm:$0xff]
        %v4885 = vld [vmem:[%s240 + $0x748] sm:$0xff]
        %v4886 = vld [vmem:[%s240 + $0x750] sm:$0xff]
        %v4887 = vld [vmem:[%s240 + $0x758] sm:$0xff]
        %v4888 = vld [vmem:[%s240 + $0x760] sm:$0xff]
        %v4889 = vld [vmem:[%s240 + $0x768] sm:$0xff]
        %v4890 = vld [vmem:[%s240 + $0x770] sm:$0xff]
        %v4891 = vld [vmem:[%s240 + $0x778] sm:$0xff]
        %v4892 = vld [vmem:[%s240 + $0x780] sm:$0xff]
        %v4893 = vld [vmem:[%s240 + $0x788] sm:$0xff]
        %v4894 = vld [vmem:[%s240 + $0x790] sm:$0xff]
        %v4895 = vld [vmem:[%s240 + $0x798] sm:$0xff]
        %v4896 = vld [vmem:[%s240 + $0x7a0] sm:$0xff]
        %v4897 = vld [vmem:[%s240 + $0x7a8] sm:$0xff]
        %v4898 = vld [vmem:[%s240 + $0x7b0] sm:$0xff]
        %v4899 = vld [vmem:[%s240 + $0x7b8] sm:$0xff]
        %v4900 = vld [vmem:[%s240 + $0x7c0] sm:$0xff]
        %v4901 = vld [vmem:[%s240 + $0x7c8] sm:$0xff]
        %v4902 = vld [vmem:[%s240 + $0x7d0] sm:$0xff]
        %v4903 = vld [vmem:[%s240 + $0x7d8] sm:$0xff]
        %v4904 = vld [vmem:[%s240 + $0x7e0] sm:$0xff]
        %v4905 = vld [vmem:[%s240 + $0x7e8] sm:$0xff]
        %v4906 = vld [vmem:[%s240 + $0x7f0] sm:$0xff]
        %v4907 = vld [vmem:[%s240 + $0x7f8] sm:$0xff]
        %s4908 = sadd.s32 %s4648, 1
        %s4909 = smul.u32 %s4908, 4
        %s4910 = scalar_lea.vmem [#allocation2], %s4909
        %v4911 = vld [vmem:[%s4910] sm:$0xf]
        %s4912 = scalar_lea.vmem %s240, 2048 [#allocation3]
        %v4913 = vld [vmem:[%s4912] sm:$0xff]
        %v4914 = vld [vmem:[%s4912 + $0x8] sm:$0xff]
        %v4915 = vld [vmem:[%s4912 + $0x10] sm:$0xff]
        %v4916 = vld [vmem:[%s4912 + $0x18] sm:$0xff]
        %v4917 = vld [vmem:[%s4912 + $0x20] sm:$0xff]
        %v4918 = vld [vmem:[%s4912 + $0x28] sm:$0xff]
        %v4919 = vld [vmem:[%s4912 + $0x30] sm:$0xff]
        %v4920 = vld [vmem:[%s4912 + $0x38] sm:$0xff]
        %v4921 = vld [vmem:[%s4912 + $0x40] sm:$0xff]
        %v4922 = vld [vmem:[%s4912 + $0x48] sm:$0xff]
        %v4923 = vld [vmem:[%s4912 + $0x50] sm:$0xff]
        %v4924 = vld [vmem:[%s4912 + $0x58] sm:$0xff]
        %v4925 = vld [vmem:[%s4912 + $0x60] sm:$0xff]
        %v4926 = vld [vmem:[%s4912 + $0x68] sm:$0xff]
        %v4927 = vld [vmem:[%s4912 + $0x70] sm:$0xff]
        %v4928 = vld [vmem:[%s4912 + $0x78] sm:$0xff]
        %v4929 = vld [vmem:[%s4912 + $0x80] sm:$0xff]
        %v4930 = vld [vmem:[%s4912 + $0x88] sm:$0xff]
        %v4931 = vld [vmem:[%s4912 + $0x90] sm:$0xff]
        %v4932 = vld [vmem:[%s4912 + $0x98] sm:$0xff]
        %v4933 = vld [vmem:[%s4912 + $0xa0] sm:$0xff]
        %v4934 = vld [vmem:[%s4912 + $0xa8] sm:$0xff]
        %v4935 = vld [vmem:[%s4912 + $0xb0] sm:$0xff]
        %v4936 = vld [vmem:[%s4912 + $0xb8] sm:$0xff]
        %v4937 = vld [vmem:[%s4912 + $0xc0] sm:$0xff]
        %v4938 = vld [vmem:[%s4912 + $0xc8] sm:$0xff]
        %v4939 = vld [vmem:[%s4912 + $0xd0] sm:$0xff]
        %v4940 = vld [vmem:[%s4912 + $0xd8] sm:$0xff]
        %v4941 = vld [vmem:[%s4912 + $0xe0] sm:$0xff]
        %v4942 = vld [vmem:[%s4912 + $0xe8] sm:$0xff]
        %v4943 = vld [vmem:[%s4912 + $0xf0] sm:$0xff]
        %v4944 = vld [vmem:[%s4912 + $0xf8] sm:$0xff]
        %v4945 = vld [vmem:[%s4912 + $0x100] sm:$0xff]
        %v4946 = vld [vmem:[%s4912 + $0x108] sm:$0xff]
        %v4947 = vld [vmem:[%s4912 + $0x110] sm:$0xff]
        %v4948 = vld [vmem:[%s4912 + $0x118] sm:$0xff]
        %v4949 = vld [vmem:[%s4912 + $0x120] sm:$0xff]
        %v4950 = vld [vmem:[%s4912 + $0x128] sm:$0xff]
        %v4951 = vld [vmem:[%s4912 + $0x130] sm:$0xff]
        %v4952 = vld [vmem:[%s4912 + $0x138] sm:$0xff]
        %v4953 = vld [vmem:[%s4912 + $0x140] sm:$0xff]
        %v4954 = vld [vmem:[%s4912 + $0x148] sm:$0xff]
        %v4955 = vld [vmem:[%s4912 + $0x150] sm:$0xff]
        %v4956 = vld [vmem:[%s4912 + $0x158] sm:$0xff]
        %v4957 = vld [vmem:[%s4912 + $0x160] sm:$0xff]
        %v4958 = vld [vmem:[%s4912 + $0x168] sm:$0xff]
        %v4959 = vld [vmem:[%s4912 + $0x170] sm:$0xff]
        %v4960 = vld [vmem:[%s4912 + $0x178] sm:$0xff]
        %v4961 = vld [vmem:[%s4912 + $0x180] sm:$0xff]
        %v4962 = vld [vmem:[%s4912 + $0x188] sm:$0xff]
        %v4963 = vld [vmem:[%s4912 + $0x190] sm:$0xff]
        %v4964 = vld [vmem:[%s4912 + $0x198] sm:$0xff]
        %v4965 = vld [vmem:[%s4912 + $0x1a0] sm:$0xff]
        %v4966 = vld [vmem:[%s4912 + $0x1a8] sm:$0xff]
        %v4967 = vld [vmem:[%s4912 + $0x1b0] sm:$0xff]
        %v4968 = vld [vmem:[%s4912 + $0x1b8] sm:$0xff]
        %v4969 = vld [vmem:[%s4912 + $0x1c0] sm:$0xff]
        %v4970 = vld [vmem:[%s4912 + $0x1c8] sm:$0xff]
        %v4971 = vld [vmem:[%s4912 + $0x1d0] sm:$0xff]
        %v4972 = vld [vmem:[%s4912 + $0x1d8] sm:$0xff]
        %v4973 = vld [vmem:[%s4912 + $0x1e0] sm:$0xff]
        %v4974 = vld [vmem:[%s4912 + $0x1e8] sm:$0xff]
        %v4975 = vld [vmem:[%s4912 + $0x1f0] sm:$0xff]
        %v4976 = vld [vmem:[%s4912 + $0x1f8] sm:$0xff]
        %v4977 = vld [vmem:[%s4912 + $0x200] sm:$0xff]
        %v4978 = vld [vmem:[%s4912 + $0x208] sm:$0xff]
        %v4979 = vld [vmem:[%s4912 + $0x210] sm:$0xff]
        %v4980 = vld [vmem:[%s4912 + $0x218] sm:$0xff]
        %v4981 = vld [vmem:[%s4912 + $0x220] sm:$0xff]
        %v4982 = vld [vmem:[%s4912 + $0x228] sm:$0xff]
        %v4983 = vld [vmem:[%s4912 + $0x230] sm:$0xff]
        %v4984 = vld [vmem:[%s4912 + $0x238] sm:$0xff]
        %v4985 = vld [vmem:[%s4912 + $0x240] sm:$0xff]
        %v4986 = vld [vmem:[%s4912 + $0x248] sm:$0xff]
        %v4987 = vld [vmem:[%s4912 + $0x250] sm:$0xff]
        %v4988 = vld [vmem:[%s4912 + $0x258] sm:$0xff]
        %v4989 = vld [vmem:[%s4912 + $0x260] sm:$0xff]
        %v4990 = vld [vmem:[%s4912 + $0x268] sm:$0xff]
        %v4991 = vld [vmem:[%s4912 + $0x270] sm:$0xff]
        %v4992 = vld [vmem:[%s4912 + $0x278] sm:$0xff]
        %v4993 = vld [vmem:[%s4912 + $0x280] sm:$0xff]
        %v4994 = vld [vmem:[%s4912 + $0x288] sm:$0xff]
        %v4995 = vld [vmem:[%s4912 + $0x290] sm:$0xff]
        %v4996 = vld [vmem:[%s4912 + $0x298] sm:$0xff]
        %v4997 = vld [vmem:[%s4912 + $0x2a0] sm:$0xff]
        %v4998 = vld [vmem:[%s4912 + $0x2a8] sm:$0xff]
        %v4999 = vld [vmem:[%s4912 + $0x2b0] sm:$0xff]
        %v5000 = vld [vmem:[%s4912 + $0x2b8] sm:$0xff]
        %v5001 = vld [vmem:[%s4912 + $0x2c0] sm:$0xff]
        %v5002 = vld [vmem:[%s4912 + $0x2c8] sm:$0xff]
        %v5003 = vld [vmem:[%s4912 + $0x2d0] sm:$0xff]
        %v5004 = vld [vmem:[%s4912 + $0x2d8] sm:$0xff]
        %v5005 = vld [vmem:[%s4912 + $0x2e0] sm:$0xff]
        %v5006 = vld [vmem:[%s4912 + $0x2e8] sm:$0xff]
        %v5007 = vld [vmem:[%s4912 + $0x2f0] sm:$0xff]
        %v5008 = vld [vmem:[%s4912 + $0x2f8] sm:$0xff]
        %v5009 = vld [vmem:[%s4912 + $0x300] sm:$0xff]
        %v5010 = vld [vmem:[%s4912 + $0x308] sm:$0xff]
        %v5011 = vld [vmem:[%s4912 + $0x310] sm:$0xff]
        %v5012 = vld [vmem:[%s4912 + $0x318] sm:$0xff]
        %v5013 = vld [vmem:[%s4912 + $0x320] sm:$0xff]
        %v5014 = vld [vmem:[%s4912 + $0x328] sm:$0xff]
        %v5015 = vld [vmem:[%s4912 + $0x330] sm:$0xff]
        %v5016 = vld [vmem:[%s4912 + $0x338] sm:$0xff]
        %v5017 = vld [vmem:[%s4912 + $0x340] sm:$0xff]
        %v5018 = vld [vmem:[%s4912 + $0x348] sm:$0xff]
        %v5019 = vld [vmem:[%s4912 + $0x350] sm:$0xff]
        %v5020 = vld [vmem:[%s4912 + $0x358] sm:$0xff]
        %v5021 = vld [vmem:[%s4912 + $0x360] sm:$0xff]
        %v5022 = vld [vmem:[%s4912 + $0x368] sm:$0xff]
        %v5023 = vld [vmem:[%s4912 + $0x370] sm:$0xff]
        %v5024 = vld [vmem:[%s4912 + $0x378] sm:$0xff]
        %v5025 = vld [vmem:[%s4912 + $0x380] sm:$0xff]
        %v5026 = vld [vmem:[%s4912 + $0x388] sm:$0xff]
        %v5027 = vld [vmem:[%s4912 + $0x390] sm:$0xff]
        %v5028 = vld [vmem:[%s4912 + $0x398] sm:$0xff]
        %v5029 = vld [vmem:[%s4912 + $0x3a0] sm:$0xff]
        %v5030 = vld [vmem:[%s4912 + $0x3a8] sm:$0xff]
        %v5031 = vld [vmem:[%s4912 + $0x3b0] sm:$0xff]
        %v5032 = vld [vmem:[%s4912 + $0x3b8] sm:$0xff]
        %v5033 = vld [vmem:[%s4912 + $0x3c0] sm:$0xff]
        %v5034 = vld [vmem:[%s4912 + $0x3c8] sm:$0xff]
        %v5035 = vld [vmem:[%s4912 + $0x3d0] sm:$0xff]
        %v5036 = vld [vmem:[%s4912 + $0x3d8] sm:$0xff]
        %v5037 = vld [vmem:[%s4912 + $0x3e0] sm:$0xff]
        %v5038 = vld [vmem:[%s4912 + $0x3e8] sm:$0xff]
        %v5039 = vld [vmem:[%s4912 + $0x3f0] sm:$0xff]
        %v5040 = vld [vmem:[%s4912 + $0x3f8] sm:$0xff]
        %v5041 = vld [vmem:[%s4912 + $0x400] sm:$0xff]
        %v5042 = vld [vmem:[%s4912 + $0x408] sm:$0xff]
        %v5043 = vld [vmem:[%s4912 + $0x410] sm:$0xff]
        %v5044 = vld [vmem:[%s4912 + $0x418] sm:$0xff]
        %v5045 = vld [vmem:[%s4912 + $0x420] sm:$0xff]
        %v5046 = vld [vmem:[%s4912 + $0x428] sm:$0xff]
        %v5047 = vld [vmem:[%s4912 + $0x430] sm:$0xff]
        %v5048 = vld [vmem:[%s4912 + $0x438] sm:$0xff]
        %v5049 = vld [vmem:[%s4912 + $0x440] sm:$0xff]
        %v5050 = vld [vmem:[%s4912 + $0x448] sm:$0xff]
        %v5051 = vld [vmem:[%s4912 + $0x450] sm:$0xff]
        %v5052 = vld [vmem:[%s4912 + $0x458] sm:$0xff]
        %v5053 = vld [vmem:[%s4912 + $0x460] sm:$0xff]
        %v5054 = vld [vmem:[%s4912 + $0x468] sm:$0xff]
        %v5055 = vld [vmem:[%s4912 + $0x470] sm:$0xff]
        %v5056 = vld [vmem:[%s4912 + $0x478] sm:$0xff]
        %v5057 = vld [vmem:[%s4912 + $0x480] sm:$0xff]
        %v5058 = vld [vmem:[%s4912 + $0x488] sm:$0xff]
        %v5059 = vld [vmem:[%s4912 + $0x490] sm:$0xff]
        %v5060 = vld [vmem:[%s4912 + $0x498] sm:$0xff]
        %v5061 = vld [vmem:[%s4912 + $0x4a0] sm:$0xff]
        %v5062 = vld [vmem:[%s4912 + $0x4a8] sm:$0xff]
        %v5063 = vld [vmem:[%s4912 + $0x4b0] sm:$0xff]
        %v5064 = vld [vmem:[%s4912 + $0x4b8] sm:$0xff]
        %v5065 = vld [vmem:[%s4912 + $0x4c0] sm:$0xff]
        %v5066 = vld [vmem:[%s4912 + $0x4c8] sm:$0xff]
        %v5067 = vld [vmem:[%s4912 + $0x4d0] sm:$0xff]
        %v5068 = vld [vmem:[%s4912 + $0x4d8] sm:$0xff]
        %v5069 = vld [vmem:[%s4912 + $0x4e0] sm:$0xff]
        %v5070 = vld [vmem:[%s4912 + $0x4e8] sm:$0xff]
        %v5071 = vld [vmem:[%s4912 + $0x4f0] sm:$0xff]
        %v5072 = vld [vmem:[%s4912 + $0x4f8] sm:$0xff]
        %v5073 = vld [vmem:[%s4912 + $0x500] sm:$0xff]
        %v5074 = vld [vmem:[%s4912 + $0x508] sm:$0xff]
        %v5075 = vld [vmem:[%s4912 + $0x510] sm:$0xff]
        %v5076 = vld [vmem:[%s4912 + $0x518] sm:$0xff]
        %v5077 = vld [vmem:[%s4912 + $0x520] sm:$0xff]
        %v5078 = vld [vmem:[%s4912 + $0x528] sm:$0xff]
        %v5079 = vld [vmem:[%s4912 + $0x530] sm:$0xff]
        %v5080 = vld [vmem:[%s4912 + $0x538] sm:$0xff]
        %v5081 = vld [vmem:[%s4912 + $0x540] sm:$0xff]
        %v5082 = vld [vmem:[%s4912 + $0x548] sm:$0xff]
        %v5083 = vld [vmem:[%s4912 + $0x550] sm:$0xff]
        %v5084 = vld [vmem:[%s4912 + $0x558] sm:$0xff]
        %v5085 = vld [vmem:[%s4912 + $0x560] sm:$0xff]
        %v5086 = vld [vmem:[%s4912 + $0x568] sm:$0xff]
        %v5087 = vld [vmem:[%s4912 + $0x570] sm:$0xff]
        %v5088 = vld [vmem:[%s4912 + $0x578] sm:$0xff]
        %v5089 = vld [vmem:[%s4912 + $0x580] sm:$0xff]
        %v5090 = vld [vmem:[%s4912 + $0x588] sm:$0xff]
        %v5091 = vld [vmem:[%s4912 + $0x590] sm:$0xff]
        %v5092 = vld [vmem:[%s4912 + $0x598] sm:$0xff]
        %v5093 = vld [vmem:[%s4912 + $0x5a0] sm:$0xff]
        %v5094 = vld [vmem:[%s4912 + $0x5a8] sm:$0xff]
        %v5095 = vld [vmem:[%s4912 + $0x5b0] sm:$0xff]
        %v5096 = vld [vmem:[%s4912 + $0x5b8] sm:$0xff]
        %v5097 = vld [vmem:[%s4912 + $0x5c0] sm:$0xff]
        %v5098 = vld [vmem:[%s4912 + $0x5c8] sm:$0xff]
        %v5099 = vld [vmem:[%s4912 + $0x5d0] sm:$0xff]
        %v5100 = vld [vmem:[%s4912 + $0x5d8] sm:$0xff]
        %v5101 = vld [vmem:[%s4912 + $0x5e0] sm:$0xff]
        %v5102 = vld [vmem:[%s4912 + $0x5e8] sm:$0xff]
        %v5103 = vld [vmem:[%s4912 + $0x5f0] sm:$0xff]
        %v5104 = vld [vmem:[%s4912 + $0x5f8] sm:$0xff]
        %v5105 = vld [vmem:[%s4912 + $0x600] sm:$0xff]
        %v5106 = vld [vmem:[%s4912 + $0x608] sm:$0xff]
        %v5107 = vld [vmem:[%s4912 + $0x610] sm:$0xff]
        %v5108 = vld [vmem:[%s4912 + $0x618] sm:$0xff]
        %v5109 = vld [vmem:[%s4912 + $0x620] sm:$0xff]
        %v5110 = vld [vmem:[%s4912 + $0x628] sm:$0xff]
        %v5111 = vld [vmem:[%s4912 + $0x630] sm:$0xff]
        %v5112 = vld [vmem:[%s4912 + $0x638] sm:$0xff]
        %v5113 = vld [vmem:[%s4912 + $0x640] sm:$0xff]
        %v5114 = vld [vmem:[%s4912 + $0x648] sm:$0xff]
        %v5115 = vld [vmem:[%s4912 + $0x650] sm:$0xff]
        %v5116 = vld [vmem:[%s4912 + $0x658] sm:$0xff]
        %v5117 = vld [vmem:[%s4912 + $0x660] sm:$0xff]
        %v5118 = vld [vmem:[%s4912 + $0x668] sm:$0xff]
        %v5119 = vld [vmem:[%s4912 + $0x670] sm:$0xff]
        %v5120 = vld [vmem:[%s4912 + $0x678] sm:$0xff]
        %v5121 = vld [vmem:[%s4912 + $0x680] sm:$0xff]
        %v5122 = vld [vmem:[%s4912 + $0x688] sm:$0xff]
        %v5123 = vld [vmem:[%s4912 + $0x690] sm:$0xff]
        %v5124 = vld [vmem:[%s4912 + $0x698] sm:$0xff]
        %v5125 = vld [vmem:[%s4912 + $0x6a0] sm:$0xff]
        %v5126 = vld [vmem:[%s4912 + $0x6a8] sm:$0xff]
        %v5127 = vld [vmem:[%s4912 + $0x6b0] sm:$0xff]
        %v5128 = vld [vmem:[%s4912 + $0x6b8] sm:$0xff]
        %v5129 = vld [vmem:[%s4912 + $0x6c0] sm:$0xff]
        %v5130 = vld [vmem:[%s4912 + $0x6c8] sm:$0xff]
        %v5131 = vld [vmem:[%s4912 + $0x6d0] sm:$0xff]
        %v5132 = vld [vmem:[%s4912 + $0x6d8] sm:$0xff]
        %v5133 = vld [vmem:[%s4912 + $0x6e0] sm:$0xff]
        %v5134 = vld [vmem:[%s4912 + $0x6e8] sm:$0xff]
        %v5135 = vld [vmem:[%s4912 + $0x6f0] sm:$0xff]
        %v5136 = vld [vmem:[%s4912 + $0x6f8] sm:$0xff]
        %v5137 = vld [vmem:[%s4912 + $0x700] sm:$0xff]
        %v5138 = vld [vmem:[%s4912 + $0x708] sm:$0xff]
        %v5139 = vld [vmem:[%s4912 + $0x710] sm:$0xff]
        %v5140 = vld [vmem:[%s4912 + $0x718] sm:$0xff]
        %v5141 = vld [vmem:[%s4912 + $0x720] sm:$0xff]
        %v5142 = vld [vmem:[%s4912 + $0x728] sm:$0xff]
        %v5143 = vld [vmem:[%s4912 + $0x730] sm:$0xff]
        %v5144 = vld [vmem:[%s4912 + $0x738] sm:$0xff]
        %v5145 = vld [vmem:[%s4912 + $0x740] sm:$0xff]
        %v5146 = vld [vmem:[%s4912 + $0x748] sm:$0xff]
        %v5147 = vld [vmem:[%s4912 + $0x750] sm:$0xff]
        %v5148 = vld [vmem:[%s4912 + $0x758] sm:$0xff]
        %v5149 = vld [vmem:[%s4912 + $0x760] sm:$0xff]
        %v5150 = vld [vmem:[%s4912 + $0x768] sm:$0xff]
        %v5151 = vld [vmem:[%s4912 + $0x770] sm:$0xff]
        %v5152 = vld [vmem:[%s4912 + $0x778] sm:$0xff]
        %v5153 = vld [vmem:[%s4912 + $0x780] sm:$0xff]
        %v5154 = vld [vmem:[%s4912 + $0x788] sm:$0xff]
        %v5155 = vld [vmem:[%s4912 + $0x790] sm:$0xff]
        %v5156 = vld [vmem:[%s4912 + $0x798] sm:$0xff]
        %v5157 = vld [vmem:[%s4912 + $0x7a0] sm:$0xff]
        %v5158 = vld [vmem:[%s4912 + $0x7a8] sm:$0xff]
        %v5159 = vld [vmem:[%s4912 + $0x7b0] sm:$0xff]
        %v5160 = vld [vmem:[%s4912 + $0x7b8] sm:$0xff]
        %v5161 = vld [vmem:[%s4912 + $0x7c0] sm:$0xff]
        %v5162 = vld [vmem:[%s4912 + $0x7c8] sm:$0xff]
        %v5163 = vld [vmem:[%s4912 + $0x7d0] sm:$0xff]
        %v5164 = vld [vmem:[%s4912 + $0x7d8] sm:$0xff]
        %v5165 = vld [vmem:[%s4912 + $0x7e0] sm:$0xff]
        %v5166 = vld [vmem:[%s4912 + $0x7e8] sm:$0xff]
        %v5167 = vld [vmem:[%s4912 + $0x7f0] sm:$0xff]
        %v5168 = vld [vmem:[%s4912 + $0x7f8] sm:$0xff]
        %v5171 = vunpack.c.l.s4 1966171168
        %v5172 = vunpack.c.0.s8 %v5171
        %v5173 = vlaneseq
        %v5174 = vshrl.u32 %v5173, 7
        %v5175 = vsub.s32 %v5172, %v5174
        %v5176 = vrot.slane %v4911, %v5175
        %v5177 = vcombine.high %v5176, %v5176
        %v5179 = vunpack.c.l.s4 1966171168
        %v5180 = vunpack.c.0.s8 %v5179
        %v5181 = vlaneseq
        %v5182 = vshrl.u32 %v5181, 7
        %v5183 = vsub.s32 %v5180, %v5182
        %v5184 = vrot.slane %v5176, %v5183
        %v5186 = vunpack.c.l.s4 1966171168
        %v5187 = vunpack.c.0.s8 %v5186
        %v5188 = vlaneseq
        %v5189 = vshrl.u32 %v5188, 7
        %v5190 = vsub.s32 %v5187, %v5189
        %v5191 = vrot.slane %v5177, %v5190
        %v5192 = vcombine.high %v5184, %v5184
        %v5193 = vcombine.high %v5191, %v5191
        %v5454 = vunpack.c.l.b16 %v4913
        %v5455 = vunpack.c.h.b16 %v4913
        %v5456 = vunpack.c.l.b16 %v4914
        %v5457 = vunpack.c.h.b16 %v4914
        %v5458 = vunpack.c.l.b16 %v4915
        %v5459 = vunpack.c.h.b16 %v4915
        %v5460 = vunpack.c.l.b16 %v4916
        %v5461 = vunpack.c.h.b16 %v4916
        %v5462 = vunpack.c.l.b16 %v4917
        %v5463 = vunpack.c.h.b16 %v4917
        %v5464 = vunpack.c.l.b16 %v4918
        %v5465 = vunpack.c.h.b16 %v4918
        %v5466 = vunpack.c.l.b16 %v4919
        %v5467 = vunpack.c.h.b16 %v4919
        %v5468 = vunpack.c.l.b16 %v4920
        %v5469 = vunpack.c.h.b16 %v4920
        %v5470 = vunpack.c.l.b16 %v4921
        %v5471 = vunpack.c.h.b16 %v4921
        %v5472 = vunpack.c.l.b16 %v4922
        %v5473 = vunpack.c.h.b16 %v4922
        %v5474 = vunpack.c.l.b16 %v4923
        %v5475 = vunpack.c.h.b16 %v4923
        %v5476 = vunpack.c.l.b16 %v4924
        %v5477 = vunpack.c.h.b16 %v4924
        %v5478 = vunpack.c.l.b16 %v4925
        %v5479 = vunpack.c.h.b16 %v4925
        %v5480 = vunpack.c.l.b16 %v4926
        %v5481 = vunpack.c.h.b16 %v4926
        %v5482 = vunpack.c.l.b16 %v4927
        %v5483 = vunpack.c.h.b16 %v4927
        %v5484 = vunpack.c.l.b16 %v4928
        %v5485 = vunpack.c.h.b16 %v4928
        %v5486 = vunpack.c.l.b16 %v4929
        %v5487 = vunpack.c.h.b16 %v4929
        %v5488 = vunpack.c.l.b16 %v4930
        %v5489 = vunpack.c.h.b16 %v4930
        %v5490 = vunpack.c.l.b16 %v4931
        %v5491 = vunpack.c.h.b16 %v4931
        %v5492 = vunpack.c.l.b16 %v4932
        %v5493 = vunpack.c.h.b16 %v4932
        %v5494 = vunpack.c.l.b16 %v4933
        %v5495 = vunpack.c.h.b16 %v4933
        %v5496 = vunpack.c.l.b16 %v4934
        %v5497 = vunpack.c.h.b16 %v4934
        %v5498 = vunpack.c.l.b16 %v4935
        %v5499 = vunpack.c.h.b16 %v4935
        %v5500 = vunpack.c.l.b16 %v4936
        %v5501 = vunpack.c.h.b16 %v4936
        %v5502 = vunpack.c.l.b16 %v4937
        %v5503 = vunpack.c.h.b16 %v4937
        %v5504 = vunpack.c.l.b16 %v4938
        %v5505 = vunpack.c.h.b16 %v4938
        %v5506 = vunpack.c.l.b16 %v4939
        %v5507 = vunpack.c.h.b16 %v4939
        %v5508 = vunpack.c.l.b16 %v4940
        %v5509 = vunpack.c.h.b16 %v4940
        %v5510 = vunpack.c.l.b16 %v4941
        %v5511 = vunpack.c.h.b16 %v4941
        %v5512 = vunpack.c.l.b16 %v4942
        %v5513 = vunpack.c.h.b16 %v4942
        %v5514 = vunpack.c.l.b16 %v4943
        %v5515 = vunpack.c.h.b16 %v4943
        %v5516 = vunpack.c.l.b16 %v4944
        %v5517 = vunpack.c.h.b16 %v4944
        %v5518 = vunpack.c.l.b16 %v4945
        %v5519 = vunpack.c.h.b16 %v4945
        %v5520 = vunpack.c.l.b16 %v4946
        %v5521 = vunpack.c.h.b16 %v4946
        %v5522 = vunpack.c.l.b16 %v4947
        %v5523 = vunpack.c.h.b16 %v4947
        %v5524 = vunpack.c.l.b16 %v4948
        %v5525 = vunpack.c.h.b16 %v4948
        %v5526 = vunpack.c.l.b16 %v4949
        %v5527 = vunpack.c.h.b16 %v4949
        %v5528 = vunpack.c.l.b16 %v4950
        %v5529 = vunpack.c.h.b16 %v4950
        %v5530 = vunpack.c.l.b16 %v4951
        %v5531 = vunpack.c.h.b16 %v4951
        %v5532 = vunpack.c.l.b16 %v4952
        %v5533 = vunpack.c.h.b16 %v4952
        %v5534 = vunpack.c.l.b16 %v4953
        %v5535 = vunpack.c.h.b16 %v4953
        %v5536 = vunpack.c.l.b16 %v4954
        %v5537 = vunpack.c.h.b16 %v4954
        %v5538 = vunpack.c.l.b16 %v4955
        %v5539 = vunpack.c.h.b16 %v4955
        %v5540 = vunpack.c.l.b16 %v4956
        %v5541 = vunpack.c.h.b16 %v4956
        %v5542 = vunpack.c.l.b16 %v4957
        %v5543 = vunpack.c.h.b16 %v4957
        %v5544 = vunpack.c.l.b16 %v4958
        %v5545 = vunpack.c.h.b16 %v4958
        %v5546 = vunpack.c.l.b16 %v4959
        %v5547 = vunpack.c.h.b16 %v4959
        %v5548 = vunpack.c.l.b16 %v4960
        %v5549 = vunpack.c.h.b16 %v4960
        %v5550 = vunpack.c.l.b16 %v4961
        %v5551 = vunpack.c.h.b16 %v4961
        %v5552 = vunpack.c.l.b16 %v4962
        %v5553 = vunpack.c.h.b16 %v4962
        %v5554 = vunpack.c.l.b16 %v4963
        %v5555 = vunpack.c.h.b16 %v4963
        %v5556 = vunpack.c.l.b16 %v4964
        %v5557 = vunpack.c.h.b16 %v4964
        %v5558 = vunpack.c.l.b16 %v4965
        %v5559 = vunpack.c.h.b16 %v4965
        %v5560 = vunpack.c.l.b16 %v4966
        %v5561 = vunpack.c.h.b16 %v4966
        %v5562 = vunpack.c.l.b16 %v4967
        %v5563 = vunpack.c.h.b16 %v4967
        %v5564 = vunpack.c.l.b16 %v4968
        %v5565 = vunpack.c.h.b16 %v4968
        %v5566 = vunpack.c.l.b16 %v4969
        %v5567 = vunpack.c.h.b16 %v4969
        %v5568 = vunpack.c.l.b16 %v4970
        %v5569 = vunpack.c.h.b16 %v4970
        %v5570 = vunpack.c.l.b16 %v4971
        %v5571 = vunpack.c.h.b16 %v4971
        %v5572 = vunpack.c.l.b16 %v4972
        %v5573 = vunpack.c.h.b16 %v4972
        %v5574 = vunpack.c.l.b16 %v4973
        %v5575 = vunpack.c.h.b16 %v4973
        %v5576 = vunpack.c.l.b16 %v4974
        %v5577 = vunpack.c.h.b16 %v4974
        %v5578 = vunpack.c.l.b16 %v4975
        %v5579 = vunpack.c.h.b16 %v4975
        %v5580 = vunpack.c.l.b16 %v4976
        %v5581 = vunpack.c.h.b16 %v4976
        %v5582 = vunpack.c.l.b16 %v4977
        %v5583 = vunpack.c.h.b16 %v4977
        %v5584 = vunpack.c.l.b16 %v4978
        %v5585 = vunpack.c.h.b16 %v4978
        %v5586 = vunpack.c.l.b16 %v4979
        %v5587 = vunpack.c.h.b16 %v4979
        %v5588 = vunpack.c.l.b16 %v4980
        %v5589 = vunpack.c.h.b16 %v4980
        %v5590 = vunpack.c.l.b16 %v4981
        %v5591 = vunpack.c.h.b16 %v4981
        %v5592 = vunpack.c.l.b16 %v4982
        %v5593 = vunpack.c.h.b16 %v4982
        %v5594 = vunpack.c.l.b16 %v4983
        %v5595 = vunpack.c.h.b16 %v4983
        %v5596 = vunpack.c.l.b16 %v4984
        %v5597 = vunpack.c.h.b16 %v4984
        %v5598 = vunpack.c.l.b16 %v4985
        %v5599 = vunpack.c.h.b16 %v4985
        %v5600 = vunpack.c.l.b16 %v4986
        %v5601 = vunpack.c.h.b16 %v4986
        %v5602 = vunpack.c.l.b16 %v4987
        %v5603 = vunpack.c.h.b16 %v4987
        %v5604 = vunpack.c.l.b16 %v4988
        %v5605 = vunpack.c.h.b16 %v4988
        %v5606 = vunpack.c.l.b16 %v4989
        %v5607 = vunpack.c.h.b16 %v4989
        %v5608 = vunpack.c.l.b16 %v4990
        %v5609 = vunpack.c.h.b16 %v4990
        %v5610 = vunpack.c.l.b16 %v4991
        %v5611 = vunpack.c.h.b16 %v4991
        %v5612 = vunpack.c.l.b16 %v4992
        %v5613 = vunpack.c.h.b16 %v4992
        %v5614 = vunpack.c.l.b16 %v4993
        %v5615 = vunpack.c.h.b16 %v4993
        %v5616 = vunpack.c.l.b16 %v4994
        %v5617 = vunpack.c.h.b16 %v4994
        %v5618 = vunpack.c.l.b16 %v4995
        %v5619 = vunpack.c.h.b16 %v4995
        %v5620 = vunpack.c.l.b16 %v4996
        %v5621 = vunpack.c.h.b16 %v4996
        %v5622 = vunpack.c.l.b16 %v4997
        %v5623 = vunpack.c.h.b16 %v4997
        %v5624 = vunpack.c.l.b16 %v4998
        %v5625 = vunpack.c.h.b16 %v4998
        %v5626 = vunpack.c.l.b16 %v4999
        %v5627 = vunpack.c.h.b16 %v4999
        %v5628 = vunpack.c.l.b16 %v5000
        %v5629 = vunpack.c.h.b16 %v5000
        %v5630 = vunpack.c.l.b16 %v5001
        %v5631 = vunpack.c.h.b16 %v5001
        %v5632 = vunpack.c.l.b16 %v5002
        %v5633 = vunpack.c.h.b16 %v5002
        %v5634 = vunpack.c.l.b16 %v5003
        %v5635 = vunpack.c.h.b16 %v5003
        %v5636 = vunpack.c.l.b16 %v5004
        %v5637 = vunpack.c.h.b16 %v5004
        %v5638 = vunpack.c.l.b16 %v5005
        %v5639 = vunpack.c.h.b16 %v5005
        %v5640 = vunpack.c.l.b16 %v5006
        %v5641 = vunpack.c.h.b16 %v5006
        %v5642 = vunpack.c.l.b16 %v5007
        %v5643 = vunpack.c.h.b16 %v5007
        %v5644 = vunpack.c.l.b16 %v5008
        %v5645 = vunpack.c.h.b16 %v5008
        %v5646 = vunpack.c.l.b16 %v5009
        %v5647 = vunpack.c.h.b16 %v5009
        %v5648 = vunpack.c.l.b16 %v5010
        %v5649 = vunpack.c.h.b16 %v5010
        %v5650 = vunpack.c.l.b16 %v5011
        %v5651 = vunpack.c.h.b16 %v5011
        %v5652 = vunpack.c.l.b16 %v5012
        %v5653 = vunpack.c.h.b16 %v5012
        %v5654 = vunpack.c.l.b16 %v5013
        %v5655 = vunpack.c.h.b16 %v5013
        %v5656 = vunpack.c.l.b16 %v5014
        %v5657 = vunpack.c.h.b16 %v5014
        %v5658 = vunpack.c.l.b16 %v5015
        %v5659 = vunpack.c.h.b16 %v5015
        %v5660 = vunpack.c.l.b16 %v5016
        %v5661 = vunpack.c.h.b16 %v5016
        %v5662 = vunpack.c.l.b16 %v5017
        %v5663 = vunpack.c.h.b16 %v5017
        %v5664 = vunpack.c.l.b16 %v5018
        %v5665 = vunpack.c.h.b16 %v5018
        %v5666 = vunpack.c.l.b16 %v5019
        %v5667 = vunpack.c.h.b16 %v5019
        %v5668 = vunpack.c.l.b16 %v5020
        %v5669 = vunpack.c.h.b16 %v5020
        %v5670 = vunpack.c.l.b16 %v5021
        %v5671 = vunpack.c.h.b16 %v5021
        %v5672 = vunpack.c.l.b16 %v5022
        %v5673 = vunpack.c.h.b16 %v5022
        %v5674 = vunpack.c.l.b16 %v5023
        %v5675 = vunpack.c.h.b16 %v5023
        %v5676 = vunpack.c.l.b16 %v5024
        %v5677 = vunpack.c.h.b16 %v5024
        %v5678 = vunpack.c.l.b16 %v5025
        %v5679 = vunpack.c.h.b16 %v5025
        %v5680 = vunpack.c.l.b16 %v5026
        %v5681 = vunpack.c.h.b16 %v5026
        %v5682 = vunpack.c.l.b16 %v5027
        %v5683 = vunpack.c.h.b16 %v5027
        %v5684 = vunpack.c.l.b16 %v5028
        %v5685 = vunpack.c.h.b16 %v5028
        %v5686 = vunpack.c.l.b16 %v5029
        %v5687 = vunpack.c.h.b16 %v5029
        %v5688 = vunpack.c.l.b16 %v5030
        %v5689 = vunpack.c.h.b16 %v5030
        %v5690 = vunpack.c.l.b16 %v5031
        %v5691 = vunpack.c.h.b16 %v5031
        %v5692 = vunpack.c.l.b16 %v5032
        %v5693 = vunpack.c.h.b16 %v5032
        %v5694 = vunpack.c.l.b16 %v5033
        %v5695 = vunpack.c.h.b16 %v5033
        %v5696 = vunpack.c.l.b16 %v5034
        %v5697 = vunpack.c.h.b16 %v5034
        %v5698 = vunpack.c.l.b16 %v5035
        %v5699 = vunpack.c.h.b16 %v5035
        %v5700 = vunpack.c.l.b16 %v5036
        %v5701 = vunpack.c.h.b16 %v5036
        %v5702 = vunpack.c.l.b16 %v5037
        %v5703 = vunpack.c.h.b16 %v5037
        %v5704 = vunpack.c.l.b16 %v5038
        %v5705 = vunpack.c.h.b16 %v5038
        %v5706 = vunpack.c.l.b16 %v5039
        %v5707 = vunpack.c.h.b16 %v5039
        %v5708 = vunpack.c.l.b16 %v5040
        %v5709 = vunpack.c.h.b16 %v5040
        %v5710 = vunpack.c.l.b16 %v5041
        %v5711 = vunpack.c.h.b16 %v5041
        %v5712 = vunpack.c.l.b16 %v5042
        %v5713 = vunpack.c.h.b16 %v5042
        %v5714 = vunpack.c.l.b16 %v5043
        %v5715 = vunpack.c.h.b16 %v5043
        %v5716 = vunpack.c.l.b16 %v5044
        %v5717 = vunpack.c.h.b16 %v5044
        %v5718 = vunpack.c.l.b16 %v5045
        %v5719 = vunpack.c.h.b16 %v5045
        %v5720 = vunpack.c.l.b16 %v5046
        %v5721 = vunpack.c.h.b16 %v5046
        %v5722 = vunpack.c.l.b16 %v5047
        %v5723 = vunpack.c.h.b16 %v5047
        %v5724 = vunpack.c.l.b16 %v5048
        %v5725 = vunpack.c.h.b16 %v5048
        %v5726 = vunpack.c.l.b16 %v5049
        %v5727 = vunpack.c.h.b16 %v5049
        %v5728 = vunpack.c.l.b16 %v5050
        %v5729 = vunpack.c.h.b16 %v5050
        %v5730 = vunpack.c.l.b16 %v5051
        %v5731 = vunpack.c.h.b16 %v5051
        %v5732 = vunpack.c.l.b16 %v5052
        %v5733 = vunpack.c.h.b16 %v5052
        %v5734 = vunpack.c.l.b16 %v5053
        %v5735 = vunpack.c.h.b16 %v5053
        %v5736 = vunpack.c.l.b16 %v5054
        %v5737 = vunpack.c.h.b16 %v5054
        %v5738 = vunpack.c.l.b16 %v5055
        %v5739 = vunpack.c.h.b16 %v5055
        %v5740 = vunpack.c.l.b16 %v5056
        %v5741 = vunpack.c.h.b16 %v5056
        %v5742 = vunpack.c.l.b16 %v5057
        %v5743 = vunpack.c.h.b16 %v5057
        %v5744 = vunpack.c.l.b16 %v5058
        %v5745 = vunpack.c.h.b16 %v5058
        %v5746 = vunpack.c.l.b16 %v5059
        %v5747 = vunpack.c.h.b16 %v5059
        %v5748 = vunpack.c.l.b16 %v5060
        %v5749 = vunpack.c.h.b16 %v5060
        %v5750 = vunpack.c.l.b16 %v5061
        %v5751 = vunpack.c.h.b16 %v5061
        %v5752 = vunpack.c.l.b16 %v5062
        %v5753 = vunpack.c.h.b16 %v5062
        %v5754 = vunpack.c.l.b16 %v5063
        %v5755 = vunpack.c.h.b16 %v5063
        %v5756 = vunpack.c.l.b16 %v5064
        %v5757 = vunpack.c.h.b16 %v5064
        %v5758 = vunpack.c.l.b16 %v5065
        %v5759 = vunpack.c.h.b16 %v5065
        %v5760 = vunpack.c.l.b16 %v5066
        %v5761 = vunpack.c.h.b16 %v5066
        %v5762 = vunpack.c.l.b16 %v5067
        %v5763 = vunpack.c.h.b16 %v5067
        %v5764 = vunpack.c.l.b16 %v5068
        %v5765 = vunpack.c.h.b16 %v5068
        %v5766 = vunpack.c.l.b16 %v5069
        %v5767 = vunpack.c.h.b16 %v5069
        %v5768 = vunpack.c.l.b16 %v5070
        %v5769 = vunpack.c.h.b16 %v5070
        %v5770 = vunpack.c.l.b16 %v5071
        %v5771 = vunpack.c.h.b16 %v5071
        %v5772 = vunpack.c.l.b16 %v5072
        %v5773 = vunpack.c.h.b16 %v5072
        %v5774 = vunpack.c.l.b16 %v5073
        %v5775 = vunpack.c.h.b16 %v5073
        %v5776 = vunpack.c.l.b16 %v5074
        %v5777 = vunpack.c.h.b16 %v5074
        %v5778 = vunpack.c.l.b16 %v5075
        %v5779 = vunpack.c.h.b16 %v5075
        %v5780 = vunpack.c.l.b16 %v5076
        %v5781 = vunpack.c.h.b16 %v5076
        %v5782 = vunpack.c.l.b16 %v5077
        %v5783 = vunpack.c.h.b16 %v5077
        %v5784 = vunpack.c.l.b16 %v5078
        %v5785 = vunpack.c.h.b16 %v5078
        %v5786 = vunpack.c.l.b16 %v5079
        %v5787 = vunpack.c.h.b16 %v5079
        %v5788 = vunpack.c.l.b16 %v5080
        %v5789 = vunpack.c.h.b16 %v5080
        %v5790 = vunpack.c.l.b16 %v5081
        %v5791 = vunpack.c.h.b16 %v5081
        %v5792 = vunpack.c.l.b16 %v5082
        %v5793 = vunpack.c.h.b16 %v5082
        %v5794 = vunpack.c.l.b16 %v5083
        %v5795 = vunpack.c.h.b16 %v5083
        %v5796 = vunpack.c.l.b16 %v5084
        %v5797 = vunpack.c.h.b16 %v5084
        %v5798 = vunpack.c.l.b16 %v5085
        %v5799 = vunpack.c.h.b16 %v5085
        %v5800 = vunpack.c.l.b16 %v5086
        %v5801 = vunpack.c.h.b16 %v5086
        %v5802 = vunpack.c.l.b16 %v5087
        %v5803 = vunpack.c.h.b16 %v5087
        %v5804 = vunpack.c.l.b16 %v5088
        %v5805 = vunpack.c.h.b16 %v5088
        %v5806 = vunpack.c.l.b16 %v5089
        %v5807 = vunpack.c.h.b16 %v5089
        %v5808 = vunpack.c.l.b16 %v5090
        %v5809 = vunpack.c.h.b16 %v5090
        %v5810 = vunpack.c.l.b16 %v5091
        %v5811 = vunpack.c.h.b16 %v5091
        %v5812 = vunpack.c.l.b16 %v5092
        %v5813 = vunpack.c.h.b16 %v5092
        %v5814 = vunpack.c.l.b16 %v5093
        %v5815 = vunpack.c.h.b16 %v5093
        %v5816 = vunpack.c.l.b16 %v5094
        %v5817 = vunpack.c.h.b16 %v5094
        %v5818 = vunpack.c.l.b16 %v5095
        %v5819 = vunpack.c.h.b16 %v5095
        %v5820 = vunpack.c.l.b16 %v5096
        %v5821 = vunpack.c.h.b16 %v5096
        %v5822 = vunpack.c.l.b16 %v5097
        %v5823 = vunpack.c.h.b16 %v5097
        %v5824 = vunpack.c.l.b16 %v5098
        %v5825 = vunpack.c.h.b16 %v5098
        %v5826 = vunpack.c.l.b16 %v5099
        %v5827 = vunpack.c.h.b16 %v5099
        %v5828 = vunpack.c.l.b16 %v5100
        %v5829 = vunpack.c.h.b16 %v5100
        %v5830 = vunpack.c.l.b16 %v5101
        %v5831 = vunpack.c.h.b16 %v5101
        %v5832 = vunpack.c.l.b16 %v5102
        %v5833 = vunpack.c.h.b16 %v5102
        %v5834 = vunpack.c.l.b16 %v5103
        %v5835 = vunpack.c.h.b16 %v5103
        %v5836 = vunpack.c.l.b16 %v5104
        %v5837 = vunpack.c.h.b16 %v5104
        %v5838 = vunpack.c.l.b16 %v5105
        %v5839 = vunpack.c.h.b16 %v5105
        %v5840 = vunpack.c.l.b16 %v5106
        %v5841 = vunpack.c.h.b16 %v5106
        %v5842 = vunpack.c.l.b16 %v5107
        %v5843 = vunpack.c.h.b16 %v5107
        %v5844 = vunpack.c.l.b16 %v5108
        %v5845 = vunpack.c.h.b16 %v5108
        %v5846 = vunpack.c.l.b16 %v5109
        %v5847 = vunpack.c.h.b16 %v5109
        %v5848 = vunpack.c.l.b16 %v5110
        %v5849 = vunpack.c.h.b16 %v5110
        %v5850 = vunpack.c.l.b16 %v5111
        %v5851 = vunpack.c.h.b16 %v5111
        %v5852 = vunpack.c.l.b16 %v5112
        %v5853 = vunpack.c.h.b16 %v5112
        %v5854 = vunpack.c.l.b16 %v5113
        %v5855 = vunpack.c.h.b16 %v5113
        %v5856 = vunpack.c.l.b16 %v5114
        %v5857 = vunpack.c.h.b16 %v5114
        %v5858 = vunpack.c.l.b16 %v5115
        %v5859 = vunpack.c.h.b16 %v5115
        %v5860 = vunpack.c.l.b16 %v5116
        %v5861 = vunpack.c.h.b16 %v5116
        %v5862 = vunpack.c.l.b16 %v5117
        %v5863 = vunpack.c.h.b16 %v5117
        %v5864 = vunpack.c.l.b16 %v5118
        %v5865 = vunpack.c.h.b16 %v5118
        %v5866 = vunpack.c.l.b16 %v5119
        %v5867 = vunpack.c.h.b16 %v5119
        %v5868 = vunpack.c.l.b16 %v5120
        %v5869 = vunpack.c.h.b16 %v5120
        %v5870 = vunpack.c.l.b16 %v5121
        %v5871 = vunpack.c.h.b16 %v5121
        %v5872 = vunpack.c.l.b16 %v5122
        %v5873 = vunpack.c.h.b16 %v5122
        %v5874 = vunpack.c.l.b16 %v5123
        %v5875 = vunpack.c.h.b16 %v5123
        %v5876 = vunpack.c.l.b16 %v5124
        %v5877 = vunpack.c.h.b16 %v5124
        %v5878 = vunpack.c.l.b16 %v5125
        %v5879 = vunpack.c.h.b16 %v5125
        %v5880 = vunpack.c.l.b16 %v5126
        %v5881 = vunpack.c.h.b16 %v5126
        %v5882 = vunpack.c.l.b16 %v5127
        %v5883 = vunpack.c.h.b16 %v5127
        %v5884 = vunpack.c.l.b16 %v5128
        %v5885 = vunpack.c.h.b16 %v5128
        %v5886 = vunpack.c.l.b16 %v5129
        %v5887 = vunpack.c.h.b16 %v5129
        %v5888 = vunpack.c.l.b16 %v5130
        %v5889 = vunpack.c.h.b16 %v5130
        %v5890 = vunpack.c.l.b16 %v5131
        %v5891 = vunpack.c.h.b16 %v5131
        %v5892 = vunpack.c.l.b16 %v5132
        %v5893 = vunpack.c.h.b16 %v5132
        %v5894 = vunpack.c.l.b16 %v5133
        %v5895 = vunpack.c.h.b16 %v5133
        %v5896 = vunpack.c.l.b16 %v5134
        %v5897 = vunpack.c.h.b16 %v5134
        %v5898 = vunpack.c.l.b16 %v5135
        %v5899 = vunpack.c.h.b16 %v5135
        %v5900 = vunpack.c.l.b16 %v5136
        %v5901 = vunpack.c.h.b16 %v5136
        %v5902 = vunpack.c.l.b16 %v5137
        %v5903 = vunpack.c.h.b16 %v5137
        %v5904 = vunpack.c.l.b16 %v5138
        %v5905 = vunpack.c.h.b16 %v5138
        %v5906 = vunpack.c.l.b16 %v5139
        %v5907 = vunpack.c.h.b16 %v5139
        %v5908 = vunpack.c.l.b16 %v5140
        %v5909 = vunpack.c.h.b16 %v5140
        %v5910 = vunpack.c.l.b16 %v5141
        %v5911 = vunpack.c.h.b16 %v5141
        %v5912 = vunpack.c.l.b16 %v5142
        %v5913 = vunpack.c.h.b16 %v5142
        %v5914 = vunpack.c.l.b16 %v5143
        %v5915 = vunpack.c.h.b16 %v5143
        %v5916 = vunpack.c.l.b16 %v5144
        %v5917 = vunpack.c.h.b16 %v5144
        %v5918 = vunpack.c.l.b16 %v5145
        %v5919 = vunpack.c.h.b16 %v5145
        %v5920 = vunpack.c.l.b16 %v5146
        %v5921 = vunpack.c.h.b16 %v5146
        %v5922 = vunpack.c.l.b16 %v5147
        %v5923 = vunpack.c.h.b16 %v5147
        %v5924 = vunpack.c.l.b16 %v5148
        %v5925 = vunpack.c.h.b16 %v5148
        %v5926 = vunpack.c.l.b16 %v5149
        %v5927 = vunpack.c.h.b16 %v5149
        %v5928 = vunpack.c.l.b16 %v5150
        %v5929 = vunpack.c.h.b16 %v5150
        %v5930 = vunpack.c.l.b16 %v5151
        %v5931 = vunpack.c.h.b16 %v5151
        %v5932 = vunpack.c.l.b16 %v5152
        %v5933 = vunpack.c.h.b16 %v5152
        %v5934 = vunpack.c.l.b16 %v5153
        %v5935 = vunpack.c.h.b16 %v5153
        %v5936 = vunpack.c.l.b16 %v5154
        %v5937 = vunpack.c.h.b16 %v5154
        %v5938 = vunpack.c.l.b16 %v5155
        %v5939 = vunpack.c.h.b16 %v5155
        %v5940 = vunpack.c.l.b16 %v5156
        %v5941 = vunpack.c.h.b16 %v5156
        %v5942 = vunpack.c.l.b16 %v5157
        %v5943 = vunpack.c.h.b16 %v5157
        %v5944 = vunpack.c.l.b16 %v5158
        %v5945 = vunpack.c.h.b16 %v5158
        %v5946 = vunpack.c.l.b16 %v5159
        %v5947 = vunpack.c.h.b16 %v5159
        %v5948 = vunpack.c.l.b16 %v5160
        %v5949 = vunpack.c.h.b16 %v5160
        %v5950 = vunpack.c.l.b16 %v5161
        %v5951 = vunpack.c.h.b16 %v5161
        %v5952 = vunpack.c.l.b16 %v5162
        %v5953 = vunpack.c.h.b16 %v5162
        %v5954 = vunpack.c.l.b16 %v5163
        %v5955 = vunpack.c.h.b16 %v5163
        %v5956 = vunpack.c.l.b16 %v5164
        %v5957 = vunpack.c.h.b16 %v5164
        %v5958 = vunpack.c.l.b16 %v5165
        %v5959 = vunpack.c.h.b16 %v5165
        %v5960 = vunpack.c.l.b16 %v5166
        %v5961 = vunpack.c.h.b16 %v5166
        %v5962 = vunpack.c.l.b16 %v5167
        %v5963 = vunpack.c.h.b16 %v5167
        %v5964 = vunpack.c.l.b16 %v5168
        %v5965 = vunpack.c.h.b16 %v5168
        %v5966 = vpack.c.b16 %v5462, %v5454
        %v5967 = vpack.c.b16 %v5463, %v5455
        %v5968 = vpack.c.b16 %v5464, %v5456
        %v5969 = vpack.c.b16 %v5465, %v5457
        %v5970 = vpack.c.b16 %v5466, %v5458
        %v5971 = vpack.c.b16 %v5467, %v5459
        %v5972 = vpack.c.b16 %v5468, %v5460
        %v5973 = vpack.c.b16 %v5469, %v5461
        %v5974 = vpack.c.b16 %v5478, %v5470
        %v5975 = vpack.c.b16 %v5479, %v5471
        %v5976 = vpack.c.b16 %v5480, %v5472
        %v5977 = vpack.c.b16 %v5481, %v5473
        %v5978 = vpack.c.b16 %v5482, %v5474
        %v5979 = vpack.c.b16 %v5483, %v5475
        %v5980 = vpack.c.b16 %v5484, %v5476
        %v5981 = vpack.c.b16 %v5485, %v5477
        %v5982 = vpack.c.b16 %v5494, %v5486
        %v5983 = vpack.c.b16 %v5495, %v5487
        %v5984 = vpack.c.b16 %v5496, %v5488
        %v5985 = vpack.c.b16 %v5497, %v5489
        %v5986 = vpack.c.b16 %v5498, %v5490
        %v5987 = vpack.c.b16 %v5499, %v5491
        %v5988 = vpack.c.b16 %v5500, %v5492
        %v5989 = vpack.c.b16 %v5501, %v5493
        %v5990 = vpack.c.b16 %v5510, %v5502
        %v5991 = vpack.c.b16 %v5511, %v5503
        %v5992 = vpack.c.b16 %v5512, %v5504
        %v5993 = vpack.c.b16 %v5513, %v5505
        %v5994 = vpack.c.b16 %v5514, %v5506
        %v5995 = vpack.c.b16 %v5515, %v5507
        %v5996 = vpack.c.b16 %v5516, %v5508
        %v5997 = vpack.c.b16 %v5517, %v5509
        %v5998 = vpack.c.b16 %v5526, %v5518
        %v5999 = vpack.c.b16 %v5527, %v5519
        %v6000 = vpack.c.b16 %v5528, %v5520
        %v6001 = vpack.c.b16 %v5529, %v5521
        %v6002 = vpack.c.b16 %v5530, %v5522
        %v6003 = vpack.c.b16 %v5531, %v5523
        %v6004 = vpack.c.b16 %v5532, %v5524
        %v6005 = vpack.c.b16 %v5533, %v5525
        %v6006 = vpack.c.b16 %v5542, %v5534
        %v6007 = vpack.c.b16 %v5543, %v5535
        %v6008 = vpack.c.b16 %v5544, %v5536
        %v6009 = vpack.c.b16 %v5545, %v5537
        %v6010 = vpack.c.b16 %v5546, %v5538
        %v6011 = vpack.c.b16 %v5547, %v5539
        %v6012 = vpack.c.b16 %v5548, %v5540
        %v6013 = vpack.c.b16 %v5549, %v5541
        %v6014 = vpack.c.b16 %v5558, %v5550
        %v6015 = vpack.c.b16 %v5559, %v5551
        %v6016 = vpack.c.b16 %v5560, %v5552
        %v6017 = vpack.c.b16 %v5561, %v5553
        %v6018 = vpack.c.b16 %v5562, %v5554
        %v6019 = vpack.c.b16 %v5563, %v5555
        %v6020 = vpack.c.b16 %v5564, %v5556
        %v6021 = vpack.c.b16 %v5565, %v5557
        %v6022 = vpack.c.b16 %v5574, %v5566
        %v6023 = vpack.c.b16 %v5575, %v5567
        %v6024 = vpack.c.b16 %v5576, %v5568
        %v6025 = vpack.c.b16 %v5577, %v5569
        %v6026 = vpack.c.b16 %v5578, %v5570
        %v6027 = vpack.c.b16 %v5579, %v5571
        %v6028 = vpack.c.b16 %v5580, %v5572
        %v6029 = vpack.c.b16 %v5581, %v5573
        %v6030 = vpack.c.b16 %v5590, %v5582
        %v6031 = vpack.c.b16 %v5591, %v5583
        %v6032 = vpack.c.b16 %v5592, %v5584
        %v6033 = vpack.c.b16 %v5593, %v5585
        %v6034 = vpack.c.b16 %v5594, %v5586
        %v6035 = vpack.c.b16 %v5595, %v5587
        %v6036 = vpack.c.b16 %v5596, %v5588
        %v6037 = vpack.c.b16 %v5597, %v5589
        %v6038 = vpack.c.b16 %v5606, %v5598
        %v6039 = vpack.c.b16 %v5607, %v5599
        %v6040 = vpack.c.b16 %v5608, %v5600
        %v6041 = vpack.c.b16 %v5609, %v5601
        %v6042 = vpack.c.b16 %v5610, %v5602
        %v6043 = vpack.c.b16 %v5611, %v5603
        %v6044 = vpack.c.b16 %v5612, %v5604
        %v6045 = vpack.c.b16 %v5613, %v5605
        %v6046 = vpack.c.b16 %v5622, %v5614
        %v6047 = vpack.c.b16 %v5623, %v5615
        %v6048 = vpack.c.b16 %v5624, %v5616
        %v6049 = vpack.c.b16 %v5625, %v5617
        %v6050 = vpack.c.b16 %v5626, %v5618
        %v6051 = vpack.c.b16 %v5627, %v5619
        %v6052 = vpack.c.b16 %v5628, %v5620
        %v6053 = vpack.c.b16 %v5629, %v5621
        %v6054 = vpack.c.b16 %v5638, %v5630
        %v6055 = vpack.c.b16 %v5639, %v5631
        %v6056 = vpack.c.b16 %v5640, %v5632
        %v6057 = vpack.c.b16 %v5641, %v5633
        %v6058 = vpack.c.b16 %v5642, %v5634
        %v6059 = vpack.c.b16 %v5643, %v5635
        %v6060 = vpack.c.b16 %v5644, %v5636
        %v6061 = vpack.c.b16 %v5645, %v5637
        %v6062 = vpack.c.b16 %v5654, %v5646
        %v6063 = vpack.c.b16 %v5655, %v5647
        %v6064 = vpack.c.b16 %v5656, %v5648
        %v6065 = vpack.c.b16 %v5657, %v5649
        %v6066 = vpack.c.b16 %v5658, %v5650
        %v6067 = vpack.c.b16 %v5659, %v5651
        %v6068 = vpack.c.b16 %v5660, %v5652
        %v6069 = vpack.c.b16 %v5661, %v5653
        %v6070 = vpack.c.b16 %v5670, %v5662
        %v6071 = vpack.c.b16 %v5671, %v5663
        %v6072 = vpack.c.b16 %v5672, %v5664
        %v6073 = vpack.c.b16 %v5673, %v5665
        %v6074 = vpack.c.b16 %v5674, %v5666
        %v6075 = vpack.c.b16 %v5675, %v5667
        %v6076 = vpack.c.b16 %v5676, %v5668
        %v6077 = vpack.c.b16 %v5677, %v5669
        %v6078 = vpack.c.b16 %v5686, %v5678
        %v6079 = vpack.c.b16 %v5687, %v5679
        %v6080 = vpack.c.b16 %v5688, %v5680
        %v6081 = vpack.c.b16 %v5689, %v5681
        %v6082 = vpack.c.b16 %v5690, %v5682
        %v6083 = vpack.c.b16 %v5691, %v5683
        %v6084 = vpack.c.b16 %v5692, %v5684
        %v6085 = vpack.c.b16 %v5693, %v5685
        %v6086 = vpack.c.b16 %v5702, %v5694
        %v6087 = vpack.c.b16 %v5703, %v5695
        %v6088 = vpack.c.b16 %v5704, %v5696
        %v6089 = vpack.c.b16 %v5705, %v5697
        %v6090 = vpack.c.b16 %v5706, %v5698
        %v6091 = vpack.c.b16 %v5707, %v5699
        %v6092 = vpack.c.b16 %v5708, %v5700
        %v6093 = vpack.c.b16 %v5709, %v5701
        %v6094 = vpack.c.b16 %v5718, %v5710
        %v6095 = vpack.c.b16 %v5719, %v5711
        %v6096 = vpack.c.b16 %v5720, %v5712
        %v6097 = vpack.c.b16 %v5721, %v5713
        %v6098 = vpack.c.b16 %v5722, %v5714
        %v6099 = vpack.c.b16 %v5723, %v5715
        %v6100 = vpack.c.b16 %v5724, %v5716
        %v6101 = vpack.c.b16 %v5725, %v5717
        %v6102 = vpack.c.b16 %v5734, %v5726
        %v6103 = vpack.c.b16 %v5735, %v5727
        %v6104 = vpack.c.b16 %v5736, %v5728
        %v6105 = vpack.c.b16 %v5737, %v5729
        %v6106 = vpack.c.b16 %v5738, %v5730
        %v6107 = vpack.c.b16 %v5739, %v5731
        %v6108 = vpack.c.b16 %v5740, %v5732
        %v6109 = vpack.c.b16 %v5741, %v5733
        %v6110 = vpack.c.b16 %v5750, %v5742
        %v6111 = vpack.c.b16 %v5751, %v5743
        %v6112 = vpack.c.b16 %v5752, %v5744
        %v6113 = vpack.c.b16 %v5753, %v5745
        %v6114 = vpack.c.b16 %v5754, %v5746
        %v6115 = vpack.c.b16 %v5755, %v5747
        %v6116 = vpack.c.b16 %v5756, %v5748
        %v6117 = vpack.c.b16 %v5757, %v5749
        %v6118 = vpack.c.b16 %v5766, %v5758
        %v6119 = vpack.c.b16 %v5767, %v5759
        %v6120 = vpack.c.b16 %v5768, %v5760
        %v6121 = vpack.c.b16 %v5769, %v5761
        %v6122 = vpack.c.b16 %v5770, %v5762
        %v6123 = vpack.c.b16 %v5771, %v5763
        %v6124 = vpack.c.b16 %v5772, %v5764
        %v6125 = vpack.c.b16 %v5773, %v5765
        %v6126 = vpack.c.b16 %v5782, %v5774
        %v6127 = vpack.c.b16 %v5783, %v5775
        %v6128 = vpack.c.b16 %v5784, %v5776
        %v6129 = vpack.c.b16 %v5785, %v5777
        %v6130 = vpack.c.b16 %v5786, %v5778
        %v6131 = vpack.c.b16 %v5787, %v5779
        %v6132 = vpack.c.b16 %v5788, %v5780
        %v6133 = vpack.c.b16 %v5789, %v5781
        %v6134 = vpack.c.b16 %v5798, %v5790
        %v6135 = vpack.c.b16 %v5799, %v5791
        %v6136 = vpack.c.b16 %v5800, %v5792
        %v6137 = vpack.c.b16 %v5801, %v5793
        %v6138 = vpack.c.b16 %v5802, %v5794
        %v6139 = vpack.c.b16 %v5803, %v5795
        %v6140 = vpack.c.b16 %v5804, %v5796
        %v6141 = vpack.c.b16 %v5805, %v5797
        %v6142 = vpack.c.b16 %v5814, %v5806
        %v6143 = vpack.c.b16 %v5815, %v5807
        %v6144 = vpack.c.b16 %v5816, %v5808
        %v6145 = vpack.c.b16 %v5817, %v5809
        %v6146 = vpack.c.b16 %v5818, %v5810
        %v6147 = vpack.c.b16 %v5819, %v5811
        %v6148 = vpack.c.b16 %v5820, %v5812
        %v6149 = vpack.c.b16 %v5821, %v5813
        %v6150 = vpack.c.b16 %v5830, %v5822
        %v6151 = vpack.c.b16 %v5831, %v5823
        %v6152 = vpack.c.b16 %v5832, %v5824
        %v6153 = vpack.c.b16 %v5833, %v5825
        %v6154 = vpack.c.b16 %v5834, %v5826
        %v6155 = vpack.c.b16 %v5835, %v5827
        %v6156 = vpack.c.b16 %v5836, %v5828
        %v6157 = vpack.c.b16 %v5837, %v5829
        %v6158 = vpack.c.b16 %v5846, %v5838
        %v6159 = vpack.c.b16 %v5847, %v5839
        %v6160 = vpack.c.b16 %v5848, %v5840
        %v6161 = vpack.c.b16 %v5849, %v5841
        %v6162 = vpack.c.b16 %v5850, %v5842
        %v6163 = vpack.c.b16 %v5851, %v5843
        %v6164 = vpack.c.b16 %v5852, %v5844
        %v6165 = vpack.c.b16 %v5853, %v5845
        %v6166 = vpack.c.b16 %v5862, %v5854
        %v6167 = vpack.c.b16 %v5863, %v5855
        %v6168 = vpack.c.b16 %v5864, %v5856
        %v6169 = vpack.c.b16 %v5865, %v5857
        %v6170 = vpack.c.b16 %v5866, %v5858
        %v6171 = vpack.c.b16 %v5867, %v5859
        %v6172 = vpack.c.b16 %v5868, %v5860
        %v6173 = vpack.c.b16 %v5869, %v5861
        %v6174 = vpack.c.b16 %v5878, %v5870
        %v6175 = vpack.c.b16 %v5879, %v5871
        %v6176 = vpack.c.b16 %v5880, %v5872
        %v6177 = vpack.c.b16 %v5881, %v5873
        %v6178 = vpack.c.b16 %v5882, %v5874
        %v6179 = vpack.c.b16 %v5883, %v5875
        %v6180 = vpack.c.b16 %v5884, %v5876
        %v6181 = vpack.c.b16 %v5885, %v5877
        %v6182 = vpack.c.b16 %v5894, %v5886
        %v6183 = vpack.c.b16 %v5895, %v5887
        %v6184 = vpack.c.b16 %v5896, %v5888
        %v6185 = vpack.c.b16 %v5897, %v5889
        %v6186 = vpack.c.b16 %v5898, %v5890
        %v6187 = vpack.c.b16 %v5899, %v5891
        %v6188 = vpack.c.b16 %v5900, %v5892
        %v6189 = vpack.c.b16 %v5901, %v5893
        %v6190 = vpack.c.b16 %v5910, %v5902
        %v6191 = vpack.c.b16 %v5911, %v5903
        %v6192 = vpack.c.b16 %v5912, %v5904
        %v6193 = vpack.c.b16 %v5913, %v5905
        %v6194 = vpack.c.b16 %v5914, %v5906
        %v6195 = vpack.c.b16 %v5915, %v5907
        %v6196 = vpack.c.b16 %v5916, %v5908
        %v6197 = vpack.c.b16 %v5917, %v5909
        %v6198 = vpack.c.b16 %v5926, %v5918
        %v6199 = vpack.c.b16 %v5927, %v5919
        %v6200 = vpack.c.b16 %v5928, %v5920
        %v6201 = vpack.c.b16 %v5929, %v5921
        %v6202 = vpack.c.b16 %v5930, %v5922
        %v6203 = vpack.c.b16 %v5931, %v5923
        %v6204 = vpack.c.b16 %v5932, %v5924
        %v6205 = vpack.c.b16 %v5933, %v5925
        %v6206 = vpack.c.b16 %v5942, %v5934
        %v6207 = vpack.c.b16 %v5943, %v5935
        %v6208 = vpack.c.b16 %v5944, %v5936
        %v6209 = vpack.c.b16 %v5945, %v5937
        %v6210 = vpack.c.b16 %v5946, %v5938
        %v6211 = vpack.c.b16 %v5947, %v5939
        %v6212 = vpack.c.b16 %v5948, %v5940
        %v6213 = vpack.c.b16 %v5949, %v5941
        %v6214 = vpack.c.b16 %v5958, %v5950
        %v6215 = vpack.c.b16 %v5959, %v5951
        %v6216 = vpack.c.b16 %v5960, %v5952
        %v6217 = vpack.c.b16 %v5961, %v5953
        %v6218 = vpack.c.b16 %v5962, %v5954
        %v6219 = vpack.c.b16 %v5963, %v5955
        %v6220 = vpack.c.b16 %v5964, %v5956
        %v6221 = vpack.c.b16 %v5965, %v5957
        %6478 = vmatprep.subr.bf16.mxu0 %v6023
        %6479 = vmatpush1.bf16.msra.mxu0 %v6022
        %6480 = vmatprep.subr.bf16.mxu0 %v6015
        %6481 = vmatpush1.bf16.msra.mxu0 %v6014
        %6482 = vmatprep.subr.bf16.mxu0 %v6007
        %6483 = vmatpush1.bf16.msra.mxu0 %v6006
        %6484 = vmatprep.subr.bf16.mxu0 %v5999
        %6485 = vmatpush1.bf16.msra.mxu0 %v5998
        %6486 = vmatprep.subr.bf16.mxu0 %v5991
        %6487 = vmatpush1.bf16.msra.mxu0 %v5990
        %6488 = vmatprep.subr.bf16.mxu0 %v5983
        %6489 = vmatpush1.bf16.msra.mxu0 %v5982
        %6490 = vmatprep.subr.bf16.mxu0 %v5975
        %6491 = vmatpush1.bf16.msra.mxu0 %v5974
        %6492 = vmatprep.subr.bf16.mxu0 %v5967
        %6493 = vmatpush1.bf16.msra.mxu0 %v5966
        %6494 = vmatprep.subr.bf16.mxu0 %v6087
        %6495 = vmatpush2.bf16.msra.mxu0 %v6086
        %6496 = vmatprep.subr.bf16.mxu0 %v6079
        %6497 = vmatpush2.bf16.msra.mxu0 %v6078
        %6498 = vmatprep.subr.bf16.mxu0 %v6071
        %6499 = vmatpush2.bf16.msra.mxu0 %v6070
        %6500 = vmatprep.subr.bf16.mxu0 %v6063
        %6501 = vmatpush2.bf16.msra.mxu0 %v6062
        %6502 = vmatprep.subr.bf16.mxu0 %v6055
        %6503 = vmatpush2.bf16.msra.mxu0 %v6054
        %6504 = vmatprep.subr.bf16.mxu0 %v6047
        %6505 = vmatpush2.bf16.msra.mxu0 %v6046
        %6506 = vmatprep.subr.bf16.mxu0 %v6039
        %6507 = vmatpush2.bf16.msra.mxu0 %v6038
        %6508 = vmatprep.subr.bf16.mxu0 %v6031
        %6509 = vmatpush2.bf16.msra.mxu0 %v6030
        %6510 = vmatprep.mubr.bf16.mxu0 %v5191
        %6511 = vmatmul.mubr.bf16.gmra.mxu0 %v5184
        %v6512 = vpop.f32.mrf.mxu0
        %v6513 = vadd.f32 0.0, %v6512
        %v6514 = vpop.f32.mrf.mxu0
        %v6515 = vadd.f32 0.0, %v6514
        %v6516 = vpop.f32.mrf.mxu0
        %v6517 = vpop.f32.mrf.mxu0
        %6518 = vdwg.mxu0
        %6519 = vmatprep.subr.bf16.mxu0 %v6151
        %6520 = vmatpush1.bf16.msra.mxu0 %v6150
        %6521 = vmatprep.subr.bf16.mxu0 %v6143
        %6522 = vmatpush1.bf16.msra.mxu0 %v6142
        %6523 = vmatprep.subr.bf16.mxu0 %v6135
        %6524 = vmatpush1.bf16.msra.mxu0 %v6134
        %6525 = vmatprep.subr.bf16.mxu0 %v6127
        %6526 = vmatpush1.bf16.msra.mxu0 %v6126
        %6527 = vmatprep.subr.bf16.mxu0 %v6119
        %6528 = vmatpush1.bf16.msra.mxu0 %v6118
        %6529 = vmatprep.subr.bf16.mxu0 %v6111
        %6530 = vmatpush1.bf16.msra.mxu0 %v6110
        %6531 = vmatprep.subr.bf16.mxu0 %v6103
        %6532 = vmatpush1.bf16.msra.mxu0 %v6102
        %6533 = vmatprep.subr.bf16.mxu0 %v6095
        %6534 = vmatpush1.bf16.msra.mxu0 %v6094
        %6535 = vmatprep.subr.bf16.mxu0 %v6215
        %6536 = vmatpush2.bf16.msra.mxu0 %v6214
        %6537 = vmatprep.subr.bf16.mxu0 %v6207
        %6538 = vmatpush2.bf16.msra.mxu0 %v6206
        %6539 = vmatprep.subr.bf16.mxu0 %v6199
        %6540 = vmatpush2.bf16.msra.mxu0 %v6198
        %6541 = vmatprep.subr.bf16.mxu0 %v6191
        %6542 = vmatpush2.bf16.msra.mxu0 %v6190
        %6543 = vmatprep.subr.bf16.mxu0 %v6183
        %6544 = vmatpush2.bf16.msra.mxu0 %v6182
        %6545 = vmatprep.subr.bf16.mxu0 %v6175
        %6546 = vmatpush2.bf16.msra.mxu0 %v6174
        %6547 = vmatprep.subr.bf16.mxu0 %v6167
        %6548 = vmatpush2.bf16.msra.mxu0 %v6166
        %6549 = vmatprep.subr.bf16.mxu0 %v6159
        %6550 = vmatpush2.bf16.msra.mxu0 %v6158
        %6551 = vmatprep.mubr.bf16.mxu0 %v5193
        %6552 = vmatmul.mubr.bf16.gmra.mxu0 %v5192
        %v6553 = vpop.f32.mrf.mxu0
        %v6554 = vadd.f32 %v6513, %v6553
        %v6555 = vpop.f32.mrf.mxu0
        %v6556 = vadd.f32 %v6515, %v6555
        %v6557 = vpop.f32.mrf.mxu0
        %v6558 = vpop.f32.mrf.mxu0
        %6559 = vdwg.mxu0
        %6560 = vmatprep.subr.bf16.mxu0 %v6025
        %6561 = vmatpush1.bf16.msra.mxu0 %v6024
        %6562 = vmatprep.subr.bf16.mxu0 %v6017
        %6563 = vmatpush1.bf16.msra.mxu0 %v6016
        %6564 = vmatprep.subr.bf16.mxu0 %v6009
        %6565 = vmatpush1.bf16.msra.mxu0 %v6008
        %6566 = vmatprep.subr.bf16.mxu0 %v6001
        %6567 = vmatpush1.bf16.msra.mxu0 %v6000
        %6568 = vmatprep.subr.bf16.mxu0 %v5993
        %6569 = vmatpush1.bf16.msra.mxu0 %v5992
        %6570 = vmatprep.subr.bf16.mxu0 %v5985
        %6571 = vmatpush1.bf16.msra.mxu0 %v5984
        %6572 = vmatprep.subr.bf16.mxu0 %v5977
        %6573 = vmatpush1.bf16.msra.mxu0 %v5976
        %6574 = vmatprep.subr.bf16.mxu0 %v5969
        %6575 = vmatpush1.bf16.msra.mxu0 %v5968
        %6576 = vmatprep.subr.bf16.mxu0 %v6089
        %6577 = vmatpush2.bf16.msra.mxu0 %v6088
        %6578 = vmatprep.subr.bf16.mxu0 %v6081
        %6579 = vmatpush2.bf16.msra.mxu0 %v6080
        %6580 = vmatprep.subr.bf16.mxu0 %v6073
        %6581 = vmatpush2.bf16.msra.mxu0 %v6072
        %6582 = vmatprep.subr.bf16.mxu0 %v6065
        %6583 = vmatpush2.bf16.msra.mxu0 %v6064
        %6584 = vmatprep.subr.bf16.mxu0 %v6057
        %6585 = vmatpush2.bf16.msra.mxu0 %v6056
        %6586 = vmatprep.subr.bf16.mxu0 %v6049
        %6587 = vmatpush2.bf16.msra.mxu0 %v6048
        %6588 = vmatprep.subr.bf16.mxu0 %v6041
        %6589 = vmatpush2.bf16.msra.mxu0 %v6040
        %6590 = vmatprep.subr.bf16.mxu0 %v6033
        %6591 = vmatpush2.bf16.msra.mxu0 %v6032
        %6592 = vmatprep.mubr.bf16.mxu0 %v5191
        %6593 = vmatmul.mubr.bf16.gmra.mxu0 %v5184
        %v6594 = vpop.f32.mrf.mxu0
        %v6595 = vadd.f32 0.0, %v6594
        %v6596 = vpop.f32.mrf.mxu0
        %v6597 = vadd.f32 0.0, %v6596
        %v6598 = vpop.f32.mrf.mxu0
        %v6599 = vpop.f32.mrf.mxu0
        %6600 = vdwg.mxu0
        %6601 = vmatprep.subr.bf16.mxu0 %v6153
        %6602 = vmatpush1.bf16.msra.mxu0 %v6152
        %6603 = vmatprep.subr.bf16.mxu0 %v6145
        %6604 = vmatpush1.bf16.msra.mxu0 %v6144
        %6605 = vmatprep.subr.bf16.mxu0 %v6137
        %6606 = vmatpush1.bf16.msra.mxu0 %v6136
        %6607 = vmatprep.subr.bf16.mxu0 %v6129
        %6608 = vmatpush1.bf16.msra.mxu0 %v6128
        %6609 = vmatprep.subr.bf16.mxu0 %v6121
        %6610 = vmatpush1.bf16.msra.mxu0 %v6120
        %6611 = vmatprep.subr.bf16.mxu0 %v6113
        %6612 = vmatpush1.bf16.msra.mxu0 %v6112
        %6613 = vmatprep.subr.bf16.mxu0 %v6105
        %6614 = vmatpush1.bf16.msra.mxu0 %v6104
        %6615 = vmatprep.subr.bf16.mxu0 %v6097
        %6616 = vmatpush1.bf16.msra.mxu0 %v6096
        %6617 = vmatprep.subr.bf16.mxu0 %v6217
        %6618 = vmatpush2.bf16.msra.mxu0 %v6216
        %6619 = vmatprep.subr.bf16.mxu0 %v6209
        %6620 = vmatpush2.bf16.msra.mxu0 %v6208
        %6621 = vmatprep.subr.bf16.mxu0 %v6201
        %6622 = vmatpush2.bf16.msra.mxu0 %v6200
        %6623 = vmatprep.subr.bf16.mxu0 %v6193
        %6624 = vmatpush2.bf16.msra.mxu0 %v6192
        %6625 = vmatprep.subr.bf16.mxu0 %v6185
        %6626 = vmatpush2.bf16.msra.mxu0 %v6184
        %6627 = vmatprep.subr.bf16.mxu0 %v6177
        %6628 = vmatpush2.bf16.msra.mxu0 %v6176
        %6629 = vmatprep.subr.bf16.mxu0 %v6169
        %6630 = vmatpush2.bf16.msra.mxu0 %v6168
        %6631 = vmatprep.subr.bf16.mxu0 %v6161
        %6632 = vmatpush2.bf16.msra.mxu0 %v6160
        %6633 = vmatprep.mubr.bf16.mxu0 %v5193
        %6634 = vmatmul.mubr.bf16.gmra.mxu0 %v5192
        %v6635 = vpop.f32.mrf.mxu0
        %v6636 = vadd.f32 %v6595, %v6635
        %v6637 = vpop.f32.mrf.mxu0
        %v6638 = vadd.f32 %v6597, %v6637
        %v6639 = vpop.f32.mrf.mxu0
        %v6640 = vpop.f32.mrf.mxu0
        %6641 = vdwg.mxu0
        %6642 = vmatprep.subr.bf16.mxu0 %v6027
        %6643 = vmatpush1.bf16.msra.mxu0 %v6026
        %6644 = vmatprep.subr.bf16.mxu0 %v6019
        %6645 = vmatpush1.bf16.msra.mxu0 %v6018
        %6646 = vmatprep.subr.bf16.mxu0 %v6011
        %6647 = vmatpush1.bf16.msra.mxu0 %v6010
        %6648 = vmatprep.subr.bf16.mxu0 %v6003
        %6649 = vmatpush1.bf16.msra.mxu0 %v6002
        %6650 = vmatprep.subr.bf16.mxu0 %v5995
        %6651 = vmatpush1.bf16.msra.mxu0 %v5994
        %6652 = vmatprep.subr.bf16.mxu0 %v5987
        %6653 = vmatpush1.bf16.msra.mxu0 %v5986
        %6654 = vmatprep.subr.bf16.mxu0 %v5979
        %6655 = vmatpush1.bf16.msra.mxu0 %v5978
        %6656 = vmatprep.subr.bf16.mxu0 %v5971
        %6657 = vmatpush1.bf16.msra.mxu0 %v5970
        %6658 = vmatprep.subr.bf16.mxu0 %v6091
        %6659 = vmatpush2.bf16.msra.mxu0 %v6090
        %6660 = vmatprep.subr.bf16.mxu0 %v6083
        %6661 = vmatpush2.bf16.msra.mxu0 %v6082
        %6662 = vmatprep.subr.bf16.mxu0 %v6075
        %6663 = vmatpush2.bf16.msra.mxu0 %v6074
        %6664 = vmatprep.subr.bf16.mxu0 %v6067
        %6665 = vmatpush2.bf16.msra.mxu0 %v6066
        %6666 = vmatprep.subr.bf16.mxu0 %v6059
        %6667 = vmatpush2.bf16.msra.mxu0 %v6058
        %6668 = vmatprep.subr.bf16.mxu0 %v6051
        %6669 = vmatpush2.bf16.msra.mxu0 %v6050
        %6670 = vmatprep.subr.bf16.mxu0 %v6043
        %6671 = vmatpush2.bf16.msra.mxu0 %v6042
        %6672 = vmatprep.subr.bf16.mxu0 %v6035
        %6673 = vmatpush2.bf16.msra.mxu0 %v6034
        %6674 = vmatprep.mubr.bf16.mxu0 %v5191
        %6675 = vmatmul.mubr.bf16.gmra.mxu0 %v5184
        %v6676 = vpop.f32.mrf.mxu0
        %v6677 = vadd.f32 0.0, %v6676
        %v6678 = vpop.f32.mrf.mxu0
        %v6679 = vadd.f32 0.0, %v6678
        %v6680 = vpop.f32.mrf.mxu0
        %v6681 = vpop.f32.mrf.mxu0
        %6682 = vdwg.mxu0
        %6683 = vmatprep.subr.bf16.mxu0 %v6155
        %6684 = vmatpush1.bf16.msra.mxu0 %v6154
        %6685 = vmatprep.subr.bf16.mxu0 %v6147
        %6686 = vmatpush1.bf16.msra.mxu0 %v6146
        %6687 = vmatprep.subr.bf16.mxu0 %v6139
        %6688 = vmatpush1.bf16.msra.mxu0 %v6138
        %6689 = vmatprep.subr.bf16.mxu0 %v6131
        %6690 = vmatpush1.bf16.msra.mxu0 %v6130
        %6691 = vmatprep.subr.bf16.mxu0 %v6123
        %6692 = vmatpush1.bf16.msra.mxu0 %v6122
        %6693 = vmatprep.subr.bf16.mxu0 %v6115
        %6694 = vmatpush1.bf16.msra.mxu0 %v6114
        %6695 = vmatprep.subr.bf16.mxu0 %v6107
        %6696 = vmatpush1.bf16.msra.mxu0 %v6106
        %6697 = vmatprep.subr.bf16.mxu0 %v6099
        %6698 = vmatpush1.bf16.msra.mxu0 %v6098
        %6699 = vmatprep.subr.bf16.mxu0 %v6219
        %6700 = vmatpush2.bf16.msra.mxu0 %v6218
        %6701 = vmatprep.subr.bf16.mxu0 %v6211
        %6702 = vmatpush2.bf16.msra.mxu0 %v6210
        %6703 = vmatprep.subr.bf16.mxu0 %v6203
        %6704 = vmatpush2.bf16.msra.mxu0 %v6202
        %6705 = vmatprep.subr.bf16.mxu0 %v6195
        %6706 = vmatpush2.bf16.msra.mxu0 %v6194
        %6707 = vmatprep.subr.bf16.mxu0 %v6187
        %6708 = vmatpush2.bf16.msra.mxu0 %v6186
        %6709 = vmatprep.subr.bf16.mxu0 %v6179
        %6710 = vmatpush2.bf16.msra.mxu0 %v6178
        %6711 = vmatprep.subr.bf16.mxu0 %v6171
        %6712 = vmatpush2.bf16.msra.mxu0 %v6170
        %6713 = vmatprep.subr.bf16.mxu0 %v6163
        %6714 = vmatpush2.bf16.msra.mxu0 %v6162
        %6715 = vmatprep.mubr.bf16.mxu0 %v5193
        %6716 = vmatmul.mubr.bf16.gmra.mxu0 %v5192
        %v6717 = vpop.f32.mrf.mxu0
        %v6718 = vadd.f32 %v6677, %v6717
        %v6719 = vpop.f32.mrf.mxu0
        %v6720 = vadd.f32 %v6679, %v6719
        %v6721 = vpop.f32.mrf.mxu0
        %v6722 = vpop.f32.mrf.mxu0
        %6723 = vdwg.mxu0
        %6724 = vmatprep.subr.bf16.mxu0 %v6029
        %6725 = vmatpush1.bf16.msra.mxu0 %v6028
        %6726 = vmatprep.subr.bf16.mxu0 %v6021
        %6727 = vmatpush1.bf16.msra.mxu0 %v6020
        %6728 = vmatprep.subr.bf16.mxu0 %v6013
        %6729 = vmatpush1.bf16.msra.mxu0 %v6012
        %6730 = vmatprep.subr.bf16.mxu0 %v6005
        %6731 = vmatpush1.bf16.msra.mxu0 %v6004
        %6732 = vmatprep.subr.bf16.mxu0 %v5997
        %6733 = vmatpush1.bf16.msra.mxu0 %v5996
        %6734 = vmatprep.subr.bf16.mxu0 %v5989
        %6735 = vmatpush1.bf16.msra.mxu0 %v5988
        %6736 = vmatprep.subr.bf16.mxu0 %v5981
        %6737 = vmatpush1.bf16.msra.mxu0 %v5980
        %6738 = vmatprep.subr.bf16.mxu0 %v5973
        %6739 = vmatpush1.bf16.msra.mxu0 %v5972
        %6740 = vmatprep.subr.bf16.mxu0 %v6093
        %6741 = vmatpush2.bf16.msra.mxu0 %v6092
        %6742 = vmatprep.subr.bf16.mxu0 %v6085
        %6743 = vmatpush2.bf16.msra.mxu0 %v6084
        %6744 = vmatprep.subr.bf16.mxu0 %v6077
        %6745 = vmatpush2.bf16.msra.mxu0 %v6076
        %6746 = vmatprep.subr.bf16.mxu0 %v6069
        %6747 = vmatpush2.bf16.msra.mxu0 %v6068
        %6748 = vmatprep.subr.bf16.mxu0 %v6061
        %6749 = vmatpush2.bf16.msra.mxu0 %v6060
        %6750 = vmatprep.subr.bf16.mxu0 %v6053
        %6751 = vmatpush2.bf16.msra.mxu0 %v6052
        %6752 = vmatprep.subr.bf16.mxu0 %v6045
        %6753 = vmatpush2.bf16.msra.mxu0 %v6044
        %6754 = vmatprep.subr.bf16.mxu0 %v6037
        %6755 = vmatpush2.bf16.msra.mxu0 %v6036
        %6756 = vmatprep.mubr.bf16.mxu0 %v5191
        %6757 = vmatmul.mubr.bf16.gmra.mxu0 %v5184
        %v6758 = vpop.f32.mrf.mxu0
        %v6759 = vadd.f32 0.0, %v6758
        %v6760 = vpop.f32.mrf.mxu0
        %v6761 = vadd.f32 0.0, %v6760
        %v6762 = vpop.f32.mrf.mxu0
        %v6763 = vpop.f32.mrf.mxu0
        %6764 = vdwg.mxu0
        %6765 = vmatprep.subr.bf16.mxu0 %v6157
        %6766 = vmatpush1.bf16.msra.mxu0 %v6156
        %6767 = vmatprep.subr.bf16.mxu0 %v6149
        %6768 = vmatpush1.bf16.msra.mxu0 %v6148
        %6769 = vmatprep.subr.bf16.mxu0 %v6141
        %6770 = vmatpush1.bf16.msra.mxu0 %v6140
        %6771 = vmatprep.subr.bf16.mxu0 %v6133
        %6772 = vmatpush1.bf16.msra.mxu0 %v6132
        %6773 = vmatprep.subr.bf16.mxu0 %v6125
        %6774 = vmatpush1.bf16.msra.mxu0 %v6124
        %6775 = vmatprep.subr.bf16.mxu0 %v6117
        %6776 = vmatpush1.bf16.msra.mxu0 %v6116
        %6777 = vmatprep.subr.bf16.mxu0 %v6109
        %6778 = vmatpush1.bf16.msra.mxu0 %v6108
        %6779 = vmatprep.subr.bf16.mxu0 %v6101
        %6780 = vmatpush1.bf16.msra.mxu0 %v6100
        %6781 = vmatprep.subr.bf16.mxu0 %v6221
        %6782 = vmatpush2.bf16.msra.mxu0 %v6220
        %6783 = vmatprep.subr.bf16.mxu0 %v6213
        %6784 = vmatpush2.bf16.msra.mxu0 %v6212
        %6785 = vmatprep.subr.bf16.mxu0 %v6205
        %6786 = vmatpush2.bf16.msra.mxu0 %v6204
        %6787 = vmatprep.subr.bf16.mxu0 %v6197
        %6788 = vmatpush2.bf16.msra.mxu0 %v6196
        %6789 = vmatprep.subr.bf16.mxu0 %v6189
        %6790 = vmatpush2.bf16.msra.mxu0 %v6188
        %6791 = vmatprep.subr.bf16.mxu0 %v6181
        %6792 = vmatpush2.bf16.msra.mxu0 %v6180
        %6793 = vmatprep.subr.bf16.mxu0 %v6173
        %6794 = vmatpush2.bf16.msra.mxu0 %v6172
        %6795 = vmatprep.subr.bf16.mxu0 %v6165
        %6796 = vmatpush2.bf16.msra.mxu0 %v6164
        %6797 = vmatprep.mubr.bf16.mxu0 %v5193
        %6798 = vmatmul.mubr.bf16.gmra.mxu0 %v5192
        %v6799 = vpop.f32.mrf.mxu0
        %v6800 = vadd.f32 %v6759, %v6799
        %v6801 = vpop.f32.mrf.mxu0
        %v6802 = vadd.f32 %v6761, %v6801
        %v6803 = vpop.f32.mrf.mxu0
        %v6804 = vpop.f32.mrf.mxu0
        %6805 = vdwg.mxu0
        %v6808 = vunpack.c.l.s4 1966171168
        %v6809 = vunpack.c.0.s8 %v6808
        %v6810 = vlaneseq
        %v6811 = vshrl.u32 %v6810, 7
        %v6812 = vsub.s32 %v6809, %v6811
        %v6813 = vrot.slane %v4651, %v6812
        %v6814 = vcombine.high %v6813, %v6813
        %v6816 = vunpack.c.l.s4 1966171168
        %v6817 = vunpack.c.0.s8 %v6816
        %v6818 = vlaneseq
        %v6819 = vshrl.u32 %v6818, 7
        %v6820 = vsub.s32 %v6817, %v6819
        %v6821 = vrot.slane %v6813, %v6820
        %v6823 = vunpack.c.l.s4 1966171168
        %v6824 = vunpack.c.0.s8 %v6823
        %v6825 = vlaneseq
        %v6826 = vshrl.u32 %v6825, 7
        %v6827 = vsub.s32 %v6824, %v6826
        %v6828 = vrot.slane %v6814, %v6827
        %v6829 = vcombine.high %v6821, %v6821
        %v6830 = vcombine.high %v6828, %v6828
        %v7091 = vunpack.c.l.b16 %v4652
        %v7092 = vunpack.c.h.b16 %v4652
        %v7093 = vunpack.c.l.b16 %v4653
        %v7094 = vunpack.c.h.b16 %v4653
        %v7095 = vunpack.c.l.b16 %v4654
        %v7096 = vunpack.c.h.b16 %v4654
        %v7097 = vunpack.c.l.b16 %v4655
        %v7098 = vunpack.c.h.b16 %v4655
        %v7099 = vunpack.c.l.b16 %v4656
        %v7100 = vunpack.c.h.b16 %v4656
        %v7101 = vunpack.c.l.b16 %v4657
        %v7102 = vunpack.c.h.b16 %v4657
        %v7103 = vunpack.c.l.b16 %v4658
        %v7104 = vunpack.c.h.b16 %v4658
        %v7105 = vunpack.c.l.b16 %v4659
        %v7106 = vunpack.c.h.b16 %v4659
        %v7107 = vunpack.c.l.b16 %v4660
        %v7108 = vunpack.c.h.b16 %v4660
        %v7109 = vunpack.c.l.b16 %v4661
        %v7110 = vunpack.c.h.b16 %v4661
        %v7111 = vunpack.c.l.b16 %v4662
        %v7112 = vunpack.c.h.b16 %v4662
        %v7113 = vunpack.c.l.b16 %v4663
        %v7114 = vunpack.c.h.b16 %v4663
        %v7115 = vunpack.c.l.b16 %v4664
        %v7116 = vunpack.c.h.b16 %v4664
        %v7117 = vunpack.c.l.b16 %v4665
        %v7118 = vunpack.c.h.b16 %v4665
        %v7119 = vunpack.c.l.b16 %v4666
        %v7120 = vunpack.c.h.b16 %v4666
        %v7121 = vunpack.c.l.b16 %v4667
        %v7122 = vunpack.c.h.b16 %v4667
        %v7123 = vunpack.c.l.b16 %v4668
        %v7124 = vunpack.c.h.b16 %v4668
        %v7125 = vunpack.c.l.b16 %v4669
        %v7126 = vunpack.c.h.b16 %v4669
        %v7127 = vunpack.c.l.b16 %v4670
        %v7128 = vunpack.c.h.b16 %v4670
        %v7129 = vunpack.c.l.b16 %v4671
        %v7130 = vunpack.c.h.b16 %v4671
        %v7131 = vunpack.c.l.b16 %v4672
        %v7132 = vunpack.c.h.b16 %v4672
        %v7133 = vunpack.c.l.b16 %v4673
        %v7134 = vunpack.c.h.b16 %v4673
        %v7135 = vunpack.c.l.b16 %v4674
        %v7136 = vunpack.c.h.b16 %v4674
        %v7137 = vunpack.c.l.b16 %v4675
        %v7138 = vunpack.c.h.b16 %v4675
        %v7139 = vunpack.c.l.b16 %v4676
        %v7140 = vunpack.c.h.b16 %v4676
        %v7141 = vunpack.c.l.b16 %v4677
        %v7142 = vunpack.c.h.b16 %v4677
        %v7143 = vunpack.c.l.b16 %v4678
        %v7144 = vunpack.c.h.b16 %v4678
        %v7145 = vunpack.c.l.b16 %v4679
        %v7146 = vunpack.c.h.b16 %v4679
        %v7147 = vunpack.c.l.b16 %v4680
        %v7148 = vunpack.c.h.b16 %v4680
        %v7149 = vunpack.c.l.b16 %v4681
        %v7150 = vunpack.c.h.b16 %v4681
        %v7151 = vunpack.c.l.b16 %v4682
        %v7152 = vunpack.c.h.b16 %v4682
        %v7153 = vunpack.c.l.b16 %v4683
        %v7154 = vunpack.c.h.b16 %v4683
        %v7155 = vunpack.c.l.b16 %v4684
        %v7156 = vunpack.c.h.b16 %v4684
        %v7157 = vunpack.c.l.b16 %v4685
        %v7158 = vunpack.c.h.b16 %v4685
        %v7159 = vunpack.c.l.b16 %v4686
        %v7160 = vunpack.c.h.b16 %v4686
        %v7161 = vunpack.c.l.b16 %v4687
        %v7162 = vunpack.c.h.b16 %v4687
        %v7163 = vunpack.c.l.b16 %v4688
        %v7164 = vunpack.c.h.b16 %v4688
        %v7165 = vunpack.c.l.b16 %v4689
        %v7166 = vunpack.c.h.b16 %v4689
        %v7167 = vunpack.c.l.b16 %v4690
        %v7168 = vunpack.c.h.b16 %v4690
        %v7169 = vunpack.c.l.b16 %v4691
        %v7170 = vunpack.c.h.b16 %v4691
        %v7171 = vunpack.c.l.b16 %v4692
        %v7172 = vunpack.c.h.b16 %v4692
        %v7173 = vunpack.c.l.b16 %v4693
        %v7174 = vunpack.c.h.b16 %v4693
        %v7175 = vunpack.c.l.b16 %v4694
        %v7176 = vunpack.c.h.b16 %v4694
        %v7177 = vunpack.c.l.b16 %v4695
        %v7178 = vunpack.c.h.b16 %v4695
        %v7179 = vunpack.c.l.b16 %v4696
        %v7180 = vunpack.c.h.b16 %v4696
        %v7181 = vunpack.c.l.b16 %v4697
        %v7182 = vunpack.c.h.b16 %v4697
        %v7183 = vunpack.c.l.b16 %v4698
        %v7184 = vunpack.c.h.b16 %v4698
        %v7185 = vunpack.c.l.b16 %v4699
        %v7186 = vunpack.c.h.b16 %v4699
        %v7187 = vunpack.c.l.b16 %v4700
        %v7188 = vunpack.c.h.b16 %v4700
        %v7189 = vunpack.c.l.b16 %v4701
        %v7190 = vunpack.c.h.b16 %v4701
        %v7191 = vunpack.c.l.b16 %v4702
        %v7192 = vunpack.c.h.b16 %v4702
        %v7193 = vunpack.c.l.b16 %v4703
        %v7194 = vunpack.c.h.b16 %v4703
        %v7195 = vunpack.c.l.b16 %v4704
        %v7196 = vunpack.c.h.b16 %v4704
        %v7197 = vunpack.c.l.b16 %v4705
        %v7198 = vunpack.c.h.b16 %v4705
        %v7199 = vunpack.c.l.b16 %v4706
        %v7200 = vunpack.c.h.b16 %v4706
        %v7201 = vunpack.c.l.b16 %v4707
        %v7202 = vunpack.c.h.b16 %v4707
        %v7203 = vunpack.c.l.b16 %v4708
        %v7204 = vunpack.c.h.b16 %v4708
        %v7205 = vunpack.c.l.b16 %v4709
        %v7206 = vunpack.c.h.b16 %v4709
        %v7207 = vunpack.c.l.b16 %v4710
        %v7208 = vunpack.c.h.b16 %v4710
        %v7209 = vunpack.c.l.b16 %v4711
        %v7210 = vunpack.c.h.b16 %v4711
        %v7211 = vunpack.c.l.b16 %v4712
        %v7212 = vunpack.c.h.b16 %v4712
        %v7213 = vunpack.c.l.b16 %v4713
        %v7214 = vunpack.c.h.b16 %v4713
        %v7215 = vunpack.c.l.b16 %v4714
        %v7216 = vunpack.c.h.b16 %v4714
        %v7217 = vunpack.c.l.b16 %v4715
        %v7218 = vunpack.c.h.b16 %v4715
        %v7219 = vunpack.c.l.b16 %v4716
        %v7220 = vunpack.c.h.b16 %v4716
        %v7221 = vunpack.c.l.b16 %v4717
        %v7222 = vunpack.c.h.b16 %v4717
        %v7223 = vunpack.c.l.b16 %v4718
        %v7224 = vunpack.c.h.b16 %v4718
        %v7225 = vunpack.c.l.b16 %v4719
        %v7226 = vunpack.c.h.b16 %v4719
        %v7227 = vunpack.c.l.b16 %v4720
        %v7228 = vunpack.c.h.b16 %v4720
        %v7229 = vunpack.c.l.b16 %v4721
        %v7230 = vunpack.c.h.b16 %v4721
        %v7231 = vunpack.c.l.b16 %v4722
        %v7232 = vunpack.c.h.b16 %v4722
        %v7233 = vunpack.c.l.b16 %v4723
        %v7234 = vunpack.c.h.b16 %v4723
        %v7235 = vunpack.c.l.b16 %v4724
        %v7236 = vunpack.c.h.b16 %v4724
        %v7237 = vunpack.c.l.b16 %v4725
        %v7238 = vunpack.c.h.b16 %v4725
        %v7239 = vunpack.c.l.b16 %v4726
        %v7240 = vunpack.c.h.b16 %v4726
        %v7241 = vunpack.c.l.b16 %v4727
        %v7242 = vunpack.c.h.b16 %v4727
        %v7243 = vunpack.c.l.b16 %v4728
        %v7244 = vunpack.c.h.b16 %v4728
        %v7245 = vunpack.c.l.b16 %v4729
        %v7246 = vunpack.c.h.b16 %v4729
        %v7247 = vunpack.c.l.b16 %v4730
        %v7248 = vunpack.c.h.b16 %v4730
        %v7249 = vunpack.c.l.b16 %v4731
        %v7250 = vunpack.c.h.b16 %v4731
        %v7251 = vunpack.c.l.b16 %v4732
        %v7252 = vunpack.c.h.b16 %v4732
        %v7253 = vunpack.c.l.b16 %v4733
        %v7254 = vunpack.c.h.b16 %v4733
        %v7255 = vunpack.c.l.b16 %v4734
        %v7256 = vunpack.c.h.b16 %v4734
        %v7257 = vunpack.c.l.b16 %v4735
        %v7258 = vunpack.c.h.b16 %v4735
        %v7259 = vunpack.c.l.b16 %v4736
        %v7260 = vunpack.c.h.b16 %v4736
        %v7261 = vunpack.c.l.b16 %v4737
        %v7262 = vunpack.c.h.b16 %v4737
        %v7263 = vunpack.c.l.b16 %v4738
        %v7264 = vunpack.c.h.b16 %v4738
        %v7265 = vunpack.c.l.b16 %v4739
        %v7266 = vunpack.c.h.b16 %v4739
        %v7267 = vunpack.c.l.b16 %v4740
        %v7268 = vunpack.c.h.b16 %v4740
        %v7269 = vunpack.c.l.b16 %v4741
        %v7270 = vunpack.c.h.b16 %v4741
        %v7271 = vunpack.c.l.b16 %v4742
        %v7272 = vunpack.c.h.b16 %v4742
        %v7273 = vunpack.c.l.b16 %v4743
        %v7274 = vunpack.c.h.b16 %v4743
        %v7275 = vunpack.c.l.b16 %v4744
        %v7276 = vunpack.c.h.b16 %v4744
        %v7277 = vunpack.c.l.b16 %v4745
        %v7278 = vunpack.c.h.b16 %v4745
        %v7279 = vunpack.c.l.b16 %v4746
        %v7280 = vunpack.c.h.b16 %v4746
        %v7281 = vunpack.c.l.b16 %v4747
        %v7282 = vunpack.c.h.b16 %v4747
        %v7283 = vunpack.c.l.b16 %v4748
        %v7284 = vunpack.c.h.b16 %v4748
        %v7285 = vunpack.c.l.b16 %v4749
        %v7286 = vunpack.c.h.b16 %v4749
        %v7287 = vunpack.c.l.b16 %v4750
        %v7288 = vunpack.c.h.b16 %v4750
        %v7289 = vunpack.c.l.b16 %v4751
        %v7290 = vunpack.c.h.b16 %v4751
        %v7291 = vunpack.c.l.b16 %v4752
        %v7292 = vunpack.c.h.b16 %v4752
        %v7293 = vunpack.c.l.b16 %v4753
        %v7294 = vunpack.c.h.b16 %v4753
        %v7295 = vunpack.c.l.b16 %v4754
        %v7296 = vunpack.c.h.b16 %v4754
        %v7297 = vunpack.c.l.b16 %v4755
        %v7298 = vunpack.c.h.b16 %v4755
        %v7299 = vunpack.c.l.b16 %v4756
        %v7300 = vunpack.c.h.b16 %v4756
        %v7301 = vunpack.c.l.b16 %v4757
        %v7302 = vunpack.c.h.b16 %v4757
        %v7303 = vunpack.c.l.b16 %v4758
        %v7304 = vunpack.c.h.b16 %v4758
        %v7305 = vunpack.c.l.b16 %v4759
        %v7306 = vunpack.c.h.b16 %v4759
        %v7307 = vunpack.c.l.b16 %v4760
        %v7308 = vunpack.c.h.b16 %v4760
        %v7309 = vunpack.c.l.b16 %v4761
        %v7310 = vunpack.c.h.b16 %v4761
        %v7311 = vunpack.c.l.b16 %v4762
        %v7312 = vunpack.c.h.b16 %v4762
        %v7313 = vunpack.c.l.b16 %v4763
        %v7314 = vunpack.c.h.b16 %v4763
        %v7315 = vunpack.c.l.b16 %v4764
        %v7316 = vunpack.c.h.b16 %v4764
        %v7317 = vunpack.c.l.b16 %v4765
        %v7318 = vunpack.c.h.b16 %v4765
        %v7319 = vunpack.c.l.b16 %v4766
        %v7320 = vunpack.c.h.b16 %v4766
        %v7321 = vunpack.c.l.b16 %v4767
        %v7322 = vunpack.c.h.b16 %v4767
        %v7323 = vunpack.c.l.b16 %v4768
        %v7324 = vunpack.c.h.b16 %v4768
        %v7325 = vunpack.c.l.b16 %v4769
        %v7326 = vunpack.c.h.b16 %v4769
        %v7327 = vunpack.c.l.b16 %v4770
        %v7328 = vunpack.c.h.b16 %v4770
        %v7329 = vunpack.c.l.b16 %v4771
        %v7330 = vunpack.c.h.b16 %v4771
        %v7331 = vunpack.c.l.b16 %v4772
        %v7332 = vunpack.c.h.b16 %v4772
        %v7333 = vunpack.c.l.b16 %v4773
        %v7334 = vunpack.c.h.b16 %v4773
        %v7335 = vunpack.c.l.b16 %v4774
        %v7336 = vunpack.c.h.b16 %v4774
        %v7337 = vunpack.c.l.b16 %v4775
        %v7338 = vunpack.c.h.b16 %v4775
        %v7339 = vunpack.c.l.b16 %v4776
        %v7340 = vunpack.c.h.b16 %v4776
        %v7341 = vunpack.c.l.b16 %v4777
        %v7342 = vunpack.c.h.b16 %v4777
        %v7343 = vunpack.c.l.b16 %v4778
        %v7344 = vunpack.c.h.b16 %v4778
        %v7345 = vunpack.c.l.b16 %v4779
        %v7346 = vunpack.c.h.b16 %v4779
        %v7347 = vunpack.c.l.b16 %v4780
        %v7348 = vunpack.c.h.b16 %v4780
        %v7349 = vunpack.c.l.b16 %v4781
        %v7350 = vunpack.c.h.b16 %v4781
        %v7351 = vunpack.c.l.b16 %v4782
        %v7352 = vunpack.c.h.b16 %v4782
        %v7353 = vunpack.c.l.b16 %v4783
        %v7354 = vunpack.c.h.b16 %v4783
        %v7355 = vunpack.c.l.b16 %v4784
        %v7356 = vunpack.c.h.b16 %v4784
        %v7357 = vunpack.c.l.b16 %v4785
        %v7358 = vunpack.c.h.b16 %v4785
        %v7359 = vunpack.c.l.b16 %v4786
        %v7360 = vunpack.c.h.b16 %v4786
        %v7361 = vunpack.c.l.b16 %v4787
        %v7362 = vunpack.c.h.b16 %v4787
        %v7363 = vunpack.c.l.b16 %v4788
        %v7364 = vunpack.c.h.b16 %v4788
        %v7365 = vunpack.c.l.b16 %v4789
        %v7366 = vunpack.c.h.b16 %v4789
        %v7367 = vunpack.c.l.b16 %v4790
        %v7368 = vunpack.c.h.b16 %v4790
        %v7369 = vunpack.c.l.b16 %v4791
        %v7370 = vunpack.c.h.b16 %v4791
        %v7371 = vunpack.c.l.b16 %v4792
        %v7372 = vunpack.c.h.b16 %v4792
        %v7373 = vunpack.c.l.b16 %v4793
        %v7374 = vunpack.c.h.b16 %v4793
        %v7375 = vunpack.c.l.b16 %v4794
        %v7376 = vunpack.c.h.b16 %v4794
        %v7377 = vunpack.c.l.b16 %v4795
        %v7378 = vunpack.c.h.b16 %v4795
        %v7379 = vunpack.c.l.b16 %v4796
        %v7380 = vunpack.c.h.b16 %v4796
        %v7381 = vunpack.c.l.b16 %v4797
        %v7382 = vunpack.c.h.b16 %v4797
        %v7383 = vunpack.c.l.b16 %v4798
        %v7384 = vunpack.c.h.b16 %v4798
        %v7385 = vunpack.c.l.b16 %v4799
        %v7386 = vunpack.c.h.b16 %v4799
        %v7387 = vunpack.c.l.b16 %v4800
        %v7388 = vunpack.c.h.b16 %v4800
        %v7389 = vunpack.c.l.b16 %v4801
        %v7390 = vunpack.c.h.b16 %v4801
        %v7391 = vunpack.c.l.b16 %v4802
        %v7392 = vunpack.c.h.b16 %v4802
        %v7393 = vunpack.c.l.b16 %v4803
        %v7394 = vunpack.c.h.b16 %v4803
        %v7395 = vunpack.c.l.b16 %v4804
        %v7396 = vunpack.c.h.b16 %v4804
        %v7397 = vunpack.c.l.b16 %v4805
        %v7398 = vunpack.c.h.b16 %v4805
        %v7399 = vunpack.c.l.b16 %v4806
        %v7400 = vunpack.c.h.b16 %v4806
        %v7401 = vunpack.c.l.b16 %v4807
        %v7402 = vunpack.c.h.b16 %v4807
        %v7403 = vunpack.c.l.b16 %v4808
        %v7404 = vunpack.c.h.b16 %v4808
        %v7405 = vunpack.c.l.b16 %v4809
        %v7406 = vunpack.c.h.b16 %v4809
        %v7407 = vunpack.c.l.b16 %v4810
        %v7408 = vunpack.c.h.b16 %v4810
        %v7409 = vunpack.c.l.b16 %v4811
        %v7410 = vunpack.c.h.b16 %v4811
        %v7411 = vunpack.c.l.b16 %v4812
        %v7412 = vunpack.c.h.b16 %v4812
        %v7413 = vunpack.c.l.b16 %v4813
        %v7414 = vunpack.c.h.b16 %v4813
        %v7415 = vunpack.c.l.b16 %v4814
        %v7416 = vunpack.c.h.b16 %v4814
        %v7417 = vunpack.c.l.b16 %v4815
        %v7418 = vunpack.c.h.b16 %v4815
        %v7419 = vunpack.c.l.b16 %v4816
        %v7420 = vunpack.c.h.b16 %v4816
        %v7421 = vunpack.c.l.b16 %v4817
        %v7422 = vunpack.c.h.b16 %v4817
        %v7423 = vunpack.c.l.b16 %v4818
        %v7424 = vunpack.c.h.b16 %v4818
        %v7425 = vunpack.c.l.b16 %v4819
        %v7426 = vunpack.c.h.b16 %v4819
        %v7427 = vunpack.c.l.b16 %v4820
        %v7428 = vunpack.c.h.b16 %v4820
        %v7429 = vunpack.c.l.b16 %v4821
        %v7430 = vunpack.c.h.b16 %v4821
        %v7431 = vunpack.c.l.b16 %v4822
        %v7432 = vunpack.c.h.b16 %v4822
        %v7433 = vunpack.c.l.b16 %v4823
        %v7434 = vunpack.c.h.b16 %v4823
        %v7435 = vunpack.c.l.b16 %v4824
        %v7436 = vunpack.c.h.b16 %v4824
        %v7437 = vunpack.c.l.b16 %v4825
        %v7438 = vunpack.c.h.b16 %v4825
        %v7439 = vunpack.c.l.b16 %v4826
        %v7440 = vunpack.c.h.b16 %v4826
        %v7441 = vunpack.c.l.b16 %v4827
        %v7442 = vunpack.c.h.b16 %v4827
        %v7443 = vunpack.c.l.b16 %v4828
        %v7444 = vunpack.c.h.b16 %v4828
        %v7445 = vunpack.c.l.b16 %v4829
        %v7446 = vunpack.c.h.b16 %v4829
        %v7447 = vunpack.c.l.b16 %v4830
        %v7448 = vunpack.c.h.b16 %v4830
        %v7449 = vunpack.c.l.b16 %v4831
        %v7450 = vunpack.c.h.b16 %v4831
        %v7451 = vunpack.c.l.b16 %v4832
        %v7452 = vunpack.c.h.b16 %v4832
        %v7453 = vunpack.c.l.b16 %v4833
        %v7454 = vunpack.c.h.b16 %v4833
        %v7455 = vunpack.c.l.b16 %v4834
        %v7456 = vunpack.c.h.b16 %v4834
        %v7457 = vunpack.c.l.b16 %v4835
        %v7458 = vunpack.c.h.b16 %v4835
        %v7459 = vunpack.c.l.b16 %v4836
        %v7460 = vunpack.c.h.b16 %v4836
        %v7461 = vunpack.c.l.b16 %v4837
        %v7462 = vunpack.c.h.b16 %v4837
        %v7463 = vunpack.c.l.b16 %v4838
        %v7464 = vunpack.c.h.b16 %v4838
        %v7465 = vunpack.c.l.b16 %v4839
        %v7466 = vunpack.c.h.b16 %v4839
        %v7467 = vunpack.c.l.b16 %v4840
        %v7468 = vunpack.c.h.b16 %v4840
        %v7469 = vunpack.c.l.b16 %v4841
        %v7470 = vunpack.c.h.b16 %v4841
        %v7471 = vunpack.c.l.b16 %v4842
        %v7472 = vunpack.c.h.b16 %v4842
        %v7473 = vunpack.c.l.b16 %v4843
        %v7474 = vunpack.c.h.b16 %v4843
        %v7475 = vunpack.c.l.b16 %v4844
        %v7476 = vunpack.c.h.b16 %v4844
        %v7477 = vunpack.c.l.b16 %v4845
        %v7478 = vunpack.c.h.b16 %v4845
        %v7479 = vunpack.c.l.b16 %v4846
        %v7480 = vunpack.c.h.b16 %v4846
        %v7481 = vunpack.c.l.b16 %v4847
        %v7482 = vunpack.c.h.b16 %v4847
        %v7483 = vunpack.c.l.b16 %v4848
        %v7484 = vunpack.c.h.b16 %v4848
        %v7485 = vunpack.c.l.b16 %v4849
        %v7486 = vunpack.c.h.b16 %v4849
        %v7487 = vunpack.c.l.b16 %v4850
        %v7488 = vunpack.c.h.b16 %v4850
        %v7489 = vunpack.c.l.b16 %v4851
        %v7490 = vunpack.c.h.b16 %v4851
        %v7491 = vunpack.c.l.b16 %v4852
        %v7492 = vunpack.c.h.b16 %v4852
        %v7493 = vunpack.c.l.b16 %v4853
        %v7494 = vunpack.c.h.b16 %v4853
        %v7495 = vunpack.c.l.b16 %v4854
        %v7496 = vunpack.c.h.b16 %v4854
        %v7497 = vunpack.c.l.b16 %v4855
        %v7498 = vunpack.c.h.b16 %v4855
        %v7499 = vunpack.c.l.b16 %v4856
        %v7500 = vunpack.c.h.b16 %v4856
        %v7501 = vunpack.c.l.b16 %v4857
        %v7502 = vunpack.c.h.b16 %v4857
        %v7503 = vunpack.c.l.b16 %v4858
        %v7504 = vunpack.c.h.b16 %v4858
        %v7505 = vunpack.c.l.b16 %v4859
        %v7506 = vunpack.c.h.b16 %v4859
        %v7507 = vunpack.c.l.b16 %v4860
        %v7508 = vunpack.c.h.b16 %v4860
        %v7509 = vunpack.c.l.b16 %v4861
        %v7510 = vunpack.c.h.b16 %v4861
        %v7511 = vunpack.c.l.b16 %v4862
        %v7512 = vunpack.c.h.b16 %v4862
        %v7513 = vunpack.c.l.b16 %v4863
        %v7514 = vunpack.c.h.b16 %v4863
        %v7515 = vunpack.c.l.b16 %v4864
        %v7516 = vunpack.c.h.b16 %v4864
        %v7517 = vunpack.c.l.b16 %v4865
        %v7518 = vunpack.c.h.b16 %v4865
        %v7519 = vunpack.c.l.b16 %v4866
        %v7520 = vunpack.c.h.b16 %v4866
        %v7521 = vunpack.c.l.b16 %v4867
        %v7522 = vunpack.c.h.b16 %v4867
        %v7523 = vunpack.c.l.b16 %v4868
        %v7524 = vunpack.c.h.b16 %v4868
        %v7525 = vunpack.c.l.b16 %v4869
        %v7526 = vunpack.c.h.b16 %v4869
        %v7527 = vunpack.c.l.b16 %v4870
        %v7528 = vunpack.c.h.b16 %v4870
        %v7529 = vunpack.c.l.b16 %v4871
        %v7530 = vunpack.c.h.b16 %v4871
        %v7531 = vunpack.c.l.b16 %v4872
        %v7532 = vunpack.c.h.b16 %v4872
        %v7533 = vunpack.c.l.b16 %v4873
        %v7534 = vunpack.c.h.b16 %v4873
        %v7535 = vunpack.c.l.b16 %v4874
        %v7536 = vunpack.c.h.b16 %v4874
        %v7537 = vunpack.c.l.b16 %v4875
        %v7538 = vunpack.c.h.b16 %v4875
        %v7539 = vunpack.c.l.b16 %v4876
        %v7540 = vunpack.c.h.b16 %v4876
        %v7541 = vunpack.c.l.b16 %v4877
        %v7542 = vunpack.c.h.b16 %v4877
        %v7543 = vunpack.c.l.b16 %v4878
        %v7544 = vunpack.c.h.b16 %v4878
        %v7545 = vunpack.c.l.b16 %v4879
        %v7546 = vunpack.c.h.b16 %v4879
        %v7547 = vunpack.c.l.b16 %v4880
        %v7548 = vunpack.c.h.b16 %v4880
        %v7549 = vunpack.c.l.b16 %v4881
        %v7550 = vunpack.c.h.b16 %v4881
        %v7551 = vunpack.c.l.b16 %v4882
        %v7552 = vunpack.c.h.b16 %v4882
        %v7553 = vunpack.c.l.b16 %v4883
        %v7554 = vunpack.c.h.b16 %v4883
        %v7555 = vunpack.c.l.b16 %v4884
        %v7556 = vunpack.c.h.b16 %v4884
        %v7557 = vunpack.c.l.b16 %v4885
        %v7558 = vunpack.c.h.b16 %v4885
        %v7559 = vunpack.c.l.b16 %v4886
        %v7560 = vunpack.c.h.b16 %v4886
        %v7561 = vunpack.c.l.b16 %v4887
        %v7562 = vunpack.c.h.b16 %v4887
        %v7563 = vunpack.c.l.b16 %v4888
        %v7564 = vunpack.c.h.b16 %v4888
        %v7565 = vunpack.c.l.b16 %v4889
        %v7566 = vunpack.c.h.b16 %v4889
        %v7567 = vunpack.c.l.b16 %v4890
        %v7568 = vunpack.c.h.b16 %v4890
        %v7569 = vunpack.c.l.b16 %v4891
        %v7570 = vunpack.c.h.b16 %v4891
        %v7571 = vunpack.c.l.b16 %v4892
        %v7572 = vunpack.c.h.b16 %v4892
        %v7573 = vunpack.c.l.b16 %v4893
        %v7574 = vunpack.c.h.b16 %v4893
        %v7575 = vunpack.c.l.b16 %v4894
        %v7576 = vunpack.c.h.b16 %v4894
        %v7577 = vunpack.c.l.b16 %v4895
        %v7578 = vunpack.c.h.b16 %v4895
        %v7579 = vunpack.c.l.b16 %v4896
        %v7580 = vunpack.c.h.b16 %v4896
        %v7581 = vunpack.c.l.b16 %v4897
        %v7582 = vunpack.c.h.b16 %v4897
        %v7583 = vunpack.c.l.b16 %v4898
        %v7584 = vunpack.c.h.b16 %v4898
        %v7585 = vunpack.c.l.b16 %v4899
        %v7586 = vunpack.c.h.b16 %v4899
        %v7587 = vunpack.c.l.b16 %v4900
        %v7588 = vunpack.c.h.b16 %v4900
        %v7589 = vunpack.c.l.b16 %v4901
        %v7590 = vunpack.c.h.b16 %v4901
        %v7591 = vunpack.c.l.b16 %v4902
        %v7592 = vunpack.c.h.b16 %v4902
        %v7593 = vunpack.c.l.b16 %v4903
        %v7594 = vunpack.c.h.b16 %v4903
        %v7595 = vunpack.c.l.b16 %v4904
        %v7596 = vunpack.c.h.b16 %v4904
        %v7597 = vunpack.c.l.b16 %v4905
        %v7598 = vunpack.c.h.b16 %v4905
        %v7599 = vunpack.c.l.b16 %v4906
        %v7600 = vunpack.c.h.b16 %v4906
        %v7601 = vunpack.c.l.b16 %v4907
        %v7602 = vunpack.c.h.b16 %v4907
        %v7603 = vpack.c.b16 %v7099, %v7091
        %v7604 = vpack.c.b16 %v7100, %v7092
        %v7605 = vpack.c.b16 %v7101, %v7093
        %v7606 = vpack.c.b16 %v7102, %v7094
        %v7607 = vpack.c.b16 %v7103, %v7095
        %v7608 = vpack.c.b16 %v7104, %v7096
        %v7609 = vpack.c.b16 %v7105, %v7097
        %v7610 = vpack.c.b16 %v7106, %v7098
        %v7611 = vpack.c.b16 %v7115, %v7107
        %v7612 = vpack.c.b16 %v7116, %v7108
        %v7613 = vpack.c.b16 %v7117, %v7109
        %v7614 = vpack.c.b16 %v7118, %v7110
        %v7615 = vpack.c.b16 %v7119, %v7111
        %v7616 = vpack.c.b16 %v7120, %v7112
        %v7617 = vpack.c.b16 %v7121, %v7113
        %v7618 = vpack.c.b16 %v7122, %v7114
        %v7619 = vpack.c.b16 %v7131, %v7123
        %v7620 = vpack.c.b16 %v7132, %v7124
        %v7621 = vpack.c.b16 %v7133, %v7125
        %v7622 = vpack.c.b16 %v7134, %v7126
        %v7623 = vpack.c.b16 %v7135, %v7127
        %v7624 = vpack.c.b16 %v7136, %v7128
        %v7625 = vpack.c.b16 %v7137, %v7129
        %v7626 = vpack.c.b16 %v7138, %v7130
        %v7627 = vpack.c.b16 %v7147, %v7139
        %v7628 = vpack.c.b16 %v7148, %v7140
        %v7629 = vpack.c.b16 %v7149, %v7141
        %v7630 = vpack.c.b16 %v7150, %v7142
        %v7631 = vpack.c.b16 %v7151, %v7143
        %v7632 = vpack.c.b16 %v7152, %v7144
        %v7633 = vpack.c.b16 %v7153, %v7145
        %v7634 = vpack.c.b16 %v7154, %v7146
        %v7635 = vpack.c.b16 %v7163, %v7155
        %v7636 = vpack.c.b16 %v7164, %v7156
        %v7637 = vpack.c.b16 %v7165, %v7157
        %v7638 = vpack.c.b16 %v7166, %v7158
        %v7639 = vpack.c.b16 %v7167, %v7159
        %v7640 = vpack.c.b16 %v7168, %v7160
        %v7641 = vpack.c.b16 %v7169, %v7161
        %v7642 = vpack.c.b16 %v7170, %v7162
        %v7643 = vpack.c.b16 %v7179, %v7171
        %v7644 = vpack.c.b16 %v7180, %v7172
        %v7645 = vpack.c.b16 %v7181, %v7173
        %v7646 = vpack.c.b16 %v7182, %v7174
        %v7647 = vpack.c.b16 %v7183, %v7175
        %v7648 = vpack.c.b16 %v7184, %v7176
        %v7649 = vpack.c.b16 %v7185, %v7177
        %v7650 = vpack.c.b16 %v7186, %v7178
        %v7651 = vpack.c.b16 %v7195, %v7187
        %v7652 = vpack.c.b16 %v7196, %v7188
        %v7653 = vpack.c.b16 %v7197, %v7189
        %v7654 = vpack.c.b16 %v7198, %v7190
        %v7655 = vpack.c.b16 %v7199, %v7191
        %v7656 = vpack.c.b16 %v7200, %v7192
        %v7657 = vpack.c.b16 %v7201, %v7193
        %v7658 = vpack.c.b16 %v7202, %v7194
        %v7659 = vpack.c.b16 %v7211, %v7203
        %v7660 = vpack.c.b16 %v7212, %v7204
        %v7661 = vpack.c.b16 %v7213, %v7205
        %v7662 = vpack.c.b16 %v7214, %v7206
        %v7663 = vpack.c.b16 %v7215, %v7207
        %v7664 = vpack.c.b16 %v7216, %v7208
        %v7665 = vpack.c.b16 %v7217, %v7209
        %v7666 = vpack.c.b16 %v7218, %v7210
        %v7667 = vpack.c.b16 %v7227, %v7219
        %v7668 = vpack.c.b16 %v7228, %v7220
        %v7669 = vpack.c.b16 %v7229, %v7221
        %v7670 = vpack.c.b16 %v7230, %v7222
        %v7671 = vpack.c.b16 %v7231, %v7223
        %v7672 = vpack.c.b16 %v7232, %v7224
        %v7673 = vpack.c.b16 %v7233, %v7225
        %v7674 = vpack.c.b16 %v7234, %v7226
        %v7675 = vpack.c.b16 %v7243, %v7235
        %v7676 = vpack.c.b16 %v7244, %v7236
        %v7677 = vpack.c.b16 %v7245, %v7237
        %v7678 = vpack.c.b16 %v7246, %v7238
        %v7679 = vpack.c.b16 %v7247, %v7239
        %v7680 = vpack.c.b16 %v7248, %v7240
        %v7681 = vpack.c.b16 %v7249, %v7241
        %v7682 = vpack.c.b16 %v7250, %v7242
        %v7683 = vpack.c.b16 %v7259, %v7251
        %v7684 = vpack.c.b16 %v7260, %v7252
        %v7685 = vpack.c.b16 %v7261, %v7253
        %v7686 = vpack.c.b16 %v7262, %v7254
        %v7687 = vpack.c.b16 %v7263, %v7255
        %v7688 = vpack.c.b16 %v7264, %v7256
        %v7689 = vpack.c.b16 %v7265, %v7257
        %v7690 = vpack.c.b16 %v7266, %v7258
        %v7691 = vpack.c.b16 %v7275, %v7267
        %v7692 = vpack.c.b16 %v7276, %v7268
        %v7693 = vpack.c.b16 %v7277, %v7269
        %v7694 = vpack.c.b16 %v7278, %v7270
        %v7695 = vpack.c.b16 %v7279, %v7271
        %v7696 = vpack.c.b16 %v7280, %v7272
        %v7697 = vpack.c.b16 %v7281, %v7273
        %v7698 = vpack.c.b16 %v7282, %v7274
        %v7699 = vpack.c.b16 %v7291, %v7283
        %v7700 = vpack.c.b16 %v7292, %v7284
        %v7701 = vpack.c.b16 %v7293, %v7285
        %v7702 = vpack.c.b16 %v7294, %v7286
        %v7703 = vpack.c.b16 %v7295, %v7287
        %v7704 = vpack.c.b16 %v7296, %v7288
        %v7705 = vpack.c.b16 %v7297, %v7289
        %v7706 = vpack.c.b16 %v7298, %v7290
        %v7707 = vpack.c.b16 %v7307, %v7299
        %v7708 = vpack.c.b16 %v7308, %v7300
        %v7709 = vpack.c.b16 %v7309, %v7301
        %v7710 = vpack.c.b16 %v7310, %v7302
        %v7711 = vpack.c.b16 %v7311, %v7303
        %v7712 = vpack.c.b16 %v7312, %v7304
        %v7713 = vpack.c.b16 %v7313, %v7305
        %v7714 = vpack.c.b16 %v7314, %v7306
        %v7715 = vpack.c.b16 %v7323, %v7315
        %v7716 = vpack.c.b16 %v7324, %v7316
        %v7717 = vpack.c.b16 %v7325, %v7317
        %v7718 = vpack.c.b16 %v7326, %v7318
        %v7719 = vpack.c.b16 %v7327, %v7319
        %v7720 = vpack.c.b16 %v7328, %v7320
        %v7721 = vpack.c.b16 %v7329, %v7321
        %v7722 = vpack.c.b16 %v7330, %v7322
        %v7723 = vpack.c.b16 %v7339, %v7331
        %v7724 = vpack.c.b16 %v7340, %v7332
        %v7725 = vpack.c.b16 %v7341, %v7333
        %v7726 = vpack.c.b16 %v7342, %v7334
        %v7727 = vpack.c.b16 %v7343, %v7335
        %v7728 = vpack.c.b16 %v7344, %v7336
        %v7729 = vpack.c.b16 %v7345, %v7337
        %v7730 = vpack.c.b16 %v7346, %v7338
        %v7731 = vpack.c.b16 %v7355, %v7347
        %v7732 = vpack.c.b16 %v7356, %v7348
        %v7733 = vpack.c.b16 %v7357, %v7349
        %v7734 = vpack.c.b16 %v7358, %v7350
        %v7735 = vpack.c.b16 %v7359, %v7351
        %v7736 = vpack.c.b16 %v7360, %v7352
        %v7737 = vpack.c.b16 %v7361, %v7353
        %v7738 = vpack.c.b16 %v7362, %v7354
        %v7739 = vpack.c.b16 %v7371, %v7363
        %v7740 = vpack.c.b16 %v7372, %v7364
        %v7741 = vpack.c.b16 %v7373, %v7365
        %v7742 = vpack.c.b16 %v7374, %v7366
        %v7743 = vpack.c.b16 %v7375, %v7367
        %v7744 = vpack.c.b16 %v7376, %v7368
        %v7745 = vpack.c.b16 %v7377, %v7369
        %v7746 = vpack.c.b16 %v7378, %v7370
        %v7747 = vpack.c.b16 %v7387, %v7379
        %v7748 = vpack.c.b16 %v7388, %v7380
        %v7749 = vpack.c.b16 %v7389, %v7381
        %v7750 = vpack.c.b16 %v7390, %v7382
        %v7751 = vpack.c.b16 %v7391, %v7383
        %v7752 = vpack.c.b16 %v7392, %v7384
        %v7753 = vpack.c.b16 %v7393, %v7385
        %v7754 = vpack.c.b16 %v7394, %v7386
        %v7755 = vpack.c.b16 %v7403, %v7395
        %v7756 = vpack.c.b16 %v7404, %v7396
        %v7757 = vpack.c.b16 %v7405, %v7397
        %v7758 = vpack.c.b16 %v7406, %v7398
        %v7759 = vpack.c.b16 %v7407, %v7399
        %v7760 = vpack.c.b16 %v7408, %v7400
        %v7761 = vpack.c.b16 %v7409, %v7401
        %v7762 = vpack.c.b16 %v7410, %v7402
        %v7763 = vpack.c.b16 %v7419, %v7411
        %v7764 = vpack.c.b16 %v7420, %v7412
        %v7765 = vpack.c.b16 %v7421, %v7413
        %v7766 = vpack.c.b16 %v7422, %v7414
        %v7767 = vpack.c.b16 %v7423, %v7415
        %v7768 = vpack.c.b16 %v7424, %v7416
        %v7769 = vpack.c.b16 %v7425, %v7417
        %v7770 = vpack.c.b16 %v7426, %v7418
        %v7771 = vpack.c.b16 %v7435, %v7427
        %v7772 = vpack.c.b16 %v7436, %v7428
        %v7773 = vpack.c.b16 %v7437, %v7429
        %v7774 = vpack.c.b16 %v7438, %v7430
        %v7775 = vpack.c.b16 %v7439, %v7431
        %v7776 = vpack.c.b16 %v7440, %v7432
        %v7777 = vpack.c.b16 %v7441, %v7433
        %v7778 = vpack.c.b16 %v7442, %v7434
        %v7779 = vpack.c.b16 %v7451, %v7443
        %v7780 = vpack.c.b16 %v7452, %v7444
        %v7781 = vpack.c.b16 %v7453, %v7445
        %v7782 = vpack.c.b16 %v7454, %v7446
        %v7783 = vpack.c.b16 %v7455, %v7447
        %v7784 = vpack.c.b16 %v7456, %v7448
        %v7785 = vpack.c.b16 %v7457, %v7449
        %v7786 = vpack.c.b16 %v7458, %v7450
        %v7787 = vpack.c.b16 %v7467, %v7459
        %v7788 = vpack.c.b16 %v7468, %v7460
        %v7789 = vpack.c.b16 %v7469, %v7461
        %v7790 = vpack.c.b16 %v7470, %v7462
        %v7791 = vpack.c.b16 %v7471, %v7463
        %v7792 = vpack.c.b16 %v7472, %v7464
        %v7793 = vpack.c.b16 %v7473, %v7465
        %v7794 = vpack.c.b16 %v7474, %v7466
        %v7795 = vpack.c.b16 %v7483, %v7475
        %v7796 = vpack.c.b16 %v7484, %v7476
        %v7797 = vpack.c.b16 %v7485, %v7477
        %v7798 = vpack.c.b16 %v7486, %v7478
        %v7799 = vpack.c.b16 %v7487, %v7479
        %v7800 = vpack.c.b16 %v7488, %v7480
        %v7801 = vpack.c.b16 %v7489, %v7481
        %v7802 = vpack.c.b16 %v7490, %v7482
        %v7803 = vpack.c.b16 %v7499, %v7491
        %v7804 = vpack.c.b16 %v7500, %v7492
        %v7805 = vpack.c.b16 %v7501, %v7493
        %v7806 = vpack.c.b16 %v7502, %v7494
        %v7807 = vpack.c.b16 %v7503, %v7495
        %v7808 = vpack.c.b16 %v7504, %v7496
        %v7809 = vpack.c.b16 %v7505, %v7497
        %v7810 = vpack.c.b16 %v7506, %v7498
        %v7811 = vpack.c.b16 %v7515, %v7507
        %v7812 = vpack.c.b16 %v7516, %v7508
        %v7813 = vpack.c.b16 %v7517, %v7509
        %v7814 = vpack.c.b16 %v7518, %v7510
        %v7815 = vpack.c.b16 %v7519, %v7511
        %v7816 = vpack.c.b16 %v7520, %v7512
        %v7817 = vpack.c.b16 %v7521, %v7513
        %v7818 = vpack.c.b16 %v7522, %v7514
        %v7819 = vpack.c.b16 %v7531, %v7523
        %v7820 = vpack.c.b16 %v7532, %v7524
        %v7821 = vpack.c.b16 %v7533, %v7525
        %v7822 = vpack.c.b16 %v7534, %v7526
        %v7823 = vpack.c.b16 %v7535, %v7527
        %v7824 = vpack.c.b16 %v7536, %v7528
        %v7825 = vpack.c.b16 %v7537, %v7529
        %v7826 = vpack.c.b16 %v7538, %v7530
        %v7827 = vpack.c.b16 %v7547, %v7539
        %v7828 = vpack.c.b16 %v7548, %v7540
        %v7829 = vpack.c.b16 %v7549, %v7541
        %v7830 = vpack.c.b16 %v7550, %v7542
        %v7831 = vpack.c.b16 %v7551, %v7543
        %v7832 = vpack.c.b16 %v7552, %v7544
        %v7833 = vpack.c.b16 %v7553, %v7545
        %v7834 = vpack.c.b16 %v7554, %v7546
        %v7835 = vpack.c.b16 %v7563, %v7555
        %v7836 = vpack.c.b16 %v7564, %v7556
        %v7837 = vpack.c.b16 %v7565, %v7557
        %v7838 = vpack.c.b16 %v7566, %v7558
        %v7839 = vpack.c.b16 %v7567, %v7559
        %v7840 = vpack.c.b16 %v7568, %v7560
        %v7841 = vpack.c.b16 %v7569, %v7561
        %v7842 = vpack.c.b16 %v7570, %v7562
        %v7843 = vpack.c.b16 %v7579, %v7571
        %v7844 = vpack.c.b16 %v7580, %v7572
        %v7845 = vpack.c.b16 %v7581, %v7573
        %v7846 = vpack.c.b16 %v7582, %v7574
        %v7847 = vpack.c.b16 %v7583, %v7575
        %v7848 = vpack.c.b16 %v7584, %v7576
        %v7849 = vpack.c.b16 %v7585, %v7577
        %v7850 = vpack.c.b16 %v7586, %v7578
        %v7851 = vpack.c.b16 %v7595, %v7587
        %v7852 = vpack.c.b16 %v7596, %v7588
        %v7853 = vpack.c.b16 %v7597, %v7589
        %v7854 = vpack.c.b16 %v7598, %v7590
        %v7855 = vpack.c.b16 %v7599, %v7591
        %v7856 = vpack.c.b16 %v7600, %v7592
        %v7857 = vpack.c.b16 %v7601, %v7593
        %v7858 = vpack.c.b16 %v7602, %v7594
        %8115 = vmatprep.subr.bf16.mxu0 %v7660
        %8116 = vmatpush1.bf16.msra.mxu0 %v7659
        %8117 = vmatprep.subr.bf16.mxu0 %v7652
        %8118 = vmatpush1.bf16.msra.mxu0 %v7651
        %8119 = vmatprep.subr.bf16.mxu0 %v7644
        %8120 = vmatpush1.bf16.msra.mxu0 %v7643
        %8121 = vmatprep.subr.bf16.mxu0 %v7636
        %8122 = vmatpush1.bf16.msra.mxu0 %v7635
        %8123 = vmatprep.subr.bf16.mxu0 %v7628
        %8124 = vmatpush1.bf16.msra.mxu0 %v7627
        %8125 = vmatprep.subr.bf16.mxu0 %v7620
        %8126 = vmatpush1.bf16.msra.mxu0 %v7619
        %8127 = vmatprep.subr.bf16.mxu0 %v7612
        %8128 = vmatpush1.bf16.msra.mxu0 %v7611
        %8129 = vmatprep.subr.bf16.mxu0 %v7604
        %8130 = vmatpush1.bf16.msra.mxu0 %v7603
        %8131 = vmatprep.subr.bf16.mxu0 %v7724
        %8132 = vmatpush2.bf16.msra.mxu0 %v7723
        %8133 = vmatprep.subr.bf16.mxu0 %v7716
        %8134 = vmatpush2.bf16.msra.mxu0 %v7715
        %8135 = vmatprep.subr.bf16.mxu0 %v7708
        %8136 = vmatpush2.bf16.msra.mxu0 %v7707
        %8137 = vmatprep.subr.bf16.mxu0 %v7700
        %8138 = vmatpush2.bf16.msra.mxu0 %v7699
        %8139 = vmatprep.subr.bf16.mxu0 %v7692
        %8140 = vmatpush2.bf16.msra.mxu0 %v7691
        %8141 = vmatprep.subr.bf16.mxu0 %v7684
        %8142 = vmatpush2.bf16.msra.mxu0 %v7683
        %8143 = vmatprep.subr.bf16.mxu0 %v7676
        %8144 = vmatpush2.bf16.msra.mxu0 %v7675
        %8145 = vmatprep.subr.bf16.mxu0 %v7668
        %8146 = vmatpush2.bf16.msra.mxu0 %v7667
        %8147 = vmatprep.mubr.bf16.mxu0 %v6828
        %8148 = vmatmul.mubr.bf16.gmra.mxu0 %v6821
        %v8149 = vpop.f32.mrf.mxu0
        %v8150 = vadd.f32 %v6554, %v8149
        %v8151 = vpop.f32.mrf.mxu0
        %v8152 = vadd.f32 %v6556, %v8151
        %v8153 = vpop.f32.mrf.mxu0
        %v8154 = vpop.f32.mrf.mxu0
        %8155 = vdwg.mxu0
        %8156 = vmatprep.subr.bf16.mxu0 %v7788
        %8157 = vmatpush1.bf16.msra.mxu0 %v7787
        %8158 = vmatprep.subr.bf16.mxu0 %v7780
        %8159 = vmatpush1.bf16.msra.mxu0 %v7779
        %8160 = vmatprep.subr.bf16.mxu0 %v7772
        %8161 = vmatpush1.bf16.msra.mxu0 %v7771
        %8162 = vmatprep.subr.bf16.mxu0 %v7764
        %8163 = vmatpush1.bf16.msra.mxu0 %v7763
        %8164 = vmatprep.subr.bf16.mxu0 %v7756
        %8165 = vmatpush1.bf16.msra.mxu0 %v7755
        %8166 = vmatprep.subr.bf16.mxu0 %v7748
        %8167 = vmatpush1.bf16.msra.mxu0 %v7747
        %8168 = vmatprep.subr.bf16.mxu0 %v7740
        %8169 = vmatpush1.bf16.msra.mxu0 %v7739
        %8170 = vmatprep.subr.bf16.mxu0 %v7732
        %8171 = vmatpush1.bf16.msra.mxu0 %v7731
        %8172 = vmatprep.subr.bf16.mxu0 %v7852
        %8173 = vmatpush2.bf16.msra.mxu0 %v7851
        %8174 = vmatprep.subr.bf16.mxu0 %v7844
        %8175 = vmatpush2.bf16.msra.mxu0 %v7843
        %8176 = vmatprep.subr.bf16.mxu0 %v7836
        %8177 = vmatpush2.bf16.msra.mxu0 %v7835
        %8178 = vmatprep.subr.bf16.mxu0 %v7828
        %8179 = vmatpush2.bf16.msra.mxu0 %v7827
        %8180 = vmatprep.subr.bf16.mxu0 %v7820
        %8181 = vmatpush2.bf16.msra.mxu0 %v7819
        %8182 = vmatprep.subr.bf16.mxu0 %v7812
        %8183 = vmatpush2.bf16.msra.mxu0 %v7811
        %8184 = vmatprep.subr.bf16.mxu0 %v7804
        %8185 = vmatpush2.bf16.msra.mxu0 %v7803
        %8186 = vmatprep.subr.bf16.mxu0 %v7796
        %8187 = vmatpush2.bf16.msra.mxu0 %v7795
        %8188 = vmatprep.mubr.bf16.mxu0 %v6830
        %8189 = vmatmul.mubr.bf16.gmra.mxu0 %v6829
        %v8190 = vpop.f32.mrf.mxu0
        %v8191 = vadd.f32 %v8150, %v8190
        %v8192 = vpop.f32.mrf.mxu0
        %v8193 = vadd.f32 %v8152, %v8192
        %v8194 = vpop.f32.mrf.mxu0
        %v8195 = vpop.f32.mrf.mxu0
        %8196 = vdwg.mxu0
        %8197 = vmatprep.subr.bf16.mxu0 %v7662
        %8198 = vmatpush1.bf16.msra.mxu0 %v7661
        %8199 = vmatprep.subr.bf16.mxu0 %v7654
        %8200 = vmatpush1.bf16.msra.mxu0 %v7653
        %8201 = vmatprep.subr.bf16.mxu0 %v7646
        %8202 = vmatpush1.bf16.msra.mxu0 %v7645
        %8203 = vmatprep.subr.bf16.mxu0 %v7638
        %8204 = vmatpush1.bf16.msra.mxu0 %v7637
        %8205 = vmatprep.subr.bf16.mxu0 %v7630
        %8206 = vmatpush1.bf16.msra.mxu0 %v7629
        %8207 = vmatprep.subr.bf16.mxu0 %v7622
        %8208 = vmatpush1.bf16.msra.mxu0 %v7621
        %8209 = vmatprep.subr.bf16.mxu0 %v7614
        %8210 = vmatpush1.bf16.msra.mxu0 %v7613
        %8211 = vmatprep.subr.bf16.mxu0 %v7606
        %8212 = vmatpush1.bf16.msra.mxu0 %v7605
        %8213 = vmatprep.subr.bf16.mxu0 %v7726
        %8214 = vmatpush2.bf16.msra.mxu0 %v7725
        %8215 = vmatprep.subr.bf16.mxu0 %v7718
        %8216 = vmatpush2.bf16.msra.mxu0 %v7717
        %8217 = vmatprep.subr.bf16.mxu0 %v7710
        %8218 = vmatpush2.bf16.msra.mxu0 %v7709
        %8219 = vmatprep.subr.bf16.mxu0 %v7702
        %8220 = vmatpush2.bf16.msra.mxu0 %v7701
        %8221 = vmatprep.subr.bf16.mxu0 %v7694
        %8222 = vmatpush2.bf16.msra.mxu0 %v7693
        %8223 = vmatprep.subr.bf16.mxu0 %v7686
        %8224 = vmatpush2.bf16.msra.mxu0 %v7685
        %8225 = vmatprep.subr.bf16.mxu0 %v7678
        %8226 = vmatpush2.bf16.msra.mxu0 %v7677
        %8227 = vmatprep.subr.bf16.mxu0 %v7670
        %8228 = vmatpush2.bf16.msra.mxu0 %v7669
        %8229 = vmatprep.mubr.bf16.mxu0 %v6828
        %8230 = vmatmul.mubr.bf16.gmra.mxu0 %v6821
        %v8231 = vpop.f32.mrf.mxu0
        %v8232 = vadd.f32 %v6636, %v8231
        %v8233 = vpop.f32.mrf.mxu0
        %v8234 = vadd.f32 %v6638, %v8233
        %v8235 = vpop.f32.mrf.mxu0
        %v8236 = vpop.f32.mrf.mxu0
        %8237 = vdwg.mxu0
        %8238 = vmatprep.subr.bf16.mxu0 %v7790
        %8239 = vmatpush1.bf16.msra.mxu0 %v7789
        %8240 = vmatprep.subr.bf16.mxu0 %v7782
        %8241 = vmatpush1.bf16.msra.mxu0 %v7781
        %8242 = vmatprep.subr.bf16.mxu0 %v7774
        %8243 = vmatpush1.bf16.msra.mxu0 %v7773
        %8244 = vmatprep.subr.bf16.mxu0 %v7766
        %8245 = vmatpush1.bf16.msra.mxu0 %v7765
        %8246 = vmatprep.subr.bf16.mxu0 %v7758
        %8247 = vmatpush1.bf16.msra.mxu0 %v7757
        %8248 = vmatprep.subr.bf16.mxu0 %v7750
        %8249 = vmatpush1.bf16.msra.mxu0 %v7749
        %8250 = vmatprep.subr.bf16.mxu0 %v7742
        %8251 = vmatpush1.bf16.msra.mxu0 %v7741
        %8252 = vmatprep.subr.bf16.mxu0 %v7734
        %8253 = vmatpush1.bf16.msra.mxu0 %v7733
        %8254 = vmatprep.subr.bf16.mxu0 %v7854
        %8255 = vmatpush2.bf16.msra.mxu0 %v7853
        %8256 = vmatprep.subr.bf16.mxu0 %v7846
        %8257 = vmatpush2.bf16.msra.mxu0 %v7845
        %8258 = vmatprep.subr.bf16.mxu0 %v7838
        %8259 = vmatpush2.bf16.msra.mxu0 %v7837
        %8260 = vmatprep.subr.bf16.mxu0 %v7830
        %8261 = vmatpush2.bf16.msra.mxu0 %v7829
        %8262 = vmatprep.subr.bf16.mxu0 %v7822
        %8263 = vmatpush2.bf16.msra.mxu0 %v7821
        %8264 = vmatprep.subr.bf16.mxu0 %v7814
        %8265 = vmatpush2.bf16.msra.mxu0 %v7813
        %8266 = vmatprep.subr.bf16.mxu0 %v7806
        %8267 = vmatpush2.bf16.msra.mxu0 %v7805
        %8268 = vmatprep.subr.bf16.mxu0 %v7798
        %8269 = vmatpush2.bf16.msra.mxu0 %v7797
        %8270 = vmatprep.mubr.bf16.mxu0 %v6830
        %8271 = vmatmul.mubr.bf16.gmra.mxu0 %v6829
        %v8272 = vpop.f32.mrf.mxu0
        %v8273 = vadd.f32 %v8232, %v8272
        %v8274 = vpop.f32.mrf.mxu0
        %v8275 = vadd.f32 %v8234, %v8274
        %v8276 = vpop.f32.mrf.mxu0
        %v8277 = vpop.f32.mrf.mxu0
        %8278 = vdwg.mxu0
        %8279 = vmatprep.subr.bf16.mxu0 %v7664
        %8280 = vmatpush1.bf16.msra.mxu0 %v7663
        %8281 = vmatprep.subr.bf16.mxu0 %v7656
        %8282 = vmatpush1.bf16.msra.mxu0 %v7655
        %8283 = vmatprep.subr.bf16.mxu0 %v7648
        %8284 = vmatpush1.bf16.msra.mxu0 %v7647
        %8285 = vmatprep.subr.bf16.mxu0 %v7640
        %8286 = vmatpush1.bf16.msra.mxu0 %v7639
        %8287 = vmatprep.subr.bf16.mxu0 %v7632
        %8288 = vmatpush1.bf16.msra.mxu0 %v7631
        %8289 = vmatprep.subr.bf16.mxu0 %v7624
        %8290 = vmatpush1.bf16.msra.mxu0 %v7623
        %8291 = vmatprep.subr.bf16.mxu0 %v7616
        %8292 = vmatpush1.bf16.msra.mxu0 %v7615
        %8293 = vmatprep.subr.bf16.mxu0 %v7608
        %8294 = vmatpush1.bf16.msra.mxu0 %v7607
        %8295 = vmatprep.subr.bf16.mxu0 %v7728
        %8296 = vmatpush2.bf16.msra.mxu0 %v7727
        %8297 = vmatprep.subr.bf16.mxu0 %v7720
        %8298 = vmatpush2.bf16.msra.mxu0 %v7719
        %8299 = vmatprep.subr.bf16.mxu0 %v7712
        %8300 = vmatpush2.bf16.msra.mxu0 %v7711
        %8301 = vmatprep.subr.bf16.mxu0 %v7704
        %8302 = vmatpush2.bf16.msra.mxu0 %v7703
        %8303 = vmatprep.subr.bf16.mxu0 %v7696
        %8304 = vmatpush2.bf16.msra.mxu0 %v7695
        %8305 = vmatprep.subr.bf16.mxu0 %v7688
        %8306 = vmatpush2.bf16.msra.mxu0 %v7687
        %8307 = vmatprep.subr.bf16.mxu0 %v7680
        %8308 = vmatpush2.bf16.msra.mxu0 %v7679
        %8309 = vmatprep.subr.bf16.mxu0 %v7672
        %8310 = vmatpush2.bf16.msra.mxu0 %v7671
        %8311 = vmatprep.mubr.bf16.mxu0 %v6828
        %8312 = vmatmul.mubr.bf16.gmra.mxu0 %v6821
        %v8313 = vpop.f32.mrf.mxu0
        %v8314 = vadd.f32 %v6718, %v8313
        %v8315 = vpop.f32.mrf.mxu0
        %v8316 = vadd.f32 %v6720, %v8315
        %v8317 = vpop.f32.mrf.mxu0
        %v8318 = vpop.f32.mrf.mxu0
        %8319 = vdwg.mxu0
        %8320 = vmatprep.subr.bf16.mxu0 %v7792
        %8321 = vmatpush1.bf16.msra.mxu0 %v7791
        %8322 = vmatprep.subr.bf16.mxu0 %v7784
        %8323 = vmatpush1.bf16.msra.mxu0 %v7783
        %8324 = vmatprep.subr.bf16.mxu0 %v7776
        %8325 = vmatpush1.bf16.msra.mxu0 %v7775
        %8326 = vmatprep.subr.bf16.mxu0 %v7768
        %8327 = vmatpush1.bf16.msra.mxu0 %v7767
        %8328 = vmatprep.subr.bf16.mxu0 %v7760
        %8329 = vmatpush1.bf16.msra.mxu0 %v7759
        %8330 = vmatprep.subr.bf16.mxu0 %v7752
        %8331 = vmatpush1.bf16.msra.mxu0 %v7751
        %8332 = vmatprep.subr.bf16.mxu0 %v7744
        %8333 = vmatpush1.bf16.msra.mxu0 %v7743
        %8334 = vmatprep.subr.bf16.mxu0 %v7736
        %8335 = vmatpush1.bf16.msra.mxu0 %v7735
        %8336 = vmatprep.subr.bf16.mxu0 %v7856
        %8337 = vmatpush2.bf16.msra.mxu0 %v7855
        %8338 = vmatprep.subr.bf16.mxu0 %v7848
        %8339 = vmatpush2.bf16.msra.mxu0 %v7847
        %8340 = vmatprep.subr.bf16.mxu0 %v7840
        %8341 = vmatpush2.bf16.msra.mxu0 %v7839
        %8342 = vmatprep.subr.bf16.mxu0 %v7832
        %8343 = vmatpush2.bf16.msra.mxu0 %v7831
        %8344 = vmatprep.subr.bf16.mxu0 %v7824
        %8345 = vmatpush2.bf16.msra.mxu0 %v7823
        %8346 = vmatprep.subr.bf16.mxu0 %v7816
        %8347 = vmatpush2.bf16.msra.mxu0 %v7815
        %8348 = vmatprep.subr.bf16.mxu0 %v7808
        %8349 = vmatpush2.bf16.msra.mxu0 %v7807
        %8350 = vmatprep.subr.bf16.mxu0 %v7800
        %8351 = vmatpush2.bf16.msra.mxu0 %v7799
        %8352 = vmatprep.mubr.bf16.mxu0 %v6830
        %8353 = vmatmul.mubr.bf16.gmra.mxu0 %v6829
        %v8354 = vpop.f32.mrf.mxu0
        %v8355 = vadd.f32 %v8314, %v8354
        %v8356 = vpop.f32.mrf.mxu0
        %v8357 = vadd.f32 %v8316, %v8356
        %v8358 = vpop.f32.mrf.mxu0
        %v8359 = vpop.f32.mrf.mxu0
        %8360 = vdwg.mxu0
        %8361 = vmatprep.subr.bf16.mxu0 %v7666
        %8362 = vmatpush1.bf16.msra.mxu0 %v7665
        %8363 = vmatprep.subr.bf16.mxu0 %v7658
        %8364 = vmatpush1.bf16.msra.mxu0 %v7657
        %8365 = vmatprep.subr.bf16.mxu0 %v7650
        %8366 = vmatpush1.bf16.msra.mxu0 %v7649
        %8367 = vmatprep.subr.bf16.mxu0 %v7642
        %8368 = vmatpush1.bf16.msra.mxu0 %v7641
        %8369 = vmatprep.subr.bf16.mxu0 %v7634
        %8370 = vmatpush1.bf16.msra.mxu0 %v7633
        %8371 = vmatprep.subr.bf16.mxu0 %v7626
        %8372 = vmatpush1.bf16.msra.mxu0 %v7625
        %8373 = vmatprep.subr.bf16.mxu0 %v7618
        %8374 = vmatpush1.bf16.msra.mxu0 %v7617
        %8375 = vmatprep.subr.bf16.mxu0 %v7610
        %8376 = vmatpush1.bf16.msra.mxu0 %v7609
        %8377 = vmatprep.subr.bf16.mxu0 %v7730
        %8378 = vmatpush2.bf16.msra.mxu0 %v7729
        %8379 = vmatprep.subr.bf16.mxu0 %v7722
        %8380 = vmatpush2.bf16.msra.mxu0 %v7721
        %8381 = vmatprep.subr.bf16.mxu0 %v7714
        %8382 = vmatpush2.bf16.msra.mxu0 %v7713
        %8383 = vmatprep.subr.bf16.mxu0 %v7706
        %8384 = vmatpush2.bf16.msra.mxu0 %v7705
        %8385 = vmatprep.subr.bf16.mxu0 %v7698
        %8386 = vmatpush2.bf16.msra.mxu0 %v7697
        %8387 = vmatprep.subr.bf16.mxu0 %v7690
        %8388 = vmatpush2.bf16.msra.mxu0 %v7689
        %8389 = vmatprep.subr.bf16.mxu0 %v7682
        %8390 = vmatpush2.bf16.msra.mxu0 %v7681
        %8391 = vmatprep.subr.bf16.mxu0 %v7674
        %8392 = vmatpush2.bf16.msra.mxu0 %v7673
        %8393 = vmatprep.mubr.bf16.mxu0 %v6828
        %8394 = vmatmul.mubr.bf16.gmra.mxu0 %v6821
        %v8395 = vpop.f32.mrf.mxu0
        %v8396 = vadd.f32 %v6800, %v8395
        %v8397 = vpop.f32.mrf.mxu0
        %v8398 = vadd.f32 %v6802, %v8397
        %v8399 = vpop.f32.mrf.mxu0
        %v8400 = vpop.f32.mrf.mxu0
        %8401 = vdwg.mxu0
        %8402 = vmatprep.subr.bf16.mxu0 %v7794
        %8403 = vmatpush1.bf16.msra.mxu0 %v7793
        %8404 = vmatprep.subr.bf16.mxu0 %v7786
        %8405 = vmatpush1.bf16.msra.mxu0 %v7785
        %8406 = vmatprep.subr.bf16.mxu0 %v7778
        %8407 = vmatpush1.bf16.msra.mxu0 %v7777
        %8408 = vmatprep.subr.bf16.mxu0 %v7770
        %8409 = vmatpush1.bf16.msra.mxu0 %v7769
        %8410 = vmatprep.subr.bf16.mxu0 %v7762
        %8411 = vmatpush1.bf16.msra.mxu0 %v7761
        %8412 = vmatprep.subr.bf16.mxu0 %v7754
        %8413 = vmatpush1.bf16.msra.mxu0 %v7753
        %8414 = vmatprep.subr.bf16.mxu0 %v7746
        %8415 = vmatpush1.bf16.msra.mxu0 %v7745
        %8416 = vmatprep.subr.bf16.mxu0 %v7738
        %8417 = vmatpush1.bf16.msra.mxu0 %v7737
        %8418 = vmatprep.subr.bf16.mxu0 %v7858
        %8419 = vmatpush2.bf16.msra.mxu0 %v7857
        %8420 = vmatprep.subr.bf16.mxu0 %v7850
        %8421 = vmatpush2.bf16.msra.mxu0 %v7849
        %8422 = vmatprep.subr.bf16.mxu0 %v7842
        %8423 = vmatpush2.bf16.msra.mxu0 %v7841
        %8424 = vmatprep.subr.bf16.mxu0 %v7834
        %8425 = vmatpush2.bf16.msra.mxu0 %v7833
        %8426 = vmatprep.subr.bf16.mxu0 %v7826
        %8427 = vmatpush2.bf16.msra.mxu0 %v7825
        %8428 = vmatprep.subr.bf16.mxu0 %v7818
        %8429 = vmatpush2.bf16.msra.mxu0 %v7817
        %8430 = vmatprep.subr.bf16.mxu0 %v7810
        %8431 = vmatpush2.bf16.msra.mxu0 %v7809
        %8432 = vmatprep.subr.bf16.mxu0 %v7802
        %8433 = vmatpush2.bf16.msra.mxu0 %v7801
        %8434 = vmatprep.mubr.bf16.mxu0 %v6830
        %8435 = vmatmul.mubr.bf16.gmra.mxu0 %v6829
        %v8436 = vpop.f32.mrf.mxu0
        %v8437 = vadd.f32 %v8396, %v8436
        %v8438 = vpop.f32.mrf.mxu0
        %v8439 = vadd.f32 %v8398, %v8438
        %v8440 = vpop.f32.mrf.mxu0
        %v8441 = vpop.f32.mrf.mxu0
        %8442 = vdwg.mxu0
        %s8443 = sadd.s32 %s4648, 2
        %s8444 = smul.u32 %s8443, 4
        %s8445 = scalar_lea.vmem [#allocation2], %s8444
        %v8446 = vld [vmem:[%s8445] sm:$0xf]
        %s8447 = scalar_lea.vmem %s240, 4096 [#allocation3]
        %v8448 = vld [vmem:[%s8447] sm:$0xff]
        %v8449 = vld [vmem:[%s8447 + $0x8] sm:$0xff]
        %v8450 = vld [vmem:[%s8447 + $0x10] sm:$0xff]
        %v8451 = vld [vmem:[%s8447 + $0x18] sm:$0xff]
        %v8452 = vld [vmem:[%s8447 + $0x20] sm:$0xff]
        %v8453 = vld [vmem:[%s8447 + $0x28] sm:$0xff]
        %v8454 = vld [vmem:[%s8447 + $0x30] sm:$0xff]
        %v8455 = vld [vmem:[%s8447 + $0x38] sm:$0xff]
        %v8456 = vld [vmem:[%s8447 + $0x40] sm:$0xff]
        %v8457 = vld [vmem:[%s8447 + $0x48] sm:$0xff]
        %v8458 = vld [vmem:[%s8447 + $0x50] sm:$0xff]
        %v8459 = vld [vmem:[%s8447 + $0x58] sm:$0xff]
        %v8460 = vld [vmem:[%s8447 + $0x60] sm:$0xff]
        %v8461 = vld [vmem:[%s8447 + $0x68] sm:$0xff]
        %v8462 = vld [vmem:[%s8447 + $0x70] sm:$0xff]
        %v8463 = vld [vmem:[%s8447 + $0x78] sm:$0xff]
        %v8464 = vld [vmem:[%s8447 + $0x80] sm:$0xff]
        %v8465 = vld [vmem:[%s8447 + $0x88] sm:$0xff]
        %v8466 = vld [vmem:[%s8447 + $0x90] sm:$0xff]
        %v8467 = vld [vmem:[%s8447 + $0x98] sm:$0xff]
        %v8468 = vld [vmem:[%s8447 + $0xa0] sm:$0xff]
        %v8469 = vld [vmem:[%s8447 + $0xa8] sm:$0xff]
        %v8470 = vld [vmem:[%s8447 + $0xb0] sm:$0xff]
        %v8471 = vld [vmem:[%s8447 + $0xb8] sm:$0xff]
        %v8472 = vld [vmem:[%s8447 + $0xc0] sm:$0xff]
        %v8473 = vld [vmem:[%s8447 + $0xc8] sm:$0xff]
        %v8474 = vld [vmem:[%s8447 + $0xd0] sm:$0xff]
        %v8475 = vld [vmem:[%s8447 + $0xd8] sm:$0xff]
        %v8476 = vld [vmem:[%s8447 + $0xe0] sm:$0xff]
        %v8477 = vld [vmem:[%s8447 + $0xe8] sm:$0xff]
        %v8478 = vld [vmem:[%s8447 + $0xf0] sm:$0xff]
        %v8479 = vld [vmem:[%s8447 + $0xf8] sm:$0xff]
        %v8480 = vld [vmem:[%s8447 + $0x100] sm:$0xff]
        %v8481 = vld [vmem:[%s8447 + $0x108] sm:$0xff]
        %v8482 = vld [vmem:[%s8447 + $0x110] sm:$0xff]
        %v8483 = vld [vmem:[%s8447 + $0x118] sm:$0xff]
        %v8484 = vld [vmem:[%s8447 + $0x120] sm:$0xff]
        %v8485 = vld [vmem:[%s8447 + $0x128] sm:$0xff]
        %v8486 = vld [vmem:[%s8447 + $0x130] sm:$0xff]
        %v8487 = vld [vmem:[%s8447 + $0x138] sm:$0xff]
        %v8488 = vld [vmem:[%s8447 + $0x140] sm:$0xff]
        %v8489 = vld [vmem:[%s8447 + $0x148] sm:$0xff]
        %v8490 = vld [vmem:[%s8447 + $0x150] sm:$0xff]
        %v8491 = vld [vmem:[%s8447 + $0x158] sm:$0xff]
        %v8492 = vld [vmem:[%s8447 + $0x160] sm:$0xff]
        %v8493 = vld [vmem:[%s8447 + $0x168] sm:$0xff]
        %v8494 = vld [vmem:[%s8447 + $0x170] sm:$0xff]
        %v8495 = vld [vmem:[%s8447 + $0x178] sm:$0xff]
        %v8496 = vld [vmem:[%s8447 + $0x180] sm:$0xff]
        %v8497 = vld [vmem:[%s8447 + $0x188] sm:$0xff]
        %v8498 = vld [vmem:[%s8447 + $0x190] sm:$0xff]
        %v8499 = vld [vmem:[%s8447 + $0x198] sm:$0xff]
        %v8500 = vld [vmem:[%s8447 + $0x1a0] sm:$0xff]
        %v8501 = vld [vmem:[%s8447 + $0x1a8] sm:$0xff]
        %v8502 = vld [vmem:[%s8447 + $0x1b0] sm:$0xff]
        %v8503 = vld [vmem:[%s8447 + $0x1b8] sm:$0xff]
        %v8504 = vld [vmem:[%s8447 + $0x1c0] sm:$0xff]
        %v8505 = vld [vmem:[%s8447 + $0x1c8] sm:$0xff]
        %v8506 = vld [vmem:[%s8447 + $0x1d0] sm:$0xff]
        %v8507 = vld [vmem:[%s8447 + $0x1d8] sm:$0xff]
        %v8508 = vld [vmem:[%s8447 + $0x1e0] sm:$0xff]
        %v8509 = vld [vmem:[%s8447 + $0x1e8] sm:$0xff]
        %v8510 = vld [vmem:[%s8447 + $0x1f0] sm:$0xff]
        %v8511 = vld [vmem:[%s8447 + $0x1f8] sm:$0xff]
        %v8512 = vld [vmem:[%s8447 + $0x200] sm:$0xff]
        %v8513 = vld [vmem:[%s8447 + $0x208] sm:$0xff]
        %v8514 = vld [vmem:[%s8447 + $0x210] sm:$0xff]
        %v8515 = vld [vmem:[%s8447 + $0x218] sm:$0xff]
        %v8516 = vld [vmem:[%s8447 + $0x220] sm:$0xff]
        %v8517 = vld [vmem:[%s8447 + $0x228] sm:$0xff]
        %v8518 = vld [vmem:[%s8447 + $0x230] sm:$0xff]
        %v8519 = vld [vmem:[%s8447 + $0x238] sm:$0xff]
        %v8520 = vld [vmem:[%s8447 + $0x240] sm:$0xff]
        %v8521 = vld [vmem:[%s8447 + $0x248] sm:$0xff]
        %v8522 = vld [vmem:[%s8447 + $0x250] sm:$0xff]
        %v8523 = vld [vmem:[%s8447 + $0x258] sm:$0xff]
        %v8524 = vld [vmem:[%s8447 + $0x260] sm:$0xff]
        %v8525 = vld [vmem:[%s8447 + $0x268] sm:$0xff]
        %v8526 = vld [vmem:[%s8447 + $0x270] sm:$0xff]
        %v8527 = vld [vmem:[%s8447 + $0x278] sm:$0xff]
        %v8528 = vld [vmem:[%s8447 + $0x280] sm:$0xff]
        %v8529 = vld [vmem:[%s8447 + $0x288] sm:$0xff]
        %v8530 = vld [vmem:[%s8447 + $0x290] sm:$0xff]
        %v8531 = vld [vmem:[%s8447 + $0x298] sm:$0xff]
        %v8532 = vld [vmem:[%s8447 + $0x2a0] sm:$0xff]
        %v8533 = vld [vmem:[%s8447 + $0x2a8] sm:$0xff]
        %v8534 = vld [vmem:[%s8447 + $0x2b0] sm:$0xff]
        %v8535 = vld [vmem:[%s8447 + $0x2b8] sm:$0xff]
        %v8536 = vld [vmem:[%s8447 + $0x2c0] sm:$0xff]
        %v8537 = vld [vmem:[%s8447 + $0x2c8] sm:$0xff]
        %v8538 = vld [vmem:[%s8447 + $0x2d0] sm:$0xff]
        %v8539 = vld [vmem:[%s8447 + $0x2d8] sm:$0xff]
        %v8540 = vld [vmem:[%s8447 + $0x2e0] sm:$0xff]
        %v8541 = vld [vmem:[%s8447 + $0x2e8] sm:$0xff]
        %v8542 = vld [vmem:[%s8447 + $0x2f0] sm:$0xff]
        %v8543 = vld [vmem:[%s8447 + $0x2f8] sm:$0xff]
        %v8544 = vld [vmem:[%s8447 + $0x300] sm:$0xff]
        %v8545 = vld [vmem:[%s8447 + $0x308] sm:$0xff]
        %v8546 = vld [vmem:[%s8447 + $0x310] sm:$0xff]
        %v8547 = vld [vmem:[%s8447 + $0x318] sm:$0xff]
        %v8548 = vld [vmem:[%s8447 + $0x320] sm:$0xff]
        %v8549 = vld [vmem:[%s8447 + $0x328] sm:$0xff]
        %v8550 = vld [vmem:[%s8447 + $0x330] sm:$0xff]
        %v8551 = vld [vmem:[%s8447 + $0x338] sm:$0xff]
        %v8552 = vld [vmem:[%s8447 + $0x340] sm:$0xff]
        %v8553 = vld [vmem:[%s8447 + $0x348] sm:$0xff]
        %v8554 = vld [vmem:[%s8447 + $0x350] sm:$0xff]
        %v8555 = vld [vmem:[%s8447 + $0x358] sm:$0xff]
        %v8556 = vld [vmem:[%s8447 + $0x360] sm:$0xff]
        %v8557 = vld [vmem:[%s8447 + $0x368] sm:$0xff]
        %v8558 = vld [vmem:[%s8447 + $0x370] sm:$0xff]
        %v8559 = vld [vmem:[%s8447 + $0x378] sm:$0xff]
        %v8560 = vld [vmem:[%s8447 + $0x380] sm:$0xff]
        %v8561 = vld [vmem:[%s8447 + $0x388] sm:$0xff]
        %v8562 = vld [vmem:[%s8447 + $0x390] sm:$0xff]
        %v8563 = vld [vmem:[%s8447 + $0x398] sm:$0xff]
        %v8564 = vld [vmem:[%s8447 + $0x3a0] sm:$0xff]
        %v8565 = vld [vmem:[%s8447 + $0x3a8] sm:$0xff]
        %v8566 = vld [vmem:[%s8447 + $0x3b0] sm:$0xff]
        %v8567 = vld [vmem:[%s8447 + $0x3b8] sm:$0xff]
        %v8568 = vld [vmem:[%s8447 + $0x3c0] sm:$0xff]
        %v8569 = vld [vmem:[%s8447 + $0x3c8] sm:$0xff]
        %v8570 = vld [vmem:[%s8447 + $0x3d0] sm:$0xff]
        %v8571 = vld [vmem:[%s8447 + $0x3d8] sm:$0xff]
        %v8572 = vld [vmem:[%s8447 + $0x3e0] sm:$0xff]
        %v8573 = vld [vmem:[%s8447 + $0x3e8] sm:$0xff]
        %v8574 = vld [vmem:[%s8447 + $0x3f0] sm:$0xff]
        %v8575 = vld [vmem:[%s8447 + $0x3f8] sm:$0xff]
        %v8576 = vld [vmem:[%s8447 + $0x400] sm:$0xff]
        %v8577 = vld [vmem:[%s8447 + $0x408] sm:$0xff]
        %v8578 = vld [vmem:[%s8447 + $0x410] sm:$0xff]
        %v8579 = vld [vmem:[%s8447 + $0x418] sm:$0xff]
        %v8580 = vld [vmem:[%s8447 + $0x420] sm:$0xff]
        %v8581 = vld [vmem:[%s8447 + $0x428] sm:$0xff]
        %v8582 = vld [vmem:[%s8447 + $0x430] sm:$0xff]
        %v8583 = vld [vmem:[%s8447 + $0x438] sm:$0xff]
        %v8584 = vld [vmem:[%s8447 + $0x440] sm:$0xff]
        %v8585 = vld [vmem:[%s8447 + $0x448] sm:$0xff]
        %v8586 = vld [vmem:[%s8447 + $0x450] sm:$0xff]
        %v8587 = vld [vmem:[%s8447 + $0x458] sm:$0xff]
        %v8588 = vld [vmem:[%s8447 + $0x460] sm:$0xff]
        %v8589 = vld [vmem:[%s8447 + $0x468] sm:$0xff]
        %v8590 = vld [vmem:[%s8447 + $0x470] sm:$0xff]
        %v8591 = vld [vmem:[%s8447 + $0x478] sm:$0xff]
        %v8592 = vld [vmem:[%s8447 + $0x480] sm:$0xff]
        %v8593 = vld [vmem:[%s8447 + $0x488] sm:$0xff]
        %v8594 = vld [vmem:[%s8447 + $0x490] sm:$0xff]
        %v8595 = vld [vmem:[%s8447 + $0x498] sm:$0xff]
        %v8596 = vld [vmem:[%s8447 + $0x4a0] sm:$0xff]
        %v8597 = vld [vmem:[%s8447 + $0x4a8] sm:$0xff]
        %v8598 = vld [vmem:[%s8447 + $0x4b0] sm:$0xff]
        %v8599 = vld [vmem:[%s8447 + $0x4b8] sm:$0xff]
        %v8600 = vld [vmem:[%s8447 + $0x4c0] sm:$0xff]
        %v8601 = vld [vmem:[%s8447 + $0x4c8] sm:$0xff]
        %v8602 = vld [vmem:[%s8447 + $0x4d0] sm:$0xff]
        %v8603 = vld [vmem:[%s8447 + $0x4d8] sm:$0xff]
        %v8604 = vld [vmem:[%s8447 + $0x4e0] sm:$0xff]
        %v8605 = vld [vmem:[%s8447 + $0x4e8] sm:$0xff]
        %v8606 = vld [vmem:[%s8447 + $0x4f0] sm:$0xff]
        %v8607 = vld [vmem:[%s8447 + $0x4f8] sm:$0xff]
        %v8608 = vld [vmem:[%s8447 + $0x500] sm:$0xff]
        %v8609 = vld [vmem:[%s8447 + $0x508] sm:$0xff]
        %v8610 = vld [vmem:[%s8447 + $0x510] sm:$0xff]
        %v8611 = vld [vmem:[%s8447 + $0x518] sm:$0xff]
        %v8612 = vld [vmem:[%s8447 + $0x520] sm:$0xff]
        %v8613 = vld [vmem:[%s8447 + $0x528] sm:$0xff]
        %v8614 = vld [vmem:[%s8447 + $0x530] sm:$0xff]
        %v8615 = vld [vmem:[%s8447 + $0x538] sm:$0xff]
        %v8616 = vld [vmem:[%s8447 + $0x540] sm:$0xff]
        %v8617 = vld [vmem:[%s8447 + $0x548] sm:$0xff]
        %v8618 = vld [vmem:[%s8447 + $0x550] sm:$0xff]
        %v8619 = vld [vmem:[%s8447 + $0x558] sm:$0xff]
        %v8620 = vld [vmem:[%s8447 + $0x560] sm:$0xff]
        %v8621 = vld [vmem:[%s8447 + $0x568] sm:$0xff]
        %v8622 = vld [vmem:[%s8447 + $0x570] sm:$0xff]
        %v8623 = vld [vmem:[%s8447 + $0x578] sm:$0xff]
        %v8624 = vld [vmem:[%s8447 + $0x580] sm:$0xff]
        %v8625 = vld [vmem:[%s8447 + $0x588] sm:$0xff]
        %v8626 = vld [vmem:[%s8447 + $0x590] sm:$0xff]
        %v8627 = vld [vmem:[%s8447 + $0x598] sm:$0xff]
        %v8628 = vld [vmem:[%s8447 + $0x5a0] sm:$0xff]
        %v8629 = vld [vmem:[%s8447 + $0x5a8] sm:$0xff]
        %v8630 = vld [vmem:[%s8447 + $0x5b0] sm:$0xff]
        %v8631 = vld [vmem:[%s8447 + $0x5b8] sm:$0xff]
        %v8632 = vld [vmem:[%s8447 + $0x5c0] sm:$0xff]
        %v8633 = vld [vmem:[%s8447 + $0x5c8] sm:$0xff]
        %v8634 = vld [vmem:[%s8447 + $0x5d0] sm:$0xff]
        %v8635 = vld [vmem:[%s8447 + $0x5d8] sm:$0xff]
        %v8636 = vld [vmem:[%s8447 + $0x5e0] sm:$0xff]
        %v8637 = vld [vmem:[%s8447 + $0x5e8] sm:$0xff]
        %v8638 = vld [vmem:[%s8447 + $0x5f0] sm:$0xff]
        %v8639 = vld [vmem:[%s8447 + $0x5f8] sm:$0xff]
        %v8640 = vld [vmem:[%s8447 + $0x600] sm:$0xff]
        %v8641 = vld [vmem:[%s8447 + $0x608] sm:$0xff]
        %v8642 = vld [vmem:[%s8447 + $0x610] sm:$0xff]
        %v8643 = vld [vmem:[%s8447 + $0x618] sm:$0xff]
        %v8644 = vld [vmem:[%s8447 + $0x620] sm:$0xff]
        %v8645 = vld [vmem:[%s8447 + $0x628] sm:$0xff]
        %v8646 = vld [vmem:[%s8447 + $0x630] sm:$0xff]
        %v8647 = vld [vmem:[%s8447 + $0x638] sm:$0xff]
        %v8648 = vld [vmem:[%s8447 + $0x640] sm:$0xff]
        %v8649 = vld [vmem:[%s8447 + $0x648] sm:$0xff]
        %v8650 = vld [vmem:[%s8447 + $0x650] sm:$0xff]
        %v8651 = vld [vmem:[%s8447 + $0x658] sm:$0xff]
        %v8652 = vld [vmem:[%s8447 + $0x660] sm:$0xff]
        %v8653 = vld [vmem:[%s8447 + $0x668] sm:$0xff]
        %v8654 = vld [vmem:[%s8447 + $0x670] sm:$0xff]
        %v8655 = vld [vmem:[%s8447 + $0x678] sm:$0xff]
        %v8656 = vld [vmem:[%s8447 + $0x680] sm:$0xff]
        %v8657 = vld [vmem:[%s8447 + $0x688] sm:$0xff]
        %v8658 = vld [vmem:[%s8447 + $0x690] sm:$0xff]
        %v8659 = vld [vmem:[%s8447 + $0x698] sm:$0xff]
        %v8660 = vld [vmem:[%s8447 + $0x6a0] sm:$0xff]
        %v8661 = vld [vmem:[%s8447 + $0x6a8] sm:$0xff]
        %v8662 = vld [vmem:[%s8447 + $0x6b0] sm:$0xff]
        %v8663 = vld [vmem:[%s8447 + $0x6b8] sm:$0xff]
        %v8664 = vld [vmem:[%s8447 + $0x6c0] sm:$0xff]
        %v8665 = vld [vmem:[%s8447 + $0x6c8] sm:$0xff]
        %v8666 = vld [vmem:[%s8447 + $0x6d0] sm:$0xff]
        %v8667 = vld [vmem:[%s8447 + $0x6d8] sm:$0xff]
        %v8668 = vld [vmem:[%s8447 + $0x6e0] sm:$0xff]
        %v8669 = vld [vmem:[%s8447 + $0x6e8] sm:$0xff]
        %v8670 = vld [vmem:[%s8447 + $0x6f0] sm:$0xff]
        %v8671 = vld [vmem:[%s8447 + $0x6f8] sm:$0xff]
        %v8672 = vld [vmem:[%s8447 + $0x700] sm:$0xff]
        %v8673 = vld [vmem:[%s8447 + $0x708] sm:$0xff]
        %v8674 = vld [vmem:[%s8447 + $0x710] sm:$0xff]
        %v8675 = vld [vmem:[%s8447 + $0x718] sm:$0xff]
        %v8676 = vld [vmem:[%s8447 + $0x720] sm:$0xff]
        %v8677 = vld [vmem:[%s8447 + $0x728] sm:$0xff]
        %v8678 = vld [vmem:[%s8447 + $0x730] sm:$0xff]
        %v8679 = vld [vmem:[%s8447 + $0x738] sm:$0xff]
        %v8680 = vld [vmem:[%s8447 + $0x740] sm:$0xff]
        %v8681 = vld [vmem:[%s8447 + $0x748] sm:$0xff]
        %v8682 = vld [vmem:[%s8447 + $0x750] sm:$0xff]
        %v8683 = vld [vmem:[%s8447 + $0x758] sm:$0xff]
        %v8684 = vld [vmem:[%s8447 + $0x760] sm:$0xff]
        %v8685 = vld [vmem:[%s8447 + $0x768] sm:$0xff]
        %v8686 = vld [vmem:[%s8447 + $0x770] sm:$0xff]
        %v8687 = vld [vmem:[%s8447 + $0x778] sm:$0xff]
        %v8688 = vld [vmem:[%s8447 + $0x780] sm:$0xff]
        %v8689 = vld [vmem:[%s8447 + $0x788] sm:$0xff]
        %v8690 = vld [vmem:[%s8447 + $0x790] sm:$0xff]
        %v8691 = vld [vmem:[%s8447 + $0x798] sm:$0xff]
        %v8692 = vld [vmem:[%s8447 + $0x7a0] sm:$0xff]
        %v8693 = vld [vmem:[%s8447 + $0x7a8] sm:$0xff]
        %v8694 = vld [vmem:[%s8447 + $0x7b0] sm:$0xff]
        %v8695 = vld [vmem:[%s8447 + $0x7b8] sm:$0xff]
        %v8696 = vld [vmem:[%s8447 + $0x7c0] sm:$0xff]
        %v8697 = vld [vmem:[%s8447 + $0x7c8] sm:$0xff]
        %v8698 = vld [vmem:[%s8447 + $0x7d0] sm:$0xff]
        %v8699 = vld [vmem:[%s8447 + $0x7d8] sm:$0xff]
        %v8700 = vld [vmem:[%s8447 + $0x7e0] sm:$0xff]
        %v8701 = vld [vmem:[%s8447 + $0x7e8] sm:$0xff]
        %v8702 = vld [vmem:[%s8447 + $0x7f0] sm:$0xff]
        %v8703 = vld [vmem:[%s8447 + $0x7f8] sm:$0xff]
        %v8706 = vunpack.c.l.s4 1966171168
        %v8707 = vunpack.c.0.s8 %v8706
        %v8708 = vlaneseq
        %v8709 = vshrl.u32 %v8708, 7
        %v8710 = vsub.s32 %v8707, %v8709
        %v8711 = vrot.slane %v8446, %v8710
        %v8712 = vcombine.high %v8711, %v8711
        %v8714 = vunpack.c.l.s4 1966171168
        %v8715 = vunpack.c.0.s8 %v8714
        %v8716 = vlaneseq
        %v8717 = vshrl.u32 %v8716, 7
        %v8718 = vsub.s32 %v8715, %v8717
        %v8719 = vrot.slane %v8711, %v8718
        %v8721 = vunpack.c.l.s4 1966171168
        %v8722 = vunpack.c.0.s8 %v8721
        %v8723 = vlaneseq
        %v8724 = vshrl.u32 %v8723, 7
        %v8725 = vsub.s32 %v8722, %v8724
        %v8726 = vrot.slane %v8712, %v8725
        %v8727 = vcombine.high %v8719, %v8719
        %v8728 = vcombine.high %v8726, %v8726
        %v8989 = vunpack.c.l.b16 %v8448
        %v8990 = vunpack.c.h.b16 %v8448
        %v8991 = vunpack.c.l.b16 %v8449
        %v8992 = vunpack.c.h.b16 %v8449
        %v8993 = vunpack.c.l.b16 %v8450
        %v8994 = vunpack.c.h.b16 %v8450
        %v8995 = vunpack.c.l.b16 %v8451
        %v8996 = vunpack.c.h.b16 %v8451
        %v8997 = vunpack.c.l.b16 %v8452
        %v8998 = vunpack.c.h.b16 %v8452
        %v8999 = vunpack.c.l.b16 %v8453
        %v9000 = vunpack.c.h.b16 %v8453
        %v9001 = vunpack.c.l.b16 %v8454
        %v9002 = vunpack.c.h.b16 %v8454
        %v9003 = vunpack.c.l.b16 %v8455
        %v9004 = vunpack.c.h.b16 %v8455
        %v9005 = vunpack.c.l.b16 %v8456
        %v9006 = vunpack.c.h.b16 %v8456
        %v9007 = vunpack.c.l.b16 %v8457
        %v9008 = vunpack.c.h.b16 %v8457
        %v9009 = vunpack.c.l.b16 %v8458
        %v9010 = vunpack.c.h.b16 %v8458
        %v9011 = vunpack.c.l.b16 %v8459
        %v9012 = vunpack.c.h.b16 %v8459
        %v9013 = vunpack.c.l.b16 %v8460
        %v9014 = vunpack.c.h.b16 %v8460
        %v9015 = vunpack.c.l.b16 %v8461
        %v9016 = vunpack.c.h.b16 %v8461
        %v9017 = vunpack.c.l.b16 %v8462
        %v9018 = vunpack.c.h.b16 %v8462
        %v9019 = vunpack.c.l.b16 %v8463
        %v9020 = vunpack.c.h.b16 %v8463
        %v9021 = vunpack.c.l.b16 %v8464
        %v9022 = vunpack.c.h.b16 %v8464
        %v9023 = vunpack.c.l.b16 %v8465
        %v9024 = vunpack.c.h.b16 %v8465
        %v9025 = vunpack.c.l.b16 %v8466
        %v9026 = vunpack.c.h.b16 %v8466
        %v9027 = vunpack.c.l.b16 %v8467
        %v9028 = vunpack.c.h.b16 %v8467
        %v9029 = vunpack.c.l.b16 %v8468
        %v9030 = vunpack.c.h.b16 %v8468
        %v9031 = vunpack.c.l.b16 %v8469
        %v9032 = vunpack.c.h.b16 %v8469
        %v9033 = vunpack.c.l.b16 %v8470
        %v9034 = vunpack.c.h.b16 %v8470
        %v9035 = vunpack.c.l.b16 %v8471
        %v9036 = vunpack.c.h.b16 %v8471
        %v9037 = vunpack.c.l.b16 %v8472
        %v9038 = vunpack.c.h.b16 %v8472
        %v9039 = vunpack.c.l.b16 %v8473
        %v9040 = vunpack.c.h.b16 %v8473
        %v9041 = vunpack.c.l.b16 %v8474
        %v9042 = vunpack.c.h.b16 %v8474
        %v9043 = vunpack.c.l.b16 %v8475
        %v9044 = vunpack.c.h.b16 %v8475
        %v9045 = vunpack.c.l.b16 %v8476
        %v9046 = vunpack.c.h.b16 %v8476
        %v9047 = vunpack.c.l.b16 %v8477
        %v9048 = vunpack.c.h.b16 %v8477
        %v9049 = vunpack.c.l.b16 %v8478
        %v9050 = vunpack.c.h.b16 %v8478
        %v9051 = vunpack.c.l.b16 %v8479
        %v9052 = vunpack.c.h.b16 %v8479
        %v9053 = vunpack.c.l.b16 %v8480
        %v9054 = vunpack.c.h.b16 %v8480
        %v9055 = vunpack.c.l.b16 %v8481
        %v9056 = vunpack.c.h.b16 %v8481
        %v9057 = vunpack.c.l.b16 %v8482
        %v9058 = vunpack.c.h.b16 %v8482
        %v9059 = vunpack.c.l.b16 %v8483
        %v9060 = vunpack.c.h.b16 %v8483
        %v9061 = vunpack.c.l.b16 %v8484
        %v9062 = vunpack.c.h.b16 %v8484
        %v9063 = vunpack.c.l.b16 %v8485
        %v9064 = vunpack.c.h.b16 %v8485
        %v9065 = vunpack.c.l.b16 %v8486
        %v9066 = vunpack.c.h.b16 %v8486
        %v9067 = vunpack.c.l.b16 %v8487
        %v9068 = vunpack.c.h.b16 %v8487
        %v9069 = vunpack.c.l.b16 %v8488
        %v9070 = vunpack.c.h.b16 %v8488
        %v9071 = vunpack.c.l.b16 %v8489
        %v9072 = vunpack.c.h.b16 %v8489
        %v9073 = vunpack.c.l.b16 %v8490
        %v9074 = vunpack.c.h.b16 %v8490
        %v9075 = vunpack.c.l.b16 %v8491
        %v9076 = vunpack.c.h.b16 %v8491
        %v9077 = vunpack.c.l.b16 %v8492
        %v9078 = vunpack.c.h.b16 %v8492
        %v9079 = vunpack.c.l.b16 %v8493
        %v9080 = vunpack.c.h.b16 %v8493
        %v9081 = vunpack.c.l.b16 %v8494
        %v9082 = vunpack.c.h.b16 %v8494
        %v9083 = vunpack.c.l.b16 %v8495
        %v9084 = vunpack.c.h.b16 %v8495
        %v9085 = vunpack.c.l.b16 %v8496
        %v9086 = vunpack.c.h.b16 %v8496
        %v9087 = vunpack.c.l.b16 %v8497
        %v9088 = vunpack.c.h.b16 %v8497
        %v9089 = vunpack.c.l.b16 %v8498
        %v9090 = vunpack.c.h.b16 %v8498
        %v9091 = vunpack.c.l.b16 %v8499
        %v9092 = vunpack.c.h.b16 %v8499
        %v9093 = vunpack.c.l.b16 %v8500
        %v9094 = vunpack.c.h.b16 %v8500
        %v9095 = vunpack.c.l.b16 %v8501
        %v9096 = vunpack.c.h.b16 %v8501
        %v9097 = vunpack.c.l.b16 %v8502
        %v9098 = vunpack.c.h.b16 %v8502
        %v9099 = vunpack.c.l.b16 %v8503
        %v9100 = vunpack.c.h.b16 %v8503
        %v9101 = vunpack.c.l.b16 %v8504
        %v9102 = vunpack.c.h.b16 %v8504
        %v9103 = vunpack.c.l.b16 %v8505
        %v9104 = vunpack.c.h.b16 %v8505
        %v9105 = vunpack.c.l.b16 %v8506
        %v9106 = vunpack.c.h.b16 %v8506
        %v9107 = vunpack.c.l.b16 %v8507
        %v9108 = vunpack.c.h.b16 %v8507
        %v9109 = vunpack.c.l.b16 %v8508
        %v9110 = vunpack.c.h.b16 %v8508
        %v9111 = vunpack.c.l.b16 %v8509
        %v9112 = vunpack.c.h.b16 %v8509
        %v9113 = vunpack.c.l.b16 %v8510
        %v9114 = vunpack.c.h.b16 %v8510
        %v9115 = vunpack.c.l.b16 %v8511
        %v9116 = vunpack.c.h.b16 %v8511
        %v9117 = vunpack.c.l.b16 %v8512
        %v9118 = vunpack.c.h.b16 %v8512
        %v9119 = vunpack.c.l.b16 %v8513
        %v9120 = vunpack.c.h.b16 %v8513
        %v9121 = vunpack.c.l.b16 %v8514
        %v9122 = vunpack.c.h.b16 %v8514
        %v9123 = vunpack.c.l.b16 %v8515
        %v9124 = vunpack.c.h.b16 %v8515
        %v9125 = vunpack.c.l.b16 %v8516
        %v9126 = vunpack.c.h.b16 %v8516
        %v9127 = vunpack.c.l.b16 %v8517
        %v9128 = vunpack.c.h.b16 %v8517
        %v9129 = vunpack.c.l.b16 %v8518
        %v9130 = vunpack.c.h.b16 %v8518
        %v9131 = vunpack.c.l.b16 %v8519
        %v9132 = vunpack.c.h.b16 %v8519
        %v9133 = vunpack.c.l.b16 %v8520
        %v9134 = vunpack.c.h.b16 %v8520
        %v9135 = vunpack.c.l.b16 %v8521
        %v9136 = vunpack.c.h.b16 %v8521
        %v9137 = vunpack.c.l.b16 %v8522
        %v9138 = vunpack.c.h.b16 %v8522
        %v9139 = vunpack.c.l.b16 %v8523
        %v9140 = vunpack.c.h.b16 %v8523
        %v9141 = vunpack.c.l.b16 %v8524
        %v9142 = vunpack.c.h.b16 %v8524
        %v9143 = vunpack.c.l.b16 %v8525
        %v9144 = vunpack.c.h.b16 %v8525
        %v9145 = vunpack.c.l.b16 %v8526
        %v9146 = vunpack.c.h.b16 %v8526
        %v9147 = vunpack.c.l.b16 %v8527
        %v9148 = vunpack.c.h.b16 %v8527
        %v9149 = vunpack.c.l.b16 %v8528
        %v9150 = vunpack.c.h.b16 %v8528
        %v9151 = vunpack.c.l.b16 %v8529
        %v9152 = vunpack.c.h.b16 %v8529
        %v9153 = vunpack.c.l.b16 %v8530
        %v9154 = vunpack.c.h.b16 %v8530
        %v9155 = vunpack.c.l.b16 %v8531
        %v9156 = vunpack.c.h.b16 %v8531
        %v9157 = vunpack.c.l.b16 %v8532
        %v9158 = vunpack.c.h.b16 %v8532
        %v9159 = vunpack.c.l.b16 %v8533
        %v9160 = vunpack.c.h.b16 %v8533
        %v9161 = vunpack.c.l.b16 %v8534
        %v9162 = vunpack.c.h.b16 %v8534
        %v9163 = vunpack.c.l.b16 %v8535
        %v9164 = vunpack.c.h.b16 %v8535
        %v9165 = vunpack.c.l.b16 %v8536
        %v9166 = vunpack.c.h.b16 %v8536
        %v9167 = vunpack.c.l.b16 %v8537
        %v9168 = vunpack.c.h.b16 %v8537
        %v9169 = vunpack.c.l.b16 %v8538
        %v9170 = vunpack.c.h.b16 %v8538
        %v9171 = vunpack.c.l.b16 %v8539
        %v9172 = vunpack.c.h.b16 %v8539
        %v9173 = vunpack.c.l.b16 %v8540
        %v9174 = vunpack.c.h.b16 %v8540
        %v9175 = vunpack.c.l.b16 %v8541
        %v9176 = vunpack.c.h.b16 %v8541
        %v9177 = vunpack.c.l.b16 %v8542
        %v9178 = vunpack.c.h.b16 %v8542
        %v9179 = vunpack.c.l.b16 %v8543
        %v9180 = vunpack.c.h.b16 %v8543
        %v9181 = vunpack.c.l.b16 %v8544
        %v9182 = vunpack.c.h.b16 %v8544
        %v9183 = vunpack.c.l.b16 %v8545
        %v9184 = vunpack.c.h.b16 %v8545
        %v9185 = vunpack.c.l.b16 %v8546
        %v9186 = vunpack.c.h.b16 %v8546
        %v9187 = vunpack.c.l.b16 %v8547
        %v9188 = vunpack.c.h.b16 %v8547
        %v9189 = vunpack.c.l.b16 %v8548
        %v9190 = vunpack.c.h.b16 %v8548
        %v9191 = vunpack.c.l.b16 %v8549
        %v9192 = vunpack.c.h.b16 %v8549
        %v9193 = vunpack.c.l.b16 %v8550
        %v9194 = vunpack.c.h.b16 %v8550
        %v9195 = vunpack.c.l.b16 %v8551
        %v9196 = vunpack.c.h.b16 %v8551
        %v9197 = vunpack.c.l.b16 %v8552
        %v9198 = vunpack.c.h.b16 %v8552
        %v9199 = vunpack.c.l.b16 %v8553
        %v9200 = vunpack.c.h.b16 %v8553
        %v9201 = vunpack.c.l.b16 %v8554
        %v9202 = vunpack.c.h.b16 %v8554
        %v9203 = vunpack.c.l.b16 %v8555
        %v9204 = vunpack.c.h.b16 %v8555
        %v9205 = vunpack.c.l.b16 %v8556
        %v9206 = vunpack.c.h.b16 %v8556
        %v9207 = vunpack.c.l.b16 %v8557
        %v9208 = vunpack.c.h.b16 %v8557
        %v9209 = vunpack.c.l.b16 %v8558
        %v9210 = vunpack.c.h.b16 %v8558
        %v9211 = vunpack.c.l.b16 %v8559
        %v9212 = vunpack.c.h.b16 %v8559
        %v9213 = vunpack.c.l.b16 %v8560
        %v9214 = vunpack.c.h.b16 %v8560
        %v9215 = vunpack.c.l.b16 %v8561
        %v9216 = vunpack.c.h.b16 %v8561
        %v9217 = vunpack.c.l.b16 %v8562
        %v9218 = vunpack.c.h.b16 %v8562
        %v9219 = vunpack.c.l.b16 %v8563
        %v9220 = vunpack.c.h.b16 %v8563
        %v9221 = vunpack.c.l.b16 %v8564
        %v9222 = vunpack.c.h.b16 %v8564
        %v9223 = vunpack.c.l.b16 %v8565
        %v9224 = vunpack.c.h.b16 %v8565
        %v9225 = vunpack.c.l.b16 %v8566
        %v9226 = vunpack.c.h.b16 %v8566
        %v9227 = vunpack.c.l.b16 %v8567
        %v9228 = vunpack.c.h.b16 %v8567
        %v9229 = vunpack.c.l.b16 %v8568
        %v9230 = vunpack.c.h.b16 %v8568
        %v9231 = vunpack.c.l.b16 %v8569
        %v9232 = vunpack.c.h.b16 %v8569
        %v9233 = vunpack.c.l.b16 %v8570
        %v9234 = vunpack.c.h.b16 %v8570
        %v9235 = vunpack.c.l.b16 %v8571
        %v9236 = vunpack.c.h.b16 %v8571
        %v9237 = vunpack.c.l.b16 %v8572
        %v9238 = vunpack.c.h.b16 %v8572
        %v9239 = vunpack.c.l.b16 %v8573
        %v9240 = vunpack.c.h.b16 %v8573
        %v9241 = vunpack.c.l.b16 %v8574
        %v9242 = vunpack.c.h.b16 %v8574
        %v9243 = vunpack.c.l.b16 %v8575
        %v9244 = vunpack.c.h.b16 %v8575
        %v9245 = vunpack.c.l.b16 %v8576
        %v9246 = vunpack.c.h.b16 %v8576
        %v9247 = vunpack.c.l.b16 %v8577
        %v9248 = vunpack.c.h.b16 %v8577
        %v9249 = vunpack.c.l.b16 %v8578
        %v9250 = vunpack.c.h.b16 %v8578
        %v9251 = vunpack.c.l.b16 %v8579
        %v9252 = vunpack.c.h.b16 %v8579
        %v9253 = vunpack.c.l.b16 %v8580
        %v9254 = vunpack.c.h.b16 %v8580
        %v9255 = vunpack.c.l.b16 %v8581
        %v9256 = vunpack.c.h.b16 %v8581
        %v9257 = vunpack.c.l.b16 %v8582
        %v9258 = vunpack.c.h.b16 %v8582
        %v9259 = vunpack.c.l.b16 %v8583
        %v9260 = vunpack.c.h.b16 %v8583
        %v9261 = vunpack.c.l.b16 %v8584
        %v9262 = vunpack.c.h.b16 %v8584
        %v9263 = vunpack.c.l.b16 %v8585
        %v9264 = vunpack.c.h.b16 %v8585
        %v9265 = vunpack.c.l.b16 %v8586
        %v9266 = vunpack.c.h.b16 %v8586
        %v9267 = vunpack.c.l.b16 %v8587
        %v9268 = vunpack.c.h.b16 %v8587
        %v9269 = vunpack.c.l.b16 %v8588
        %v9270 = vunpack.c.h.b16 %v8588
        %v9271 = vunpack.c.l.b16 %v8589
        %v9272 = vunpack.c.h.b16 %v8589
        %v9273 = vunpack.c.l.b16 %v8590
        %v9274 = vunpack.c.h.b16 %v8590
        %v9275 = vunpack.c.l.b16 %v8591
        %v9276 = vunpack.c.h.b16 %v8591
        %v9277 = vunpack.c.l.b16 %v8592
        %v9278 = vunpack.c.h.b16 %v8592
        %v9279 = vunpack.c.l.b16 %v8593
        %v9280 = vunpack.c.h.b16 %v8593
        %v9281 = vunpack.c.l.b16 %v8594
        %v9282 = vunpack.c.h.b16 %v8594
        %v9283 = vunpack.c.l.b16 %v8595
        %v9284 = vunpack.c.h.b16 %v8595
        %v9285 = vunpack.c.l.b16 %v8596
        %v9286 = vunpack.c.h.b16 %v8596
        %v9287 = vunpack.c.l.b16 %v8597
        %v9288 = vunpack.c.h.b16 %v8597
        %v9289 = vunpack.c.l.b16 %v8598
        %v9290 = vunpack.c.h.b16 %v8598
        %v9291 = vunpack.c.l.b16 %v8599
        %v9292 = vunpack.c.h.b16 %v8599
        %v9293 = vunpack.c.l.b16 %v8600
        %v9294 = vunpack.c.h.b16 %v8600
        %v9295 = vunpack.c.l.b16 %v8601
        %v9296 = vunpack.c.h.b16 %v8601
        %v9297 = vunpack.c.l.b16 %v8602
        %v9298 = vunpack.c.h.b16 %v8602
        %v9299 = vunpack.c.l.b16 %v8603
        %v9300 = vunpack.c.h.b16 %v8603
        %v9301 = vunpack.c.l.b16 %v8604
        %v9302 = vunpack.c.h.b16 %v8604
        %v9303 = vunpack.c.l.b16 %v8605
        %v9304 = vunpack.c.h.b16 %v8605
        %v9305 = vunpack.c.l.b16 %v8606
        %v9306 = vunpack.c.h.b16 %v8606
        %v9307 = vunpack.c.l.b16 %v8607
        %v9308 = vunpack.c.h.b16 %v8607
        %v9309 = vunpack.c.l.b16 %v8608
        %v9310 = vunpack.c.h.b16 %v8608
        %v9311 = vunpack.c.l.b16 %v8609
        %v9312 = vunpack.c.h.b16 %v8609
        %v9313 = vunpack.c.l.b16 %v8610
        %v9314 = vunpack.c.h.b16 %v8610
        %v9315 = vunpack.c.l.b16 %v8611
        %v9316 = vunpack.c.h.b16 %v8611
        %v9317 = vunpack.c.l.b16 %v8612
        %v9318 = vunpack.c.h.b16 %v8612
        %v9319 = vunpack.c.l.b16 %v8613
        %v9320 = vunpack.c.h.b16 %v8613
        %v9321 = vunpack.c.l.b16 %v8614
        %v9322 = vunpack.c.h.b16 %v8614
        %v9323 = vunpack.c.l.b16 %v8615
        %v9324 = vunpack.c.h.b16 %v8615
        %v9325 = vunpack.c.l.b16 %v8616
        %v9326 = vunpack.c.h.b16 %v8616
        %v9327 = vunpack.c.l.b16 %v8617
        %v9328 = vunpack.c.h.b16 %v8617
        %v9329 = vunpack.c.l.b16 %v8618
        %v9330 = vunpack.c.h.b16 %v8618
        %v9331 = vunpack.c.l.b16 %v8619
        %v9332 = vunpack.c.h.b16 %v8619
        %v9333 = vunpack.c.l.b16 %v8620
        %v9334 = vunpack.c.h.b16 %v8620
        %v9335 = vunpack.c.l.b16 %v8621
        %v9336 = vunpack.c.h.b16 %v8621
        %v9337 = vunpack.c.l.b16 %v8622
        %v9338 = vunpack.c.h.b16 %v8622
        %v9339 = vunpack.c.l.b16 %v8623
        %v9340 = vunpack.c.h.b16 %v8623
        %v9341 = vunpack.c.l.b16 %v8624
        %v9342 = vunpack.c.h.b16 %v8624
        %v9343 = vunpack.c.l.b16 %v8625
        %v9344 = vunpack.c.h.b16 %v8625
        %v9345 = vunpack.c.l.b16 %v8626
        %v9346 = vunpack.c.h.b16 %v8626
        %v9347 = vunpack.c.l.b16 %v8627
        %v9348 = vunpack.c.h.b16 %v8627
        %v9349 = vunpack.c.l.b16 %v8628
        %v9350 = vunpack.c.h.b16 %v8628
        %v9351 = vunpack.c.l.b16 %v8629
        %v9352 = vunpack.c.h.b16 %v8629
        %v9353 = vunpack.c.l.b16 %v8630
        %v9354 = vunpack.c.h.b16 %v8630
        %v9355 = vunpack.c.l.b16 %v8631
        %v9356 = vunpack.c.h.b16 %v8631
        %v9357 = vunpack.c.l.b16 %v8632
        %v9358 = vunpack.c.h.b16 %v8632
        %v9359 = vunpack.c.l.b16 %v8633
        %v9360 = vunpack.c.h.b16 %v8633
        %v9361 = vunpack.c.l.b16 %v8634
        %v9362 = vunpack.c.h.b16 %v8634
        %v9363 = vunpack.c.l.b16 %v8635
        %v9364 = vunpack.c.h.b16 %v8635
        %v9365 = vunpack.c.l.b16 %v8636
        %v9366 = vunpack.c.h.b16 %v8636
        %v9367 = vunpack.c.l.b16 %v8637
        %v9368 = vunpack.c.h.b16 %v8637
        %v9369 = vunpack.c.l.b16 %v8638
        %v9370 = vunpack.c.h.b16 %v8638
        %v9371 = vunpack.c.l.b16 %v8639
        %v9372 = vunpack.c.h.b16 %v8639
        %v9373 = vunpack.c.l.b16 %v8640
        %v9374 = vunpack.c.h.b16 %v8640
        %v9375 = vunpack.c.l.b16 %v8641
        %v9376 = vunpack.c.h.b16 %v8641
        %v9377 = vunpack.c.l.b16 %v8642
        %v9378 = vunpack.c.h.b16 %v8642
        %v9379 = vunpack.c.l.b16 %v8643
        %v9380 = vunpack.c.h.b16 %v8643
        %v9381 = vunpack.c.l.b16 %v8644
        %v9382 = vunpack.c.h.b16 %v8644
        %v9383 = vunpack.c.l.b16 %v8645
        %v9384 = vunpack.c.h.b16 %v8645
        %v9385 = vunpack.c.l.b16 %v8646
        %v9386 = vunpack.c.h.b16 %v8646
        %v9387 = vunpack.c.l.b16 %v8647
        %v9388 = vunpack.c.h.b16 %v8647
        %v9389 = vunpack.c.l.b16 %v8648
        %v9390 = vunpack.c.h.b16 %v8648
        %v9391 = vunpack.c.l.b16 %v8649
        %v9392 = vunpack.c.h.b16 %v8649
        %v9393 = vunpack.c.l.b16 %v8650
        %v9394 = vunpack.c.h.b16 %v8650
        %v9395 = vunpack.c.l.b16 %v8651
        %v9396 = vunpack.c.h.b16 %v8651
        %v9397 = vunpack.c.l.b16 %v8652
        %v9398 = vunpack.c.h.b16 %v8652
        %v9399 = vunpack.c.l.b16 %v8653
        %v9400 = vunpack.c.h.b16 %v8653
        %v9401 = vunpack.c.l.b16 %v8654
        %v9402 = vunpack.c.h.b16 %v8654
        %v9403 = vunpack.c.l.b16 %v8655
        %v9404 = vunpack.c.h.b16 %v8655
        %v9405 = vunpack.c.l.b16 %v8656
        %v9406 = vunpack.c.h.b16 %v8656
        %v9407 = vunpack.c.l.b16 %v8657
        %v9408 = vunpack.c.h.b16 %v8657
        %v9409 = vunpack.c.l.b16 %v8658
        %v9410 = vunpack.c.h.b16 %v8658
        %v9411 = vunpack.c.l.b16 %v8659
        %v9412 = vunpack.c.h.b16 %v8659
        %v9413 = vunpack.c.l.b16 %v8660
        %v9414 = vunpack.c.h.b16 %v8660
        %v9415 = vunpack.c.l.b16 %v8661
        %v9416 = vunpack.c.h.b16 %v8661
        %v9417 = vunpack.c.l.b16 %v8662
        %v9418 = vunpack.c.h.b16 %v8662
        %v9419 = vunpack.c.l.b16 %v8663
        %v9420 = vunpack.c.h.b16 %v8663
        %v9421 = vunpack.c.l.b16 %v8664
        %v9422 = vunpack.c.h.b16 %v8664
        %v9423 = vunpack.c.l.b16 %v8665
        %v9424 = vunpack.c.h.b16 %v8665
        %v9425 = vunpack.c.l.b16 %v8666
        %v9426 = vunpack.c.h.b16 %v8666
        %v9427 = vunpack.c.l.b16 %v8667
        %v9428 = vunpack.c.h.b16 %v8667
        %v9429 = vunpack.c.l.b16 %v8668
        %v9430 = vunpack.c.h.b16 %v8668
        %v9431 = vunpack.c.l.b16 %v8669
        %v9432 = vunpack.c.h.b16 %v8669
        %v9433 = vunpack.c.l.b16 %v8670
        %v9434 = vunpack.c.h.b16 %v8670
        %v9435 = vunpack.c.l.b16 %v8671
        %v9436 = vunpack.c.h.b16 %v8671
        %v9437 = vunpack.c.l.b16 %v8672
        %v9438 = vunpack.c.h.b16 %v8672
        %v9439 = vunpack.c.l.b16 %v8673
        %v9440 = vunpack.c.h.b16 %v8673
        %v9441 = vunpack.c.l.b16 %v8674
        %v9442 = vunpack.c.h.b16 %v8674
        %v9443 = vunpack.c.l.b16 %v8675
        %v9444 = vunpack.c.h.b16 %v8675
        %v9445 = vunpack.c.l.b16 %v8676
        %v9446 = vunpack.c.h.b16 %v8676
        %v9447 = vunpack.c.l.b16 %v8677
        %v9448 = vunpack.c.h.b16 %v8677
        %v9449 = vunpack.c.l.b16 %v8678
        %v9450 = vunpack.c.h.b16 %v8678
        %v9451 = vunpack.c.l.b16 %v8679
        %v9452 = vunpack.c.h.b16 %v8679
        %v9453 = vunpack.c.l.b16 %v8680
        %v9454 = vunpack.c.h.b16 %v8680
        %v9455 = vunpack.c.l.b16 %v8681
        %v9456 = vunpack.c.h.b16 %v8681
        %v9457 = vunpack.c.l.b16 %v8682
        %v9458 = vunpack.c.h.b16 %v8682
        %v9459 = vunpack.c.l.b16 %v8683
        %v9460 = vunpack.c.h.b16 %v8683
        %v9461 = vunpack.c.l.b16 %v8684
        %v9462 = vunpack.c.h.b16 %v8684
        %v9463 = vunpack.c.l.b16 %v8685
        %v9464 = vunpack.c.h.b16 %v8685
        %v9465 = vunpack.c.l.b16 %v8686
        %v9466 = vunpack.c.h.b16 %v8686
        %v9467 = vunpack.c.l.b16 %v8687
        %v9468 = vunpack.c.h.b16 %v8687
        %v9469 = vunpack.c.l.b16 %v8688
        %v9470 = vunpack.c.h.b16 %v8688
        %v9471 = vunpack.c.l.b16 %v8689
        %v9472 = vunpack.c.h.b16 %v8689
        %v9473 = vunpack.c.l.b16 %v8690
        %v9474 = vunpack.c.h.b16 %v8690
        %v9475 = vunpack.c.l.b16 %v8691
        %v9476 = vunpack.c.h.b16 %v8691
        %v9477 = vunpack.c.l.b16 %v8692
        %v9478 = vunpack.c.h.b16 %v8692
        %v9479 = vunpack.c.l.b16 %v8693
        %v9480 = vunpack.c.h.b16 %v8693
        %v9481 = vunpack.c.l.b16 %v8694
        %v9482 = vunpack.c.h.b16 %v8694
        %v9483 = vunpack.c.l.b16 %v8695
        %v9484 = vunpack.c.h.b16 %v8695
        %v9485 = vunpack.c.l.b16 %v8696
        %v9486 = vunpack.c.h.b16 %v8696
        %v9487 = vunpack.c.l.b16 %v8697
        %v9488 = vunpack.c.h.b16 %v8697
        %v9489 = vunpack.c.l.b16 %v8698
        %v9490 = vunpack.c.h.b16 %v8698
        %v9491 = vunpack.c.l.b16 %v8699
        %v9492 = vunpack.c.h.b16 %v8699
        %v9493 = vunpack.c.l.b16 %v8700
        %v9494 = vunpack.c.h.b16 %v8700
        %v9495 = vunpack.c.l.b16 %v8701
        %v9496 = vunpack.c.h.b16 %v8701
        %v9497 = vunpack.c.l.b16 %v8702
        %v9498 = vunpack.c.h.b16 %v8702
        %v9499 = vunpack.c.l.b16 %v8703
        %v9500 = vunpack.c.h.b16 %v8703
        %v9501 = vpack.c.b16 %v8997, %v8989
        %v9502 = vpack.c.b16 %v8998, %v8990
        %v9503 = vpack.c.b16 %v8999, %v8991
        %v9504 = vpack.c.b16 %v9000, %v8992
        %v9505 = vpack.c.b16 %v9001, %v8993
        %v9506 = vpack.c.b16 %v9002, %v8994
        %v9507 = vpack.c.b16 %v9003, %v8995
        %v9508 = vpack.c.b16 %v9004, %v8996
        %v9509 = vpack.c.b16 %v9013, %v9005
        %v9510 = vpack.c.b16 %v9014, %v9006
        %v9511 = vpack.c.b16 %v9015, %v9007
        %v9512 = vpack.c.b16 %v9016, %v9008
        %v9513 = vpack.c.b16 %v9017, %v9009
        %v9514 = vpack.c.b16 %v9018, %v9010
        %v9515 = vpack.c.b16 %v9019, %v9011
        %v9516 = vpack.c.b16 %v9020, %v9012
        %v9517 = vpack.c.b16 %v9029, %v9021
        %v9518 = vpack.c.b16 %v9030, %v9022
        %v9519 = vpack.c.b16 %v9031, %v9023
        %v9520 = vpack.c.b16 %v9032, %v9024
        %v9521 = vpack.c.b16 %v9033, %v9025
        %v9522 = vpack.c.b16 %v9034, %v9026
        %v9523 = vpack.c.b16 %v9035, %v9027
        %v9524 = vpack.c.b16 %v9036, %v9028
        %v9525 = vpack.c.b16 %v9045, %v9037
        %v9526 = vpack.c.b16 %v9046, %v9038
        %v9527 = vpack.c.b16 %v9047, %v9039
        %v9528 = vpack.c.b16 %v9048, %v9040
        %v9529 = vpack.c.b16 %v9049, %v9041
        %v9530 = vpack.c.b16 %v9050, %v9042
        %v9531 = vpack.c.b16 %v9051, %v9043
        %v9532 = vpack.c.b16 %v9052, %v9044
        %v9533 = vpack.c.b16 %v9061, %v9053
        %v9534 = vpack.c.b16 %v9062, %v9054
        %v9535 = vpack.c.b16 %v9063, %v9055
        %v9536 = vpack.c.b16 %v9064, %v9056
        %v9537 = vpack.c.b16 %v9065, %v9057
        %v9538 = vpack.c.b16 %v9066, %v9058
        %v9539 = vpack.c.b16 %v9067, %v9059
        %v9540 = vpack.c.b16 %v9068, %v9060
        %v9541 = vpack.c.b16 %v9077, %v9069
        %v9542 = vpack.c.b16 %v9078, %v9070
        %v9543 = vpack.c.b16 %v9079, %v9071
        %v9544 = vpack.c.b16 %v9080, %v9072
        %v9545 = vpack.c.b16 %v9081, %v9073
        %v9546 = vpack.c.b16 %v9082, %v9074
        %v9547 = vpack.c.b16 %v9083, %v9075
        %v9548 = vpack.c.b16 %v9084, %v9076
        %v9549 = vpack.c.b16 %v9093, %v9085
        %v9550 = vpack.c.b16 %v9094, %v9086
        %v9551 = vpack.c.b16 %v9095, %v9087
        %v9552 = vpack.c.b16 %v9096, %v9088
        %v9553 = vpack.c.b16 %v9097, %v9089
        %v9554 = vpack.c.b16 %v9098, %v9090
        %v9555 = vpack.c.b16 %v9099, %v9091
        %v9556 = vpack.c.b16 %v9100, %v9092
        %v9557 = vpack.c.b16 %v9109, %v9101
        %v9558 = vpack.c.b16 %v9110, %v9102
        %v9559 = vpack.c.b16 %v9111, %v9103
        %v9560 = vpack.c.b16 %v9112, %v9104
        %v9561 = vpack.c.b16 %v9113, %v9105
        %v9562 = vpack.c.b16 %v9114, %v9106
        %v9563 = vpack.c.b16 %v9115, %v9107
        %v9564 = vpack.c.b16 %v9116, %v9108
        %v9565 = vpack.c.b16 %v9125, %v9117
        %v9566 = vpack.c.b16 %v9126, %v9118
        %v9567 = vpack.c.b16 %v9127, %v9119
        %v9568 = vpack.c.b16 %v9128, %v9120
        %v9569 = vpack.c.b16 %v9129, %v9121
        %v9570 = vpack.c.b16 %v9130, %v9122
        %v9571 = vpack.c.b16 %v9131, %v9123
        %v9572 = vpack.c.b16 %v9132, %v9124
        %v9573 = vpack.c.b16 %v9141, %v9133
        %v9574 = vpack.c.b16 %v9142, %v9134
        %v9575 = vpack.c.b16 %v9143, %v9135
        %v9576 = vpack.c.b16 %v9144, %v9136
        %v9577 = vpack.c.b16 %v9145, %v9137
        %v9578 = vpack.c.b16 %v9146, %v9138
        %v9579 = vpack.c.b16 %v9147, %v9139
        %v9580 = vpack.c.b16 %v9148, %v9140
        %v9581 = vpack.c.b16 %v9157, %v9149
        %v9582 = vpack.c.b16 %v9158, %v9150
        %v9583 = vpack.c.b16 %v9159, %v9151
        %v9584 = vpack.c.b16 %v9160, %v9152
        %v9585 = vpack.c.b16 %v9161, %v9153
        %v9586 = vpack.c.b16 %v9162, %v9154
        %v9587 = vpack.c.b16 %v9163, %v9155
        %v9588 = vpack.c.b16 %v9164, %v9156
        %v9589 = vpack.c.b16 %v9173, %v9165
        %v9590 = vpack.c.b16 %v9174, %v9166
        %v9591 = vpack.c.b16 %v9175, %v9167
        %v9592 = vpack.c.b16 %v9176, %v9168
        %v9593 = vpack.c.b16 %v9177, %v9169
        %v9594 = vpack.c.b16 %v9178, %v9170
        %v9595 = vpack.c.b16 %v9179, %v9171
        %v9596 = vpack.c.b16 %v9180, %v9172
        %v9597 = vpack.c.b16 %v9189, %v9181
        %v9598 = vpack.c.b16 %v9190, %v9182
        %v9599 = vpack.c.b16 %v9191, %v9183
        %v9600 = vpack.c.b16 %v9192, %v9184
        %v9601 = vpack.c.b16 %v9193, %v9185
        %v9602 = vpack.c.b16 %v9194, %v9186
        %v9603 = vpack.c.b16 %v9195, %v9187
        %v9604 = vpack.c.b16 %v9196, %v9188
        %v9605 = vpack.c.b16 %v9205, %v9197
        %v9606 = vpack.c.b16 %v9206, %v9198
        %v9607 = vpack.c.b16 %v9207, %v9199
        %v9608 = vpack.c.b16 %v9208, %v9200
        %v9609 = vpack.c.b16 %v9209, %v9201
        %v9610 = vpack.c.b16 %v9210, %v9202
        %v9611 = vpack.c.b16 %v9211, %v9203
        %v9612 = vpack.c.b16 %v9212, %v9204
        %v9613 = vpack.c.b16 %v9221, %v9213
        %v9614 = vpack.c.b16 %v9222, %v9214
        %v9615 = vpack.c.b16 %v9223, %v9215
        %v9616 = vpack.c.b16 %v9224, %v9216
        %v9617 = vpack.c.b16 %v9225, %v9217
        %v9618 = vpack.c.b16 %v9226, %v9218
        %v9619 = vpack.c.b16 %v9227, %v9219
        %v9620 = vpack.c.b16 %v9228, %v9220
        %v9621 = vpack.c.b16 %v9237, %v9229
        %v9622 = vpack.c.b16 %v9238, %v9230
        %v9623 = vpack.c.b16 %v9239, %v9231
        %v9624 = vpack.c.b16 %v9240, %v9232
        %v9625 = vpack.c.b16 %v9241, %v9233
        %v9626 = vpack.c.b16 %v9242, %v9234
        %v9627 = vpack.c.b16 %v9243, %v9235
        %v9628 = vpack.c.b16 %v9244, %v9236
        %v9629 = vpack.c.b16 %v9253, %v9245
        %v9630 = vpack.c.b16 %v9254, %v9246
        %v9631 = vpack.c.b16 %v9255, %v9247
        %v9632 = vpack.c.b16 %v9256, %v9248
        %v9633 = vpack.c.b16 %v9257, %v9249
        %v9634 = vpack.c.b16 %v9258, %v9250
        %v9635 = vpack.c.b16 %v9259, %v9251
        %v9636 = vpack.c.b16 %v9260, %v9252
        %v9637 = vpack.c.b16 %v9269, %v9261
        %v9638 = vpack.c.b16 %v9270, %v9262
        %v9639 = vpack.c.b16 %v9271, %v9263
        %v9640 = vpack.c.b16 %v9272, %v9264
        %v9641 = vpack.c.b16 %v9273, %v9265
        %v9642 = vpack.c.b16 %v9274, %v9266
        %v9643 = vpack.c.b16 %v9275, %v9267
        %v9644 = vpack.c.b16 %v9276, %v9268
        %v9645 = vpack.c.b16 %v9285, %v9277
        %v9646 = vpack.c.b16 %v9286, %v9278
        %v9647 = vpack.c.b16 %v9287, %v9279
        %v9648 = vpack.c.b16 %v9288, %v9280
        %v9649 = vpack.c.b16 %v9289, %v9281
        %v9650 = vpack.c.b16 %v9290, %v9282
        %v9651 = vpack.c.b16 %v9291, %v9283
        %v9652 = vpack.c.b16 %v9292, %v9284
        %v9653 = vpack.c.b16 %v9301, %v9293
        %v9654 = vpack.c.b16 %v9302, %v9294
        %v9655 = vpack.c.b16 %v9303, %v9295
        %v9656 = vpack.c.b16 %v9304, %v9296
        %v9657 = vpack.c.b16 %v9305, %v9297
        %v9658 = vpack.c.b16 %v9306, %v9298
        %v9659 = vpack.c.b16 %v9307, %v9299
        %v9660 = vpack.c.b16 %v9308, %v9300
        %v9661 = vpack.c.b16 %v9317, %v9309
        %v9662 = vpack.c.b16 %v9318, %v9310
        %v9663 = vpack.c.b16 %v9319, %v9311
        %v9664 = vpack.c.b16 %v9320, %v9312
        %v9665 = vpack.c.b16 %v9321, %v9313
        %v9666 = vpack.c.b16 %v9322, %v9314
        %v9667 = vpack.c.b16 %v9323, %v9315
        %v9668 = vpack.c.b16 %v9324, %v9316
        %v9669 = vpack.c.b16 %v9333, %v9325
        %v9670 = vpack.c.b16 %v9334, %v9326
        %v9671 = vpack.c.b16 %v9335, %v9327
        %v9672 = vpack.c.b16 %v9336, %v9328
        %v9673 = vpack.c.b16 %v9337, %v9329
        %v9674 = vpack.c.b16 %v9338, %v9330
        %v9675 = vpack.c.b16 %v9339, %v9331
        %v9676 = vpack.c.b16 %v9340, %v9332
        %v9677 = vpack.c.b16 %v9349, %v9341
        %v9678 = vpack.c.b16 %v9350, %v9342
        %v9679 = vpack.c.b16 %v9351, %v9343
        %v9680 = vpack.c.b16 %v9352, %v9344
        %v9681 = vpack.c.b16 %v9353, %v9345
        %v9682 = vpack.c.b16 %v9354, %v9346
        %v9683 = vpack.c.b16 %v9355, %v9347
        %v9684 = vpack.c.b16 %v9356, %v9348
        %v9685 = vpack.c.b16 %v9365, %v9357
        %v9686 = vpack.c.b16 %v9366, %v9358
        %v9687 = vpack.c.b16 %v9367, %v9359
        %v9688 = vpack.c.b16 %v9368, %v9360
        %v9689 = vpack.c.b16 %v9369, %v9361
        %v9690 = vpack.c.b16 %v9370, %v9362
        %v9691 = vpack.c.b16 %v9371, %v9363
        %v9692 = vpack.c.b16 %v9372, %v9364
        %v9693 = vpack.c.b16 %v9381, %v9373
        %v9694 = vpack.c.b16 %v9382, %v9374
        %v9695 = vpack.c.b16 %v9383, %v9375
        %v9696 = vpack.c.b16 %v9384, %v9376
        %v9697 = vpack.c.b16 %v9385, %v9377
        %v9698 = vpack.c.b16 %v9386, %v9378
        %v9699 = vpack.c.b16 %v9387, %v9379
        %v9700 = vpack.c.b16 %v9388, %v9380
        %v9701 = vpack.c.b16 %v9397, %v9389
        %v9702 = vpack.c.b16 %v9398, %v9390
        %v9703 = vpack.c.b16 %v9399, %v9391
        %v9704 = vpack.c.b16 %v9400, %v9392
        %v9705 = vpack.c.b16 %v9401, %v9393
        %v9706 = vpack.c.b16 %v9402, %v9394
        %v9707 = vpack.c.b16 %v9403, %v9395
        %v9708 = vpack.c.b16 %v9404, %v9396
        %v9709 = vpack.c.b16 %v9413, %v9405
        %v9710 = vpack.c.b16 %v9414, %v9406
        %v9711 = vpack.c.b16 %v9415, %v9407
        %v9712 = vpack.c.b16 %v9416, %v9408
        %v9713 = vpack.c.b16 %v9417, %v9409
        %v9714 = vpack.c.b16 %v9418, %v9410
        %v9715 = vpack.c.b16 %v9419, %v9411
        %v9716 = vpack.c.b16 %v9420, %v9412
        %v9717 = vpack.c.b16 %v9429, %v9421
        %v9718 = vpack.c.b16 %v9430, %v9422
        %v9719 = vpack.c.b16 %v9431, %v9423
        %v9720 = vpack.c.b16 %v9432, %v9424
        %v9721 = vpack.c.b16 %v9433, %v9425
        %v9722 = vpack.c.b16 %v9434, %v9426
        %v9723 = vpack.c.b16 %v9435, %v9427
        %v9724 = vpack.c.b16 %v9436, %v9428
        %v9725 = vpack.c.b16 %v9445, %v9437
        %v9726 = vpack.c.b16 %v9446, %v9438
        %v9727 = vpack.c.b16 %v9447, %v9439
        %v9728 = vpack.c.b16 %v9448, %v9440
        %v9729 = vpack.c.b16 %v9449, %v9441
        %v9730 = vpack.c.b16 %v9450, %v9442
        %v9731 = vpack.c.b16 %v9451, %v9443
        %v9732 = vpack.c.b16 %v9452, %v9444
        %v9733 = vpack.c.b16 %v9461, %v9453
        %v9734 = vpack.c.b16 %v9462, %v9454
        %v9735 = vpack.c.b16 %v9463, %v9455
        %v9736 = vpack.c.b16 %v9464, %v9456
        %v9737 = vpack.c.b16 %v9465, %v9457
        %v9738 = vpack.c.b16 %v9466, %v9458
        %v9739 = vpack.c.b16 %v9467, %v9459
        %v9740 = vpack.c.b16 %v9468, %v9460
        %v9741 = vpack.c.b16 %v9477, %v9469
        %v9742 = vpack.c.b16 %v9478, %v9470
        %v9743 = vpack.c.b16 %v9479, %v9471
        %v9744 = vpack.c.b16 %v9480, %v9472
        %v9745 = vpack.c.b16 %v9481, %v9473
        %v9746 = vpack.c.b16 %v9482, %v9474
        %v9747 = vpack.c.b16 %v9483, %v9475
        %v9748 = vpack.c.b16 %v9484, %v9476
        %v9749 = vpack.c.b16 %v9493, %v9485
        %v9750 = vpack.c.b16 %v9494, %v9486
        %v9751 = vpack.c.b16 %v9495, %v9487
        %v9752 = vpack.c.b16 %v9496, %v9488
        %v9753 = vpack.c.b16 %v9497, %v9489
        %v9754 = vpack.c.b16 %v9498, %v9490
        %v9755 = vpack.c.b16 %v9499, %v9491
        %v9756 = vpack.c.b16 %v9500, %v9492
        %10013 = vmatprep.subr.bf16.mxu0 %v9558
        %10014 = vmatpush1.bf16.msra.mxu0 %v9557
        %10015 = vmatprep.subr.bf16.mxu0 %v9550
        %10016 = vmatpush1.bf16.msra.mxu0 %v9549
        %10017 = vmatprep.subr.bf16.mxu0 %v9542
        %10018 = vmatpush1.bf16.msra.mxu0 %v9541
        %10019 = vmatprep.subr.bf16.mxu0 %v9534
        %10020 = vmatpush1.bf16.msra.mxu0 %v9533
        %10021 = vmatprep.subr.bf16.mxu0 %v9526
        %10022 = vmatpush1.bf16.msra.mxu0 %v9525
        %10023 = vmatprep.subr.bf16.mxu0 %v9518
        %10024 = vmatpush1.bf16.msra.mxu0 %v9517
        %10025 = vmatprep.subr.bf16.mxu0 %v9510
        %10026 = vmatpush1.bf16.msra.mxu0 %v9509
        %10027 = vmatprep.subr.bf16.mxu0 %v9502
        %10028 = vmatpush1.bf16.msra.mxu0 %v9501
        %10029 = vmatprep.subr.bf16.mxu0 %v9622
        %10030 = vmatpush2.bf16.msra.mxu0 %v9621
        %10031 = vmatprep.subr.bf16.mxu0 %v9614
        %10032 = vmatpush2.bf16.msra.mxu0 %v9613
        %10033 = vmatprep.subr.bf16.mxu0 %v9606
        %10034 = vmatpush2.bf16.msra.mxu0 %v9605
        %10035 = vmatprep.subr.bf16.mxu0 %v9598
        %10036 = vmatpush2.bf16.msra.mxu0 %v9597
        %10037 = vmatprep.subr.bf16.mxu0 %v9590
        %10038 = vmatpush2.bf16.msra.mxu0 %v9589
        %10039 = vmatprep.subr.bf16.mxu0 %v9582
        %10040 = vmatpush2.bf16.msra.mxu0 %v9581
        %10041 = vmatprep.subr.bf16.mxu0 %v9574
        %10042 = vmatpush2.bf16.msra.mxu0 %v9573
        %10043 = vmatprep.subr.bf16.mxu0 %v9566
        %10044 = vmatpush2.bf16.msra.mxu0 %v9565
        %10045 = vmatprep.mubr.bf16.mxu0 %v8726
        %10046 = vmatmul.mubr.bf16.gmra.mxu0 %v8719
        %v10047 = vpop.f32.mrf.mxu0
        %v10048 = vadd.f32 0.0, %v10047
        %v10049 = vpop.f32.mrf.mxu0
        %v10050 = vadd.f32 0.0, %v10049
        %v10051 = vpop.f32.mrf.mxu0
        %v10052 = vpop.f32.mrf.mxu0
        %10053 = vdwg.mxu0
        %10054 = vmatprep.subr.bf16.mxu0 %v9686
        %10055 = vmatpush1.bf16.msra.mxu0 %v9685
        %10056 = vmatprep.subr.bf16.mxu0 %v9678
        %10057 = vmatpush1.bf16.msra.mxu0 %v9677
        %10058 = vmatprep.subr.bf16.mxu0 %v9670
        %10059 = vmatpush1.bf16.msra.mxu0 %v9669
        %10060 = vmatprep.subr.bf16.mxu0 %v9662
        %10061 = vmatpush1.bf16.msra.mxu0 %v9661
        %10062 = vmatprep.subr.bf16.mxu0 %v9654
        %10063 = vmatpush1.bf16.msra.mxu0 %v9653
        %10064 = vmatprep.subr.bf16.mxu0 %v9646
        %10065 = vmatpush1.bf16.msra.mxu0 %v9645
        %10066 = vmatprep.subr.bf16.mxu0 %v9638
        %10067 = vmatpush1.bf16.msra.mxu0 %v9637
        %10068 = vmatprep.subr.bf16.mxu0 %v9630
        %10069 = vmatpush1.bf16.msra.mxu0 %v9629
        %10070 = vmatprep.subr.bf16.mxu0 %v9750
        %10071 = vmatpush2.bf16.msra.mxu0 %v9749
        %10072 = vmatprep.subr.bf16.mxu0 %v9742
        %10073 = vmatpush2.bf16.msra.mxu0 %v9741
        %10074 = vmatprep.subr.bf16.mxu0 %v9734
        %10075 = vmatpush2.bf16.msra.mxu0 %v9733
        %10076 = vmatprep.subr.bf16.mxu0 %v9726
        %10077 = vmatpush2.bf16.msra.mxu0 %v9725
        %10078 = vmatprep.subr.bf16.mxu0 %v9718
        %10079 = vmatpush2.bf16.msra.mxu0 %v9717
        %10080 = vmatprep.subr.bf16.mxu0 %v9710
        %10081 = vmatpush2.bf16.msra.mxu0 %v9709
        %10082 = vmatprep.subr.bf16.mxu0 %v9702
        %10083 = vmatpush2.bf16.msra.mxu0 %v9701
        %10084 = vmatprep.subr.bf16.mxu0 %v9694
        %10085 = vmatpush2.bf16.msra.mxu0 %v9693
        %10086 = vmatprep.mubr.bf16.mxu0 %v8728
        %10087 = vmatmul.mubr.bf16.gmra.mxu0 %v8727
        %v10088 = vpop.f32.mrf.mxu0
        %v10089 = vadd.f32 %v10048, %v10088
        %v10090 = vpop.f32.mrf.mxu0
        %v10091 = vadd.f32 %v10050, %v10090
        %v10092 = vpop.f32.mrf.mxu0
        %v10093 = vpop.f32.mrf.mxu0
        %10094 = vdwg.mxu0
        %10095 = vmatprep.subr.bf16.mxu0 %v9560
        %10096 = vmatpush1.bf16.msra.mxu0 %v9559
        %10097 = vmatprep.subr.bf16.mxu0 %v9552
        %10098 = vmatpush1.bf16.msra.mxu0 %v9551
        %10099 = vmatprep.subr.bf16.mxu0 %v9544
        %10100 = vmatpush1.bf16.msra.mxu0 %v9543
        %10101 = vmatprep.subr.bf16.mxu0 %v9536
        %10102 = vmatpush1.bf16.msra.mxu0 %v9535
        %10103 = vmatprep.subr.bf16.mxu0 %v9528
        %10104 = vmatpush1.bf16.msra.mxu0 %v9527
        %10105 = vmatprep.subr.bf16.mxu0 %v9520
        %10106 = vmatpush1.bf16.msra.mxu0 %v9519
        %10107 = vmatprep.subr.bf16.mxu0 %v9512
        %10108 = vmatpush1.bf16.msra.mxu0 %v9511
        %10109 = vmatprep.subr.bf16.mxu0 %v9504
        %10110 = vmatpush1.bf16.msra.mxu0 %v9503
        %10111 = vmatprep.subr.bf16.mxu0 %v9624
        %10112 = vmatpush2.bf16.msra.mxu0 %v9623
        %10113 = vmatprep.subr.bf16.mxu0 %v9616
        %10114 = vmatpush2.bf16.msra.mxu0 %v9615
        %10115 = vmatprep.subr.bf16.mxu0 %v9608
        %10116 = vmatpush2.bf16.msra.mxu0 %v9607
        %10117 = vmatprep.subr.bf16.mxu0 %v9600
        %10118 = vmatpush2.bf16.msra.mxu0 %v9599
        %10119 = vmatprep.subr.bf16.mxu0 %v9592
        %10120 = vmatpush2.bf16.msra.mxu0 %v9591
        %10121 = vmatprep.subr.bf16.mxu0 %v9584
        %10122 = vmatpush2.bf16.msra.mxu0 %v9583
        %10123 = vmatprep.subr.bf16.mxu0 %v9576
        %10124 = vmatpush2.bf16.msra.mxu0 %v9575
        %10125 = vmatprep.subr.bf16.mxu0 %v9568
        %10126 = vmatpush2.bf16.msra.mxu0 %v9567
        %10127 = vmatprep.mubr.bf16.mxu0 %v8726
        %10128 = vmatmul.mubr.bf16.gmra.mxu0 %v8719
        %v10129 = vpop.f32.mrf.mxu0
        %v10130 = vadd.f32 0.0, %v10129
        %v10131 = vpop.f32.mrf.mxu0
        %v10132 = vadd.f32 0.0, %v10131
        %v10133 = vpop.f32.mrf.mxu0
        %v10134 = vpop.f32.mrf.mxu0
        %10135 = vdwg.mxu0
        %10136 = vmatprep.subr.bf16.mxu0 %v9688
        %10137 = vmatpush1.bf16.msra.mxu0 %v9687
        %10138 = vmatprep.subr.bf16.mxu0 %v9680
        %10139 = vmatpush1.bf16.msra.mxu0 %v9679
        %10140 = vmatprep.subr.bf16.mxu0 %v9672
        %10141 = vmatpush1.bf16.msra.mxu0 %v9671
        %10142 = vmatprep.subr.bf16.mxu0 %v9664
        %10143 = vmatpush1.bf16.msra.mxu0 %v9663
        %10144 = vmatprep.subr.bf16.mxu0 %v9656
        %10145 = vmatpush1.bf16.msra.mxu0 %v9655
        %10146 = vmatprep.subr.bf16.mxu0 %v9648
        %10147 = vmatpush1.bf16.msra.mxu0 %v9647
        %10148 = vmatprep.subr.bf16.mxu0 %v9640
        %10149 = vmatpush1.bf16.msra.mxu0 %v9639
        %10150 = vmatprep.subr.bf16.mxu0 %v9632
        %10151 = vmatpush1.bf16.msra.mxu0 %v9631
        %10152 = vmatprep.subr.bf16.mxu0 %v9752
        %10153 = vmatpush2.bf16.msra.mxu0 %v9751
        %10154 = vmatprep.subr.bf16.mxu0 %v9744
        %10155 = vmatpush2.bf16.msra.mxu0 %v9743
        %10156 = vmatprep.subr.bf16.mxu0 %v9736
        %10157 = vmatpush2.bf16.msra.mxu0 %v9735
        %10158 = vmatprep.subr.bf16.mxu0 %v9728
        %10159 = vmatpush2.bf16.msra.mxu0 %v9727
        %10160 = vmatprep.subr.bf16.mxu0 %v9720
        %10161 = vmatpush2.bf16.msra.mxu0 %v9719
        %10162 = vmatprep.subr.bf16.mxu0 %v9712
        %10163 = vmatpush2.bf16.msra.mxu0 %v9711
        %10164 = vmatprep.subr.bf16.mxu0 %v9704
        %10165 = vmatpush2.bf16.msra.mxu0 %v9703
        %10166 = vmatprep.subr.bf16.mxu0 %v9696
        %10167 = vmatpush2.bf16.msra.mxu0 %v9695
        %10168 = vmatprep.mubr.bf16.mxu0 %v8728
        %10169 = vmatmul.mubr.bf16.gmra.mxu0 %v8727
        %v10170 = vpop.f32.mrf.mxu0
        %v10171 = vadd.f32 %v10130, %v10170
        %v10172 = vpop.f32.mrf.mxu0
        %v10173 = vadd.f32 %v10132, %v10172
        %v10174 = vpop.f32.mrf.mxu0
        %v10175 = vpop.f32.mrf.mxu0
        %10176 = vdwg.mxu0
        %10177 = vmatprep.subr.bf16.mxu0 %v9562
        %10178 = vmatpush1.bf16.msra.mxu0 %v9561
        %10179 = vmatprep.subr.bf16.mxu0 %v9554
        %10180 = vmatpush1.bf16.msra.mxu0 %v9553
        %10181 = vmatprep.subr.bf16.mxu0 %v9546
        %10182 = vmatpush1.bf16.msra.mxu0 %v9545
        %10183 = vmatprep.subr.bf16.mxu0 %v9538
        %10184 = vmatpush1.bf16.msra.mxu0 %v9537
        %10185 = vmatprep.subr.bf16.mxu0 %v9530
        %10186 = vmatpush1.bf16.msra.mxu0 %v9529
        %10187 = vmatprep.subr.bf16.mxu0 %v9522
        %10188 = vmatpush1.bf16.msra.mxu0 %v9521
        %10189 = vmatprep.subr.bf16.mxu0 %v9514
        %10190 = vmatpush1.bf16.msra.mxu0 %v9513
        %10191 = vmatprep.subr.bf16.mxu0 %v9506
        %10192 = vmatpush1.bf16.msra.mxu0 %v9505
        %10193 = vmatprep.subr.bf16.mxu0 %v9626
        %10194 = vmatpush2.bf16.msra.mxu0 %v9625
        %10195 = vmatprep.subr.bf16.mxu0 %v9618
        %10196 = vmatpush2.bf16.msra.mxu0 %v9617
        %10197 = vmatprep.subr.bf16.mxu0 %v9610
        %10198 = vmatpush2.bf16.msra.mxu0 %v9609
        %10199 = vmatprep.subr.bf16.mxu0 %v9602
        %10200 = vmatpush2.bf16.msra.mxu0 %v9601
        %10201 = vmatprep.subr.bf16.mxu0 %v9594
        %10202 = vmatpush2.bf16.msra.mxu0 %v9593
        %10203 = vmatprep.subr.bf16.mxu0 %v9586
        %10204 = vmatpush2.bf16.msra.mxu0 %v9585
        %10205 = vmatprep.subr.bf16.mxu0 %v9578
        %10206 = vmatpush2.bf16.msra.mxu0 %v9577
        %10207 = vmatprep.subr.bf16.mxu0 %v9570
        %10208 = vmatpush2.bf16.msra.mxu0 %v9569
        %10209 = vmatprep.mubr.bf16.mxu0 %v8726
        %10210 = vmatmul.mubr.bf16.gmra.mxu0 %v8719
        %v10211 = vpop.f32.mrf.mxu0
        %v10212 = vadd.f32 0.0, %v10211
        %v10213 = vpop.f32.mrf.mxu0
        %v10214 = vadd.f32 0.0, %v10213
        %v10215 = vpop.f32.mrf.mxu0
        %v10216 = vpop.f32.mrf.mxu0
        %10217 = vdwg.mxu0
        %10218 = vmatprep.subr.bf16.mxu0 %v9690
        %10219 = vmatpush1.bf16.msra.mxu0 %v9689
        %10220 = vmatprep.subr.bf16.mxu0 %v9682
        %10221 = vmatpush1.bf16.msra.mxu0 %v9681
        %10222 = vmatprep.subr.bf16.mxu0 %v9674
        %10223 = vmatpush1.bf16.msra.mxu0 %v9673
        %10224 = vmatprep.subr.bf16.mxu0 %v9666
        %10225 = vmatpush1.bf16.msra.mxu0 %v9665
        %10226 = vmatprep.subr.bf16.mxu0 %v9658
        %10227 = vmatpush1.bf16.msra.mxu0 %v9657
        %10228 = vmatprep.subr.bf16.mxu0 %v9650
        %10229 = vmatpush1.bf16.msra.mxu0 %v9649
        %10230 = vmatprep.subr.bf16.mxu0 %v9642
        %10231 = vmatpush1.bf16.msra.mxu0 %v9641
        %10232 = vmatprep.subr.bf16.mxu0 %v9634
        %10233 = vmatpush1.bf16.msra.mxu0 %v9633
        %10234 = vmatprep.subr.bf16.mxu0 %v9754
        %10235 = vmatpush2.bf16.msra.mxu0 %v9753
        %10236 = vmatprep.subr.bf16.mxu0 %v9746
        %10237 = vmatpush2.bf16.msra.mxu0 %v9745
        %10238 = vmatprep.subr.bf16.mxu0 %v9738
        %10239 = vmatpush2.bf16.msra.mxu0 %v9737
        %10240 = vmatprep.subr.bf16.mxu0 %v9730
        %10241 = vmatpush2.bf16.msra.mxu0 %v9729
        %10242 = vmatprep.subr.bf16.mxu0 %v9722
        %10243 = vmatpush2.bf16.msra.mxu0 %v9721
        %10244 = vmatprep.subr.bf16.mxu0 %v9714
        %10245 = vmatpush2.bf16.msra.mxu0 %v9713
        %10246 = vmatprep.subr.bf16.mxu0 %v9706
        %10247 = vmatpush2.bf16.msra.mxu0 %v9705
        %10248 = vmatprep.subr.bf16.mxu0 %v9698
        %10249 = vmatpush2.bf16.msra.mxu0 %v9697
        %10250 = vmatprep.mubr.bf16.mxu0 %v8728
        %10251 = vmatmul.mubr.bf16.gmra.mxu0 %v8727
        %v10252 = vpop.f32.mrf.mxu0
        %v10253 = vadd.f32 %v10212, %v10252
        %v10254 = vpop.f32.mrf.mxu0
        %v10255 = vadd.f32 %v10214, %v10254
        %v10256 = vpop.f32.mrf.mxu0
        %v10257 = vpop.f32.mrf.mxu0
        %10258 = vdwg.mxu0
        %10259 = vmatprep.subr.bf16.mxu0 %v9564
        %10260 = vmatpush1.bf16.msra.mxu0 %v9563
        %10261 = vmatprep.subr.bf16.mxu0 %v9556
        %10262 = vmatpush1.bf16.msra.mxu0 %v9555
        %10263 = vmatprep.subr.bf16.mxu0 %v9548
        %10264 = vmatpush1.bf16.msra.mxu0 %v9547
        %10265 = vmatprep.subr.bf16.mxu0 %v9540
        %10266 = vmatpush1.bf16.msra.mxu0 %v9539
        %10267 = vmatprep.subr.bf16.mxu0 %v9532
        %10268 = vmatpush1.bf16.msra.mxu0 %v9531
        %10269 = vmatprep.subr.bf16.mxu0 %v9524
        %10270 = vmatpush1.bf16.msra.mxu0 %v9523
        %10271 = vmatprep.subr.bf16.mxu0 %v9516
        %10272 = vmatpush1.bf16.msra.mxu0 %v9515
        %10273 = vmatprep.subr.bf16.mxu0 %v9508
        %10274 = vmatpush1.bf16.msra.mxu0 %v9507
        %10275 = vmatprep.subr.bf16.mxu0 %v9628
        %10276 = vmatpush2.bf16.msra.mxu0 %v9627
        %10277 = vmatprep.subr.bf16.mxu0 %v9620
        %10278 = vmatpush2.bf16.msra.mxu0 %v9619
        %10279 = vmatprep.subr.bf16.mxu0 %v9612
        %10280 = vmatpush2.bf16.msra.mxu0 %v9611
        %10281 = vmatprep.subr.bf16.mxu0 %v9604
        %10282 = vmatpush2.bf16.msra.mxu0 %v9603
        %10283 = vmatprep.subr.bf16.mxu0 %v9596
        %10284 = vmatpush2.bf16.msra.mxu0 %v9595
        %10285 = vmatprep.subr.bf16.mxu0 %v9588
        %10286 = vmatpush2.bf16.msra.mxu0 %v9587
        %10287 = vmatprep.subr.bf16.mxu0 %v9580
        %10288 = vmatpush2.bf16.msra.mxu0 %v9579
        %10289 = vmatprep.subr.bf16.mxu0 %v9572
        %10290 = vmatpush2.bf16.msra.mxu0 %v9571
        %10291 = vmatprep.mubr.bf16.mxu0 %v8726
        %10292 = vmatmul.mubr.bf16.gmra.mxu0 %v8719
        %v10293 = vpop.f32.mrf.mxu0
        %v10294 = vadd.f32 0.0, %v10293
        %v10295 = vpop.f32.mrf.mxu0
        %v10296 = vadd.f32 0.0, %v10295
        %v10297 = vpop.f32.mrf.mxu0
        %v10298 = vpop.f32.mrf.mxu0
        %10299 = vdwg.mxu0
        %10300 = vmatprep.subr.bf16.mxu0 %v9692
        %10301 = vmatpush1.bf16.msra.mxu0 %v9691
        %10302 = vmatprep.subr.bf16.mxu0 %v9684
        %10303 = vmatpush1.bf16.msra.mxu0 %v9683
        %10304 = vmatprep.subr.bf16.mxu0 %v9676
        %10305 = vmatpush1.bf16.msra.mxu0 %v9675
        %10306 = vmatprep.subr.bf16.mxu0 %v9668
        %10307 = vmatpush1.bf16.msra.mxu0 %v9667
        %10308 = vmatprep.subr.bf16.mxu0 %v9660
        %10309 = vmatpush1.bf16.msra.mxu0 %v9659
        %10310 = vmatprep.subr.bf16.mxu0 %v9652
        %10311 = vmatpush1.bf16.msra.mxu0 %v9651
        %10312 = vmatprep.subr.bf16.mxu0 %v9644
        %10313 = vmatpush1.bf16.msra.mxu0 %v9643
        %10314 = vmatprep.subr.bf16.mxu0 %v9636
        %10315 = vmatpush1.bf16.msra.mxu0 %v9635
        %10316 = vmatprep.subr.bf16.mxu0 %v9756
        %10317 = vmatpush2.bf16.msra.mxu0 %v9755
        %10318 = vmatprep.subr.bf16.mxu0 %v9748
        %10319 = vmatpush2.bf16.msra.mxu0 %v9747
        %10320 = vmatprep.subr.bf16.mxu0 %v9740
        %10321 = vmatpush2.bf16.msra.mxu0 %v9739
        %10322 = vmatprep.subr.bf16.mxu0 %v9732
        %10323 = vmatpush2.bf16.msra.mxu0 %v9731
        %10324 = vmatprep.subr.bf16.mxu0 %v9724
        %10325 = vmatpush2.bf16.msra.mxu0 %v9723
        %10326 = vmatprep.subr.bf16.mxu0 %v9716
        %10327 = vmatpush2.bf16.msra.mxu0 %v9715
        %10328 = vmatprep.subr.bf16.mxu0 %v9708
        %10329 = vmatpush2.bf16.msra.mxu0 %v9707
        %10330 = vmatprep.subr.bf16.mxu0 %v9700
        %10331 = vmatpush2.bf16.msra.mxu0 %v9699
        %10332 = vmatprep.mubr.bf16.mxu0 %v8728
        %10333 = vmatmul.mubr.bf16.gmra.mxu0 %v8727
        %v10334 = vpop.f32.mrf.mxu0
        %v10335 = vadd.f32 %v10294, %v10334
        %v10336 = vpop.f32.mrf.mxu0
        %v10337 = vadd.f32 %v10296, %v10336
        %v10338 = vpop.f32.mrf.mxu0
        %v10339 = vpop.f32.mrf.mxu0
        %10340 = vdwg.mxu0
        %v10341 = vadd.f32 %v8191, %v10089
        %v10342 = vadd.f32 %v8193, %v10091
        %v10343 = vadd.f32 %v8273, %v10171
        %v10344 = vadd.f32 %v8275, %v10173
        %v10345 = vadd.f32 %v8355, %v10253
        %v10346 = vadd.f32 %v8357, %v10255
        %v10347 = vadd.f32 %v8437, %v10335
        %v10348 = vadd.f32 %v8439, %v10337
        %s10349 = sadd.s32 %s4648, 3
        %s10350 = smul.u32 %s10349, 4
        %s10351 = scalar_lea.vmem [#allocation2], %s10350
        %v10352 = vld [vmem:[%s10351] sm:$0xf]
        %s10353 = scalar_lea.vmem %s240, 6144 [#allocation3]
        %v10354 = vld [vmem:[%s10353] sm:$0xff]
        %v10355 = vld [vmem:[%s10353 + $0x8] sm:$0xff]
        %v10356 = vld [vmem:[%s10353 + $0x10] sm:$0xff]
        %v10357 = vld [vmem:[%s10353 + $0x18] sm:$0xff]
        %v10358 = vld [vmem:[%s10353 + $0x20] sm:$0xff]
        %v10359 = vld [vmem:[%s10353 + $0x28] sm:$0xff]
        %v10360 = vld [vmem:[%s10353 + $0x30] sm:$0xff]
        %v10361 = vld [vmem:[%s10353 + $0x38] sm:$0xff]
        %v10362 = vld [vmem:[%s10353 + $0x40] sm:$0xff]
        %v10363 = vld [vmem:[%s10353 + $0x48] sm:$0xff]
        %v10364 = vld [vmem:[%s10353 + $0x50] sm:$0xff]
        %v10365 = vld [vmem:[%s10353 + $0x58] sm:$0xff]
        %v10366 = vld [vmem:[%s10353 + $0x60] sm:$0xff]
        %v10367 = vld [vmem:[%s10353 + $0x68] sm:$0xff]
        %v10368 = vld [vmem:[%s10353 + $0x70] sm:$0xff]
        %v10369 = vld [vmem:[%s10353 + $0x78] sm:$0xff]
        %v10370 = vld [vmem:[%s10353 + $0x80] sm:$0xff]
        %v10371 = vld [vmem:[%s10353 + $0x88] sm:$0xff]
        %v10372 = vld [vmem:[%s10353 + $0x90] sm:$0xff]
        %v10373 = vld [vmem:[%s10353 + $0x98] sm:$0xff]
        %v10374 = vld [vmem:[%s10353 + $0xa0] sm:$0xff]
        %v10375 = vld [vmem:[%s10353 + $0xa8] sm:$0xff]
        %v10376 = vld [vmem:[%s10353 + $0xb0] sm:$0xff]
        %v10377 = vld [vmem:[%s10353 + $0xb8] sm:$0xff]
        %v10378 = vld [vmem:[%s10353 + $0xc0] sm:$0xff]
        %v10379 = vld [vmem:[%s10353 + $0xc8] sm:$0xff]
        %v10380 = vld [vmem:[%s10353 + $0xd0] sm:$0xff]
        %v10381 = vld [vmem:[%s10353 + $0xd8] sm:$0xff]
        %v10382 = vld [vmem:[%s10353 + $0xe0] sm:$0xff]
        %v10383 = vld [vmem:[%s10353 + $0xe8] sm:$0xff]
        %v10384 = vld [vmem:[%s10353 + $0xf0] sm:$0xff]
        %v10385 = vld [vmem:[%s10353 + $0xf8] sm:$0xff]
        %v10386 = vld [vmem:[%s10353 + $0x100] sm:$0xff]
        %v10387 = vld [vmem:[%s10353 + $0x108] sm:$0xff]
        %v10388 = vld [vmem:[%s10353 + $0x110] sm:$0xff]
        %v10389 = vld [vmem:[%s10353 + $0x118] sm:$0xff]
        %v10390 = vld [vmem:[%s10353 + $0x120] sm:$0xff]
        %v10391 = vld [vmem:[%s10353 + $0x128] sm:$0xff]
        %v10392 = vld [vmem:[%s10353 + $0x130] sm:$0xff]
        %v10393 = vld [vmem:[%s10353 + $0x138] sm:$0xff]
        %v10394 = vld [vmem:[%s10353 + $0x140] sm:$0xff]
        %v10395 = vld [vmem:[%s10353 + $0x148] sm:$0xff]
        %v10396 = vld [vmem:[%s10353 + $0x150] sm:$0xff]
        %v10397 = vld [vmem:[%s10353 + $0x158] sm:$0xff]
        %v10398 = vld [vmem:[%s10353 + $0x160] sm:$0xff]
        %v10399 = vld [vmem:[%s10353 + $0x168] sm:$0xff]
        %v10400 = vld [vmem:[%s10353 + $0x170] sm:$0xff]
        %v10401 = vld [vmem:[%s10353 + $0x178] sm:$0xff]
        %v10402 = vld [vmem:[%s10353 + $0x180] sm:$0xff]
        %v10403 = vld [vmem:[%s10353 + $0x188] sm:$0xff]
        %v10404 = vld [vmem:[%s10353 + $0x190] sm:$0xff]
        %v10405 = vld [vmem:[%s10353 + $0x198] sm:$0xff]
        %v10406 = vld [vmem:[%s10353 + $0x1a0] sm:$0xff]
        %v10407 = vld [vmem:[%s10353 + $0x1a8] sm:$0xff]
        %v10408 = vld [vmem:[%s10353 + $0x1b0] sm:$0xff]
        %v10409 = vld [vmem:[%s10353 + $0x1b8] sm:$0xff]
        %v10410 = vld [vmem:[%s10353 + $0x1c0] sm:$0xff]
        %v10411 = vld [vmem:[%s10353 + $0x1c8] sm:$0xff]
        %v10412 = vld [vmem:[%s10353 + $0x1d0] sm:$0xff]
        %v10413 = vld [vmem:[%s10353 + $0x1d8] sm:$0xff]
        %v10414 = vld [vmem:[%s10353 + $0x1e0] sm:$0xff]
        %v10415 = vld [vmem:[%s10353 + $0x1e8] sm:$0xff]
        %v10416 = vld [vmem:[%s10353 + $0x1f0] sm:$0xff]
        %v10417 = vld [vmem:[%s10353 + $0x1f8] sm:$0xff]
        %v10418 = vld [vmem:[%s10353 + $0x200] sm:$0xff]
        %v10419 = vld [vmem:[%s10353 + $0x208] sm:$0xff]
        %v10420 = vld [vmem:[%s10353 + $0x210] sm:$0xff]
        %v10421 = vld [vmem:[%s10353 + $0x218] sm:$0xff]
        %v10422 = vld [vmem:[%s10353 + $0x220] sm:$0xff]
        %v10423 = vld [vmem:[%s10353 + $0x228] sm:$0xff]
        %v10424 = vld [vmem:[%s10353 + $0x230] sm:$0xff]
        %v10425 = vld [vmem:[%s10353 + $0x238] sm:$0xff]
        %v10426 = vld [vmem:[%s10353 + $0x240] sm:$0xff]
        %v10427 = vld [vmem:[%s10353 + $0x248] sm:$0xff]
        %v10428 = vld [vmem:[%s10353 + $0x250] sm:$0xff]
        %v10429 = vld [vmem:[%s10353 + $0x258] sm:$0xff]
        %v10430 = vld [vmem:[%s10353 + $0x260] sm:$0xff]
        %v10431 = vld [vmem:[%s10353 + $0x268] sm:$0xff]
        %v10432 = vld [vmem:[%s10353 + $0x270] sm:$0xff]
        %v10433 = vld [vmem:[%s10353 + $0x278] sm:$0xff]
        %v10434 = vld [vmem:[%s10353 + $0x280] sm:$0xff]
        %v10435 = vld [vmem:[%s10353 + $0x288] sm:$0xff]
        %v10436 = vld [vmem:[%s10353 + $0x290] sm:$0xff]
        %v10437 = vld [vmem:[%s10353 + $0x298] sm:$0xff]
        %v10438 = vld [vmem:[%s10353 + $0x2a0] sm:$0xff]
        %v10439 = vld [vmem:[%s10353 + $0x2a8] sm:$0xff]
        %v10440 = vld [vmem:[%s10353 + $0x2b0] sm:$0xff]
        %v10441 = vld [vmem:[%s10353 + $0x2b8] sm:$0xff]
        %v10442 = vld [vmem:[%s10353 + $0x2c0] sm:$0xff]
        %v10443 = vld [vmem:[%s10353 + $0x2c8] sm:$0xff]
        %v10444 = vld [vmem:[%s10353 + $0x2d0] sm:$0xff]
        %v10445 = vld [vmem:[%s10353 + $0x2d8] sm:$0xff]
        %v10446 = vld [vmem:[%s10353 + $0x2e0] sm:$0xff]
        %v10447 = vld [vmem:[%s10353 + $0x2e8] sm:$0xff]
        %v10448 = vld [vmem:[%s10353 + $0x2f0] sm:$0xff]
        %v10449 = vld [vmem:[%s10353 + $0x2f8] sm:$0xff]
        %v10450 = vld [vmem:[%s10353 + $0x300] sm:$0xff]
        %v10451 = vld [vmem:[%s10353 + $0x308] sm:$0xff]
        %v10452 = vld [vmem:[%s10353 + $0x310] sm:$0xff]
        %v10453 = vld [vmem:[%s10353 + $0x318] sm:$0xff]
        %v10454 = vld [vmem:[%s10353 + $0x320] sm:$0xff]
        %v10455 = vld [vmem:[%s10353 + $0x328] sm:$0xff]
        %v10456 = vld [vmem:[%s10353 + $0x330] sm:$0xff]
        %v10457 = vld [vmem:[%s10353 + $0x338] sm:$0xff]
        %v10458 = vld [vmem:[%s10353 + $0x340] sm:$0xff]
        %v10459 = vld [vmem:[%s10353 + $0x348] sm:$0xff]
        %v10460 = vld [vmem:[%s10353 + $0x350] sm:$0xff]
        %v10461 = vld [vmem:[%s10353 + $0x358] sm:$0xff]
        %v10462 = vld [vmem:[%s10353 + $0x360] sm:$0xff]
        %v10463 = vld [vmem:[%s10353 + $0x368] sm:$0xff]
        %v10464 = vld [vmem:[%s10353 + $0x370] sm:$0xff]
        %v10465 = vld [vmem:[%s10353 + $0x378] sm:$0xff]
        %v10466 = vld [vmem:[%s10353 + $0x380] sm:$0xff]
        %v10467 = vld [vmem:[%s10353 + $0x388] sm:$0xff]
        %v10468 = vld [vmem:[%s10353 + $0x390] sm:$0xff]
        %v10469 = vld [vmem:[%s10353 + $0x398] sm:$0xff]
        %v10470 = vld [vmem:[%s10353 + $0x3a0] sm:$0xff]
        %v10471 = vld [vmem:[%s10353 + $0x3a8] sm:$0xff]
        %v10472 = vld [vmem:[%s10353 + $0x3b0] sm:$0xff]
        %v10473 = vld [vmem:[%s10353 + $0x3b8] sm:$0xff]
        %v10474 = vld [vmem:[%s10353 + $0x3c0] sm:$0xff]
        %v10475 = vld [vmem:[%s10353 + $0x3c8] sm:$0xff]
        %v10476 = vld [vmem:[%s10353 + $0x3d0] sm:$0xff]
        %v10477 = vld [vmem:[%s10353 + $0x3d8] sm:$0xff]
        %v10478 = vld [vmem:[%s10353 + $0x3e0] sm:$0xff]
        %v10479 = vld [vmem:[%s10353 + $0x3e8] sm:$0xff]
        %v10480 = vld [vmem:[%s10353 + $0x3f0] sm:$0xff]
        %v10481 = vld [vmem:[%s10353 + $0x3f8] sm:$0xff]
        %v10482 = vld [vmem:[%s10353 + $0x400] sm:$0xff]
        %v10483 = vld [vmem:[%s10353 + $0x408] sm:$0xff]
        %v10484 = vld [vmem:[%s10353 + $0x410] sm:$0xff]
        %v10485 = vld [vmem:[%s10353 + $0x418] sm:$0xff]
        %v10486 = vld [vmem:[%s10353 + $0x420] sm:$0xff]
        %v10487 = vld [vmem:[%s10353 + $0x428] sm:$0xff]
        %v10488 = vld [vmem:[%s10353 + $0x430] sm:$0xff]
        %v10489 = vld [vmem:[%s10353 + $0x438] sm:$0xff]
        %v10490 = vld [vmem:[%s10353 + $0x440] sm:$0xff]
        %v10491 = vld [vmem:[%s10353 + $0x448] sm:$0xff]
        %v10492 = vld [vmem:[%s10353 + $0x450] sm:$0xff]
        %v10493 = vld [vmem:[%s10353 + $0x458] sm:$0xff]
        %v10494 = vld [vmem:[%s10353 + $0x460] sm:$0xff]
        %v10495 = vld [vmem:[%s10353 + $0x468] sm:$0xff]
        %v10496 = vld [vmem:[%s10353 + $0x470] sm:$0xff]
        %v10497 = vld [vmem:[%s10353 + $0x478] sm:$0xff]
        %v10498 = vld [vmem:[%s10353 + $0x480] sm:$0xff]
        %v10499 = vld [vmem:[%s10353 + $0x488] sm:$0xff]
        %v10500 = vld [vmem:[%s10353 + $0x490] sm:$0xff]
        %v10501 = vld [vmem:[%s10353 + $0x498] sm:$0xff]
        %v10502 = vld [vmem:[%s10353 + $0x4a0] sm:$0xff]
        %v10503 = vld [vmem:[%s10353 + $0x4a8] sm:$0xff]
        %v10504 = vld [vmem:[%s10353 + $0x4b0] sm:$0xff]
        %v10505 = vld [vmem:[%s10353 + $0x4b8] sm:$0xff]
        %v10506 = vld [vmem:[%s10353 + $0x4c0] sm:$0xff]
        %v10507 = vld [vmem:[%s10353 + $0x4c8] sm:$0xff]
        %v10508 = vld [vmem:[%s10353 + $0x4d0] sm:$0xff]
        %v10509 = vld [vmem:[%s10353 + $0x4d8] sm:$0xff]
        %v10510 = vld [vmem:[%s10353 + $0x4e0] sm:$0xff]
        %v10511 = vld [vmem:[%s10353 + $0x4e8] sm:$0xff]
        %v10512 = vld [vmem:[%s10353 + $0x4f0] sm:$0xff]
        %v10513 = vld [vmem:[%s10353 + $0x4f8] sm:$0xff]
        %v10514 = vld [vmem:[%s10353 + $0x500] sm:$0xff]
        %v10515 = vld [vmem:[%s10353 + $0x508] sm:$0xff]
        %v10516 = vld [vmem:[%s10353 + $0x510] sm:$0xff]
        %v10517 = vld [vmem:[%s10353 + $0x518] sm:$0xff]
        %v10518 = vld [vmem:[%s10353 + $0x520] sm:$0xff]
        %v10519 = vld [vmem:[%s10353 + $0x528] sm:$0xff]
        %v10520 = vld [vmem:[%s10353 + $0x530] sm:$0xff]
        %v10521 = vld [vmem:[%s10353 + $0x538] sm:$0xff]
        %v10522 = vld [vmem:[%s10353 + $0x540] sm:$0xff]
        %v10523 = vld [vmem:[%s10353 + $0x548] sm:$0xff]
        %v10524 = vld [vmem:[%s10353 + $0x550] sm:$0xff]
        %v10525 = vld [vmem:[%s10353 + $0x558] sm:$0xff]
        %v10526 = vld [vmem:[%s10353 + $0x560] sm:$0xff]
        %v10527 = vld [vmem:[%s10353 + $0x568] sm:$0xff]
        %v10528 = vld [vmem:[%s10353 + $0x570] sm:$0xff]
        %v10529 = vld [vmem:[%s10353 + $0x578] sm:$0xff]
        %v10530 = vld [vmem:[%s10353 + $0x580] sm:$0xff]
        %v10531 = vld [vmem:[%s10353 + $0x588] sm:$0xff]
        %v10532 = vld [vmem:[%s10353 + $0x590] sm:$0xff]
        %v10533 = vld [vmem:[%s10353 + $0x598] sm:$0xff]
        %v10534 = vld [vmem:[%s10353 + $0x5a0] sm:$0xff]
        %v10535 = vld [vmem:[%s10353 + $0x5a8] sm:$0xff]
        %v10536 = vld [vmem:[%s10353 + $0x5b0] sm:$0xff]
        %v10537 = vld [vmem:[%s10353 + $0x5b8] sm:$0xff]
        %v10538 = vld [vmem:[%s10353 + $0x5c0] sm:$0xff]
        %v10539 = vld [vmem:[%s10353 + $0x5c8] sm:$0xff]
        %v10540 = vld [vmem:[%s10353 + $0x5d0] sm:$0xff]
        %v10541 = vld [vmem:[%s10353 + $0x5d8] sm:$0xff]
        %v10542 = vld [vmem:[%s10353 + $0x5e0] sm:$0xff]
        %v10543 = vld [vmem:[%s10353 + $0x5e8] sm:$0xff]
        %v10544 = vld [vmem:[%s10353 + $0x5f0] sm:$0xff]
        %v10545 = vld [vmem:[%s10353 + $0x5f8] sm:$0xff]
        %v10546 = vld [vmem:[%s10353 + $0x600] sm:$0xff]
        %v10547 = vld [vmem:[%s10353 + $0x608] sm:$0xff]
        %v10548 = vld [vmem:[%s10353 + $0x610] sm:$0xff]
        %v10549 = vld [vmem:[%s10353 + $0x618] sm:$0xff]
        %v10550 = vld [vmem:[%s10353 + $0x620] sm:$0xff]
        %v10551 = vld [vmem:[%s10353 + $0x628] sm:$0xff]
        %v10552 = vld [vmem:[%s10353 + $0x630] sm:$0xff]
        %v10553 = vld [vmem:[%s10353 + $0x638] sm:$0xff]
        %v10554 = vld [vmem:[%s10353 + $0x640] sm:$0xff]
        %v10555 = vld [vmem:[%s10353 + $0x648] sm:$0xff]
        %v10556 = vld [vmem:[%s10353 + $0x650] sm:$0xff]
        %v10557 = vld [vmem:[%s10353 + $0x658] sm:$0xff]
        %v10558 = vld [vmem:[%s10353 + $0x660] sm:$0xff]
        %v10559 = vld [vmem:[%s10353 + $0x668] sm:$0xff]
        %v10560 = vld [vmem:[%s10353 + $0x670] sm:$0xff]
        %v10561 = vld [vmem:[%s10353 + $0x678] sm:$0xff]
        %v10562 = vld [vmem:[%s10353 + $0x680] sm:$0xff]
        %v10563 = vld [vmem:[%s10353 + $0x688] sm:$0xff]
        %v10564 = vld [vmem:[%s10353 + $0x690] sm:$0xff]
        %v10565 = vld [vmem:[%s10353 + $0x698] sm:$0xff]
        %v10566 = vld [vmem:[%s10353 + $0x6a0] sm:$0xff]
        %v10567 = vld [vmem:[%s10353 + $0x6a8] sm:$0xff]
        %v10568 = vld [vmem:[%s10353 + $0x6b0] sm:$0xff]
        %v10569 = vld [vmem:[%s10353 + $0x6b8] sm:$0xff]
        %v10570 = vld [vmem:[%s10353 + $0x6c0] sm:$0xff]
        %v10571 = vld [vmem:[%s10353 + $0x6c8] sm:$0xff]
        %v10572 = vld [vmem:[%s10353 + $0x6d0] sm:$0xff]
        %v10573 = vld [vmem:[%s10353 + $0x6d8] sm:$0xff]
        %v10574 = vld [vmem:[%s10353 + $0x6e0] sm:$0xff]
        %v10575 = vld [vmem:[%s10353 + $0x6e8] sm:$0xff]
        %v10576 = vld [vmem:[%s10353 + $0x6f0] sm:$0xff]
        %v10577 = vld [vmem:[%s10353 + $0x6f8] sm:$0xff]
        %v10578 = vld [vmem:[%s10353 + $0x700] sm:$0xff]
        %v10579 = vld [vmem:[%s10353 + $0x708] sm:$0xff]
        %v10580 = vld [vmem:[%s10353 + $0x710] sm:$0xff]
        %v10581 = vld [vmem:[%s10353 + $0x718] sm:$0xff]
        %v10582 = vld [vmem:[%s10353 + $0x720] sm:$0xff]
        %v10583 = vld [vmem:[%s10353 + $0x728] sm:$0xff]
        %v10584 = vld [vmem:[%s10353 + $0x730] sm:$0xff]
        %v10585 = vld [vmem:[%s10353 + $0x738] sm:$0xff]
        %v10586 = vld [vmem:[%s10353 + $0x740] sm:$0xff]
        %v10587 = vld [vmem:[%s10353 + $0x748] sm:$0xff]
        %v10588 = vld [vmem:[%s10353 + $0x750] sm:$0xff]
        %v10589 = vld [vmem:[%s10353 + $0x758] sm:$0xff]
        %v10590 = vld [vmem:[%s10353 + $0x760] sm:$0xff]
        %v10591 = vld [vmem:[%s10353 + $0x768] sm:$0xff]
        %v10592 = vld [vmem:[%s10353 + $0x770] sm:$0xff]
        %v10593 = vld [vmem:[%s10353 + $0x778] sm:$0xff]
        %v10594 = vld [vmem:[%s10353 + $0x780] sm:$0xff]
        %v10595 = vld [vmem:[%s10353 + $0x788] sm:$0xff]
        %v10596 = vld [vmem:[%s10353 + $0x790] sm:$0xff]
        %v10597 = vld [vmem:[%s10353 + $0x798] sm:$0xff]
        %v10598 = vld [vmem:[%s10353 + $0x7a0] sm:$0xff]
        %v10599 = vld [vmem:[%s10353 + $0x7a8] sm:$0xff]
        %v10600 = vld [vmem:[%s10353 + $0x7b0] sm:$0xff]
        %v10601 = vld [vmem:[%s10353 + $0x7b8] sm:$0xff]
        %v10602 = vld [vmem:[%s10353 + $0x7c0] sm:$0xff]
        %v10603 = vld [vmem:[%s10353 + $0x7c8] sm:$0xff]
        %v10604 = vld [vmem:[%s10353 + $0x7d0] sm:$0xff]
        %v10605 = vld [vmem:[%s10353 + $0x7d8] sm:$0xff]
        %v10606 = vld [vmem:[%s10353 + $0x7e0] sm:$0xff]
        %v10607 = vld [vmem:[%s10353 + $0x7e8] sm:$0xff]
        %v10608 = vld [vmem:[%s10353 + $0x7f0] sm:$0xff]
        %v10609 = vld [vmem:[%s10353 + $0x7f8] sm:$0xff]
        %v10612 = vunpack.c.l.s4 1966171168
        %v10613 = vunpack.c.0.s8 %v10612
        %v10614 = vlaneseq
        %v10615 = vshrl.u32 %v10614, 7
        %v10616 = vsub.s32 %v10613, %v10615
        %v10617 = vrot.slane %v10352, %v10616
        %v10618 = vcombine.high %v10617, %v10617
        %v10620 = vunpack.c.l.s4 1966171168
        %v10621 = vunpack.c.0.s8 %v10620
        %v10622 = vlaneseq
        %v10623 = vshrl.u32 %v10622, 7
        %v10624 = vsub.s32 %v10621, %v10623
        %v10625 = vrot.slane %v10617, %v10624
        %v10627 = vunpack.c.l.s4 1966171168
        %v10628 = vunpack.c.0.s8 %v10627
        %v10629 = vlaneseq
        %v10630 = vshrl.u32 %v10629, 7
        %v10631 = vsub.s32 %v10628, %v10630
        %v10632 = vrot.slane %v10618, %v10631
        %v10633 = vcombine.high %v10625, %v10625
        %v10634 = vcombine.high %v10632, %v10632
        %v10895 = vunpack.c.l.b16 %v10354
        %v10896 = vunpack.c.h.b16 %v10354
        %v10897 = vunpack.c.l.b16 %v10355
        %v10898 = vunpack.c.h.b16 %v10355
        %v10899 = vunpack.c.l.b16 %v10356
        %v10900 = vunpack.c.h.b16 %v10356
        %v10901 = vunpack.c.l.b16 %v10357
        %v10902 = vunpack.c.h.b16 %v10357
        %v10903 = vunpack.c.l.b16 %v10358
        %v10904 = vunpack.c.h.b16 %v10358
        %v10905 = vunpack.c.l.b16 %v10359
        %v10906 = vunpack.c.h.b16 %v10359
        %v10907 = vunpack.c.l.b16 %v10360
        %v10908 = vunpack.c.h.b16 %v10360
        %v10909 = vunpack.c.l.b16 %v10361
        %v10910 = vunpack.c.h.b16 %v10361
        %v10911 = vunpack.c.l.b16 %v10362
        %v10912 = vunpack.c.h.b16 %v10362
        %v10913 = vunpack.c.l.b16 %v10363
        %v10914 = vunpack.c.h.b16 %v10363
        %v10915 = vunpack.c.l.b16 %v10364
        %v10916 = vunpack.c.h.b16 %v10364
        %v10917 = vunpack.c.l.b16 %v10365
        %v10918 = vunpack.c.h.b16 %v10365
        %v10919 = vunpack.c.l.b16 %v10366
        %v10920 = vunpack.c.h.b16 %v10366
        %v10921 = vunpack.c.l.b16 %v10367
        %v10922 = vunpack.c.h.b16 %v10367
        %v10923 = vunpack.c.l.b16 %v10368
        %v10924 = vunpack.c.h.b16 %v10368
        %v10925 = vunpack.c.l.b16 %v10369
        %v10926 = vunpack.c.h.b16 %v10369
        %v10927 = vunpack.c.l.b16 %v10370
        %v10928 = vunpack.c.h.b16 %v10370
        %v10929 = vunpack.c.l.b16 %v10371
        %v10930 = vunpack.c.h.b16 %v10371
        %v10931 = vunpack.c.l.b16 %v10372
        %v10932 = vunpack.c.h.b16 %v10372
        %v10933 = vunpack.c.l.b16 %v10373
        %v10934 = vunpack.c.h.b16 %v10373
        %v10935 = vunpack.c.l.b16 %v10374
        %v10936 = vunpack.c.h.b16 %v10374
        %v10937 = vunpack.c.l.b16 %v10375
        %v10938 = vunpack.c.h.b16 %v10375
        %v10939 = vunpack.c.l.b16 %v10376
        %v10940 = vunpack.c.h.b16 %v10376
        %v10941 = vunpack.c.l.b16 %v10377
        %v10942 = vunpack.c.h.b16 %v10377
        %v10943 = vunpack.c.l.b16 %v10378
        %v10944 = vunpack.c.h.b16 %v10378
        %v10945 = vunpack.c.l.b16 %v10379
        %v10946 = vunpack.c.h.b16 %v10379
        %v10947 = vunpack.c.l.b16 %v10380
        %v10948 = vunpack.c.h.b16 %v10380
        %v10949 = vunpack.c.l.b16 %v10381
        %v10950 = vunpack.c.h.b16 %v10381
        %v10951 = vunpack.c.l.b16 %v10382
        %v10952 = vunpack.c.h.b16 %v10382
        %v10953 = vunpack.c.l.b16 %v10383
        %v10954 = vunpack.c.h.b16 %v10383
        %v10955 = vunpack.c.l.b16 %v10384
        %v10956 = vunpack.c.h.b16 %v10384
        %v10957 = vunpack.c.l.b16 %v10385
        %v10958 = vunpack.c.h.b16 %v10385
        %v10959 = vunpack.c.l.b16 %v10386
        %v10960 = vunpack.c.h.b16 %v10386
        %v10961 = vunpack.c.l.b16 %v10387
        %v10962 = vunpack.c.h.b16 %v10387
        %v10963 = vunpack.c.l.b16 %v10388
        %v10964 = vunpack.c.h.b16 %v10388
        %v10965 = vunpack.c.l.b16 %v10389
        %v10966 = vunpack.c.h.b16 %v10389
        %v10967 = vunpack.c.l.b16 %v10390
        %v10968 = vunpack.c.h.b16 %v10390
        %v10969 = vunpack.c.l.b16 %v10391
        %v10970 = vunpack.c.h.b16 %v10391
        %v10971 = vunpack.c.l.b16 %v10392
        %v10972 = vunpack.c.h.b16 %v10392
        %v10973 = vunpack.c.l.b16 %v10393
        %v10974 = vunpack.c.h.b16 %v10393
        %v10975 = vunpack.c.l.b16 %v10394
        %v10976 = vunpack.c.h.b16 %v10394
        %v10977 = vunpack.c.l.b16 %v10395
        %v10978 = vunpack.c.h.b16 %v10395
        %v10979 = vunpack.c.l.b16 %v10396
        %v10980 = vunpack.c.h.b16 %v10396
        %v10981 = vunpack.c.l.b16 %v10397
        %v10982 = vunpack.c.h.b16 %v10397
        %v10983 = vunpack.c.l.b16 %v10398
        %v10984 = vunpack.c.h.b16 %v10398
        %v10985 = vunpack.c.l.b16 %v10399
        %v10986 = vunpack.c.h.b16 %v10399
        %v10987 = vunpack.c.l.b16 %v10400
        %v10988 = vunpack.c.h.b16 %v10400
        %v10989 = vunpack.c.l.b16 %v10401
        %v10990 = vunpack.c.h.b16 %v10401
        %v10991 = vunpack.c.l.b16 %v10402
        %v10992 = vunpack.c.h.b16 %v10402
        %v10993 = vunpack.c.l.b16 %v10403
        %v10994 = vunpack.c.h.b16 %v10403
        %v10995 = vunpack.c.l.b16 %v10404
        %v10996 = vunpack.c.h.b16 %v10404
        %v10997 = vunpack.c.l.b16 %v10405
        %v10998 = vunpack.c.h.b16 %v10405
        %v10999 = vunpack.c.l.b16 %v10406
        %v11000 = vunpack.c.h.b16 %v10406
        %v11001 = vunpack.c.l.b16 %v10407
        %v11002 = vunpack.c.h.b16 %v10407
        %v11003 = vunpack.c.l.b16 %v10408
        %v11004 = vunpack.c.h.b16 %v10408
        %v11005 = vunpack.c.l.b16 %v10409
        %v11006 = vunpack.c.h.b16 %v10409
        %v11007 = vunpack.c.l.b16 %v10410
        %v11008 = vunpack.c.h.b16 %v10410
        %v11009 = vunpack.c.l.b16 %v10411
        %v11010 = vunpack.c.h.b16 %v10411
        %v11011 = vunpack.c.l.b16 %v10412
        %v11012 = vunpack.c.h.b16 %v10412
        %v11013 = vunpack.c.l.b16 %v10413
        %v11014 = vunpack.c.h.b16 %v10413
        %v11015 = vunpack.c.l.b16 %v10414
        %v11016 = vunpack.c.h.b16 %v10414
        %v11017 = vunpack.c.l.b16 %v10415
        %v11018 = vunpack.c.h.b16 %v10415
        %v11019 = vunpack.c.l.b16 %v10416
        %v11020 = vunpack.c.h.b16 %v10416
        %v11021 = vunpack.c.l.b16 %v10417
        %v11022 = vunpack.c.h.b16 %v10417
        %v11023 = vunpack.c.l.b16 %v10418
        %v11024 = vunpack.c.h.b16 %v10418
        %v11025 = vunpack.c.l.b16 %v10419
        %v11026 = vunpack.c.h.b16 %v10419
        %v11027 = vunpack.c.l.b16 %v10420
        %v11028 = vunpack.c.h.b16 %v10420
        %v11029 = vunpack.c.l.b16 %v10421
        %v11030 = vunpack.c.h.b16 %v10421
        %v11031 = vunpack.c.l.b16 %v10422
        %v11032 = vunpack.c.h.b16 %v10422
        %v11033 = vunpack.c.l.b16 %v10423
        %v11034 = vunpack.c.h.b16 %v10423
        %v11035 = vunpack.c.l.b16 %v10424
        %v11036 = vunpack.c.h.b16 %v10424
        %v11037 = vunpack.c.l.b16 %v10425
        %v11038 = vunpack.c.h.b16 %v10425
        %v11039 = vunpack.c.l.b16 %v10426
        %v11040 = vunpack.c.h.b16 %v10426
        %v11041 = vunpack.c.l.b16 %v10427
        %v11042 = vunpack.c.h.b16 %v10427
        %v11043 = vunpack.c.l.b16 %v10428
        %v11044 = vunpack.c.h.b16 %v10428
        %v11045 = vunpack.c.l.b16 %v10429
        %v11046 = vunpack.c.h.b16 %v10429
        %v11047 = vunpack.c.l.b16 %v10430
        %v11048 = vunpack.c.h.b16 %v10430
        %v11049 = vunpack.c.l.b16 %v10431
        %v11050 = vunpack.c.h.b16 %v10431
        %v11051 = vunpack.c.l.b16 %v10432
        %v11052 = vunpack.c.h.b16 %v10432
        %v11053 = vunpack.c.l.b16 %v10433
        %v11054 = vunpack.c.h.b16 %v10433
        %v11055 = vunpack.c.l.b16 %v10434
        %v11056 = vunpack.c.h.b16 %v10434
        %v11057 = vunpack.c.l.b16 %v10435
        %v11058 = vunpack.c.h.b16 %v10435
        %v11059 = vunpack.c.l.b16 %v10436
        %v11060 = vunpack.c.h.b16 %v10436
        %v11061 = vunpack.c.l.b16 %v10437
        %v11062 = vunpack.c.h.b16 %v10437
        %v11063 = vunpack.c.l.b16 %v10438
        %v11064 = vunpack.c.h.b16 %v10438
        %v11065 = vunpack.c.l.b16 %v10439
        %v11066 = vunpack.c.h.b16 %v10439
        %v11067 = vunpack.c.l.b16 %v10440
        %v11068 = vunpack.c.h.b16 %v10440
        %v11069 = vunpack.c.l.b16 %v10441
        %v11070 = vunpack.c.h.b16 %v10441
        %v11071 = vunpack.c.l.b16 %v10442
        %v11072 = vunpack.c.h.b16 %v10442
        %v11073 = vunpack.c.l.b16 %v10443
        %v11074 = vunpack.c.h.b16 %v10443
        %v11075 = vunpack.c.l.b16 %v10444
        %v11076 = vunpack.c.h.b16 %v10444
        %v11077 = vunpack.c.l.b16 %v10445
        %v11078 = vunpack.c.h.b16 %v10445
        %v11079 = vunpack.c.l.b16 %v10446
        %v11080 = vunpack.c.h.b16 %v10446
        %v11081 = vunpack.c.l.b16 %v10447
        %v11082 = vunpack.c.h.b16 %v10447
        %v11083 = vunpack.c.l.b16 %v10448
        %v11084 = vunpack.c.h.b16 %v10448
        %v11085 = vunpack.c.l.b16 %v10449
        %v11086 = vunpack.c.h.b16 %v10449
        %v11087 = vunpack.c.l.b16 %v10450
        %v11088 = vunpack.c.h.b16 %v10450
        %v11089 = vunpack.c.l.b16 %v10451
        %v11090 = vunpack.c.h.b16 %v10451
        %v11091 = vunpack.c.l.b16 %v10452
        %v11092 = vunpack.c.h.b16 %v10452
        %v11093 = vunpack.c.l.b16 %v10453
        %v11094 = vunpack.c.h.b16 %v10453
        %v11095 = vunpack.c.l.b16 %v10454
        %v11096 = vunpack.c.h.b16 %v10454
        %v11097 = vunpack.c.l.b16 %v10455
        %v11098 = vunpack.c.h.b16 %v10455
        %v11099 = vunpack.c.l.b16 %v10456
        %v11100 = vunpack.c.h.b16 %v10456
        %v11101 = vunpack.c.l.b16 %v10457
        %v11102 = vunpack.c.h.b16 %v10457
        %v11103 = vunpack.c.l.b16 %v10458
        %v11104 = vunpack.c.h.b16 %v10458
        %v11105 = vunpack.c.l.b16 %v10459
        %v11106 = vunpack.c.h.b16 %v10459
        %v11107 = vunpack.c.l.b16 %v10460
        %v11108 = vunpack.c.h.b16 %v10460
        %v11109 = vunpack.c.l.b16 %v10461
        %v11110 = vunpack.c.h.b16 %v10461
        %v11111 = vunpack.c.l.b16 %v10462
        %v11112 = vunpack.c.h.b16 %v10462
        %v11113 = vunpack.c.l.b16 %v10463
        %v11114 = vunpack.c.h.b16 %v10463
        %v11115 = vunpack.c.l.b16 %v10464
        %v11116 = vunpack.c.h.b16 %v10464
        %v11117 = vunpack.c.l.b16 %v10465
        %v11118 = vunpack.c.h.b16 %v10465
        %v11119 = vunpack.c.l.b16 %v10466
        %v11120 = vunpack.c.h.b16 %v10466
        %v11121 = vunpack.c.l.b16 %v10467
        %v11122 = vunpack.c.h.b16 %v10467
        %v11123 = vunpack.c.l.b16 %v10468
        %v11124 = vunpack.c.h.b16 %v10468
        %v11125 = vunpack.c.l.b16 %v10469
        %v11126 = vunpack.c.h.b16 %v10469
        %v11127 = vunpack.c.l.b16 %v10470
        %v11128 = vunpack.c.h.b16 %v10470
        %v11129 = vunpack.c.l.b16 %v10471
        %v11130 = vunpack.c.h.b16 %v10471
        %v11131 = vunpack.c.l.b16 %v10472
        %v11132 = vunpack.c.h.b16 %v10472
        %v11133 = vunpack.c.l.b16 %v10473
        %v11134 = vunpack.c.h.b16 %v10473
        %v11135 = vunpack.c.l.b16 %v10474
        %v11136 = vunpack.c.h.b16 %v10474
        %v11137 = vunpack.c.l.b16 %v10475
        %v11138 = vunpack.c.h.b16 %v10475
        %v11139 = vunpack.c.l.b16 %v10476
        %v11140 = vunpack.c.h.b16 %v10476
        %v11141 = vunpack.c.l.b16 %v10477
        %v11142 = vunpack.c.h.b16 %v10477
        %v11143 = vunpack.c.l.b16 %v10478
        %v11144 = vunpack.c.h.b16 %v10478
        %v11145 = vunpack.c.l.b16 %v10479
        %v11146 = vunpack.c.h.b16 %v10479
        %v11147 = vunpack.c.l.b16 %v10480
        %v11148 = vunpack.c.h.b16 %v10480
        %v11149 = vunpack.c.l.b16 %v10481
        %v11150 = vunpack.c.h.b16 %v10481
        %v11151 = vunpack.c.l.b16 %v10482
        %v11152 = vunpack.c.h.b16 %v10482
        %v11153 = vunpack.c.l.b16 %v10483
        %v11154 = vunpack.c.h.b16 %v10483
        %v11155 = vunpack.c.l.b16 %v10484
        %v11156 = vunpack.c.h.b16 %v10484
        %v11157 = vunpack.c.l.b16 %v10485
        %v11158 = vunpack.c.h.b16 %v10485
        %v11159 = vunpack.c.l.b16 %v10486
        %v11160 = vunpack.c.h.b16 %v10486
        %v11161 = vunpack.c.l.b16 %v10487
        %v11162 = vunpack.c.h.b16 %v10487
        %v11163 = vunpack.c.l.b16 %v10488
        %v11164 = vunpack.c.h.b16 %v10488
        %v11165 = vunpack.c.l.b16 %v10489
        %v11166 = vunpack.c.h.b16 %v10489
        %v11167 = vunpack.c.l.b16 %v10490
        %v11168 = vunpack.c.h.b16 %v10490
        %v11169 = vunpack.c.l.b16 %v10491
        %v11170 = vunpack.c.h.b16 %v10491
        %v11171 = vunpack.c.l.b16 %v10492
        %v11172 = vunpack.c.h.b16 %v10492
        %v11173 = vunpack.c.l.b16 %v10493
        %v11174 = vunpack.c.h.b16 %v10493
        %v11175 = vunpack.c.l.b16 %v10494
        %v11176 = vunpack.c.h.b16 %v10494
        %v11177 = vunpack.c.l.b16 %v10495
        %v11178 = vunpack.c.h.b16 %v10495
        %v11179 = vunpack.c.l.b16 %v10496
        %v11180 = vunpack.c.h.b16 %v10496
        %v11181 = vunpack.c.l.b16 %v10497
        %v11182 = vunpack.c.h.b16 %v10497
        %v11183 = vunpack.c.l.b16 %v10498
        %v11184 = vunpack.c.h.b16 %v10498
        %v11185 = vunpack.c.l.b16 %v10499
        %v11186 = vunpack.c.h.b16 %v10499
        %v11187 = vunpack.c.l.b16 %v10500
        %v11188 = vunpack.c.h.b16 %v10500
        %v11189 = vunpack.c.l.b16 %v10501
        %v11190 = vunpack.c.h.b16 %v10501
        %v11191 = vunpack.c.l.b16 %v10502
        %v11192 = vunpack.c.h.b16 %v10502
        %v11193 = vunpack.c.l.b16 %v10503
        %v11194 = vunpack.c.h.b16 %v10503
        %v11195 = vunpack.c.l.b16 %v10504
        %v11196 = vunpack.c.h.b16 %v10504
        %v11197 = vunpack.c.l.b16 %v10505
        %v11198 = vunpack.c.h.b16 %v10505
        %v11199 = vunpack.c.l.b16 %v10506
        %v11200 = vunpack.c.h.b16 %v10506
        %v11201 = vunpack.c.l.b16 %v10507
        %v11202 = vunpack.c.h.b16 %v10507
        %v11203 = vunpack.c.l.b16 %v10508
        %v11204 = vunpack.c.h.b16 %v10508
        %v11205 = vunpack.c.l.b16 %v10509
        %v11206 = vunpack.c.h.b16 %v10509
        %v11207 = vunpack.c.l.b16 %v10510
        %v11208 = vunpack.c.h.b16 %v10510
        %v11209 = vunpack.c.l.b16 %v10511
        %v11210 = vunpack.c.h.b16 %v10511
        %v11211 = vunpack.c.l.b16 %v10512
        %v11212 = vunpack.c.h.b16 %v10512
        %v11213 = vunpack.c.l.b16 %v10513
        %v11214 = vunpack.c.h.b16 %v10513
        %v11215 = vunpack.c.l.b16 %v10514
        %v11216 = vunpack.c.h.b16 %v10514
        %v11217 = vunpack.c.l.b16 %v10515
        %v11218 = vunpack.c.h.b16 %v10515
        %v11219 = vunpack.c.l.b16 %v10516
        %v11220 = vunpack.c.h.b16 %v10516
        %v11221 = vunpack.c.l.b16 %v10517
        %v11222 = vunpack.c.h.b16 %v10517
        %v11223 = vunpack.c.l.b16 %v10518
        %v11224 = vunpack.c.h.b16 %v10518
        %v11225 = vunpack.c.l.b16 %v10519
        %v11226 = vunpack.c.h.b16 %v10519
        %v11227 = vunpack.c.l.b16 %v10520
        %v11228 = vunpack.c.h.b16 %v10520
        %v11229 = vunpack.c.l.b16 %v10521
        %v11230 = vunpack.c.h.b16 %v10521
        %v11231 = vunpack.c.l.b16 %v10522
        %v11232 = vunpack.c.h.b16 %v10522
        %v11233 = vunpack.c.l.b16 %v10523
        %v11234 = vunpack.c.h.b16 %v10523
        %v11235 = vunpack.c.l.b16 %v10524
        %v11236 = vunpack.c.h.b16 %v10524
        %v11237 = vunpack.c.l.b16 %v10525
        %v11238 = vunpack.c.h.b16 %v10525
        %v11239 = vunpack.c.l.b16 %v10526
        %v11240 = vunpack.c.h.b16 %v10526
        %v11241 = vunpack.c.l.b16 %v10527
        %v11242 = vunpack.c.h.b16 %v10527
        %v11243 = vunpack.c.l.b16 %v10528
        %v11244 = vunpack.c.h.b16 %v10528
        %v11245 = vunpack.c.l.b16 %v10529
        %v11246 = vunpack.c.h.b16 %v10529
        %v11247 = vunpack.c.l.b16 %v10530
        %v11248 = vunpack.c.h.b16 %v10530
        %v11249 = vunpack.c.l.b16 %v10531
        %v11250 = vunpack.c.h.b16 %v10531
        %v11251 = vunpack.c.l.b16 %v10532
        %v11252 = vunpack.c.h.b16 %v10532
        %v11253 = vunpack.c.l.b16 %v10533
        %v11254 = vunpack.c.h.b16 %v10533
        %v11255 = vunpack.c.l.b16 %v10534
        %v11256 = vunpack.c.h.b16 %v10534
        %v11257 = vunpack.c.l.b16 %v10535
        %v11258 = vunpack.c.h.b16 %v10535
        %v11259 = vunpack.c.l.b16 %v10536
        %v11260 = vunpack.c.h.b16 %v10536
        %v11261 = vunpack.c.l.b16 %v10537
        %v11262 = vunpack.c.h.b16 %v10537
        %v11263 = vunpack.c.l.b16 %v10538
        %v11264 = vunpack.c.h.b16 %v10538
        %v11265 = vunpack.c.l.b16 %v10539
        %v11266 = vunpack.c.h.b16 %v10539
        %v11267 = vunpack.c.l.b16 %v10540
        %v11268 = vunpack.c.h.b16 %v10540
        %v11269 = vunpack.c.l.b16 %v10541
        %v11270 = vunpack.c.h.b16 %v10541
        %v11271 = vunpack.c.l.b16 %v10542
        %v11272 = vunpack.c.h.b16 %v10542
        %v11273 = vunpack.c.l.b16 %v10543
        %v11274 = vunpack.c.h.b16 %v10543
        %v11275 = vunpack.c.l.b16 %v10544
        %v11276 = vunpack.c.h.b16 %v10544
        %v11277 = vunpack.c.l.b16 %v10545
        %v11278 = vunpack.c.h.b16 %v10545
        %v11279 = vunpack.c.l.b16 %v10546
        %v11280 = vunpack.c.h.b16 %v10546
        %v11281 = vunpack.c.l.b16 %v10547
        %v11282 = vunpack.c.h.b16 %v10547
        %v11283 = vunpack.c.l.b16 %v10548
        %v11284 = vunpack.c.h.b16 %v10548
        %v11285 = vunpack.c.l.b16 %v10549
        %v11286 = vunpack.c.h.b16 %v10549
        %v11287 = vunpack.c.l.b16 %v10550
        %v11288 = vunpack.c.h.b16 %v10550
        %v11289 = vunpack.c.l.b16 %v10551
        %v11290 = vunpack.c.h.b16 %v10551
        %v11291 = vunpack.c.l.b16 %v10552
        %v11292 = vunpack.c.h.b16 %v10552
        %v11293 = vunpack.c.l.b16 %v10553
        %v11294 = vunpack.c.h.b16 %v10553
        %v11295 = vunpack.c.l.b16 %v10554
        %v11296 = vunpack.c.h.b16 %v10554
        %v11297 = vunpack.c.l.b16 %v10555
        %v11298 = vunpack.c.h.b16 %v10555
        %v11299 = vunpack.c.l.b16 %v10556
        %v11300 = vunpack.c.h.b16 %v10556
        %v11301 = vunpack.c.l.b16 %v10557
        %v11302 = vunpack.c.h.b16 %v10557
        %v11303 = vunpack.c.l.b16 %v10558
        %v11304 = vunpack.c.h.b16 %v10558
        %v11305 = vunpack.c.l.b16 %v10559
        %v11306 = vunpack.c.h.b16 %v10559
        %v11307 = vunpack.c.l.b16 %v10560
        %v11308 = vunpack.c.h.b16 %v10560
        %v11309 = vunpack.c.l.b16 %v10561
        %v11310 = vunpack.c.h.b16 %v10561
        %v11311 = vunpack.c.l.b16 %v10562
        %v11312 = vunpack.c.h.b16 %v10562
        %v11313 = vunpack.c.l.b16 %v10563
        %v11314 = vunpack.c.h.b16 %v10563
        %v11315 = vunpack.c.l.b16 %v10564
        %v11316 = vunpack.c.h.b16 %v10564
        %v11317 = vunpack.c.l.b16 %v10565
        %v11318 = vunpack.c.h.b16 %v10565
        %v11319 = vunpack.c.l.b16 %v10566
        %v11320 = vunpack.c.h.b16 %v10566
        %v11321 = vunpack.c.l.b16 %v10567
        %v11322 = vunpack.c.h.b16 %v10567
        %v11323 = vunpack.c.l.b16 %v10568
        %v11324 = vunpack.c.h.b16 %v10568
        %v11325 = vunpack.c.l.b16 %v10569
        %v11326 = vunpack.c.h.b16 %v10569
        %v11327 = vunpack.c.l.b16 %v10570
        %v11328 = vunpack.c.h.b16 %v10570
        %v11329 = vunpack.c.l.b16 %v10571
        %v11330 = vunpack.c.h.b16 %v10571
        %v11331 = vunpack.c.l.b16 %v10572
        %v11332 = vunpack.c.h.b16 %v10572
        %v11333 = vunpack.c.l.b16 %v10573
        %v11334 = vunpack.c.h.b16 %v10573
        %v11335 = vunpack.c.l.b16 %v10574
        %v11336 = vunpack.c.h.b16 %v10574
        %v11337 = vunpack.c.l.b16 %v10575
        %v11338 = vunpack.c.h.b16 %v10575
        %v11339 = vunpack.c.l.b16 %v10576
        %v11340 = vunpack.c.h.b16 %v10576
        %v11341 = vunpack.c.l.b16 %v10577
        %v11342 = vunpack.c.h.b16 %v10577
        %v11343 = vunpack.c.l.b16 %v10578
        %v11344 = vunpack.c.h.b16 %v10578
        %v11345 = vunpack.c.l.b16 %v10579
        %v11346 = vunpack.c.h.b16 %v10579
        %v11347 = vunpack.c.l.b16 %v10580
        %v11348 = vunpack.c.h.b16 %v10580
        %v11349 = vunpack.c.l.b16 %v10581
        %v11350 = vunpack.c.h.b16 %v10581
        %v11351 = vunpack.c.l.b16 %v10582
        %v11352 = vunpack.c.h.b16 %v10582
        %v11353 = vunpack.c.l.b16 %v10583
        %v11354 = vunpack.c.h.b16 %v10583
        %v11355 = vunpack.c.l.b16 %v10584
        %v11356 = vunpack.c.h.b16 %v10584
        %v11357 = vunpack.c.l.b16 %v10585
        %v11358 = vunpack.c.h.b16 %v10585
        %v11359 = vunpack.c.l.b16 %v10586
        %v11360 = vunpack.c.h.b16 %v10586
        %v11361 = vunpack.c.l.b16 %v10587
        %v11362 = vunpack.c.h.b16 %v10587
        %v11363 = vunpack.c.l.b16 %v10588
        %v11364 = vunpack.c.h.b16 %v10588
        %v11365 = vunpack.c.l.b16 %v10589
        %v11366 = vunpack.c.h.b16 %v10589
        %v11367 = vunpack.c.l.b16 %v10590
        %v11368 = vunpack.c.h.b16 %v10590
        %v11369 = vunpack.c.l.b16 %v10591
        %v11370 = vunpack.c.h.b16 %v10591
        %v11371 = vunpack.c.l.b16 %v10592
        %v11372 = vunpack.c.h.b16 %v10592
        %v11373 = vunpack.c.l.b16 %v10593
        %v11374 = vunpack.c.h.b16 %v10593
        %v11375 = vunpack.c.l.b16 %v10594
        %v11376 = vunpack.c.h.b16 %v10594
        %v11377 = vunpack.c.l.b16 %v10595
        %v11378 = vunpack.c.h.b16 %v10595
        %v11379 = vunpack.c.l.b16 %v10596
        %v11380 = vunpack.c.h.b16 %v10596
        %v11381 = vunpack.c.l.b16 %v10597
        %v11382 = vunpack.c.h.b16 %v10597
        %v11383 = vunpack.c.l.b16 %v10598
        %v11384 = vunpack.c.h.b16 %v10598
        %v11385 = vunpack.c.l.b16 %v10599
        %v11386 = vunpack.c.h.b16 %v10599
        %v11387 = vunpack.c.l.b16 %v10600
        %v11388 = vunpack.c.h.b16 %v10600
        %v11389 = vunpack.c.l.b16 %v10601
        %v11390 = vunpack.c.h.b16 %v10601
        %v11391 = vunpack.c.l.b16 %v10602
        %v11392 = vunpack.c.h.b16 %v10602
        %v11393 = vunpack.c.l.b16 %v10603
        %v11394 = vunpack.c.h.b16 %v10603
        %v11395 = vunpack.c.l.b16 %v10604
        %v11396 = vunpack.c.h.b16 %v10604
        %v11397 = vunpack.c.l.b16 %v10605
        %v11398 = vunpack.c.h.b16 %v10605
        %v11399 = vunpack.c.l.b16 %v10606
        %v11400 = vunpack.c.h.b16 %v10606
        %v11401 = vunpack.c.l.b16 %v10607
        %v11402 = vunpack.c.h.b16 %v10607
        %v11403 = vunpack.c.l.b16 %v10608
        %v11404 = vunpack.c.h.b16 %v10608
        %v11405 = vunpack.c.l.b16 %v10609
        %v11406 = vunpack.c.h.b16 %v10609
        %v11407 = vpack.c.b16 %v10903, %v10895
        %v11408 = vpack.c.b16 %v10904, %v10896
        %v11409 = vpack.c.b16 %v10905, %v10897
        %v11410 = vpack.c.b16 %v10906, %v10898
        %v11411 = vpack.c.b16 %v10907, %v10899
        %v11412 = vpack.c.b16 %v10908, %v10900
        %v11413 = vpack.c.b16 %v10909, %v10901
        %v11414 = vpack.c.b16 %v10910, %v10902
        %v11415 = vpack.c.b16 %v10919, %v10911
        %v11416 = vpack.c.b16 %v10920, %v10912
        %v11417 = vpack.c.b16 %v10921, %v10913
        %v11418 = vpack.c.b16 %v10922, %v10914
        %v11419 = vpack.c.b16 %v10923, %v10915
        %v11420 = vpack.c.b16 %v10924, %v10916
        %v11421 = vpack.c.b16 %v10925, %v10917
        %v11422 = vpack.c.b16 %v10926, %v10918
        %v11423 = vpack.c.b16 %v10935, %v10927
        %v11424 = vpack.c.b16 %v10936, %v10928
        %v11425 = vpack.c.b16 %v10937, %v10929
        %v11426 = vpack.c.b16 %v10938, %v10930
        %v11427 = vpack.c.b16 %v10939, %v10931
        %v11428 = vpack.c.b16 %v10940, %v10932
        %v11429 = vpack.c.b16 %v10941, %v10933
        %v11430 = vpack.c.b16 %v10942, %v10934
        %v11431 = vpack.c.b16 %v10951, %v10943
        %v11432 = vpack.c.b16 %v10952, %v10944
        %v11433 = vpack.c.b16 %v10953, %v10945
        %v11434 = vpack.c.b16 %v10954, %v10946
        %v11435 = vpack.c.b16 %v10955, %v10947
        %v11436 = vpack.c.b16 %v10956, %v10948
        %v11437 = vpack.c.b16 %v10957, %v10949
        %v11438 = vpack.c.b16 %v10958, %v10950
        %v11439 = vpack.c.b16 %v10967, %v10959
        %v11440 = vpack.c.b16 %v10968, %v10960
        %v11441 = vpack.c.b16 %v10969, %v10961
        %v11442 = vpack.c.b16 %v10970, %v10962
        %v11443 = vpack.c.b16 %v10971, %v10963
        %v11444 = vpack.c.b16 %v10972, %v10964
        %v11445 = vpack.c.b16 %v10973, %v10965
        %v11446 = vpack.c.b16 %v10974, %v10966
        %v11447 = vpack.c.b16 %v10983, %v10975
        %v11448 = vpack.c.b16 %v10984, %v10976
        %v11449 = vpack.c.b16 %v10985, %v10977
        %v11450 = vpack.c.b16 %v10986, %v10978
        %v11451 = vpack.c.b16 %v10987, %v10979
        %v11452 = vpack.c.b16 %v10988, %v10980
        %v11453 = vpack.c.b16 %v10989, %v10981
        %v11454 = vpack.c.b16 %v10990, %v10982
        %v11455 = vpack.c.b16 %v10999, %v10991
        %v11456 = vpack.c.b16 %v11000, %v10992
        %v11457 = vpack.c.b16 %v11001, %v10993
        %v11458 = vpack.c.b16 %v11002, %v10994
        %v11459 = vpack.c.b16 %v11003, %v10995
        %v11460 = vpack.c.b16 %v11004, %v10996
        %v11461 = vpack.c.b16 %v11005, %v10997
        %v11462 = vpack.c.b16 %v11006, %v10998
        %v11463 = vpack.c.b16 %v11015, %v11007
        %v11464 = vpack.c.b16 %v11016, %v11008
        %v11465 = vpack.c.b16 %v11017, %v11009
        %v11466 = vpack.c.b16 %v11018, %v11010
        %v11467 = vpack.c.b16 %v11019, %v11011
        %v11468 = vpack.c.b16 %v11020, %v11012
        %v11469 = vpack.c.b16 %v11021, %v11013
        %v11470 = vpack.c.b16 %v11022, %v11014
        %v11471 = vpack.c.b16 %v11031, %v11023
        %v11472 = vpack.c.b16 %v11032, %v11024
        %v11473 = vpack.c.b16 %v11033, %v11025
        %v11474 = vpack.c.b16 %v11034, %v11026
        %v11475 = vpack.c.b16 %v11035, %v11027
        %v11476 = vpack.c.b16 %v11036, %v11028
        %v11477 = vpack.c.b16 %v11037, %v11029
        %v11478 = vpack.c.b16 %v11038, %v11030
        %v11479 = vpack.c.b16 %v11047, %v11039
        %v11480 = vpack.c.b16 %v11048, %v11040
        %v11481 = vpack.c.b16 %v11049, %v11041
        %v11482 = vpack.c.b16 %v11050, %v11042
        %v11483 = vpack.c.b16 %v11051, %v11043
        %v11484 = vpack.c.b16 %v11052, %v11044
        %v11485 = vpack.c.b16 %v11053, %v11045
        %v11486 = vpack.c.b16 %v11054, %v11046
        %v11487 = vpack.c.b16 %v11063, %v11055
        %v11488 = vpack.c.b16 %v11064, %v11056
        %v11489 = vpack.c.b16 %v11065, %v11057
        %v11490 = vpack.c.b16 %v11066, %v11058
        %v11491 = vpack.c.b16 %v11067, %v11059
        %v11492 = vpack.c.b16 %v11068, %v11060
        %v11493 = vpack.c.b16 %v11069, %v11061
        %v11494 = vpack.c.b16 %v11070, %v11062
        %v11495 = vpack.c.b16 %v11079, %v11071
        %v11496 = vpack.c.b16 %v11080, %v11072
        %v11497 = vpack.c.b16 %v11081, %v11073
        %v11498 = vpack.c.b16 %v11082, %v11074
        %v11499 = vpack.c.b16 %v11083, %v11075
        %v11500 = vpack.c.b16 %v11084, %v11076
        %v11501 = vpack.c.b16 %v11085, %v11077
        %v11502 = vpack.c.b16 %v11086, %v11078
        %v11503 = vpack.c.b16 %v11095, %v11087
        %v11504 = vpack.c.b16 %v11096, %v11088
        %v11505 = vpack.c.b16 %v11097, %v11089
        %v11506 = vpack.c.b16 %v11098, %v11090
        %v11507 = vpack.c.b16 %v11099, %v11091
        %v11508 = vpack.c.b16 %v11100, %v11092
        %v11509 = vpack.c.b16 %v11101, %v11093
        %v11510 = vpack.c.b16 %v11102, %v11094
        %v11511 = vpack.c.b16 %v11111, %v11103
        %v11512 = vpack.c.b16 %v11112, %v11104
        %v11513 = vpack.c.b16 %v11113, %v11105
        %v11514 = vpack.c.b16 %v11114, %v11106
        %v11515 = vpack.c.b16 %v11115, %v11107
        %v11516 = vpack.c.b16 %v11116, %v11108
        %v11517 = vpack.c.b16 %v11117, %v11109
        %v11518 = vpack.c.b16 %v11118, %v11110
        %v11519 = vpack.c.b16 %v11127, %v11119
        %v11520 = vpack.c.b16 %v11128, %v11120
        %v11521 = vpack.c.b16 %v11129, %v11121
        %v11522 = vpack.c.b16 %v11130, %v11122
        %v11523 = vpack.c.b16 %v11131, %v11123
        %v11524 = vpack.c.b16 %v11132, %v11124
        %v11525 = vpack.c.b16 %v11133, %v11125
        %v11526 = vpack.c.b16 %v11134, %v11126
        %v11527 = vpack.c.b16 %v11143, %v11135
        %v11528 = vpack.c.b16 %v11144, %v11136
        %v11529 = vpack.c.b16 %v11145, %v11137
        %v11530 = vpack.c.b16 %v11146, %v11138
        %v11531 = vpack.c.b16 %v11147, %v11139
        %v11532 = vpack.c.b16 %v11148, %v11140
        %v11533 = vpack.c.b16 %v11149, %v11141
        %v11534 = vpack.c.b16 %v11150, %v11142
        %v11535 = vpack.c.b16 %v11159, %v11151
        %v11536 = vpack.c.b16 %v11160, %v11152
        %v11537 = vpack.c.b16 %v11161, %v11153
        %v11538 = vpack.c.b16 %v11162, %v11154
        %v11539 = vpack.c.b16 %v11163, %v11155
        %v11540 = vpack.c.b16 %v11164, %v11156
        %v11541 = vpack.c.b16 %v11165, %v11157
        %v11542 = vpack.c.b16 %v11166, %v11158
        %v11543 = vpack.c.b16 %v11175, %v11167
        %v11544 = vpack.c.b16 %v11176, %v11168
        %v11545 = vpack.c.b16 %v11177, %v11169
        %v11546 = vpack.c.b16 %v11178, %v11170
        %v11547 = vpack.c.b16 %v11179, %v11171
        %v11548 = vpack.c.b16 %v11180, %v11172
        %v11549 = vpack.c.b16 %v11181, %v11173
        %v11550 = vpack.c.b16 %v11182, %v11174
        %v11551 = vpack.c.b16 %v11191, %v11183
        %v11552 = vpack.c.b16 %v11192, %v11184
        %v11553 = vpack.c.b16 %v11193, %v11185
        %v11554 = vpack.c.b16 %v11194, %v11186
        %v11555 = vpack.c.b16 %v11195, %v11187
        %v11556 = vpack.c.b16 %v11196, %v11188
        %v11557 = vpack.c.b16 %v11197, %v11189
        %v11558 = vpack.c.b16 %v11198, %v11190
        %v11559 = vpack.c.b16 %v11207, %v11199
        %v11560 = vpack.c.b16 %v11208, %v11200
        %v11561 = vpack.c.b16 %v11209, %v11201
        %v11562 = vpack.c.b16 %v11210, %v11202
        %v11563 = vpack.c.b16 %v11211, %v11203
        %v11564 = vpack.c.b16 %v11212, %v11204
        %v11565 = vpack.c.b16 %v11213, %v11205
        %v11566 = vpack.c.b16 %v11214, %v11206
        %v11567 = vpack.c.b16 %v11223, %v11215
        %v11568 = vpack.c.b16 %v11224, %v11216
        %v11569 = vpack.c.b16 %v11225, %v11217
        %v11570 = vpack.c.b16 %v11226, %v11218
        %v11571 = vpack.c.b16 %v11227, %v11219
        %v11572 = vpack.c.b16 %v11228, %v11220
        %v11573 = vpack.c.b16 %v11229, %v11221
        %v11574 = vpack.c.b16 %v11230, %v11222
        %v11575 = vpack.c.b16 %v11239, %v11231
        %v11576 = vpack.c.b16 %v11240, %v11232
        %v11577 = vpack.c.b16 %v11241, %v11233
        %v11578 = vpack.c.b16 %v11242, %v11234
        %v11579 = vpack.c.b16 %v11243, %v11235
        %v11580 = vpack.c.b16 %v11244, %v11236
        %v11581 = vpack.c.b16 %v11245, %v11237
        %v11582 = vpack.c.b16 %v11246, %v11238
        %v11583 = vpack.c.b16 %v11255, %v11247
        %v11584 = vpack.c.b16 %v11256, %v11248
        %v11585 = vpack.c.b16 %v11257, %v11249
        %v11586 = vpack.c.b16 %v11258, %v11250
        %v11587 = vpack.c.b16 %v11259, %v11251
        %v11588 = vpack.c.b16 %v11260, %v11252
        %v11589 = vpack.c.b16 %v11261, %v11253
        %v11590 = vpack.c.b16 %v11262, %v11254
        %v11591 = vpack.c.b16 %v11271, %v11263
        %v11592 = vpack.c.b16 %v11272, %v11264
        %v11593 = vpack.c.b16 %v11273, %v11265
        %v11594 = vpack.c.b16 %v11274, %v11266
        %v11595 = vpack.c.b16 %v11275, %v11267
        %v11596 = vpack.c.b16 %v11276, %v11268
        %v11597 = vpack.c.b16 %v11277, %v11269
        %v11598 = vpack.c.b16 %v11278, %v11270
        %v11599 = vpack.c.b16 %v11287, %v11279
        %v11600 = vpack.c.b16 %v11288, %v11280
        %v11601 = vpack.c.b16 %v11289, %v11281
        %v11602 = vpack.c.b16 %v11290, %v11282
        %v11603 = vpack.c.b16 %v11291, %v11283
        %v11604 = vpack.c.b16 %v11292, %v11284
        %v11605 = vpack.c.b16 %v11293, %v11285
        %v11606 = vpack.c.b16 %v11294, %v11286
        %v11607 = vpack.c.b16 %v11303, %v11295
        %v11608 = vpack.c.b16 %v11304, %v11296
        %v11609 = vpack.c.b16 %v11305, %v11297
        %v11610 = vpack.c.b16 %v11306, %v11298
        %v11611 = vpack.c.b16 %v11307, %v11299
        %v11612 = vpack.c.b16 %v11308, %v11300
        %v11613 = vpack.c.b16 %v11309, %v11301
        %v11614 = vpack.c.b16 %v11310, %v11302
        %v11615 = vpack.c.b16 %v11319, %v11311
        %v11616 = vpack.c.b16 %v11320, %v11312
        %v11617 = vpack.c.b16 %v11321, %v11313
        %v11618 = vpack.c.b16 %v11322, %v11314
        %v11619 = vpack.c.b16 %v11323, %v11315
        %v11620 = vpack.c.b16 %v11324, %v11316
        %v11621 = vpack.c.b16 %v11325, %v11317
        %v11622 = vpack.c.b16 %v11326, %v11318
        %v11623 = vpack.c.b16 %v11335, %v11327
        %v11624 = vpack.c.b16 %v11336, %v11328
        %v11625 = vpack.c.b16 %v11337, %v11329
        %v11626 = vpack.c.b16 %v11338, %v11330
        %v11627 = vpack.c.b16 %v11339, %v11331
        %v11628 = vpack.c.b16 %v11340, %v11332
        %v11629 = vpack.c.b16 %v11341, %v11333
        %v11630 = vpack.c.b16 %v11342, %v11334
        %v11631 = vpack.c.b16 %v11351, %v11343
        %v11632 = vpack.c.b16 %v11352, %v11344
        %v11633 = vpack.c.b16 %v11353, %v11345
        %v11634 = vpack.c.b16 %v11354, %v11346
        %v11635 = vpack.c.b16 %v11355, %v11347
        %v11636 = vpack.c.b16 %v11356, %v11348
        %v11637 = vpack.c.b16 %v11357, %v11349
        %v11638 = vpack.c.b16 %v11358, %v11350
        %v11639 = vpack.c.b16 %v11367, %v11359
        %v11640 = vpack.c.b16 %v11368, %v11360
        %v11641 = vpack.c.b16 %v11369, %v11361
        %v11642 = vpack.c.b16 %v11370, %v11362
        %v11643 = vpack.c.b16 %v11371, %v11363
        %v11644 = vpack.c.b16 %v11372, %v11364
        %v11645 = vpack.c.b16 %v11373, %v11365
        %v11646 = vpack.c.b16 %v11374, %v11366
        %v11647 = vpack.c.b16 %v11383, %v11375
        %v11648 = vpack.c.b16 %v11384, %v11376
        %v11649 = vpack.c.b16 %v11385, %v11377
        %v11650 = vpack.c.b16 %v11386, %v11378
        %v11651 = vpack.c.b16 %v11387, %v11379
        %v11652 = vpack.c.b16 %v11388, %v11380
        %v11653 = vpack.c.b16 %v11389, %v11381
        %v11654 = vpack.c.b16 %v11390, %v11382
        %v11655 = vpack.c.b16 %v11399, %v11391
        %v11656 = vpack.c.b16 %v11400, %v11392
        %v11657 = vpack.c.b16 %v11401, %v11393
        %v11658 = vpack.c.b16 %v11402, %v11394
        %v11659 = vpack.c.b16 %v11403, %v11395
        %v11660 = vpack.c.b16 %v11404, %v11396
        %v11661 = vpack.c.b16 %v11405, %v11397
        %v11662 = vpack.c.b16 %v11406, %v11398
        %11919 = vmatprep.subr.bf16.mxu0 %v11464
        %11920 = vmatpush1.bf16.msra.mxu0 %v11463
        %11921 = vmatprep.subr.bf16.mxu0 %v11456
        %11922 = vmatpush1.bf16.msra.mxu0 %v11455
        %11923 = vmatprep.subr.bf16.mxu0 %v11448
        %11924 = vmatpush1.bf16.msra.mxu0 %v11447
        %11925 = vmatprep.subr.bf16.mxu0 %v11440
        %11926 = vmatpush1.bf16.msra.mxu0 %v11439
        %11927 = vmatprep.subr.bf16.mxu0 %v11432
        %11928 = vmatpush1.bf16.msra.mxu0 %v11431
        %11929 = vmatprep.subr.bf16.mxu0 %v11424
        %11930 = vmatpush1.bf16.msra.mxu0 %v11423
        %11931 = vmatprep.subr.bf16.mxu0 %v11416
        %11932 = vmatpush1.bf16.msra.mxu0 %v11415
        %11933 = vmatprep.subr.bf16.mxu0 %v11408
        %11934 = vmatpush1.bf16.msra.mxu0 %v11407
        %11935 = vmatprep.subr.bf16.mxu0 %v11528
        %11936 = vmatpush2.bf16.msra.mxu0 %v11527
        %11937 = vmatprep.subr.bf16.mxu0 %v11520
        %11938 = vmatpush2.bf16.msra.mxu0 %v11519
        %11939 = vmatprep.subr.bf16.mxu0 %v11512
        %11940 = vmatpush2.bf16.msra.mxu0 %v11511
        %11941 = vmatprep.subr.bf16.mxu0 %v11504
        %11942 = vmatpush2.bf16.msra.mxu0 %v11503
        %11943 = vmatprep.subr.bf16.mxu0 %v11496
        %11944 = vmatpush2.bf16.msra.mxu0 %v11495
        %11945 = vmatprep.subr.bf16.mxu0 %v11488
        %11946 = vmatpush2.bf16.msra.mxu0 %v11487
        %11947 = vmatprep.subr.bf16.mxu0 %v11480
        %11948 = vmatpush2.bf16.msra.mxu0 %v11479
        %11949 = vmatprep.subr.bf16.mxu0 %v11472
        %11950 = vmatpush2.bf16.msra.mxu0 %v11471
        %11951 = vmatprep.mubr.bf16.mxu0 %v10632
        %11952 = vmatmul.mubr.bf16.gmra.mxu0 %v10625
        %v11953 = vpop.f32.mrf.mxu0
        %v11954 = vadd.f32 0.0, %v11953
        %v11955 = vpop.f32.mrf.mxu0
        %v11956 = vadd.f32 0.0, %v11955
        %v11957 = vpop.f32.mrf.mxu0
        %v11958 = vpop.f32.mrf.mxu0
        %11959 = vdwg.mxu0
        %11960 = vmatprep.subr.bf16.mxu0 %v11592
        %11961 = vmatpush1.bf16.msra.mxu0 %v11591
        %11962 = vmatprep.subr.bf16.mxu0 %v11584
        %11963 = vmatpush1.bf16.msra.mxu0 %v11583
        %11964 = vmatprep.subr.bf16.mxu0 %v11576
        %11965 = vmatpush1.bf16.msra.mxu0 %v11575
        %11966 = vmatprep.subr.bf16.mxu0 %v11568
        %11967 = vmatpush1.bf16.msra.mxu0 %v11567
        %11968 = vmatprep.subr.bf16.mxu0 %v11560
        %11969 = vmatpush1.bf16.msra.mxu0 %v11559
        %11970 = vmatprep.subr.bf16.mxu0 %v11552
        %11971 = vmatpush1.bf16.msra.mxu0 %v11551
        %11972 = vmatprep.subr.bf16.mxu0 %v11544
        %11973 = vmatpush1.bf16.msra.mxu0 %v11543
        %11974 = vmatprep.subr.bf16.mxu0 %v11536
        %11975 = vmatpush1.bf16.msra.mxu0 %v11535
        %11976 = vmatprep.subr.bf16.mxu0 %v11656
        %11977 = vmatpush2.bf16.msra.mxu0 %v11655
        %11978 = vmatprep.subr.bf16.mxu0 %v11648
        %11979 = vmatpush2.bf16.msra.mxu0 %v11647
        %11980 = vmatprep.subr.bf16.mxu0 %v11640
        %11981 = vmatpush2.bf16.msra.mxu0 %v11639
        %11982 = vmatprep.subr.bf16.mxu0 %v11632
        %11983 = vmatpush2.bf16.msra.mxu0 %v11631
        %11984 = vmatprep.subr.bf16.mxu0 %v11624
        %11985 = vmatpush2.bf16.msra.mxu0 %v11623
        %11986 = vmatprep.subr.bf16.mxu0 %v11616
        %11987 = vmatpush2.bf16.msra.mxu0 %v11615
        %11988 = vmatprep.subr.bf16.mxu0 %v11608
        %11989 = vmatpush2.bf16.msra.mxu0 %v11607
        %11990 = vmatprep.subr.bf16.mxu0 %v11600
        %11991 = vmatpush2.bf16.msra.mxu0 %v11599
        %11992 = vmatprep.mubr.bf16.mxu0 %v10634
        %11993 = vmatmul.mubr.bf16.gmra.mxu0 %v10633
        %v11994 = vpop.f32.mrf.mxu0
        %v11995 = vadd.f32 %v11954, %v11994
        %v11996 = vpop.f32.mrf.mxu0
        %v11997 = vadd.f32 %v11956, %v11996
        %v11998 = vpop.f32.mrf.mxu0
        %v11999 = vpop.f32.mrf.mxu0
        %12000 = vdwg.mxu0
        %12001 = vmatprep.subr.bf16.mxu0 %v11466
        %12002 = vmatpush1.bf16.msra.mxu0 %v11465
        %12003 = vmatprep.subr.bf16.mxu0 %v11458
        %12004 = vmatpush1.bf16.msra.mxu0 %v11457
        %12005 = vmatprep.subr.bf16.mxu0 %v11450
        %12006 = vmatpush1.bf16.msra.mxu0 %v11449
        %12007 = vmatprep.subr.bf16.mxu0 %v11442
        %12008 = vmatpush1.bf16.msra.mxu0 %v11441
        %12009 = vmatprep.subr.bf16.mxu0 %v11434
        %12010 = vmatpush1.bf16.msra.mxu0 %v11433
        %12011 = vmatprep.subr.bf16.mxu0 %v11426
        %12012 = vmatpush1.bf16.msra.mxu0 %v11425
        %12013 = vmatprep.subr.bf16.mxu0 %v11418
        %12014 = vmatpush1.bf16.msra.mxu0 %v11417
        %12015 = vmatprep.subr.bf16.mxu0 %v11410
        %12016 = vmatpush1.bf16.msra.mxu0 %v11409
        %12017 = vmatprep.subr.bf16.mxu0 %v11530
        %12018 = vmatpush2.bf16.msra.mxu0 %v11529
        %12019 = vmatprep.subr.bf16.mxu0 %v11522
        %12020 = vmatpush2.bf16.msra.mxu0 %v11521
        %12021 = vmatprep.subr.bf16.mxu0 %v11514
        %12022 = vmatpush2.bf16.msra.mxu0 %v11513
        %12023 = vmatprep.subr.bf16.mxu0 %v11506
        %12024 = vmatpush2.bf16.msra.mxu0 %v11505
        %12025 = vmatprep.subr.bf16.mxu0 %v11498
        %12026 = vmatpush2.bf16.msra.mxu0 %v11497
        %12027 = vmatprep.subr.bf16.mxu0 %v11490
        %12028 = vmatpush2.bf16.msra.mxu0 %v11489
        %12029 = vmatprep.subr.bf16.mxu0 %v11482
        %12030 = vmatpush2.bf16.msra.mxu0 %v11481
        %12031 = vmatprep.subr.bf16.mxu0 %v11474
        %12032 = vmatpush2.bf16.msra.mxu0 %v11473
        %12033 = vmatprep.mubr.bf16.mxu0 %v10632
        %12034 = vmatmul.mubr.bf16.gmra.mxu0 %v10625
        %v12035 = vpop.f32.mrf.mxu0
        %v12036 = vadd.f32 0.0, %v12035
        %v12037 = vpop.f32.mrf.mxu0
        %v12038 = vadd.f32 0.0, %v12037
        %v12039 = vpop.f32.mrf.mxu0
        %v12040 = vpop.f32.mrf.mxu0
        %12041 = vdwg.mxu0
        %12042 = vmatprep.subr.bf16.mxu0 %v11594
        %12043 = vmatpush1.bf16.msra.mxu0 %v11593
        %12044 = vmatprep.subr.bf16.mxu0 %v11586
        %12045 = vmatpush1.bf16.msra.mxu0 %v11585
        %12046 = vmatprep.subr.bf16.mxu0 %v11578
        %12047 = vmatpush1.bf16.msra.mxu0 %v11577
        %12048 = vmatprep.subr.bf16.mxu0 %v11570
        %12049 = vmatpush1.bf16.msra.mxu0 %v11569
        %12050 = vmatprep.subr.bf16.mxu0 %v11562
        %12051 = vmatpush1.bf16.msra.mxu0 %v11561
        %12052 = vmatprep.subr.bf16.mxu0 %v11554
        %12053 = vmatpush1.bf16.msra.mxu0 %v11553
        %12054 = vmatprep.subr.bf16.mxu0 %v11546
        %12055 = vmatpush1.bf16.msra.mxu0 %v11545
        %12056 = vmatprep.subr.bf16.mxu0 %v11538
        %12057 = vmatpush1.bf16.msra.mxu0 %v11537
        %12058 = vmatprep.subr.bf16.mxu0 %v11658
        %12059 = vmatpush2.bf16.msra.mxu0 %v11657
        %12060 = vmatprep.subr.bf16.mxu0 %v11650
        %12061 = vmatpush2.bf16.msra.mxu0 %v11649
        %12062 = vmatprep.subr.bf16.mxu0 %v11642
        %12063 = vmatpush2.bf16.msra.mxu0 %v11641
        %12064 = vmatprep.subr.bf16.mxu0 %v11634
        %12065 = vmatpush2.bf16.msra.mxu0 %v11633
        %12066 = vmatprep.subr.bf16.mxu0 %v11626
        %12067 = vmatpush2.bf16.msra.mxu0 %v11625
        %12068 = vmatprep.subr.bf16.mxu0 %v11618
        %12069 = vmatpush2.bf16.msra.mxu0 %v11617
        %12070 = vmatprep.subr.bf16.mxu0 %v11610
        %12071 = vmatpush2.bf16.msra.mxu0 %v11609
        %12072 = vmatprep.subr.bf16.mxu0 %v11602
        %12073 = vmatpush2.bf16.msra.mxu0 %v11601
        %12074 = vmatprep.mubr.bf16.mxu0 %v10634
        %12075 = vmatmul.mubr.bf16.gmra.mxu0 %v10633
        %v12076 = vpop.f32.mrf.mxu0
        %v12077 = vadd.f32 %v12036, %v12076
        %v12078 = vpop.f32.mrf.mxu0
        %v12079 = vadd.f32 %v12038, %v12078
        %v12080 = vpop.f32.mrf.mxu0
        %v12081 = vpop.f32.mrf.mxu0
        %12082 = vdwg.mxu0
        %12083 = vmatprep.subr.bf16.mxu0 %v11468
        %12084 = vmatpush1.bf16.msra.mxu0 %v11467
        %12085 = vmatprep.subr.bf16.mxu0 %v11460
        %12086 = vmatpush1.bf16.msra.mxu0 %v11459
        %12087 = vmatprep.subr.bf16.mxu0 %v11452
        %12088 = vmatpush1.bf16.msra.mxu0 %v11451
        %12089 = vmatprep.subr.bf16.mxu0 %v11444
        %12090 = vmatpush1.bf16.msra.mxu0 %v11443
        %12091 = vmatprep.subr.bf16.mxu0 %v11436
        %12092 = vmatpush1.bf16.msra.mxu0 %v11435
        %12093 = vmatprep.subr.bf16.mxu0 %v11428
        %12094 = vmatpush1.bf16.msra.mxu0 %v11427
        %12095 = vmatprep.subr.bf16.mxu0 %v11420
        %12096 = vmatpush1.bf16.msra.mxu0 %v11419
        %12097 = vmatprep.subr.bf16.mxu0 %v11412
        %12098 = vmatpush1.bf16.msra.mxu0 %v11411
        %12099 = vmatprep.subr.bf16.mxu0 %v11532
        %12100 = vmatpush2.bf16.msra.mxu0 %v11531
        %12101 = vmatprep.subr.bf16.mxu0 %v11524
        %12102 = vmatpush2.bf16.msra.mxu0 %v11523
        %12103 = vmatprep.subr.bf16.mxu0 %v11516
        %12104 = vmatpush2.bf16.msra.mxu0 %v11515
        %12105 = vmatprep.subr.bf16.mxu0 %v11508
        %12106 = vmatpush2.bf16.msra.mxu0 %v11507
        %12107 = vmatprep.subr.bf16.mxu0 %v11500
        %12108 = vmatpush2.bf16.msra.mxu0 %v11499
        %12109 = vmatprep.subr.bf16.mxu0 %v11492
        %12110 = vmatpush2.bf16.msra.mxu0 %v11491
        %12111 = vmatprep.subr.bf16.mxu0 %v11484
        %12112 = vmatpush2.bf16.msra.mxu0 %v11483
        %12113 = vmatprep.subr.bf16.mxu0 %v11476
        %12114 = vmatpush2.bf16.msra.mxu0 %v11475
        %12115 = vmatprep.mubr.bf16.mxu0 %v10632
        %12116 = vmatmul.mubr.bf16.gmra.mxu0 %v10625
        %v12117 = vpop.f32.mrf.mxu0
        %v12118 = vadd.f32 0.0, %v12117
        %v12119 = vpop.f32.mrf.mxu0
        %v12120 = vadd.f32 0.0, %v12119
        %v12121 = vpop.f32.mrf.mxu0
        %v12122 = vpop.f32.mrf.mxu0
        %12123 = vdwg.mxu0
        %12124 = vmatprep.subr.bf16.mxu0 %v11596
        %12125 = vmatpush1.bf16.msra.mxu0 %v11595
        %12126 = vmatprep.subr.bf16.mxu0 %v11588
        %12127 = vmatpush1.bf16.msra.mxu0 %v11587
        %12128 = vmatprep.subr.bf16.mxu0 %v11580
        %12129 = vmatpush1.bf16.msra.mxu0 %v11579
        %12130 = vmatprep.subr.bf16.mxu0 %v11572
        %12131 = vmatpush1.bf16.msra.mxu0 %v11571
        %12132 = vmatprep.subr.bf16.mxu0 %v11564
        %12133 = vmatpush1.bf16.msra.mxu0 %v11563
        %12134 = vmatprep.subr.bf16.mxu0 %v11556
        %12135 = vmatpush1.bf16.msra.mxu0 %v11555
        %12136 = vmatprep.subr.bf16.mxu0 %v11548
        %12137 = vmatpush1.bf16.msra.mxu0 %v11547
        %12138 = vmatprep.subr.bf16.mxu0 %v11540
        %12139 = vmatpush1.bf16.msra.mxu0 %v11539
        %12140 = vmatprep.subr.bf16.mxu0 %v11660
        %12141 = vmatpush2.bf16.msra.mxu0 %v11659
        %12142 = vmatprep.subr.bf16.mxu0 %v11652
        %12143 = vmatpush2.bf16.msra.mxu0 %v11651
        %12144 = vmatprep.subr.bf16.mxu0 %v11644
        %12145 = vmatpush2.bf16.msra.mxu0 %v11643
        %12146 = vmatprep.subr.bf16.mxu0 %v11636
        %12147 = vmatpush2.bf16.msra.mxu0 %v11635
        %12148 = vmatprep.subr.bf16.mxu0 %v11628
        %12149 = vmatpush2.bf16.msra.mxu0 %v11627
        %12150 = vmatprep.subr.bf16.mxu0 %v11620
        %12151 = vmatpush2.bf16.msra.mxu0 %v11619
        %12152 = vmatprep.subr.bf16.mxu0 %v11612
        %12153 = vmatpush2.bf16.msra.mxu0 %v11611
        %12154 = vmatprep.subr.bf16.mxu0 %v11604
        %12155 = vmatpush2.bf16.msra.mxu0 %v11603
        %12156 = vmatprep.mubr.bf16.mxu0 %v10634
        %12157 = vmatmul.mubr.bf16.gmra.mxu0 %v10633
        %v12158 = vpop.f32.mrf.mxu0
        %v12159 = vadd.f32 %v12118, %v12158
        %v12160 = vpop.f32.mrf.mxu0
        %v12161 = vadd.f32 %v12120, %v12160
        %v12162 = vpop.f32.mrf.mxu0
        %v12163 = vpop.f32.mrf.mxu0
        %12164 = vdwg.mxu0
        %12165 = vmatprep.subr.bf16.mxu0 %v11470
        %12166 = vmatpush1.bf16.msra.mxu0 %v11469
        %12167 = vmatprep.subr.bf16.mxu0 %v11462
        %12168 = vmatpush1.bf16.msra.mxu0 %v11461
        %12169 = vmatprep.subr.bf16.mxu0 %v11454
        %12170 = vmatpush1.bf16.msra.mxu0 %v11453
        %12171 = vmatprep.subr.bf16.mxu0 %v11446
        %12172 = vmatpush1.bf16.msra.mxu0 %v11445
        %12173 = vmatprep.subr.bf16.mxu0 %v11438
        %12174 = vmatpush1.bf16.msra.mxu0 %v11437
        %12175 = vmatprep.subr.bf16.mxu0 %v11430
        %12176 = vmatpush1.bf16.msra.mxu0 %v11429
        %12177 = vmatprep.subr.bf16.mxu0 %v11422
        %12178 = vmatpush1.bf16.msra.mxu0 %v11421
        %12179 = vmatprep.subr.bf16.mxu0 %v11414
        %12180 = vmatpush1.bf16.msra.mxu0 %v11413
        %12181 = vmatprep.subr.bf16.mxu0 %v11534
        %12182 = vmatpush2.bf16.msra.mxu0 %v11533
        %12183 = vmatprep.subr.bf16.mxu0 %v11526
        %12184 = vmatpush2.bf16.msra.mxu0 %v11525
        %12185 = vmatprep.subr.bf16.mxu0 %v11518
        %12186 = vmatpush2.bf16.msra.mxu0 %v11517
        %12187 = vmatprep.subr.bf16.mxu0 %v11510
        %12188 = vmatpush2.bf16.msra.mxu0 %v11509
        %12189 = vmatprep.subr.bf16.mxu0 %v11502
        %12190 = vmatpush2.bf16.msra.mxu0 %v11501
        %12191 = vmatprep.subr.bf16.mxu0 %v11494
        %12192 = vmatpush2.bf16.msra.mxu0 %v11493
        %12193 = vmatprep.subr.bf16.mxu0 %v11486
        %12194 = vmatpush2.bf16.msra.mxu0 %v11485
        %12195 = vmatprep.subr.bf16.mxu0 %v11478
        %12196 = vmatpush2.bf16.msra.mxu0 %v11477
        %12197 = vmatprep.mubr.bf16.mxu0 %v10632
        %12198 = vmatmul.mubr.bf16.gmra.mxu0 %v10625
        %v12199 = vpop.f32.mrf.mxu0
        %v12200 = vadd.f32 0.0, %v12199
        %v12201 = vpop.f32.mrf.mxu0
        %v12202 = vadd.f32 0.0, %v12201
        %v12203 = vpop.f32.mrf.mxu0
        %v12204 = vpop.f32.mrf.mxu0
        %12205 = vdwg.mxu0
        %12206 = vmatprep.subr.bf16.mxu0 %v11598
        %12207 = vmatpush1.bf16.msra.mxu0 %v11597
        %12208 = vmatprep.subr.bf16.mxu0 %v11590
        %12209 = vmatpush1.bf16.msra.mxu0 %v11589
        %12210 = vmatprep.subr.bf16.mxu0 %v11582
        %12211 = vmatpush1.bf16.msra.mxu0 %v11581
        %12212 = vmatprep.subr.bf16.mxu0 %v11574
        %12213 = vmatpush1.bf16.msra.mxu0 %v11573
        %12214 = vmatprep.subr.bf16.mxu0 %v11566
        %12215 = vmatpush1.bf16.msra.mxu0 %v11565
        %12216 = vmatprep.subr.bf16.mxu0 %v11558
        %12217 = vmatpush1.bf16.msra.mxu0 %v11557
        %12218 = vmatprep.subr.bf16.mxu0 %v11550
        %12219 = vmatpush1.bf16.msra.mxu0 %v11549
        %12220 = vmatprep.subr.bf16.mxu0 %v11542
        %12221 = vmatpush1.bf16.msra.mxu0 %v11541
        %12222 = vmatprep.subr.bf16.mxu0 %v11662
        %12223 = vmatpush2.bf16.msra.mxu0 %v11661
        %12224 = vmatprep.subr.bf16.mxu0 %v11654
        %12225 = vmatpush2.bf16.msra.mxu0 %v11653
        %12226 = vmatprep.subr.bf16.mxu0 %v11646
        %12227 = vmatpush2.bf16.msra.mxu0 %v11645
        %12228 = vmatprep.subr.bf16.mxu0 %v11638
        %12229 = vmatpush2.bf16.msra.mxu0 %v11637
        %12230 = vmatprep.subr.bf16.mxu0 %v11630
        %12231 = vmatpush2.bf16.msra.mxu0 %v11629
        %12232 = vmatprep.subr.bf16.mxu0 %v11622
        %12233 = vmatpush2.bf16.msra.mxu0 %v11621
        %12234 = vmatprep.subr.bf16.mxu0 %v11614
        %12235 = vmatpush2.bf16.msra.mxu0 %v11613
        %12236 = vmatprep.subr.bf16.mxu0 %v11606
        %12237 = vmatpush2.bf16.msra.mxu0 %v11605
        %12238 = vmatprep.mubr.bf16.mxu0 %v10634
        %12239 = vmatmul.mubr.bf16.gmra.mxu0 %v10633
        %v12240 = vpop.f32.mrf.mxu0
        %v12241 = vadd.f32 %v12200, %v12240
        %v12242 = vpop.f32.mrf.mxu0
        %v12243 = vadd.f32 %v12202, %v12242
        %v12244 = vpop.f32.mrf.mxu0
        %v12245 = vpop.f32.mrf.mxu0
        %12246 = vdwg.mxu0
        %v12247 = vadd.f32 %v10341, %v11995
        %v12248 = vadd.f32 %v10342, %v11997
        %v12249 = vadd.f32 %v10343, %v12077
        %v12250 = vadd.f32 %v10344, %v12079
        %v12251 = vadd.f32 %v10345, %v12159
        %v12252 = vadd.f32 %v10346, %v12161
        %v12253 = vadd.f32 %v10347, %v12241
        %v12254 = vadd.f32 %v10348, %v12243
        %v12255 = vld [vmem:[%s282] sm:$0xff]
        %v12256 = vld [vmem:[%s282 + $0x8] sm:$0xff]
        %v12265 = vcombine.low %v12247, %v12248
        %v12266 = vcombine.low %v12249, %v12250
        %v12268 = vunpack.c.l.s4 1983009808
        %v12269 = vunpack.c.0.s8 %v12268
        %v12270 = vlaneseq
        %v12271 = vshrl.u32 %v12270, 7
        %v12272 = vsub.s32 %v12269, %v12271
        %v12273 = vrot.slane %v12265, %v12272
        %v12275 = vunpack.c.l.s4 1983009808
        %v12276 = vunpack.c.0.s8 %v12275
        %v12277 = vlaneseq
        %v12278 = vshrl.u32 %v12277, 7
        %v12279 = vsub.s32 %v12276, %v12278
        %v12280 = vrot.slane %v12266, %v12279
        %v12281 = vcombine.low %v12273, %v12280
        %v12282 = vcombine.low %v12251, %v12252
        %v12283 = vcombine.low %v12253, %v12254
        %v12285 = vunpack.c.l.s4 1983009808
        %v12286 = vunpack.c.0.s8 %v12285
        %v12287 = vlaneseq
        %v12288 = vshrl.u32 %v12287, 7
        %v12289 = vsub.s32 %v12286, %v12288
        %v12290 = vrot.slane %v12282, %v12289
        %v12292 = vunpack.c.l.s4 1983009808
        %v12293 = vunpack.c.0.s8 %v12292
        %v12294 = vlaneseq
        %v12295 = vshrl.u32 %v12294, 7
        %v12296 = vsub.s32 %v12293, %v12295
        %v12297 = vrot.slane %v12283, %v12296
        %v12298 = vcombine.low %v12290, %v12297
        %v12301 = vadd.f32 %v12255, %v12281
        %v12302 = vadd.f32 %v12256, %v12298
        %12303 = vst [vmem:[%s282] sm:$0xff] %v12301
        %12304 = vst [vmem:[%s282 + $0x8] sm:$0xff] %v12302
        %s12305 = smul.u32 8, %s23
        %p12306 = scmp.lt.s32.totalorder %s12305, 7
        %s12307 = scalar_select %p12306, %s12305, 7
        %s12308 = smul.addr %s12307, 2
        %s12309 = scalar_lea.vmem %s5, %s12308
        // Predicated region
        $region49: #{span_predictor_forward.1} parent=39 // pred_check
          %p12310 = pneg %p166
        $region50: #{span_predictor_forward.1} parent=39 // pred_check_branch
          %12312 = sbr.rel (%p12310) target = $region52
        $region51: #{span_predictor_forward.1} parent=39 // pred_region
          %s12313 = smul.u32 8, %s23
        $region52: #{span_predictor_forward.1} parent=39 // pred_fallthru
          _
        // Predicated region
        $region53: #{span_predictor_forward.1} parent=39 // pred_check
          %p12314 = pneg %p166
        $region54: #{span_predictor_forward.1} parent=39 // pred_check_branch
          %12316 = sbr.rel (%p12314) target = $region56
        $region55: #{span_predictor_forward.1} parent=39 // pred_region
          %s12317 = smul.u32 8, %s23
          %p12318 = scmp.lt.s32.totalorder %s12317, 7
          %s12319 = scalar_select %p12318, %s12317, 7
          %s12320 = smul.addr %s12319, 2
          %s12321 = scalar_lea.vmem %s5, %s12320
        $region56: #{span_predictor_forward.1} parent=39 // pred_fallthru
          _
      $region40: #{span_predictor_forward.1} parent=5 // pred_fallthru
        _
      %p12322 = scmp.le.s32.totalorder 2, %s14
      // Predicated region
      $region57: #{span_predictor_forward.1} parent=5 // pred_check
        %p12323 = pneg %p12322
      $region58: #{span_predictor_forward.1} parent=5 // pred_check_branch
        %12325 = sbr.rel (%p12323) target = $region60
      $region59: #{span_predictor_forward.1} parent=5 // pred_region
        %s12326 = ssub.s32 %s14, 2
      $region60: #{span_predictor_forward.1} parent=5 // pred_fallthru
        _
    $region6: #{span_predictor_forward.1} parent=1 // loop_footer
      %s18 = sadd.s32 1, %s14
    $region7: #{span_predictor_forward.1} parent=1 // loop_footer_branch
      %13 = sbr.rel target = $region3
    $region8: #{span_predictor_forward.1} parent=1 // loop_exit
      _
    %12327 = vsyncpa [#allocation4], 1
    %s12328 = scalar_lea.sflag [#allocation4], 1
    %12329 = vsyncpa %s12328, 1

</llo_original>
